<compile_context>
chip_gen: v7x
topology: tpu7x:2x2x1
jax: 0.10.0
libtpu: 0.0.40
codegen_flags: <defaults>
</compile_context>

<pallas_src>
import functools

import jax
import jax.numpy as jnp
from jax.experimental import pallas as pl
from jax.experimental.pallas import tpu as pltpu

EMBED = 128          # embed_size (scaled down from 2048 for the synthetic test)
HEADS = 4            # heads (scaled down from 24; must divide EMBED)
HEAD_DIM = EMBED // HEADS
FWD_EXP = 4          # forward_expansion
LN_EPS = 1e-5


# ---------------------------------------------------------------------------
# Fused kernel: attention core + fc_out + (add+LN) + FFN + (add+LN)
# Processes Bb batch elements per grid step; fc_out / FFN run on (Bb*S, E).
# ---------------------------------------------------------------------------
def _decoder_block_kernel(x_ref, q_src_ref, k_src_ref, mask_ref,
                          fc_w_ref, fc_b_ref, ln_g_ref, ln_b_ref,
                          w1_ref, b1_ref, w2_ref, b2_ref,
                          o_ref, *, heads, head_dim, scale, eps):
    bb, s, e = x_ref.shape
    rows = bb * s

    # Per-step lane-dense slabs (Bb, S, E).  Argument wiring follows the reference:
    # attention(x, key, value, trg_mask) -> MHA(values=x, keys=key, query=value, mask).
    q = (q_src_ref[...] * scale).astype(jnp.bfloat16)   # query, scale folded in once
    k = k_src_ref[...].astype(jnp.bfloat16)              # keys
    v = x_ref[...].astype(jnp.bfloat16)                  # values

    # Additive mask bias, computed ONCE per grid step (hoisted out of the head loop).
    mask = mask_ref[...].reshape(bb, s, s)
    neg_bias = jnp.where(mask == 0, jnp.float32(-1e20), jnp.float32(0.0))

    # --- multi-head attention with fc_out folded in per head (no lane concatenate) ---
    fc_acc = jnp.zeros((rows, e), jnp.float32)
    for h in range(heads):                                # small static head count
        lo = h * head_dim
        qh = q[:, :, lo:lo + head_dim]                    # (Bb, S, D) bf16
        kh = k[:, :, lo:lo + head_dim]
        vh = v[:, :, lo:lo + head_dim]

        energy = jnp.einsum('bqd,bkd->bqk', qh, kh,
                            preferred_element_type=jnp.float32) + neg_bias  # (Bb,S,S)
        energy = energy - jnp.max(energy, axis=-1, keepdims=True)
        p = jnp.exp(energy)
        inv_l = pl.reciprocal(jnp.sum(p, axis=-1, keepdims=True), approx=True)
        attn = (p * inv_l).astype(jnp.bfloat16)

        head_out = jnp.einsum('bqk,bkd->bqd', attn, vh,
                              preferred_element_type=jnp.float32)           # (Bb,S,D)

        # fc_out accumulated per head: (rows, D) @ (D, E) with M = Bb*S rows.
        fc_acc = fc_acc + jnp.dot(
            head_out.reshape(rows, head_dim).astype(jnp.bfloat16),
            fc_w_ref[lo:lo + head_dim, :],
            preferred_element_type=jnp.float32)

    fc = fc_acc + fc_b_ref[...].astype(jnp.float32)       # (rows, E)

    # --- shared LayerNorm (same gamma/beta used twice, as in the module) ---
    g = ln_g_ref[...].astype(jnp.float32)
    b = ln_b_ref[...].astype(jnp.float32)

    def layer_norm(t):
        mu = jnp.mean(t, axis=-1, keepdims=True)
        var = jnp.mean(jnp.square(t - mu), axis=-1, keepdims=True)
        return (t - mu) * jax.lax.rsqrt(var + eps) * g + b

    # x = dropout(norm(attention + x))   (dropout == identity in eval)
    x_res = x_ref[...].astype(jnp.float32).reshape(rows, e)
    x1 = layer_norm(fc + x_res)

    # forward = feed_forward(x);  x = dropout(norm(forward + x))
    h1 = jnp.dot(x1.astype(jnp.bfloat16), w1_ref[...],
                 preferred_element_type=jnp.float32) + b1_ref[...].astype(jnp.float32)
    h1 = jnp.maximum(h1, 0.0)
    ff = jnp.dot(h1.astype(jnp.bfloat16), w2_ref[...],
                 preferred_element_type=jnp.float32) + b2_ref[...].astype(jnp.float32)

    o_ref[...] = layer_norm(ff + x1).reshape(bb, s, e).astype(o_ref.dtype)


def _pick_batch_block(n, s, max_rows=512, target_rows=128):
    """Largest divisor of n with bb*s <= max_rows, preferring an even grid extent
    (v7x megacore) as long as each step still has >= target_rows MXU rows."""
    bb = 1
    for cand in range(1, n + 1):
        if n % cand == 0 and cand * s <= max_rows:
            bb = cand
    while n // bb == 1 and bb % 2 == 0 and (bb // 2) * s >= target_rows:
        bb //= 2
    return bb


# ---------------------------------------------------------------------------
# DecoderBlock forward: one fused pallas_call, grid over batch blocks.
# ---------------------------------------------------------------------------
def decoder_block_forward(params, x, value, key_t, src_mask, trg_mask):
    del src_mask  # unused by the reference forward
    N, S, E = x.shape
    Fh = FWD_EXP * E
    assert value.shape == (N, S, E) and key_t.shape == (N, S, E)
    assert trg_mask.shape == (N, 1, S, S)

    Bb = _pick_batch_block(N, S)

    # Weights go to bf16 for MXU throughput / half the HBM+VMEM traffic;
    # biases / LN params stay f32 (added in f32).
    fc_w = params["fc_out_w"].astype(jnp.bfloat16)
    w1 = params["w1"].astype(jnp.bfloat16)
    w2 = params["w2"].astype(jnp.bfloat16)

    kernel = functools.partial(
        _decoder_block_kernel,
        heads=HEADS, head_dim=HEAD_DIM, scale=1.0 / (EMBED ** 0.5), eps=LN_EPS)

    const2d = lambda n: (0, 0)
    return pl.pallas_call(
        kernel,
        out_shape=jax.ShapeDtypeStruct((N, S, E), jnp.float32),
        grid=(N // Bb,),
        in_specs=[
            pl.BlockSpec((Bb, S, E), lambda n: (n, 0, 0)),        # x (values + residual)
            pl.BlockSpec((Bb, S, E), lambda n: (n, 0, 0)),        # value -> query
            pl.BlockSpec((Bb, S, E), lambda n: (n, 0, 0)),        # key   -> keys
            pl.BlockSpec((Bb, 1, S, S), lambda n: (n, 0, 0, 0)),  # trg_mask
            pl.BlockSpec((E, E), const2d),                        # fc_out_w (bf16)
            pl.BlockSpec((1, E), const2d),                        # fc_out_b
            pl.BlockSpec((1, E), const2d),                        # ln_g
            pl.BlockSpec((1, E), const2d),                        # ln_b
            pl.BlockSpec((E, Fh), const2d),                       # w1 (bf16)
            pl.BlockSpec((1, Fh), const2d),                       # b1
            pl.BlockSpec((Fh, E), const2d),                       # w2 (bf16)
            pl.BlockSpec((1, E), const2d),                        # b2
        ],
        out_specs=pl.BlockSpec((Bb, S, E), lambda n: (n, 0, 0)),
        compiler_params=pltpu.CompilerParams(
            dimension_semantics=("parallel",)),                   # shard batch blocks across TCs
    )(x, value, key_t, trg_mask,
      fc_w, params["fc_out_b"], params["ln_g"], params["ln_b"],
      w1, params["b1"], w2, params["b2"])


# ---------------------------------------------------------------------------
# Pure-JAX f32 reference for numerical verification
# ---------------------------------------------------------------------------
def reference(params, x, value, key_t, trg_mask):
    N, Sq, E = value.shape
    H, D = HEADS, HEAD_DIM
    q = value.reshape(N, Sq, H, D)
    k = key_t.reshape(N, key_t.shape[1], H, D)
    v = x.reshape(N, x.shape[1], H, D)
    energy = jnp.einsum('nqhd,nkhd->nhqk', q, k)
    energy = jnp.where(trg_mask == 0, -1e20, energy)
    attn = jax.nn.softmax(energy / (EMBED ** 0.5), axis=3)
    out = jnp.einsum('nhql,nlhd->nqhd', attn, v).reshape(N, Sq, E)
    out = out @ params["fc_out_w"] + params["fc_out_b"][0]

    def ln(t):
        mu = t.mean(-1, keepdims=True)
        var = ((t - mu) ** 2).mean(-1, keepdims=True)
        return (t - mu) / jnp.sqrt(var + LN_EPS) * params["ln_g"][0] + params["ln_b"][0]

    x1 = ln(out + x)
    h = jnp.maximum(x1 @ params["w1"] + params["b1"][0], 0.0)
    ff = h @ params["w2"] + params["b2"][0]
    return ln(ff + x1)


if __name__ == "__main__":
    rng = jax.random.PRNGKey(0)
    ks = jax.random.split(rng, 9)

    # N chosen so that Bb*S = 128 MXU rows per grid step with an even grid extent.
    N, S = 32, 8
    x = jax.random.normal(ks[0], (N, S, EMBED), jnp.float32)
    value = jax.random.normal(ks[1], (N, S, EMBED), jnp.float32)
    key_t = jax.random.normal(ks[2], (N, S, EMBED), jnp.float32)
    trg_mask = jnp.broadcast_to(
        jnp.tril(jnp.ones((S, S), jnp.int32))[None, None], (N, 1, S, S))
    src_mask = jnp.ones((N, 1, 1, S), jnp.int32)   # unused by the forward

    params = {
        "fc_out_w": 0.05 * jax.random.normal(ks[3], (EMBED, EMBED), jnp.float32),
        "fc_out_b": 0.01 * jax.random.normal(ks[4], (1, EMBED), jnp.float32),
        "ln_g": jnp.ones((1, EMBED), jnp.float32),       # nn.LayerNorm default init
        "ln_b": jnp.zeros((1, EMBED), jnp.float32),
        "w1": 0.05 * jax.random.normal(ks[5], (EMBED, FWD_EXP * EMBED), jnp.float32),
        "b1": 0.01 * jax.random.normal(ks[6], (1, FWD_EXP * EMBED), jnp.float32),
        "w2": 0.05 * jax.random.normal(ks[7], (FWD_EXP * EMBED, EMBED), jnp.float32),
        "b2": 0.01 * jax.random.normal(ks[8], (1, EMBED), jnp.float32),
    }

    out = decoder_block_forward(params, x, value, key_t, src_mask, trg_mask)
    out = jax.block_until_ready(out)

    ref = reference(params, x, value, key_t, trg_mask)
    assert out.shape == (N, S, EMBED)
    assert not bool(jnp.any(jnp.isnan(out)))
    # bf16 MXU operands (f32 accumulation) + approx softmax reciprocal (~2^-12 rel err)
    # give a few-percent worst-case deviation vs. the f32 reference at these magnitudes.
    max_err = float(jnp.max(jnp.abs(out - ref)))
    assert jnp.allclose(out, ref, atol=5e-2, rtol=5e-2), max_err

    print("KERNEL_OK")
</pallas_src>

<mosaic_0001>
module attributes {stable_mosaic.version = 11 : i64} {
  func.func @_decoder_block_kernel(%arg0: i32, %arg1: memref<16x8x128xf32, #tpu.memory_space<vmem>>, %arg2: memref<16x8x128xf32, #tpu.memory_space<vmem>>, %arg3: memref<16x8x128xf32, #tpu.memory_space<vmem>>, %arg4: memref<16x1x8x8xi32, #tpu.memory_space<vmem>>, %arg5: memref<128x128xbf16, #tpu.memory_space<vmem>>, %arg6: memref<1x128xf32, #tpu.memory_space<vmem>>, %arg7: memref<1x128xf32, #tpu.memory_space<vmem>>, %arg8: memref<1x128xf32, #tpu.memory_space<vmem>>, %arg9: memref<128x512xbf16, #tpu.memory_space<vmem>>, %arg10: memref<1x512xf32, #tpu.memory_space<vmem>>, %arg11: memref<512x128xbf16, #tpu.memory_space<vmem>>, %arg12: memref<1x128xf32, #tpu.memory_space<vmem>>, %arg13: memref<16x8x128xf32, #tpu.memory_space<vmem>>) attributes {dimension_semantics = [#tpu.dimension_semantics<parallel>], iteration_bounds = array<i64: 2>, scalar_prefetch = 0 : i64, scratch_operands = 0 : i64, tpu.core_type = #tpu.core_type<tc>, window_params = [{transform_indices = @transform_0, window_bounds = array<i64: 16, 8, 128>}, {transform_indices = @transform_1, window_bounds = array<i64: 16, 8, 128>}, {transform_indices = @transform_2, window_bounds = array<i64: 16, 8, 128>}, {transform_indices = @transform_3, window_bounds = array<i64: 16, 1, 8, 8>}, {pipeline_mode = #tpu.pipeline_mode<synchronous>, transform_indices = @transform_4, window_bounds = array<i64: 128, 128>}, {pipeline_mode = #tpu.pipeline_mode<synchronous>, transform_indices = @transform_5, window_bounds = array<i64: 1, 128>}, {pipeline_mode = #tpu.pipeline_mode<synchronous>, transform_indices = @transform_6, window_bounds = array<i64: 1, 128>}, {pipeline_mode = #tpu.pipeline_mode<synchronous>, transform_indices = @transform_7, window_bounds = array<i64: 1, 128>}, {pipeline_mode = #tpu.pipeline_mode<synchronous>, transform_indices = @transform_8, window_bounds = array<i64: 128, 512>}, {pipeline_mode = #tpu.pipeline_mode<synchronous>, transform_indices = @transform_9, window_bounds = array<i64: 1, 512>}, {pipeline_mode = #tpu.pipeline_mode<synchronous>, transform_indices = @transform_10, window_bounds = array<i64: 512, 128>}, {pipeline_mode = #tpu.pipeline_mode<synchronous>, transform_indices = @transform_11, window_bounds = array<i64: 1, 128>}, {transform_indices = @transform_12, window_bounds = array<i64: 16, 8, 128>}]} {
    %c0 = arith.constant 0 : index
    %c0_0 = arith.constant 0 : index
    %c0_1 = arith.constant 0 : index
    %0 = vector.load %arg2[%c0, %c0_0, %c0_1] : memref<16x8x128xf32, #tpu.memory_space<vmem>>, vector<16x8x128xf32>
    %cst = arith.constant 0.0883883461 : f32
    %1 = vector.broadcast %cst : f32 to vector<16x8x128xf32>
    %2 = arith.mulf %0, %1 : vector<16x8x128xf32>
    %3 = arith.truncf %2 : vector<16x8x128xf32> to vector<16x8x128xbf16>
    %c0_2 = arith.constant 0 : index
    %c0_3 = arith.constant 0 : index
    %c0_4 = arith.constant 0 : index
    %4 = vector.load %arg3[%c0_2, %c0_3, %c0_4] : memref<16x8x128xf32, #tpu.memory_space<vmem>>, vector<16x8x128xf32>
    %5 = arith.truncf %4 : vector<16x8x128xf32> to vector<16x8x128xbf16>
    %c0_5 = arith.constant 0 : index
    %c0_6 = arith.constant 0 : index
    %c0_7 = arith.constant 0 : index
    %6 = vector.load %arg1[%c0_5, %c0_6, %c0_7] : memref<16x8x128xf32, #tpu.memory_space<vmem>>, vector<16x8x128xf32>
    %7 = arith.truncf %6 : vector<16x8x128xf32> to vector<16x8x128xbf16>
    %c0_8 = arith.constant 0 : index
    %c0_9 = arith.constant 0 : index
    %c0_10 = arith.constant 0 : index
    %c0_11 = arith.constant 0 : index
    %8 = vector.load %arg4[%c0_8, %c0_9, %c0_10, %c0_11] : memref<16x1x8x8xi32, #tpu.memory_space<vmem>>, vector<16x1x8x8xi32>
    %9 = vector.shape_cast %8 : vector<16x1x8x8xi32> to vector<16x8x8xi32>
    %c0_i32 = arith.constant 0 : i32
    %10 = vector.broadcast %c0_i32 : i32 to vector<16x8x8xi32>
    %11 = arith.cmpi eq, %9, %10 : vector<16x8x8xi32>
    %cst_12 = arith.constant -1.000000e+20 : f32
    %cst_13 = arith.constant 0.000000e+00 : f32
    %12 = vector.broadcast %cst_12 : f32 to vector<16x8x8xf32>
    %13 = vector.broadcast %cst_13 : f32 to vector<16x8x8xf32>
    %14 = arith.select %11, %12, %13 : vector<16x8x8xi1>, vector<16x8x8xf32>
    %cst_14 = arith.constant 0.000000e+00 : f32
    %15 = vector.broadcast %cst_14 : f32 to vector<128x128xf32>
    %16 = vector.extract_strided_slice %3 {offsets = [0, 0, 0], sizes = [16, 8, 32], strides = [1, 1, 1]} : vector<16x8x128xbf16> to vector<16x8x32xbf16>
    %17 = vector.extract_strided_slice %5 {offsets = [0, 0, 0], sizes = [16, 8, 32], strides = [1, 1, 1]} : vector<16x8x128xbf16> to vector<16x8x32xbf16>
    %18 = vector.extract_strided_slice %7 {offsets = [0, 0, 0], sizes = [16, 8, 32], strides = [1, 1, 1]} : vector<16x8x128xbf16> to vector<16x8x32xbf16>
    "tpu.trace_start"() <{level = 10 : i32, message = "bqd,bkd->bqk"}> : () -> ()
    %cst_15 = arith.constant dense<0.000000e+00> : vector<16x8x8xf32>
    %19 = tpu.matmul %16, %17, %cst_15 {dimension_numbers = #tpu.dot_dimension_numbers<[2], [2], [1], [1], [0, 0, 0, 1, 1, 1], [0], [0]>} : vector<16x8x32xbf16>, vector<16x8x32xbf16>, vector<16x8x8xf32> -> vector<16x8x8xf32>
    "tpu.trace_stop"() : () -> ()
    %20 = arith.addf %19, %14 : vector<16x8x8xf32>
    %cst_16 = arith.constant dense<0xFF800000> : vector<16x8xf32>
    %21 = vector.multi_reduction <maximumf>, %20, %cst_16 [2] : vector<16x8x8xf32> to vector<16x8xf32>
    %22 = vector.shape_cast %21 : vector<16x8xf32> to vector<16x8x1xf32>
    %23 = vector.broadcast %22 : vector<16x8x1xf32> to vector<16x8x8xf32>
    %24 = arith.subf %20, %23 : vector<16x8x8xf32>
    %25 = math.exp %24 : vector<16x8x8xf32>
    %cst_17 = arith.constant dense<0.000000e+00> : vector<16x8xf32>
    %26 = vector.multi_reduction <add>, %25, %cst_17 [2] : vector<16x8x8xf32> to vector<16x8xf32>
    %27 = vector.shape_cast %26 : vector<16x8xf32> to vector<16x8x1xf32>
    %28 = tpu.reciprocal %27 {approx = true} : vector<16x8x1xf32> -> vector<16x8x1xf32>
    %29 = vector.broadcast %28 : vector<16x8x1xf32> to vector<16x8x8xf32>
    %30 = arith.mulf %25, %29 : vector<16x8x8xf32>
    %31 = arith.truncf %30 : vector<16x8x8xf32> to vector<16x8x8xbf16>
    "tpu.trace_start"() <{level = 10 : i32, message = "bqk,bkd->bqd"}> : () -> ()
    %cst_18 = arith.constant dense<0.000000e+00> : vector<16x8x32xf32>
    %32 = tpu.matmul %31, %18, %cst_18 {dimension_numbers = #tpu.dot_dimension_numbers<[2], [1], [1], [2], [0, 0, 0, 1, 1, 2], [0], [0]>} : vector<16x8x8xbf16>, vector<16x8x32xbf16>, vector<16x8x32xf32> -> vector<16x8x32xf32>
    "tpu.trace_stop"() : () -> ()
    %33 = vector.shape_cast %32 : vector<16x8x32xf32> to vector<128x32xf32>
    %34 = arith.truncf %33 : vector<128x32xf32> to vector<128x32xbf16>
    %c0_19 = arith.constant 0 : index
    %c0_20 = arith.constant 0 : index
    %35 = vector.load %arg5[%c0_19, %c0_20] : memref<128x128xbf16, #tpu.memory_space<vmem>>, vector<32x128xbf16>
    %cst_21 = arith.constant dense<0.000000e+00> : vector<128x128xf32>
    %36 = tpu.matmul %34, %35, %cst_21 {dimension_numbers = #tpu.dot_dimension_numbers<[1], [0], [0], [1], [0, 0, 1, 1], [], []>} : vector<128x32xbf16>, vector<32x128xbf16>, vector<128x128xf32> -> vector<128x128xf32>
    %37 = arith.addf %15, %36 : vector<128x128xf32>
    %38 = vector.extract_strided_slice %3 {offsets = [0, 0, 32], sizes = [16, 8, 32], strides = [1, 1, 1]} : vector<16x8x128xbf16> to vector<16x8x32xbf16>
    %39 = vector.extract_strided_slice %5 {offsets = [0, 0, 32], sizes = [16, 8, 32], strides = [1, 1, 1]} : vector<16x8x128xbf16> to vector<16x8x32xbf16>
    %40 = vector.extract_strided_slice %7 {offsets = [0, 0, 32], sizes = [16, 8, 32], strides = [1, 1, 1]} : vector<16x8x128xbf16> to vector<16x8x32xbf16>
    "tpu.trace_start"() <{level = 10 : i32, message = "bqd,bkd->bqk"}> : () -> ()
    %cst_22 = arith.constant dense<0.000000e+00> : vector<16x8x8xf32>
    %41 = tpu.matmul %38, %39, %cst_22 {dimension_numbers = #tpu.dot_dimension_numbers<[2], [2], [1], [1], [0, 0, 0, 1, 1, 1], [0], [0]>} : vector<16x8x32xbf16>, vector<16x8x32xbf16>, vector<16x8x8xf32> -> vector<16x8x8xf32>
    "tpu.trace_stop"() : () -> ()
    %42 = arith.addf %41, %14 : vector<16x8x8xf32>
    %cst_23 = arith.constant dense<0xFF800000> : vector<16x8xf32>
    %43 = vector.multi_reduction <maximumf>, %42, %cst_23 [2] : vector<16x8x8xf32> to vector<16x8xf32>
    %44 = vector.shape_cast %43 : vector<16x8xf32> to vector<16x8x1xf32>
    %45 = vector.broadcast %44 : vector<16x8x1xf32> to vector<16x8x8xf32>
    %46 = arith.subf %42, %45 : vector<16x8x8xf32>
    %47 = math.exp %46 : vector<16x8x8xf32>
    %cst_24 = arith.constant dense<0.000000e+00> : vector<16x8xf32>
    %48 = vector.multi_reduction <add>, %47, %cst_24 [2] : vector<16x8x8xf32> to vector<16x8xf32>
    %49 = vector.shape_cast %48 : vector<16x8xf32> to vector<16x8x1xf32>
    %50 = tpu.reciprocal %49 {approx = true} : vector<16x8x1xf32> -> vector<16x8x1xf32>
    %51 = vector.broadcast %50 : vector<16x8x1xf32> to vector<16x8x8xf32>
    %52 = arith.mulf %47, %51 : vector<16x8x8xf32>
    %53 = arith.truncf %52 : vector<16x8x8xf32> to vector<16x8x8xbf16>
    "tpu.trace_start"() <{level = 10 : i32, message = "bqk,bkd->bqd"}> : () -> ()
    %cst_25 = arith.constant dense<0.000000e+00> : vector<16x8x32xf32>
    %54 = tpu.matmul %53, %40, %cst_25 {dimension_numbers = #tpu.dot_dimension_numbers<[2], [1], [1], [2], [0, 0, 0, 1, 1, 2], [0], [0]>} : vector<16x8x8xbf16>, vector<16x8x32xbf16>, vector<16x8x32xf32> -> vector<16x8x32xf32>
    "tpu.trace_stop"() : () -> ()
    %55 = vector.shape_cast %54 : vector<16x8x32xf32> to vector<128x32xf32>
    %56 = arith.truncf %55 : vector<128x32xf32> to vector<128x32xbf16>
    %c32 = arith.constant 32 : index
    %c0_26 = arith.constant 0 : index
    %57 = vector.load %arg5[%c32, %c0_26] : memref<128x128xbf16, #tpu.memory_space<vmem>>, vector<32x128xbf16>
    %cst_27 = arith.constant dense<0.000000e+00> : vector<128x128xf32>
    %58 = tpu.matmul %56, %57, %cst_27 {dimension_numbers = #tpu.dot_dimension_numbers<[1], [0], [0], [1], [0, 0, 1, 1], [], []>} : vector<128x32xbf16>, vector<32x128xbf16>, vector<128x128xf32> -> vector<128x128xf32>
    %59 = arith.addf %37, %58 : vector<128x128xf32>
    %60 = vector.extract_strided_slice %3 {offsets = [0, 0, 64], sizes = [16, 8, 32], strides = [1, 1, 1]} : vector<16x8x128xbf16> to vector<16x8x32xbf16>
    %61 = vector.extract_strided_slice %5 {offsets = [0, 0, 64], sizes = [16, 8, 32], strides = [1, 1, 1]} : vector<16x8x128xbf16> to vector<16x8x32xbf16>
    %62 = vector.extract_strided_slice %7 {offsets = [0, 0, 64], sizes = [16, 8, 32], strides = [1, 1, 1]} : vector<16x8x128xbf16> to vector<16x8x32xbf16>
    "tpu.trace_start"() <{level = 10 : i32, message = "bqd,bkd->bqk"}> : () -> ()
    %cst_28 = arith.constant dense<0.000000e+00> : vector<16x8x8xf32>
    %63 = tpu.matmul %60, %61, %cst_28 {dimension_numbers = #tpu.dot_dimension_numbers<[2], [2], [1], [1], [0, 0, 0, 1, 1, 1], [0], [0]>} : vector<16x8x32xbf16>, vector<16x8x32xbf16>, vector<16x8x8xf32> -> vector<16x8x8xf32>
    "tpu.trace_stop"() : () -> ()
    %64 = arith.addf %63, %14 : vector<16x8x8xf32>
    %cst_29 = arith.constant dense<0xFF800000> : vector<16x8xf32>
    %65 = vector.multi_reduction <maximumf>, %64, %cst_29 [2] : vector<16x8x8xf32> to vector<16x8xf32>
    %66 = vector.shape_cast %65 : vector<16x8xf32> to vector<16x8x1xf32>
    %67 = vector.broadcast %66 : vector<16x8x1xf32> to vector<16x8x8xf32>
    %68 = arith.subf %64, %67 : vector<16x8x8xf32>
    %69 = math.exp %68 : vector<16x8x8xf32>
    %cst_30 = arith.constant dense<0.000000e+00> : vector<16x8xf32>
    %70 = vector.multi_reduction <add>, %69, %cst_30 [2] : vector<16x8x8xf32> to vector<16x8xf32>
    %71 = vector.shape_cast %70 : vector<16x8xf32> to vector<16x8x1xf32>
    %72 = tpu.reciprocal %71 {approx = true} : vector<16x8x1xf32> -> vector<16x8x1xf32>
    %73 = vector.broadcast %72 : vector<16x8x1xf32> to vector<16x8x8xf32>
    %74 = arith.mulf %69, %73 : vector<16x8x8xf32>
    %75 = arith.truncf %74 : vector<16x8x8xf32> to vector<16x8x8xbf16>
    "tpu.trace_start"() <{level = 10 : i32, message = "bqk,bkd->bqd"}> : () -> ()
    %cst_31 = arith.constant dense<0.000000e+00> : vector<16x8x32xf32>
    %76 = tpu.matmul %75, %62, %cst_31 {dimension_numbers = #tpu.dot_dimension_numbers<[2], [1], [1], [2], [0, 0, 0, 1, 1, 2], [0], [0]>} : vector<16x8x8xbf16>, vector<16x8x32xbf16>, vector<16x8x32xf32> -> vector<16x8x32xf32>
    "tpu.trace_stop"() : () -> ()
    %77 = vector.shape_cast %76 : vector<16x8x32xf32> to vector<128x32xf32>
    %78 = arith.truncf %77 : vector<128x32xf32> to vector<128x32xbf16>
    %c64 = arith.constant 64 : index
    %c0_32 = arith.constant 0 : index
    %79 = vector.load %arg5[%c64, %c0_32] : memref<128x128xbf16, #tpu.memory_space<vmem>>, vector<32x128xbf16>
    %cst_33 = arith.constant dense<0.000000e+00> : vector<128x128xf32>
    %80 = tpu.matmul %78, %79, %cst_33 {dimension_numbers = #tpu.dot_dimension_numbers<[1], [0], [0], [1], [0, 0, 1, 1], [], []>} : vector<128x32xbf16>, vector<32x128xbf16>, vector<128x128xf32> -> vector<128x128xf32>
    %81 = arith.addf %59, %80 : vector<128x128xf32>
    %82 = vector.extract_strided_slice %3 {offsets = [0, 0, 96], sizes = [16, 8, 32], strides = [1, 1, 1]} : vector<16x8x128xbf16> to vector<16x8x32xbf16>
    %83 = vector.extract_strided_slice %5 {offsets = [0, 0, 96], sizes = [16, 8, 32], strides = [1, 1, 1]} : vector<16x8x128xbf16> to vector<16x8x32xbf16>
    %84 = vector.extract_strided_slice %7 {offsets = [0, 0, 96], sizes = [16, 8, 32], strides = [1, 1, 1]} : vector<16x8x128xbf16> to vector<16x8x32xbf16>
    "tpu.trace_start"() <{level = 10 : i32, message = "bqd,bkd->bqk"}> : () -> ()
    %cst_34 = arith.constant dense<0.000000e+00> : vector<16x8x8xf32>
    %85 = tpu.matmul %82, %83, %cst_34 {dimension_numbers = #tpu.dot_dimension_numbers<[2], [2], [1], [1], [0, 0, 0, 1, 1, 1], [0], [0]>} : vector<16x8x32xbf16>, vector<16x8x32xbf16>, vector<16x8x8xf32> -> vector<16x8x8xf32>
    "tpu.trace_stop"() : () -> ()
    %86 = arith.addf %85, %14 : vector<16x8x8xf32>
    %cst_35 = arith.constant dense<0xFF800000> : vector<16x8xf32>
    %87 = vector.multi_reduction <maximumf>, %86, %cst_35 [2] : vector<16x8x8xf32> to vector<16x8xf32>
    %88 = vector.shape_cast %87 : vector<16x8xf32> to vector<16x8x1xf32>
    %89 = vector.broadcast %88 : vector<16x8x1xf32> to vector<16x8x8xf32>
    %90 = arith.subf %86, %89 : vector<16x8x8xf32>
    %91 = math.exp %90 : vector<16x8x8xf32>
    %cst_36 = arith.constant dense<0.000000e+00> : vector<16x8xf32>
    %92 = vector.multi_reduction <add>, %91, %cst_36 [2] : vector<16x8x8xf32> to vector<16x8xf32>
    %93 = vector.shape_cast %92 : vector<16x8xf32> to vector<16x8x1xf32>
    %94 = tpu.reciprocal %93 {approx = true} : vector<16x8x1xf32> -> vector<16x8x1xf32>
    %95 = vector.broadcast %94 : vector<16x8x1xf32> to vector<16x8x8xf32>
    %96 = arith.mulf %91, %95 : vector<16x8x8xf32>
    %97 = arith.truncf %96 : vector<16x8x8xf32> to vector<16x8x8xbf16>
    "tpu.trace_start"() <{level = 10 : i32, message = "bqk,bkd->bqd"}> : () -> ()
    %cst_37 = arith.constant dense<0.000000e+00> : vector<16x8x32xf32>
    %98 = tpu.matmul %97, %84, %cst_37 {dimension_numbers = #tpu.dot_dimension_numbers<[2], [1], [1], [2], [0, 0, 0, 1, 1, 2], [0], [0]>} : vector<16x8x8xbf16>, vector<16x8x32xbf16>, vector<16x8x32xf32> -> vector<16x8x32xf32>
    "tpu.trace_stop"() : () -> ()
    %99 = vector.shape_cast %98 : vector<16x8x32xf32> to vector<128x32xf32>
    %100 = arith.truncf %99 : vector<128x32xf32> to vector<128x32xbf16>
    %c96 = arith.constant 96 : index
    %c0_38 = arith.constant 0 : index
    %101 = vector.load %arg5[%c96, %c0_38] : memref<128x128xbf16, #tpu.memory_space<vmem>>, vector<32x128xbf16>
    %cst_39 = arith.constant dense<0.000000e+00> : vector<128x128xf32>
    %102 = tpu.matmul %100, %101, %cst_39 {dimension_numbers = #tpu.dot_dimension_numbers<[1], [0], [0], [1], [0, 0, 1, 1], [], []>} : vector<128x32xbf16>, vector<32x128xbf16>, vector<128x128xf32> -> vector<128x128xf32>
    %103 = arith.addf %81, %102 : vector<128x128xf32>
    %c0_40 = arith.constant 0 : index
    %c0_41 = arith.constant 0 : index
    %104 = vector.load %arg6[%c0_40, %c0_41] : memref<1x128xf32, #tpu.memory_space<vmem>>, vector<1x128xf32>
    %105 = vector.broadcast %104 : vector<1x128xf32> to vector<128x128xf32>
    %106 = arith.addf %103, %105 : vector<128x128xf32>
    %c0_42 = arith.constant 0 : index
    %c0_43 = arith.constant 0 : index
    %107 = vector.load %arg7[%c0_42, %c0_43] : memref<1x128xf32, #tpu.memory_space<vmem>>, vector<1x128xf32>
    %c0_44 = arith.constant 0 : index
    %c0_45 = arith.constant 0 : index
    %108 = vector.load %arg8[%c0_44, %c0_45] : memref<1x128xf32, #tpu.memory_space<vmem>>, vector<1x128xf32>
    %c0_46 = arith.constant 0 : index
    %c0_47 = arith.constant 0 : index
    %c0_48 = arith.constant 0 : index
    %109 = vector.load %arg1[%c0_46, %c0_47, %c0_48] : memref<16x8x128xf32, #tpu.memory_space<vmem>>, vector<16x8x128xf32>
    %110 = vector.shape_cast %109 : vector<16x8x128xf32> to vector<128x128xf32>
    %111 = arith.addf %106, %110 : vector<128x128xf32>
    %cst_49 = arith.constant dense<0.000000e+00> : vector<128xf32>
    %112 = vector.multi_reduction <add>, %111, %cst_49 [1] : vector<128x128xf32> to vector<128xf32>
    %113 = vector.shape_cast %112 : vector<128xf32> to vector<128x1xf32>
    %cst_50 = arith.constant 1.280000e+02 : f32
    %114 = vector.broadcast %cst_50 : f32 to vector<128x1xf32>
    %115 = arith.divf %113, %114 : vector<128x1xf32>
    %116 = vector.broadcast %115 : vector<128x1xf32> to vector<128x128xf32>
    %117 = arith.subf %111, %116 : vector<128x128xf32>
    %118 = arith.mulf %117, %117 : vector<128x128xf32>
    %cst_51 = arith.constant dense<0.000000e+00> : vector<128xf32>
    %119 = vector.multi_reduction <add>, %118, %cst_51 [1] : vector<128x128xf32> to vector<128xf32>
    %120 = vector.shape_cast %119 : vector<128xf32> to vector<128x1xf32>
    %cst_52 = arith.constant 1.280000e+02 : f32
    %121 = vector.broadcast %cst_52 : f32 to vector<128x1xf32>
    %122 = arith.divf %120, %121 : vector<128x1xf32>
    %123 = vector.broadcast %115 : vector<128x1xf32> to vector<128x128xf32>
    %124 = arith.subf %111, %123 : vector<128x128xf32>
    %cst_53 = arith.constant 9.99999974E-6 : f32
    %125 = vector.broadcast %cst_53 : f32 to vector<128x1xf32>
    %126 = arith.addf %122, %125 : vector<128x1xf32>
    %127 = math.rsqrt %126 : vector<128x1xf32>
    %128 = vector.broadcast %127 : vector<128x1xf32> to vector<128x128xf32>
    %129 = arith.mulf %124, %128 : vector<128x128xf32>
    %130 = vector.broadcast %107 : vector<1x128xf32> to vector<128x128xf32>
    %131 = arith.mulf %129, %130 : vector<128x128xf32>
    %132 = vector.broadcast %108 : vector<1x128xf32> to vector<128x128xf32>
    %133 = arith.addf %131, %132 : vector<128x128xf32>
    %134 = arith.truncf %133 : vector<128x128xf32> to vector<128x128xbf16>
    %c0_54 = arith.constant 0 : index
    %c0_55 = arith.constant 0 : index
    %135 = vector.load %arg9[%c0_54, %c0_55] : memref<128x512xbf16, #tpu.memory_space<vmem>>, vector<128x512xbf16>
    %cst_56 = arith.constant dense<0.000000e+00> : vector<128x512xf32>
    %136 = tpu.matmul %134, %135, %cst_56 {dimension_numbers = #tpu.dot_dimension_numbers<[1], [0], [0], [1], [0, 0, 1, 1], [], []>} : vector<128x128xbf16>, vector<128x512xbf16>, vector<128x512xf32> -> vector<128x512xf32>
    %c0_57 = arith.constant 0 : index
    %c0_58 = arith.constant 0 : index
    %137 = vector.load %arg10[%c0_57, %c0_58] : memref<1x512xf32, #tpu.memory_space<vmem>>, vector<1x512xf32>
    %138 = vector.broadcast %137 : vector<1x512xf32> to vector<128x512xf32>
    %139 = arith.addf %136, %138 : vector<128x512xf32>
    %cst_59 = arith.constant 0.000000e+00 : f32
    %140 = vector.broadcast %cst_59 : f32 to vector<128x512xf32>
    %141 = arith.maximumf %139, %140 : vector<128x512xf32>
    %142 = arith.truncf %141 : vector<128x512xf32> to vector<128x512xbf16>
    %c0_60 = arith.constant 0 : index
    %c0_61 = arith.constant 0 : index
    %143 = vector.load %arg11[%c0_60, %c0_61] : memref<512x128xbf16, #tpu.memory_space<vmem>>, vector<512x128xbf16>
    %cst_62 = arith.constant dense<0.000000e+00> : vector<128x128xf32>
    %144 = tpu.matmul %142, %143, %cst_62 {dimension_numbers = #tpu.dot_dimension_numbers<[1], [0], [0], [1], [0, 0, 1, 1], [], []>} : vector<128x512xbf16>, vector<512x128xbf16>, vector<128x128xf32> -> vector<128x128xf32>
    %c0_63 = arith.constant 0 : index
    %c0_64 = arith.constant 0 : index
    %145 = vector.load %arg12[%c0_63, %c0_64] : memref<1x128xf32, #tpu.memory_space<vmem>>, vector<1x128xf32>
    %146 = vector.broadcast %145 : vector<1x128xf32> to vector<128x128xf32>
    %147 = arith.addf %144, %146 : vector<128x128xf32>
    %148 = arith.addf %147, %133 : vector<128x128xf32>
    %cst_65 = arith.constant dense<0.000000e+00> : vector<128xf32>
    %149 = vector.multi_reduction <add>, %148, %cst_65 [1] : vector<128x128xf32> to vector<128xf32>
    %150 = vector.shape_cast %149 : vector<128xf32> to vector<128x1xf32>
    %cst_66 = arith.constant 1.280000e+02 : f32
    %151 = vector.broadcast %cst_66 : f32 to vector<128x1xf32>
    %152 = arith.divf %150, %151 : vector<128x1xf32>
    %153 = vector.broadcast %152 : vector<128x1xf32> to vector<128x128xf32>
    %154 = arith.subf %148, %153 : vector<128x128xf32>
    %155 = arith.mulf %154, %154 : vector<128x128xf32>
    %cst_67 = arith.constant dense<0.000000e+00> : vector<128xf32>
    %156 = vector.multi_reduction <add>, %155, %cst_67 [1] : vector<128x128xf32> to vector<128xf32>
    %157 = vector.shape_cast %156 : vector<128xf32> to vector<128x1xf32>
    %cst_68 = arith.constant 1.280000e+02 : f32
    %158 = vector.broadcast %cst_68 : f32 to vector<128x1xf32>
    %159 = arith.divf %157, %158 : vector<128x1xf32>
    %160 = vector.broadcast %152 : vector<128x1xf32> to vector<128x128xf32>
    %161 = arith.subf %148, %160 : vector<128x128xf32>
    %cst_69 = arith.constant 9.99999974E-6 : f32
    %162 = vector.broadcast %cst_69 : f32 to vector<128x1xf32>
    %163 = arith.addf %159, %162 : vector<128x1xf32>
    %164 = math.rsqrt %163 : vector<128x1xf32>
    %165 = vector.broadcast %164 : vector<128x1xf32> to vector<128x128xf32>
    %166 = arith.mulf %161, %165 : vector<128x128xf32>
    %167 = vector.broadcast %107 : vector<1x128xf32> to vector<128x128xf32>
    %168 = arith.mulf %166, %167 : vector<128x128xf32>
    %169 = vector.broadcast %108 : vector<1x128xf32> to vector<128x128xf32>
    %170 = arith.addf %168, %169 : vector<128x128xf32>
    %171 = vector.shape_cast %170 : vector<128x128xf32> to vector<16x8x128xf32>
    %c0_70 = arith.constant 0 : index
    %c0_71 = arith.constant 0 : index
    %c0_72 = arith.constant 0 : index
    %172 = vector.load %arg13[%c0_70, %c0_71, %c0_72] : memref<16x8x128xf32, #tpu.memory_space<vmem>>, vector<16x8x128xf32>
    tpu.vector_store %arg13[%c0_70, %c0_71, %c0_72], %171 {strides = array<i32>} : memref<16x8x128xf32, #tpu.memory_space<vmem>>, vector<16x8x128xf32>,
    return
  }
  func.func @transform_0(%arg0: i32) -> (i32, i32, i32) {
    %c0_i32 = arith.constant 0 : i32
    %c0_i32_0 = arith.constant 0 : i32
    %c0_i32_1 = arith.constant 0 : i32
    return %arg0, %c0_i32, %c0_i32_0 : i32, i32, i32
  }
  func.func @transform_1(%arg0: i32) -> (i32, i32, i32) {
    %c0_i32 = arith.constant 0 : i32
    %c0_i32_0 = arith.constant 0 : i32
    %c0_i32_1 = arith.constant 0 : i32
    return %arg0, %c0_i32, %c0_i32_0 : i32, i32, i32
  }
  func.func @transform_2(%arg0: i32) -> (i32, i32, i32) {
    %c0_i32 = arith.constant 0 : i32
    %c0_i32_0 = arith.constant 0 : i32
    %c0_i32_1 = arith.constant 0 : i32
    return %arg0, %c0_i32, %c0_i32_0 : i32, i32, i32
  }
  func.func @transform_3(%arg0: i32) -> (i32, i32, i32, i32) {
    %c0_i32 = arith.constant 0 : i32
    %c0_i32_0 = arith.constant 0 : i32
    %c0_i32_1 = arith.constant 0 : i32
    %c0_i32_2 = arith.constant 0 : i32
    return %arg0, %c0_i32, %c0_i32_0, %c0_i32_1 : i32, i32, i32, i32
  }
  func.func @transform_4(%arg0: i32) -> (i32, i32) {
    %c0_i32 = arith.constant 0 : i32
    %c0_i32_0 = arith.constant 0 : i32
    %c0_i32_1 = arith.constant 0 : i32
    return %c0_i32, %c0_i32_0 : i32, i32
  }
  func.func @transform_5(%arg0: i32) -> (i32, i32) {
    %c0_i32 = arith.constant 0 : i32
    %c0_i32_0 = arith.constant 0 : i32
    %c0_i32_1 = arith.constant 0 : i32
    return %c0_i32, %c0_i32_0 : i32, i32
  }
  func.func @transform_6(%arg0: i32) -> (i32, i32) {
    %c0_i32 = arith.constant 0 : i32
    %c0_i32_0 = arith.constant 0 : i32
    %c0_i32_1 = arith.constant 0 : i32
    return %c0_i32, %c0_i32_0 : i32, i32
  }
  func.func @transform_7(%arg0: i32) -> (i32, i32) {
    %c0_i32 = arith.constant 0 : i32
    %c0_i32_0 = arith.constant 0 : i32
    %c0_i32_1 = arith.constant 0 : i32
    return %c0_i32, %c0_i32_0 : i32, i32
  }
  func.func @transform_8(%arg0: i32) -> (i32, i32) {
    %c0_i32 = arith.constant 0 : i32
    %c0_i32_0 = arith.constant 0 : i32
    %c0_i32_1 = arith.constant 0 : i32
    return %c0_i32, %c0_i32_0 : i32, i32
  }
  func.func @transform_9(%arg0: i32) -> (i32, i32) {
    %c0_i32 = arith.constant 0 : i32
    %c0_i32_0 = arith.constant 0 : i32
    %c0_i32_1 = arith.constant 0 : i32
    return %c0_i32, %c0_i32_0 : i32, i32
  }
  func.func @transform_10(%arg0: i32) -> (i32, i32) {
    %c0_i32 = arith.constant 0 : i32
    %c0_i32_0 = arith.constant 0 : i32
    %c0_i32_1 = arith.constant 0 : i32
    return %c0_i32, %c0_i32_0 : i32, i32
  }
  func.func @transform_11(%arg0: i32) -> (i32, i32) {
    %c0_i32 = arith.constant 0 : i32
    %c0_i32_0 = arith.constant 0 : i32
    %c0_i32_1 = arith.constant 0 : i32
    return %c0_i32, %c0_i32_0 : i32, i32
  }
  func.func @transform_12(%arg0: i32) -> (i32, i32, i32) {
    %c0_i32 = arith.constant 0 : i32
    %c0_i32_0 = arith.constant 0 : i32
    %c0_i32_1 = arith.constant 0 : i32
    return %arg0, %c0_i32, %c0_i32_0 : i32, i32, i32
  }
}

</mosaic_0001>

<llo_original>
// kernel: tpu_custom_call.1
$region0: #{tpu_custom_call.1}
  #allocation0 [shape = 'u32[]', space=smem, size = 0x4, offset = 0x4, fixed_abs, tag = 'smem constant byte address 0x4 - core index']
  #allocation1 [shape = 'u32[144,128]{1,0:T(1,128)}', space=vmem, size = 0x12000, scoped, tag = 'internal scratch']
  %s0 = inlined_call_operand.vmem [shape: f32[32,8,128], index: 0, kind: input, shape index: {}]
  %s1 = inlined_call_operand.hbm [shape: f32[32,8,128], index: 1, kind: input, shape index: {}]
  %s2 = inlined_call_operand.hbm [shape: f32[32,8,128], index: 2, kind: input, shape index: {}]
  %s3 = inlined_call_operand.vmem [shape: s32[32,1,8,8], index: 3, kind: input, shape index: {}]
  %s4 = inlined_call_operand.vmem [shape: bf16[128,128], index: 4, kind: input, shape index: {}]
  %s5 = inlined_call_operand.vmem [shape: f32[1,128], index: 5, kind: input, shape index: {}]
  %s6 = inlined_call_operand.vmem [shape: f32[1,128], index: 6, kind: input, shape index: {}]
  %s7 = inlined_call_operand.vmem [shape: f32[1,128], index: 7, kind: input, shape index: {}]
  %s8 = inlined_call_operand.hbm [shape: bf16[128,512], index: 8, kind: input, shape index: {}]
  %s9 = inlined_call_operand.vmem [shape: f32[1,512], index: 9, kind: input, shape index: {}]
  %s10 = inlined_call_operand.hbm [shape: bf16[512,128], index: 10, kind: input, shape index: {}]
  %s11 = inlined_call_operand.vmem [shape: f32[1,128], index: 11, kind: input, shape index: {}]
  %s12 = inlined_call_operand.hbm [shape: f32[32,8,128], index: 12, kind: output, shape index: {}]
  %s13 = sld [smem:[#allocation0]]
  $region97: #{tpu_custom_call.1} parent=0
    _
  %s15 = ssub.s32 1, %s13
  %s16 = scalar_select 0, %s15, %s13
  $region1: #{tpu_custom_call.1} parent=0
    #allocation2 [shape = 'u8[131072]{0}', space=vmem, size = 0x20000, scoped, tag = 'input window, operand 1']
    #allocation3 [shape = 's32[2]{0}', space=sflag, size = 0x8, scoped, tag = 'scoped memory for tpu_custom_call.1']
    #allocation4 [shape = 's32[2]{0}', space=sflag, size = 0x8, scoped, tag = 'scoped memory for tpu_custom_call.1']
    #allocation5 [shape = 'u8[131072]{0}', space=vmem, size = 0x20000, scoped, tag = 'input window, operand 2']
    #allocation6 [shape = 's32[2]{0}', space=sflag, size = 0x8, scoped, tag = 'scoped memory for tpu_custom_call.1']
    #allocation7 [shape = 'u8[131072]{0}', space=vmem, size = 0x20000, scoped, tag = 'input window, operand 8, single buffered']
    #allocation8 [shape = 'u8[131072]{0}', space=vmem, size = 0x20000, scoped, tag = 'input window, operand 10, single buffered']
    #allocation9 [shape = 's32[1]{0}', space=sflag, size = 0x4, scoped, tag = 'scoped memory for tpu_custom_call.1']
    #allocation10 [shape = 'u8[131072]{0}', space=vmem, size = 0x20000, scoped, tag = 'output window, operand 0']
    %17 = vsyncpa [#allocation3], 0
    %s18 = scalar_lea.sflag [#allocation3], 1
    %19 = vsyncpa %s18, 0
    %20 = vsyncpa [#allocation6], 0
    %s21 = scalar_lea.sflag [#allocation6], 1
    %22 = vsyncpa %s21, 0
    %23 = vsyncpa [#allocation9], 0
    %24 = vsyncpa [#allocation4], 0
    %s25 = scalar_lea.sflag [#allocation4], 1
    %26 = vsyncpa %s25, 0
    loop: start=0, step=1, limit=4
    $region2: #{tpu_custom_call.1} parent=1 // loop_pre_header
      _
    $region3: #{tpu_custom_call.1} parent=1 // loop_header
      %s28 = sphi 0, %s32
      %p29 = scmp.ge.s32.totalorder %s28, 4
      %s38 = sphi 0, %s40
      %s41 = sphi 0, %s38
      %s42 = sphi 0, %s41
      %s58 = sphi 0, %s42
      %s64 = sphi 0, %s66
      %s67 = sphi 0, %s64
      %s68 = sphi 0, %s67
      %s84 = sphi 0, %s68
      %s90 = sphi 0, %s92
      %s93 = sphi 0, %s90
      %s94 = sphi 0, %s93
      %s110 = sphi 0, %s94
      %s116 = sphi 0, %s118
      %s119 = sphi 0, %s116
      %s120 = sphi 0, %s119
      %s136 = sphi 0, %s120
      %s140 = sphi 0, %s140
      %s142 = sphi 0, %s140
      %s143 = sphi 0, %s142
      %s157 = sphi 0, %s143
      %s161 = sphi 0, %s161
      %s163 = sphi 0, %s161
      %s164 = sphi 0, %s163
      %s178 = sphi 0, %s164
      %s182 = sphi 0, %s182
      %s184 = sphi 0, %s182
      %s185 = sphi 0, %s184
      %s199 = sphi 0, %s185
      %s203 = sphi 0, %s203
      %s205 = sphi 0, %s203
      %s206 = sphi 0, %s205
      %s220 = sphi 0, %s206
      %s224 = sphi 0, %s224
      %s226 = sphi 0, %s224
      %s227 = sphi 0, %s226
      %s241 = sphi 0, %s227
      %s245 = sphi 0, %s245
      %s247 = sphi 0, %s245
      %s248 = sphi 0, %s247
      %s262 = sphi 0, %s248
      %s266 = sphi 0, %s266
      %s268 = sphi 0, %s266
      %s269 = sphi 0, %s268
      %s283 = sphi 0, %s269
      %s287 = sphi 0, %s287
      %s289 = sphi 0, %s287
      %s290 = sphi 0, %s289
      %s304 = sphi 0, %s290
      %s310 = sphi 0, %s312
      %s313 = sphi 0, %s310
      %s314 = sphi 0, %s313
      %s330 = sphi 0, %s314
    $region4: #{tpu_custom_call.1} parent=1 // loop_header_branch
      %31 = sbr.rel (%p29) target = $region8
    $region5: #{tpu_custom_call.1} parent=1 // loop_body
      %s33 = ssub.s32 %s28, 1
      %s34 = ssub.s32 %s28, 2
      %s35 = sadd.s32 %s28, 1
      %s36 = ssub.s32 %s28, %s35
      %p37 = scmp.eq.s32.totalorder %s36, 0
      %s39 = sadd.s32 %s38, 1
      %s40 = scalar_select %p37, %s38, %s39
      %p43 = pneg %p37
      %p44 = scmp.eq.s32.totalorder %s28, 1
      %p45 = por %p43, %p44
      %p46 = scmp.ne.s32.totalorder %s38, %s41
      %p47 = scmp.eq.s32.totalorder %s28, 0
      %p48 = por %p46, %p47
      %p49 = scmp.ne.s32.totalorder %s38, %s41
      %p50 = scmp.eq.s32.totalorder %s33, 1
      %p51 = por %p49, %p50
      %p52 = scmp.ne.s32.totalorder %s41, %s42
      %p53 = scmp.eq.s32.totalorder %s33, 0
      %p54 = por %p52, %p53
      %p55 = scmp.ne.s32.totalorder %s41, %s42
      %p56 = scmp.eq.s32.totalorder %s34, 1
      %p57 = por %p55, %p56
      %p59 = scmp.ne.s32.totalorder %s42, %s58
      %p60 = scmp.eq.s32.totalorder %s34, 0
      %p61 = por %p59, %p60
      %s62 = ssub.s32 %s28, %s35
      %p63 = scmp.eq.s32.totalorder %s62, 0
      %s65 = sadd.s32 %s64, 1
      %s66 = scalar_select %p63, %s64, %s65
      %p69 = pneg %p63
      %p70 = scmp.eq.s32.totalorder %s28, 1
      %p71 = por %p69, %p70
      %p72 = scmp.ne.s32.totalorder %s64, %s67
      %p73 = scmp.eq.s32.totalorder %s28, 0
      %p74 = por %p72, %p73
      %p75 = scmp.ne.s32.totalorder %s64, %s67
      %p76 = scmp.eq.s32.totalorder %s33, 1
      %p77 = por %p75, %p76
      %p78 = scmp.ne.s32.totalorder %s67, %s68
      %p79 = scmp.eq.s32.totalorder %s33, 0
      %p80 = por %p78, %p79
      %p81 = scmp.ne.s32.totalorder %s67, %s68
      %p82 = scmp.eq.s32.totalorder %s34, 1
      %p83 = por %p81, %p82
      %p85 = scmp.ne.s32.totalorder %s68, %s84
      %p86 = scmp.eq.s32.totalorder %s34, 0
      %p87 = por %p85, %p86
      %s88 = ssub.s32 %s28, %s35
      %p89 = scmp.eq.s32.totalorder %s88, 0
      %s91 = sadd.s32 %s90, 1
      %s92 = scalar_select %p89, %s90, %s91
      %p95 = pneg %p89
      %p96 = scmp.eq.s32.totalorder %s28, 1
      %p97 = por %p95, %p96
      %p98 = scmp.ne.s32.totalorder %s90, %s93
      %p99 = scmp.eq.s32.totalorder %s28, 0
      %p100 = por %p98, %p99
      %p101 = scmp.ne.s32.totalorder %s90, %s93
      %p102 = scmp.eq.s32.totalorder %s33, 1
      %p103 = por %p101, %p102
      %p104 = scmp.ne.s32.totalorder %s93, %s94
      %p105 = scmp.eq.s32.totalorder %s33, 0
      %p106 = por %p104, %p105
      %p107 = scmp.ne.s32.totalorder %s93, %s94
      %p108 = scmp.eq.s32.totalorder %s34, 1
      %p109 = por %p107, %p108
      %p111 = scmp.ne.s32.totalorder %s94, %s110
      %p112 = scmp.eq.s32.totalorder %s34, 0
      %p113 = por %p111, %p112
      %s114 = ssub.s32 %s28, %s35
      %p115 = scmp.eq.s32.totalorder %s114, 0
      %s117 = sadd.s32 %s116, 1
      %s118 = scalar_select %p115, %s116, %s117
      %p121 = pneg %p115
      %p122 = scmp.eq.s32.totalorder %s28, 1
      %p123 = por %p121, %p122
      %p124 = scmp.ne.s32.totalorder %s116, %s119
      %p125 = scmp.eq.s32.totalorder %s28, 0
      %p126 = por %p124, %p125
      %p127 = scmp.ne.s32.totalorder %s116, %s119
      %p128 = scmp.eq.s32.totalorder %s33, 1
      %p129 = por %p127, %p128
      %p130 = scmp.ne.s32.totalorder %s119, %s120
      %p131 = scmp.eq.s32.totalorder %s33, 0
      %p132 = por %p130, %p131
      %p133 = scmp.ne.s32.totalorder %s119, %s120
      %p134 = scmp.eq.s32.totalorder %s34, 1
      %p135 = por %p133, %p134
      %p137 = scmp.ne.s32.totalorder %s120, %s136
      %p138 = scmp.eq.s32.totalorder %s34, 0
      %p139 = por %p137, %p138
      %s141 = sadd.s32 %s140, 1
      %p144 = scmp.eq.s32.totalorder %s28, 1
      %p145 = scmp.ne.s32.totalorder %s140, %s142
      %p146 = scmp.eq.s32.totalorder %s28, 0
      %p147 = por %p145, %p146
      %p148 = scmp.ne.s32.totalorder %s140, %s142
      %p149 = scmp.eq.s32.totalorder %s33, 1
      %p150 = por %p148, %p149
      %p151 = scmp.ne.s32.totalorder %s142, %s143
      %p152 = scmp.eq.s32.totalorder %s33, 0
      %p153 = por %p151, %p152
      %p154 = scmp.ne.s32.totalorder %s142, %s143
      %p155 = scmp.eq.s32.totalorder %s34, 1
      %p156 = por %p154, %p155
      %p158 = scmp.ne.s32.totalorder %s143, %s157
      %p159 = scmp.eq.s32.totalorder %s34, 0
      %p160 = por %p158, %p159
      %s162 = sadd.s32 %s161, 1
      %p165 = scmp.eq.s32.totalorder %s28, 1
      %p166 = scmp.ne.s32.totalorder %s161, %s163
      %p167 = scmp.eq.s32.totalorder %s28, 0
      %p168 = por %p166, %p167
      %p169 = scmp.ne.s32.totalorder %s161, %s163
      %p170 = scmp.eq.s32.totalorder %s33, 1
      %p171 = por %p169, %p170
      %p172 = scmp.ne.s32.totalorder %s163, %s164
      %p173 = scmp.eq.s32.totalorder %s33, 0
      %p174 = por %p172, %p173
      %p175 = scmp.ne.s32.totalorder %s163, %s164
      %p176 = scmp.eq.s32.totalorder %s34, 1
      %p177 = por %p175, %p176
      %p179 = scmp.ne.s32.totalorder %s164, %s178
      %p180 = scmp.eq.s32.totalorder %s34, 0
      %p181 = por %p179, %p180
      %s183 = sadd.s32 %s182, 1
      %p186 = scmp.eq.s32.totalorder %s28, 1
      %p187 = scmp.ne.s32.totalorder %s182, %s184
      %p188 = scmp.eq.s32.totalorder %s28, 0
      %p189 = por %p187, %p188
      %p190 = scmp.ne.s32.totalorder %s182, %s184
      %p191 = scmp.eq.s32.totalorder %s33, 1
      %p192 = por %p190, %p191
      %p193 = scmp.ne.s32.totalorder %s184, %s185
      %p194 = scmp.eq.s32.totalorder %s33, 0
      %p195 = por %p193, %p194
      %p196 = scmp.ne.s32.totalorder %s184, %s185
      %p197 = scmp.eq.s32.totalorder %s34, 1
      %p198 = por %p196, %p197
      %p200 = scmp.ne.s32.totalorder %s185, %s199
      %p201 = scmp.eq.s32.totalorder %s34, 0
      %p202 = por %p200, %p201
      %s204 = sadd.s32 %s203, 1
      %p207 = scmp.eq.s32.totalorder %s28, 1
      %p208 = scmp.ne.s32.totalorder %s203, %s205
      %p209 = scmp.eq.s32.totalorder %s28, 0
      %p210 = por %p208, %p209
      %p211 = scmp.ne.s32.totalorder %s203, %s205
      %p212 = scmp.eq.s32.totalorder %s33, 1
      %p213 = por %p211, %p212
      %p214 = scmp.ne.s32.totalorder %s205, %s206
      %p215 = scmp.eq.s32.totalorder %s33, 0
      %p216 = por %p214, %p215
      %p217 = scmp.ne.s32.totalorder %s205, %s206
      %p218 = scmp.eq.s32.totalorder %s34, 1
      %p219 = por %p217, %p218
      %p221 = scmp.ne.s32.totalorder %s206, %s220
      %p222 = scmp.eq.s32.totalorder %s34, 0
      %p223 = por %p221, %p222
      %s225 = sadd.s32 %s224, 1
      %p228 = scmp.eq.s32.totalorder %s28, 1
      %p229 = scmp.ne.s32.totalorder %s224, %s226
      %p230 = scmp.eq.s32.totalorder %s28, 0
      %p231 = por %p229, %p230
      %p232 = scmp.ne.s32.totalorder %s224, %s226
      %p233 = scmp.eq.s32.totalorder %s33, 1
      %p234 = por %p232, %p233
      %p235 = scmp.ne.s32.totalorder %s226, %s227
      %p236 = scmp.eq.s32.totalorder %s33, 0
      %p237 = por %p235, %p236
      %p238 = scmp.ne.s32.totalorder %s226, %s227
      %p239 = scmp.eq.s32.totalorder %s34, 1
      %p240 = por %p238, %p239
      %p242 = scmp.ne.s32.totalorder %s227, %s241
      %p243 = scmp.eq.s32.totalorder %s34, 0
      %p244 = por %p242, %p243
      %s246 = sadd.s32 %s245, 1
      %p249 = scmp.eq.s32.totalorder %s28, 1
      %p250 = scmp.ne.s32.totalorder %s245, %s247
      %p251 = scmp.eq.s32.totalorder %s28, 0
      %p252 = por %p250, %p251
      %p253 = scmp.ne.s32.totalorder %s245, %s247
      %p254 = scmp.eq.s32.totalorder %s33, 1
      %p255 = por %p253, %p254
      %p256 = scmp.ne.s32.totalorder %s247, %s248
      %p257 = scmp.eq.s32.totalorder %s33, 0
      %p258 = por %p256, %p257
      %p259 = scmp.ne.s32.totalorder %s247, %s248
      %p260 = scmp.eq.s32.totalorder %s34, 1
      %p261 = por %p259, %p260
      %p263 = scmp.ne.s32.totalorder %s248, %s262
      %p264 = scmp.eq.s32.totalorder %s34, 0
      %p265 = por %p263, %p264
      %s267 = sadd.s32 %s266, 1
      %p270 = scmp.eq.s32.totalorder %s28, 1
      %p271 = scmp.ne.s32.totalorder %s266, %s268
      %p272 = scmp.eq.s32.totalorder %s28, 0
      %p273 = por %p271, %p272
      %p274 = scmp.ne.s32.totalorder %s266, %s268
      %p275 = scmp.eq.s32.totalorder %s33, 1
      %p276 = por %p274, %p275
      %p277 = scmp.ne.s32.totalorder %s268, %s269
      %p278 = scmp.eq.s32.totalorder %s33, 0
      %p279 = por %p277, %p278
      %p280 = scmp.ne.s32.totalorder %s268, %s269
      %p281 = scmp.eq.s32.totalorder %s34, 1
      %p282 = por %p280, %p281
      %p284 = scmp.ne.s32.totalorder %s269, %s283
      %p285 = scmp.eq.s32.totalorder %s34, 0
      %p286 = por %p284, %p285
      %s288 = sadd.s32 %s287, 1
      %p291 = scmp.eq.s32.totalorder %s28, 1
      %p292 = scmp.ne.s32.totalorder %s287, %s289
      %p293 = scmp.eq.s32.totalorder %s28, 0
      %p294 = por %p292, %p293
      %p295 = scmp.ne.s32.totalorder %s287, %s289
      %p296 = scmp.eq.s32.totalorder %s33, 1
      %p297 = por %p295, %p296
      %p298 = scmp.ne.s32.totalorder %s289, %s290
      %p299 = scmp.eq.s32.totalorder %s33, 0
      %p300 = por %p298, %p299
      %p301 = scmp.ne.s32.totalorder %s289, %s290
      %p302 = scmp.eq.s32.totalorder %s34, 1
      %p303 = por %p301, %p302
      %p305 = scmp.ne.s32.totalorder %s290, %s304
      %p306 = scmp.eq.s32.totalorder %s34, 0
      %p307 = por %p305, %p306
      %s308 = ssub.s32 %s28, %s35
      %p309 = scmp.eq.s32.totalorder %s308, 0
      %s311 = sadd.s32 %s310, 1
      %s312 = scalar_select %p309, %s310, %s311
      %p315 = pneg %p309
      %p316 = scmp.eq.s32.totalorder %s28, 1
      %p317 = por %p315, %p316
      %p318 = scmp.ne.s32.totalorder %s310, %s313
      %p319 = scmp.eq.s32.totalorder %s28, 0
      %p320 = por %p318, %p319
      %p321 = scmp.ne.s32.totalorder %s310, %s313
      %p322 = scmp.eq.s32.totalorder %s33, 1
      %p323 = por %p321, %p322
      %p324 = scmp.ne.s32.totalorder %s313, %s314
      %p325 = scmp.eq.s32.totalorder %s33, 0
      %p326 = por %p324, %p325
      %p327 = scmp.ne.s32.totalorder %s313, %s314
      %p328 = scmp.eq.s32.totalorder %s34, 1
      %p329 = por %p327, %p328
      %p331 = scmp.ne.s32.totalorder %s314, %s330
      %p332 = scmp.eq.s32.totalorder %s34, 0
      %p333 = por %p331, %p332
      %p334 = scmp.le.s32.totalorder 1, %s28
      %p335 = scmp.lt.s32.totalorder %s28, 3
      %p336 = pnand %p334, %p335
      %p337 = pneg %p336
      // Predicated region
      $region9: #{tpu_custom_call.1} parent=5 // pred_check
        _
      $region10: #{tpu_custom_call.1} parent=5 // pred_check_branch
        %339 = sbr.rel (%p336) target = $region12
      $region11: #{tpu_custom_call.1} parent=5 // pred_region
        %s340 = ssub.s32 %s28, 1
        // Predicated region
        $region13: #{tpu_custom_call.1} parent=11 // pred_check
          %p341 = pneg %p153
        $region14: #{tpu_custom_call.1} parent=11 // pred_check_branch
          %343 = sbr.rel (%p341) target = $region16
        $region15: #{tpu_custom_call.1} parent=11 // pred_region
          _
        $region16: #{tpu_custom_call.1} parent=11 // pred_fallthru
          _
        // Predicated region
        $region17: #{tpu_custom_call.1} parent=11 // pred_check
          %p344 = pneg %p174
        $region18: #{tpu_custom_call.1} parent=11 // pred_check_branch
          %346 = sbr.rel (%p344) target = $region20
        $region19: #{tpu_custom_call.1} parent=11 // pred_region
          _
        $region20: #{tpu_custom_call.1} parent=11 // pred_fallthru
          _
        // Predicated region
        $region21: #{tpu_custom_call.1} parent=11 // pred_check
          %p347 = pneg %p195
        $region22: #{tpu_custom_call.1} parent=11 // pred_check_branch
          %349 = sbr.rel (%p347) target = $region24
        $region23: #{tpu_custom_call.1} parent=11 // pred_region
          _
        $region24: #{tpu_custom_call.1} parent=11 // pred_fallthru
          _
        // Predicated region
        $region25: #{tpu_custom_call.1} parent=11 // pred_check
          %p350 = pneg %p216
        $region26: #{tpu_custom_call.1} parent=11 // pred_check_branch
          %352 = sbr.rel (%p350) target = $region28
        $region27: #{tpu_custom_call.1} parent=11 // pred_region
          _
        $region28: #{tpu_custom_call.1} parent=11 // pred_fallthru
          _
        // Predicated region
        $region29: #{tpu_custom_call.1} parent=11 // pred_check
          %p353 = pneg %p237
        $region30: #{tpu_custom_call.1} parent=11 // pred_check_branch
          %355 = sbr.rel (%p353) target = $region32
        $region31: #{tpu_custom_call.1} parent=11 // pred_region
          %s357 = ssub.s32 4096, 4096
          %358 = vsyncadd [#allocation6], %s357
          %s359 = sshll.u32 [#allocation7], 4
          %s360 = int_to_ptr.vmem [resolvable:$true] %s359
          %365 = dma.hbm_to_vmem [thread:$0]  %s8, 4096, %s360, [#allocation6], 256, 256, 16
        $region32: #{tpu_custom_call.1} parent=11 // pred_fallthru
          _
        // Predicated region
        $region33: #{tpu_custom_call.1} parent=11 // pred_check
          %p366 = pneg %p258
        $region34: #{tpu_custom_call.1} parent=11 // pred_check_branch
          %368 = sbr.rel (%p366) target = $region36
        $region35: #{tpu_custom_call.1} parent=11 // pred_region
          _
        $region36: #{tpu_custom_call.1} parent=11 // pred_fallthru
          _
        // Predicated region
        $region37: #{tpu_custom_call.1} parent=11 // pred_check
          %p369 = pneg %p279
        $region38: #{tpu_custom_call.1} parent=11 // pred_check_branch
          %371 = sbr.rel (%p369) target = $region40
        $region39: #{tpu_custom_call.1} parent=11 // pred_region
          %s373 = ssub.s32 4096, 4096
          %374 = vsyncadd [#allocation9], %s373
          %s375 = sshll.u32 [#allocation8], 4
          %s376 = int_to_ptr.vmem [resolvable:$true] %s375
          %381 = dma.hbm_to_vmem [thread:$0]  %s10, 4096, %s376, [#allocation9], 64, 64, 4
        $region40: #{tpu_custom_call.1} parent=11 // pred_fallthru
          _
        // Predicated region
        $region41: #{tpu_custom_call.1} parent=11 // pred_check
          %p382 = pneg %p300
        $region42: #{tpu_custom_call.1} parent=11 // pred_check_branch
          %384 = sbr.rel (%p382) target = $region44
        $region43: #{tpu_custom_call.1} parent=11 // pred_region
          _
        $region44: #{tpu_custom_call.1} parent=11 // pred_fallthru
          _
      $region12: #{tpu_custom_call.1} parent=5 // pred_fallthru
        _
      %p385 = scmp.lt.s32.totalorder %s28, 2
      // Predicated region
      $region45: #{tpu_custom_call.1} parent=5 // pred_check
        %p386 = pneg %p385
      $region46: #{tpu_custom_call.1} parent=5 // pred_check_branch
        %388 = sbr.rel (%p386) target = $region48
      $region47: #{tpu_custom_call.1} parent=5 // pred_region
        // Predicated region
        $region49: #{tpu_custom_call.1} parent=47 // pred_check
          %p389 = pneg %p48
        $region50: #{tpu_custom_call.1} parent=47 // pred_check_branch
          %391 = sbr.rel (%p389) target = $region52
        $region51: #{tpu_custom_call.1} parent=47 // pred_region
          %s392 = smul.u32 16, %s28
          %p393 = scmp.lt.s32.totalorder %s392, 31
          %s394 = scalar_select %p393, %s392, 31
          %s395 = smul.addr %s394, 8
          %s396 = scalar_lea.vmem %s0, %s395
          %s397 = smul.u32 16, %s28
        $region52: #{tpu_custom_call.1} parent=47 // pred_fallthru
          _
        // Predicated region
        $region53: #{tpu_custom_call.1} parent=47 // pred_check
          %p398 = pneg %p74
        $region54: #{tpu_custom_call.1} parent=47 // pred_check_branch
          %400 = sbr.rel (%p398) target = $region56
        $region55: #{tpu_custom_call.1} parent=47 // pred_region
          %s401 = sand.u32 %s64, 1
          %s402 = scalar_lea.sflag [#allocation3], %s401
          %s403 = sand.u32 %s64, 1
          %s404 = smul.addr %s403, 128
          %s405 = scalar_lea.vmem [#allocation2], %s404
          %s406 = smul.u32 16, %s28
          %s408 = ssub.s32 2048, 2048
          %409 = vsyncadd %s402, %s408
          %s410 = smul.addr %s406, 128
          %s411 = scalar_lea.hbm %s1, %s410
          %s412 = sshll.u32 %s405, 4
          %s413 = int_to_ptr.vmem [resolvable:$true] %s412
          %418 = dma.hbm_to_vmem [thread:$0]  %s411, 2048, %s413, %s402, 128, 128, 8
        $region56: #{tpu_custom_call.1} parent=47 // pred_fallthru
          _
        // Predicated region
        $region57: #{tpu_custom_call.1} parent=47 // pred_check
          %p419 = pneg %p100
        $region58: #{tpu_custom_call.1} parent=47 // pred_check_branch
          %421 = sbr.rel (%p419) target = $region60
        $region59: #{tpu_custom_call.1} parent=47 // pred_region
          %s422 = sand.u32 %s28, 1
          %s423 = scalar_lea.sflag [#allocation6], %s422
          %s424 = sand.u32 %s90, 1
          %s425 = smul.addr %s424, 128
          %s426 = scalar_lea.vmem [#allocation5], %s425
          %s427 = smul.u32 16, %s28
          %s429 = ssub.s32 2048, 2048
          %430 = vsyncadd %s423, %s429
          %s431 = smul.addr %s427, 128
          %s432 = scalar_lea.hbm %s2, %s431
          %s433 = sshll.u32 %s426, 4
          %s434 = int_to_ptr.vmem [resolvable:$true] %s433
          %439 = dma.hbm_to_vmem [thread:$0]  %s432, 2048, %s434, %s423, 128, 128, 8
        $region60: #{tpu_custom_call.1} parent=47 // pred_fallthru
          _
        // Predicated region
        $region61: #{tpu_custom_call.1} parent=47 // pred_check
          %p440 = pneg %p126
        $region62: #{tpu_custom_call.1} parent=47 // pred_check_branch
          %442 = sbr.rel (%p440) target = $region64
        $region63: #{tpu_custom_call.1} parent=47 // pred_region
          %s443 = smul.u32 16, %s28
          %p444 = scmp.lt.s32.totalorder %s443, 31
          %s445 = scalar_select %p444, %s443, 31
          %s446 = smul.addr %s445, 8
          %s447 = scalar_lea.vmem %s3, %s446
          %s448 = smul.u32 16, %s28
        $region64: #{tpu_custom_call.1} parent=47 // pred_fallthru
          _
      $region48: #{tpu_custom_call.1} parent=5 // pred_fallthru
        _
      %p449 = scmp.le.s32.totalorder 1, %s28
      %p450 = scmp.lt.s32.totalorder %s28, 3
      %p451 = pnand %p449, %p450
      %p452 = pneg %p451
      // Predicated region
      $region65: #{tpu_custom_call.1} parent=5 // pred_check
        _
      $region66: #{tpu_custom_call.1} parent=5 // pred_check_branch
        %454 = sbr.rel (%p451) target = $region68
      $region67: #{tpu_custom_call.1} parent=5 // pred_region
        %s455 = ssub.s32 %s28, 1
        %s456 = sand.u32 %s67, 1
        %s457 = scalar_lea.sflag [#allocation3], %s456
        %s458 = sand.u32 %s67, 1
        %s459 = smul.addr %s458, 128
        %s460 = scalar_lea.vmem [#allocation2], %s459
        // Predicated region
        $region69: #{tpu_custom_call.1} parent=67 // pred_check
          %p461 = pneg %p80
        $region70: #{tpu_custom_call.1} parent=67 // pred_check_branch
          %463 = sbr.rel (%p461) target = $region72
        $region71: #{tpu_custom_call.1} parent=67 // pred_region
          %464 = dma.done %s457, 2048
        $region72: #{tpu_custom_call.1} parent=67 // pred_fallthru
          _
        %s465 = sand.u32 %s33, 1
        %s466 = scalar_lea.sflag [#allocation6], %s465
        %s467 = sand.u32 %s93, 1
        %s468 = smul.addr %s467, 128
        %s469 = scalar_lea.vmem [#allocation5], %s468
        // Predicated region
        $region73: #{tpu_custom_call.1} parent=67 // pred_check
          %p470 = pneg %p106
        $region74: #{tpu_custom_call.1} parent=67 // pred_check_branch
          %472 = sbr.rel (%p470) target = $region76
        $region75: #{tpu_custom_call.1} parent=67 // pred_region
          %473 = dma.done %s466, 2048
        $region76: #{tpu_custom_call.1} parent=67 // pred_fallthru
          _
        // Predicated region
        $region77: #{tpu_custom_call.1} parent=67 // pred_check
          %p474 = pneg %p237
        $region78: #{tpu_custom_call.1} parent=67 // pred_check_branch
          %476 = sbr.rel (%p474) target = $region80
        $region79: #{tpu_custom_call.1} parent=67 // pred_region
          %477 = dma.done [#allocation6], 4096
        $region80: #{tpu_custom_call.1} parent=67 // pred_fallthru
          _
        // Predicated region
        $region81: #{tpu_custom_call.1} parent=67 // pred_check
          %p478 = pneg %p279
        $region82: #{tpu_custom_call.1} parent=67 // pred_check_branch
          %480 = sbr.rel (%p478) target = $region84
        $region83: #{tpu_custom_call.1} parent=67 // pred_region
          %481 = dma.done [#allocation9], 4096
        $region84: #{tpu_custom_call.1} parent=67 // pred_fallthru
          _
        %s482 = smul.u32 16, %s33
        %p483 = scmp.lt.s32.totalorder %s482, 31
        %s484 = scalar_select %p483, %s482, 31
        %s485 = smul.addr %s484, 8
        %s486 = scalar_lea.vmem %s0, %s485
        %p487 = pneg %p54
        %p488 = pneg %p51
        %s489 = sand.u32 %s67, 1
        %s490 = scalar_lea.sflag [#allocation3], %s489
        %s491 = sand.u32 %s67, 1
        %s492 = smul.addr %s491, 128
        %s493 = scalar_lea.vmem [#allocation2], %s492
        %p494 = pneg %p80
        %p495 = pneg %p77
        %s496 = sand.u32 %s33, 1
        %s497 = scalar_lea.sflag [#allocation6], %s496
        %s498 = sand.u32 %s93, 1
        %s499 = smul.addr %s498, 128
        %s500 = scalar_lea.vmem [#allocation5], %s499
        %p501 = pneg %p106
        %p502 = pneg %p103
        %s503 = smul.u32 16, %s33
        %p504 = scmp.lt.s32.totalorder %s503, 31
        %s505 = scalar_select %p504, %s503, 31
        %s506 = smul.addr %s505, 8
        %s507 = scalar_lea.vmem %s3, %s506
        %p508 = pneg %p132
        %p509 = pneg %p129
        %p510 = pneg %p153
        %p511 = pneg %p150
        %p512 = pneg %p174
        %p513 = pneg %p171
        %p514 = pneg %p195
        %p515 = pneg %p192
        %p516 = pneg %p216
        %p517 = pneg %p213
        %p518 = pneg %p237
        %p519 = pneg %p234
        %p520 = pneg %p258
        %p521 = pneg %p255
        %p522 = pneg %p279
        %p523 = pneg %p276
        %p524 = pneg %p300
        %p525 = pneg %p297
        %p526 = pneg %p326
        %p527 = pneg %p323
        %s528 = sand.u32 %s313, 1
        %s529 = scalar_lea.sflag [#allocation4], %s528
        %s530 = sand.u32 %s313, 1
        %s531 = smul.addr %s530, 128
        %s532 = scalar_lea.vmem [#allocation10], %s531
        %s533 = smul.u32 16, %s33
        %p534 = scmp.lt.s32.totalorder %s533, 31
        %s535 = scalar_select %p534, %s533, 31
        %s536 = smul.addr %s535, 8
        %s537 = scalar_lea.vmem %s0, %s536
        %s538 = smul.u32 16, %s33
        %s539 = smul.u32 16, %s33
        %s540 = smul.u32 16, %s33
        %s541 = smul.u32 16, %s33
        %p542 = scmp.lt.s32.totalorder %s541, 31
        %s543 = scalar_select %p542, %s541, 31
        %s544 = smul.addr %s543, 8
        %s545 = scalar_lea.vmem %s3, %s544
        %s546 = smul.u32 16, %s33
        %s547 = smul.u32 16, %s33
        %v549 = vld [vmem:[%s460] sm:$0xff]
        %v550 = vld [vmem:[%s460 + $0x8] sm:$0xff]
        %v551 = vld [vmem:[%s460 + $0x10] sm:$0xff]
        %v552 = vld [vmem:[%s460 + $0x18] sm:$0xff]
        %v553 = vld [vmem:[%s460 + $0x20] sm:$0xff]
        %v554 = vld [vmem:[%s460 + $0x28] sm:$0xff]
        %v555 = vld [vmem:[%s460 + $0x30] sm:$0xff]
        %v556 = vld [vmem:[%s460 + $0x38] sm:$0xff]
        %v557 = vld [vmem:[%s460 + $0x40] sm:$0xff]
        %v558 = vld [vmem:[%s460 + $0x48] sm:$0xff]
        %v559 = vld [vmem:[%s460 + $0x50] sm:$0xff]
        %v560 = vld [vmem:[%s460 + $0x58] sm:$0xff]
        %v561 = vld [vmem:[%s460 + $0x60] sm:$0xff]
        %v562 = vld [vmem:[%s460 + $0x68] sm:$0xff]
        %v563 = vld [vmem:[%s460 + $0x70] sm:$0xff]
        %v564 = vld [vmem:[%s460 + $0x78] sm:$0xff]
        %v565 = vmul.f32 %v549, 0.088388346
        %v566 = vmul.f32 %v550, 0.088388346
        %v567 = vmul.f32 %v551, 0.088388346
        %v568 = vmul.f32 %v552, 0.088388346
        %v569 = vmul.f32 %v553, 0.088388346
        %v570 = vmul.f32 %v554, 0.088388346
        %v571 = vmul.f32 %v555, 0.088388346
        %v572 = vmul.f32 %v556, 0.088388346
        %v573 = vmul.f32 %v557, 0.088388346
        %v574 = vmul.f32 %v558, 0.088388346
        %v575 = vmul.f32 %v559, 0.088388346
        %v576 = vmul.f32 %v560, 0.088388346
        %v577 = vmul.f32 %v561, 0.088388346
        %v578 = vmul.f32 %v562, 0.088388346
        %v579 = vmul.f32 %v563, 0.088388346
        %v580 = vmul.f32 %v564, 0.088388346
        %v581 = vpack.c.bf16 %v565, %v565
        %v582 = vpack.c.bf16 %v566, %v566
        %v583 = vpack.c.bf16 %v567, %v567
        %v584 = vpack.c.bf16 %v568, %v568
        %v585 = vpack.c.bf16 %v569, %v569
        %v586 = vpack.c.bf16 %v570, %v570
        %v587 = vpack.c.bf16 %v571, %v571
        %v588 = vpack.c.bf16 %v572, %v572
        %v589 = vpack.c.bf16 %v573, %v573
        %v590 = vpack.c.bf16 %v574, %v574
        %v591 = vpack.c.bf16 %v575, %v575
        %v592 = vpack.c.bf16 %v576, %v576
        %v593 = vpack.c.bf16 %v577, %v577
        %v594 = vpack.c.bf16 %v578, %v578
        %v595 = vpack.c.bf16 %v579, %v579
        %v596 = vpack.c.bf16 %v580, %v580
        %v597 = vld [vmem:[%s469] sm:$0xff]
        %v598 = vld [vmem:[%s469 + $0x8] sm:$0xff]
        %v599 = vld [vmem:[%s469 + $0x10] sm:$0xff]
        %v600 = vld [vmem:[%s469 + $0x18] sm:$0xff]
        %v601 = vld [vmem:[%s469 + $0x20] sm:$0xff]
        %v602 = vld [vmem:[%s469 + $0x28] sm:$0xff]
        %v603 = vld [vmem:[%s469 + $0x30] sm:$0xff]
        %v604 = vld [vmem:[%s469 + $0x38] sm:$0xff]
        %v605 = vld [vmem:[%s469 + $0x40] sm:$0xff]
        %v606 = vld [vmem:[%s469 + $0x48] sm:$0xff]
        %v607 = vld [vmem:[%s469 + $0x50] sm:$0xff]
        %v608 = vld [vmem:[%s469 + $0x58] sm:$0xff]
        %v609 = vld [vmem:[%s469 + $0x60] sm:$0xff]
        %v610 = vld [vmem:[%s469 + $0x68] sm:$0xff]
        %v611 = vld [vmem:[%s469 + $0x70] sm:$0xff]
        %v612 = vld [vmem:[%s469 + $0x78] sm:$0xff]
        %v613 = vpack.c.bf16 %v597, %v597
        %v614 = vpack.c.bf16 %v598, %v598
        %v615 = vpack.c.bf16 %v599, %v599
        %v616 = vpack.c.bf16 %v600, %v600
        %v617 = vpack.c.bf16 %v601, %v601
        %v618 = vpack.c.bf16 %v602, %v602
        %v619 = vpack.c.bf16 %v603, %v603
        %v620 = vpack.c.bf16 %v604, %v604
        %v621 = vpack.c.bf16 %v605, %v605
        %v622 = vpack.c.bf16 %v606, %v606
        %v623 = vpack.c.bf16 %v607, %v607
        %v624 = vpack.c.bf16 %v608, %v608
        %v625 = vpack.c.bf16 %v609, %v609
        %v626 = vpack.c.bf16 %v610, %v610
        %v627 = vpack.c.bf16 %v611, %v611
        %v628 = vpack.c.bf16 %v612, %v612
        %v629 = vld [vmem:[%s537] sm:$0xff]
        %v630 = vld [vmem:[%s537 + $0x8] sm:$0xff]
        %v631 = vld [vmem:[%s537 + $0x10] sm:$0xff]
        %v632 = vld [vmem:[%s537 + $0x18] sm:$0xff]
        %v633 = vld [vmem:[%s537 + $0x20] sm:$0xff]
        %v634 = vld [vmem:[%s537 + $0x28] sm:$0xff]
        %v635 = vld [vmem:[%s537 + $0x30] sm:$0xff]
        %v636 = vld [vmem:[%s537 + $0x38] sm:$0xff]
        %v637 = vld [vmem:[%s537 + $0x40] sm:$0xff]
        %v638 = vld [vmem:[%s537 + $0x48] sm:$0xff]
        %v639 = vld [vmem:[%s537 + $0x50] sm:$0xff]
        %v640 = vld [vmem:[%s537 + $0x58] sm:$0xff]
        %v641 = vld [vmem:[%s537 + $0x60] sm:$0xff]
        %v642 = vld [vmem:[%s537 + $0x68] sm:$0xff]
        %v643 = vld [vmem:[%s537 + $0x70] sm:$0xff]
        %v644 = vld [vmem:[%s537 + $0x78] sm:$0xff]
        %v645 = vpack.c.bf16 %v629, %v629
        %v646 = vpack.c.bf16 %v630, %v630
        %v647 = vpack.c.bf16 %v631, %v631
        %v648 = vpack.c.bf16 %v632, %v632
        %v649 = vpack.c.bf16 %v633, %v633
        %v650 = vpack.c.bf16 %v634, %v634
        %v651 = vpack.c.bf16 %v635, %v635
        %v652 = vpack.c.bf16 %v636, %v636
        %v653 = vpack.c.bf16 %v637, %v637
        %v654 = vpack.c.bf16 %v638, %v638
        %v655 = vpack.c.bf16 %v639, %v639
        %v656 = vpack.c.bf16 %v640, %v640
        %v657 = vpack.c.bf16 %v641, %v641
        %v658 = vpack.c.bf16 %v642, %v642
        %v659 = vpack.c.bf16 %v643, %v643
        %v660 = vpack.c.bf16 %v644, %v644
        %v661 = vld [vmem:[%s545] sm:$0xff]
        %v662 = vld [vmem:[%s545 + $0x8] sm:$0xff]
        %v663 = vld [vmem:[%s545 + $0x10] sm:$0xff]
        %v664 = vld [vmem:[%s545 + $0x18] sm:$0xff]
        %v665 = vld [vmem:[%s545 + $0x20] sm:$0xff]
        %v666 = vld [vmem:[%s545 + $0x28] sm:$0xff]
        %v667 = vld [vmem:[%s545 + $0x30] sm:$0xff]
        %v668 = vld [vmem:[%s545 + $0x38] sm:$0xff]
        %v669 = vld [vmem:[%s545 + $0x40] sm:$0xff]
        %v670 = vld [vmem:[%s545 + $0x48] sm:$0xff]
        %v671 = vld [vmem:[%s545 + $0x50] sm:$0xff]
        %v672 = vld [vmem:[%s545 + $0x58] sm:$0xff]
        %v673 = vld [vmem:[%s545 + $0x60] sm:$0xff]
        %v674 = vld [vmem:[%s545 + $0x68] sm:$0xff]
        %v675 = vld [vmem:[%s545 + $0x70] sm:$0xff]
        %v676 = vld [vmem:[%s545 + $0x78] sm:$0xff]
        %vm677 = vcmp.eq.s32.totalorder %v661, 0
        %vm678 = vcmp.eq.s32.totalorder %v662, 0
        %vm679 = vcmp.eq.s32.totalorder %v663, 0
        %vm680 = vcmp.eq.s32.totalorder %v664, 0
        %vm681 = vcmp.eq.s32.totalorder %v665, 0
        %vm682 = vcmp.eq.s32.totalorder %v666, 0
        %vm683 = vcmp.eq.s32.totalorder %v667, 0
        %vm684 = vcmp.eq.s32.totalorder %v668, 0
        %vm685 = vcmp.eq.s32.totalorder %v669, 0
        %vm686 = vcmp.eq.s32.totalorder %v670, 0
        %vm687 = vcmp.eq.s32.totalorder %v671, 0
        %vm688 = vcmp.eq.s32.totalorder %v672, 0
        %vm689 = vcmp.eq.s32.totalorder %v673, 0
        %vm690 = vcmp.eq.s32.totalorder %v674, 0
        %vm691 = vcmp.eq.s32.totalorder %v675, 0
        %vm692 = vcmp.eq.s32.totalorder %v676, 0
        %v693 = vsel %vm677, -1e+20, 0.0
        %v694 = vsel %vm678, -1e+20, 0.0
        %v695 = vsel %vm679, -1e+20, 0.0
        %v696 = vsel %vm680, -1e+20, 0.0
        %v697 = vsel %vm681, -1e+20, 0.0
        %v698 = vsel %vm682, -1e+20, 0.0
        %v699 = vsel %vm683, -1e+20, 0.0
        %v700 = vsel %vm684, -1e+20, 0.0
        %v701 = vsel %vm685, -1e+20, 0.0
        %v702 = vsel %vm686, -1e+20, 0.0
        %v703 = vsel %vm687, -1e+20, 0.0
        %v704 = vsel %vm688, -1e+20, 0.0
        %v705 = vsel %vm689, -1e+20, 0.0
        %v706 = vsel %vm690, -1e+20, 0.0
        %v707 = vsel %vm691, -1e+20, 0.0
        %v708 = vsel %vm692, -1e+20, 0.0
        %vm709 = vcmask 261120
        %v711 = vsel %vm709, %v581, 0
        %v714 = vsel %vm709, %v613, 0
        %716 = vmatprep.subr.bf16.mxu0 0
        %717 = vmatpush1.bf16.xpose.msra.mxu0 %v714
        %718 = vmatprep.subr.bf16.mxu0 0
        %719 = vmatpush1.bf16.xpose.msra.mxu0 0
        %720 = vmatprep.subr.bf16.mxu0 0
        %721 = vmatpush1.bf16.xpose.msra.mxu0 0
        %722 = vmatprep.subr.bf16.mxu0 0
        %723 = vmatpush1.bf16.xpose.msra.mxu0 0
        %724 = vmatprep.subr.bf16.mxu0 0
        %725 = vmatpush1.bf16.xpose.msra.mxu0 0
        %726 = vmatprep.subr.bf16.mxu0 0
        %727 = vmatpush1.bf16.xpose.msra.mxu0 0
        %728 = vmatprep.subr.bf16.mxu0 0
        %729 = vmatpush1.bf16.xpose.msra.mxu0 0
        %730 = vmatprep.subr.bf16.mxu0 0
        %731 = vmatpush1.bf16.xpose.msra.mxu0 0
        %732 = vmatprep.subr.bf16.mxu0 0
        %733 = vmatpush1.bf16.xpose.msra.mxu0 0
        %734 = vmatprep.subr.bf16.mxu0 0
        %735 = vmatpush1.bf16.xpose.msra.mxu0 0
        %736 = vmatprep.subr.bf16.mxu0 0
        %737 = vmatpush1.bf16.xpose.msra.mxu0 0
        %738 = vmatprep.subr.bf16.mxu0 0
        %739 = vmatpush1.bf16.xpose.msra.mxu0 0
        %740 = vmatprep.subr.bf16.mxu0 0
        %741 = vmatpush1.bf16.xpose.msra.mxu0 0
        %742 = vmatprep.subr.bf16.mxu0 0
        %743 = vmatpush1.bf16.xpose.msra.mxu0 0
        %744 = vmatprep.subr.bf16.mxu0 0
        %745 = vmatpush1.bf16.xpose.msra.mxu0 0
        %746 = vmatprep.subr.bf16.mxu0 0
        %747 = vmatpush1.bf16.xpose.msra.mxu0 0
        %748 = vmatprep.mubr.bf16.mxu0 0
        %749 = vmatmul.mubr.bf16.gmra.mrb[0].mxu0 %v711
        %v750 = vpop.f32.mrb[0].mxu0
        %v751 = vadd.f32 %v693, %v750
        %v752 = vpop.f32.mrb[0].mxu0
        %v753 = vpop.f32.mrb[0].mxu0
        %v754 = vpop.f32.mrb[0].mxu0
        %755 = vdwg.mxu0
        %v757 = vsel %vm709, %v582, 0
        %v760 = vsel %vm709, %v614, 0
        %762 = vmatprep.subr.bf16.mxu0 0
        %763 = vmatpush1.bf16.xpose.msra.mxu0 %v760
        %764 = vmatprep.subr.bf16.mxu0 0
        %765 = vmatpush1.bf16.xpose.msra.mxu0 0
        %766 = vmatprep.subr.bf16.mxu0 0
        %767 = vmatpush1.bf16.xpose.msra.mxu0 0
        %768 = vmatprep.subr.bf16.mxu0 0
        %769 = vmatpush1.bf16.xpose.msra.mxu0 0
        %770 = vmatprep.subr.bf16.mxu0 0
        %771 = vmatpush1.bf16.xpose.msra.mxu0 0
        %772 = vmatprep.subr.bf16.mxu0 0
        %773 = vmatpush1.bf16.xpose.msra.mxu0 0
        %774 = vmatprep.subr.bf16.mxu0 0
        %775 = vmatpush1.bf16.xpose.msra.mxu0 0
        %776 = vmatprep.subr.bf16.mxu0 0
        %777 = vmatpush1.bf16.xpose.msra.mxu0 0
        %778 = vmatprep.subr.bf16.mxu0 0
        %779 = vmatpush1.bf16.xpose.msra.mxu0 0
        %780 = vmatprep.subr.bf16.mxu0 0
        %781 = vmatpush1.bf16.xpose.msra.mxu0 0
        %782 = vmatprep.subr.bf16.mxu0 0
        %783 = vmatpush1.bf16.xpose.msra.mxu0 0
        %784 = vmatprep.subr.bf16.mxu0 0
        %785 = vmatpush1.bf16.xpose.msra.mxu0 0
        %786 = vmatprep.subr.bf16.mxu0 0
        %787 = vmatpush1.bf16.xpose.msra.mxu0 0
        %788 = vmatprep.subr.bf16.mxu0 0
        %789 = vmatpush1.bf16.xpose.msra.mxu0 0
        %790 = vmatprep.subr.bf16.mxu0 0
        %791 = vmatpush1.bf16.xpose.msra.mxu0 0
        %792 = vmatprep.subr.bf16.mxu0 0
        %793 = vmatpush1.bf16.xpose.msra.mxu0 0
        %794 = vmatprep.mubr.bf16.mxu0 0
        %795 = vmatmul.mubr.bf16.gmra.mrb[0].mxu0 %v757
        %v796 = vpop.f32.mrb[0].mxu0
        %v797 = vadd.f32 %v694, %v796
        %v798 = vpop.f32.mrb[0].mxu0
        %v799 = vpop.f32.mrb[0].mxu0
        %v800 = vpop.f32.mrb[0].mxu0
        %801 = vdwg.mxu0
        %v803 = vsel %vm709, %v583, 0
        %v806 = vsel %vm709, %v615, 0
        %808 = vmatprep.subr.bf16.mxu0 0
        %809 = vmatpush1.bf16.xpose.msra.mxu0 %v806
        %810 = vmatprep.subr.bf16.mxu0 0
        %811 = vmatpush1.bf16.xpose.msra.mxu0 0
        %812 = vmatprep.subr.bf16.mxu0 0
        %813 = vmatpush1.bf16.xpose.msra.mxu0 0
        %814 = vmatprep.subr.bf16.mxu0 0
        %815 = vmatpush1.bf16.xpose.msra.mxu0 0
        %816 = vmatprep.subr.bf16.mxu0 0
        %817 = vmatpush1.bf16.xpose.msra.mxu0 0
        %818 = vmatprep.subr.bf16.mxu0 0
        %819 = vmatpush1.bf16.xpose.msra.mxu0 0
        %820 = vmatprep.subr.bf16.mxu0 0
        %821 = vmatpush1.bf16.xpose.msra.mxu0 0
        %822 = vmatprep.subr.bf16.mxu0 0
        %823 = vmatpush1.bf16.xpose.msra.mxu0 0
        %824 = vmatprep.subr.bf16.mxu0 0
        %825 = vmatpush1.bf16.xpose.msra.mxu0 0
        %826 = vmatprep.subr.bf16.mxu0 0
        %827 = vmatpush1.bf16.xpose.msra.mxu0 0
        %828 = vmatprep.subr.bf16.mxu0 0
        %829 = vmatpush1.bf16.xpose.msra.mxu0 0
        %830 = vmatprep.subr.bf16.mxu0 0
        %831 = vmatpush1.bf16.xpose.msra.mxu0 0
        %832 = vmatprep.subr.bf16.mxu0 0
        %833 = vmatpush1.bf16.xpose.msra.mxu0 0
        %834 = vmatprep.subr.bf16.mxu0 0
        %835 = vmatpush1.bf16.xpose.msra.mxu0 0
        %836 = vmatprep.subr.bf16.mxu0 0
        %837 = vmatpush1.bf16.xpose.msra.mxu0 0
        %838 = vmatprep.subr.bf16.mxu0 0
        %839 = vmatpush1.bf16.xpose.msra.mxu0 0
        %840 = vmatprep.mubr.bf16.mxu0 0
        %841 = vmatmul.mubr.bf16.gmra.mrb[0].mxu0 %v803
        %v842 = vpop.f32.mrb[0].mxu0
        %v843 = vadd.f32 %v695, %v842
        %v844 = vpop.f32.mrb[0].mxu0
        %v845 = vpop.f32.mrb[0].mxu0
        %v846 = vpop.f32.mrb[0].mxu0
        %847 = vdwg.mxu0
        %v849 = vsel %vm709, %v584, 0
        %v852 = vsel %vm709, %v616, 0
        %854 = vmatprep.subr.bf16.mxu0 0
        %855 = vmatpush1.bf16.xpose.msra.mxu0 %v852
        %856 = vmatprep.subr.bf16.mxu0 0
        %857 = vmatpush1.bf16.xpose.msra.mxu0 0
        %858 = vmatprep.subr.bf16.mxu0 0
        %859 = vmatpush1.bf16.xpose.msra.mxu0 0
        %860 = vmatprep.subr.bf16.mxu0 0
        %861 = vmatpush1.bf16.xpose.msra.mxu0 0
        %862 = vmatprep.subr.bf16.mxu0 0
        %863 = vmatpush1.bf16.xpose.msra.mxu0 0
        %864 = vmatprep.subr.bf16.mxu0 0
        %865 = vmatpush1.bf16.xpose.msra.mxu0 0
        %866 = vmatprep.subr.bf16.mxu0 0
        %867 = vmatpush1.bf16.xpose.msra.mxu0 0
        %868 = vmatprep.subr.bf16.mxu0 0
        %869 = vmatpush1.bf16.xpose.msra.mxu0 0
        %870 = vmatprep.subr.bf16.mxu0 0
        %871 = vmatpush1.bf16.xpose.msra.mxu0 0
        %872 = vmatprep.subr.bf16.mxu0 0
        %873 = vmatpush1.bf16.xpose.msra.mxu0 0
        %874 = vmatprep.subr.bf16.mxu0 0
        %875 = vmatpush1.bf16.xpose.msra.mxu0 0
        %876 = vmatprep.subr.bf16.mxu0 0
        %877 = vmatpush1.bf16.xpose.msra.mxu0 0
        %878 = vmatprep.subr.bf16.mxu0 0
        %879 = vmatpush1.bf16.xpose.msra.mxu0 0
        %880 = vmatprep.subr.bf16.mxu0 0
        %881 = vmatpush1.bf16.xpose.msra.mxu0 0
        %882 = vmatprep.subr.bf16.mxu0 0
        %883 = vmatpush1.bf16.xpose.msra.mxu0 0
        %884 = vmatprep.subr.bf16.mxu0 0
        %885 = vmatpush1.bf16.xpose.msra.mxu0 0
        %886 = vmatprep.mubr.bf16.mxu0 0
        %887 = vmatmul.mubr.bf16.gmra.mrb[0].mxu0 %v849
        %v888 = vpop.f32.mrb[0].mxu0
        %v889 = vadd.f32 %v696, %v888
        %v890 = vpop.f32.mrb[0].mxu0
        %v891 = vpop.f32.mrb[0].mxu0
        %v892 = vpop.f32.mrb[0].mxu0
        %893 = vdwg.mxu0
        %v895 = vsel %vm709, %v585, 0
        %v898 = vsel %vm709, %v617, 0
        %900 = vmatprep.subr.bf16.mxu0 0
        %901 = vmatpush1.bf16.xpose.msra.mxu0 %v898
        %902 = vmatprep.subr.bf16.mxu0 0
        %903 = vmatpush1.bf16.xpose.msra.mxu0 0
        %904 = vmatprep.subr.bf16.mxu0 0
        %905 = vmatpush1.bf16.xpose.msra.mxu0 0
        %906 = vmatprep.subr.bf16.mxu0 0
        %907 = vmatpush1.bf16.xpose.msra.mxu0 0
        %908 = vmatprep.subr.bf16.mxu0 0
        %909 = vmatpush1.bf16.xpose.msra.mxu0 0
        %910 = vmatprep.subr.bf16.mxu0 0
        %911 = vmatpush1.bf16.xpose.msra.mxu0 0
        %912 = vmatprep.subr.bf16.mxu0 0
        %913 = vmatpush1.bf16.xpose.msra.mxu0 0
        %914 = vmatprep.subr.bf16.mxu0 0
        %915 = vmatpush1.bf16.xpose.msra.mxu0 0
        %916 = vmatprep.subr.bf16.mxu0 0
        %917 = vmatpush1.bf16.xpose.msra.mxu0 0
        %918 = vmatprep.subr.bf16.mxu0 0
        %919 = vmatpush1.bf16.xpose.msra.mxu0 0
        %920 = vmatprep.subr.bf16.mxu0 0
        %921 = vmatpush1.bf16.xpose.msra.mxu0 0
        %922 = vmatprep.subr.bf16.mxu0 0
        %923 = vmatpush1.bf16.xpose.msra.mxu0 0
        %924 = vmatprep.subr.bf16.mxu0 0
        %925 = vmatpush1.bf16.xpose.msra.mxu0 0
        %926 = vmatprep.subr.bf16.mxu0 0
        %927 = vmatpush1.bf16.xpose.msra.mxu0 0
        %928 = vmatprep.subr.bf16.mxu0 0
        %929 = vmatpush1.bf16.xpose.msra.mxu0 0
        %930 = vmatprep.subr.bf16.mxu0 0
        %931 = vmatpush1.bf16.xpose.msra.mxu0 0
        %932 = vmatprep.mubr.bf16.mxu0 0
        %933 = vmatmul.mubr.bf16.gmra.mrb[0].mxu0 %v895
        %v934 = vpop.f32.mrb[0].mxu0
        %v935 = vadd.f32 %v697, %v934
        %v936 = vpop.f32.mrb[0].mxu0
        %v937 = vpop.f32.mrb[0].mxu0
        %v938 = vpop.f32.mrb[0].mxu0
        %939 = vdwg.mxu0
        %v941 = vsel %vm709, %v586, 0
        %v944 = vsel %vm709, %v618, 0
        %946 = vmatprep.subr.bf16.mxu0 0
        %947 = vmatpush1.bf16.xpose.msra.mxu0 %v944
        %948 = vmatprep.subr.bf16.mxu0 0
        %949 = vmatpush1.bf16.xpose.msra.mxu0 0
        %950 = vmatprep.subr.bf16.mxu0 0
        %951 = vmatpush1.bf16.xpose.msra.mxu0 0
        %952 = vmatprep.subr.bf16.mxu0 0
        %953 = vmatpush1.bf16.xpose.msra.mxu0 0
        %954 = vmatprep.subr.bf16.mxu0 0
        %955 = vmatpush1.bf16.xpose.msra.mxu0 0
        %956 = vmatprep.subr.bf16.mxu0 0
        %957 = vmatpush1.bf16.xpose.msra.mxu0 0
        %958 = vmatprep.subr.bf16.mxu0 0
        %959 = vmatpush1.bf16.xpose.msra.mxu0 0
        %960 = vmatprep.subr.bf16.mxu0 0
        %961 = vmatpush1.bf16.xpose.msra.mxu0 0
        %962 = vmatprep.subr.bf16.mxu0 0
        %963 = vmatpush1.bf16.xpose.msra.mxu0 0
        %964 = vmatprep.subr.bf16.mxu0 0
        %965 = vmatpush1.bf16.xpose.msra.mxu0 0
        %966 = vmatprep.subr.bf16.mxu0 0
        %967 = vmatpush1.bf16.xpose.msra.mxu0 0
        %968 = vmatprep.subr.bf16.mxu0 0
        %969 = vmatpush1.bf16.xpose.msra.mxu0 0
        %970 = vmatprep.subr.bf16.mxu0 0
        %971 = vmatpush1.bf16.xpose.msra.mxu0 0
        %972 = vmatprep.subr.bf16.mxu0 0
        %973 = vmatpush1.bf16.xpose.msra.mxu0 0
        %974 = vmatprep.subr.bf16.mxu0 0
        %975 = vmatpush1.bf16.xpose.msra.mxu0 0
        %976 = vmatprep.subr.bf16.mxu0 0
        %977 = vmatpush1.bf16.xpose.msra.mxu0 0
        %978 = vmatprep.mubr.bf16.mxu0 0
        %979 = vmatmul.mubr.bf16.gmra.mrb[0].mxu0 %v941
        %v980 = vpop.f32.mrb[0].mxu0
        %v981 = vadd.f32 %v698, %v980
        %v982 = vpop.f32.mrb[0].mxu0
        %v983 = vpop.f32.mrb[0].mxu0
        %v984 = vpop.f32.mrb[0].mxu0
        %985 = vdwg.mxu0
        %v987 = vsel %vm709, %v587, 0
        %v990 = vsel %vm709, %v619, 0
        %992 = vmatprep.subr.bf16.mxu0 0
        %993 = vmatpush1.bf16.xpose.msra.mxu0 %v990
        %994 = vmatprep.subr.bf16.mxu0 0
        %995 = vmatpush1.bf16.xpose.msra.mxu0 0
        %996 = vmatprep.subr.bf16.mxu0 0
        %997 = vmatpush1.bf16.xpose.msra.mxu0 0
        %998 = vmatprep.subr.bf16.mxu0 0
        %999 = vmatpush1.bf16.xpose.msra.mxu0 0
        %1000 = vmatprep.subr.bf16.mxu0 0
        %1001 = vmatpush1.bf16.xpose.msra.mxu0 0
        %1002 = vmatprep.subr.bf16.mxu0 0
        %1003 = vmatpush1.bf16.xpose.msra.mxu0 0
        %1004 = vmatprep.subr.bf16.mxu0 0
        %1005 = vmatpush1.bf16.xpose.msra.mxu0 0
        %1006 = vmatprep.subr.bf16.mxu0 0
        %1007 = vmatpush1.bf16.xpose.msra.mxu0 0
        %1008 = vmatprep.subr.bf16.mxu0 0
        %1009 = vmatpush1.bf16.xpose.msra.mxu0 0
        %1010 = vmatprep.subr.bf16.mxu0 0
        %1011 = vmatpush1.bf16.xpose.msra.mxu0 0
        %1012 = vmatprep.subr.bf16.mxu0 0
        %1013 = vmatpush1.bf16.xpose.msra.mxu0 0
        %1014 = vmatprep.subr.bf16.mxu0 0
        %1015 = vmatpush1.bf16.xpose.msra.mxu0 0
        %1016 = vmatprep.subr.bf16.mxu0 0
        %1017 = vmatpush1.bf16.xpose.msra.mxu0 0
        %1018 = vmatprep.subr.bf16.mxu0 0
        %1019 = vmatpush1.bf16.xpose.msra.mxu0 0
        %1020 = vmatprep.subr.bf16.mxu0 0
        %1021 = vmatpush1.bf16.xpose.msra.mxu0 0
        %1022 = vmatprep.subr.bf16.mxu0 0
        %1023 = vmatpush1.bf16.xpose.msra.mxu0 0
        %1024 = vmatprep.mubr.bf16.mxu0 0
        %1025 = vmatmul.mubr.bf16.gmra.mrb[0].mxu0 %v987
        %v1026 = vpop.f32.mrb[0].mxu0
        %v1027 = vadd.f32 %v699, %v1026
        %v1028 = vpop.f32.mrb[0].mxu0
        %v1029 = vpop.f32.mrb[0].mxu0
        %v1030 = vpop.f32.mrb[0].mxu0
        %1031 = vdwg.mxu0
        %v1033 = vsel %vm709, %v588, 0
        %v1036 = vsel %vm709, %v620, 0
        %1038 = vmatprep.subr.bf16.mxu0 0
        %1039 = vmatpush1.bf16.xpose.msra.mxu0 %v1036
        %1040 = vmatprep.subr.bf16.mxu0 0
        %1041 = vmatpush1.bf16.xpose.msra.mxu0 0
        %1042 = vmatprep.subr.bf16.mxu0 0
        %1043 = vmatpush1.bf16.xpose.msra.mxu0 0
        %1044 = vmatprep.subr.bf16.mxu0 0
        %1045 = vmatpush1.bf16.xpose.msra.mxu0 0
        %1046 = vmatprep.subr.bf16.mxu0 0
        %1047 = vmatpush1.bf16.xpose.msra.mxu0 0
        %1048 = vmatprep.subr.bf16.mxu0 0
        %1049 = vmatpush1.bf16.xpose.msra.mxu0 0
        %1050 = vmatprep.subr.bf16.mxu0 0
        %1051 = vmatpush1.bf16.xpose.msra.mxu0 0
        %1052 = vmatprep.subr.bf16.mxu0 0
        %1053 = vmatpush1.bf16.xpose.msra.mxu0 0
        %1054 = vmatprep.subr.bf16.mxu0 0
        %1055 = vmatpush1.bf16.xpose.msra.mxu0 0
        %1056 = vmatprep.subr.bf16.mxu0 0
        %1057 = vmatpush1.bf16.xpose.msra.mxu0 0
        %1058 = vmatprep.subr.bf16.mxu0 0
        %1059 = vmatpush1.bf16.xpose.msra.mxu0 0
        %1060 = vmatprep.subr.bf16.mxu0 0
        %1061 = vmatpush1.bf16.xpose.msra.mxu0 0
        %1062 = vmatprep.subr.bf16.mxu0 0
        %1063 = vmatpush1.bf16.xpose.msra.mxu0 0
        %1064 = vmatprep.subr.bf16.mxu0 0
        %1065 = vmatpush1.bf16.xpose.msra.mxu0 0
        %1066 = vmatprep.subr.bf16.mxu0 0
        %1067 = vmatpush1.bf16.xpose.msra.mxu0 0
        %1068 = vmatprep.subr.bf16.mxu0 0
        %1069 = vmatpush1.bf16.xpose.msra.mxu0 0
        %1070 = vmatprep.mubr.bf16.mxu0 0
        %1071 = vmatmul.mubr.bf16.gmra.mrb[0].mxu0 %v1033
        %v1072 = vpop.f32.mrb[0].mxu0
        %v1073 = vadd.f32 %v700, %v1072
        %v1074 = vpop.f32.mrb[0].mxu0
        %v1075 = vpop.f32.mrb[0].mxu0
        %v1076 = vpop.f32.mrb[0].mxu0
        %1077 = vdwg.mxu0
        %v1079 = vsel %vm709, %v589, 0
        %v1082 = vsel %vm709, %v621, 0
        %1084 = vmatprep.subr.bf16.mxu0 0
        %1085 = vmatpush1.bf16.xpose.msra.mxu0 %v1082
        %1086 = vmatprep.subr.bf16.mxu0 0
        %1087 = vmatpush1.bf16.xpose.msra.mxu0 0
        %1088 = vmatprep.subr.bf16.mxu0 0
        %1089 = vmatpush1.bf16.xpose.msra.mxu0 0
        %1090 = vmatprep.subr.bf16.mxu0 0
        %1091 = vmatpush1.bf16.xpose.msra.mxu0 0
        %1092 = vmatprep.subr.bf16.mxu0 0
        %1093 = vmatpush1.bf16.xpose.msra.mxu0 0
        %1094 = vmatprep.subr.bf16.mxu0 0
        %1095 = vmatpush1.bf16.xpose.msra.mxu0 0
        %1096 = vmatprep.subr.bf16.mxu0 0
        %1097 = vmatpush1.bf16.xpose.msra.mxu0 0
        %1098 = vmatprep.subr.bf16.mxu0 0
        %1099 = vmatpush1.bf16.xpose.msra.mxu0 0
        %1100 = vmatprep.subr.bf16.mxu0 0
        %1101 = vmatpush1.bf16.xpose.msra.mxu0 0
        %1102 = vmatprep.subr.bf16.mxu0 0
        %1103 = vmatpush1.bf16.xpose.msra.mxu0 0
        %1104 = vmatprep.subr.bf16.mxu0 0
        %1105 = vmatpush1.bf16.xpose.msra.mxu0 0
        %1106 = vmatprep.subr.bf16.mxu0 0
        %1107 = vmatpush1.bf16.xpose.msra.mxu0 0
        %1108 = vmatprep.subr.bf16.mxu0 0
        %1109 = vmatpush1.bf16.xpose.msra.mxu0 0
        %1110 = vmatprep.subr.bf16.mxu0 0
        %1111 = vmatpush1.bf16.xpose.msra.mxu0 0
        %1112 = vmatprep.subr.bf16.mxu0 0
        %1113 = vmatpush1.bf16.xpose.msra.mxu0 0
        %1114 = vmatprep.subr.bf16.mxu0 0
        %1115 = vmatpush1.bf16.xpose.msra.mxu0 0
        %1116 = vmatprep.mubr.bf16.mxu0 0
        %1117 = vmatmul.mubr.bf16.gmra.mrb[0].mxu0 %v1079
        %v1118 = vpop.f32.mrb[0].mxu0
        %v1119 = vadd.f32 %v701, %v1118
        %v1120 = vpop.f32.mrb[0].mxu0
        %v1121 = vpop.f32.mrb[0].mxu0
        %v1122 = vpop.f32.mrb[0].mxu0
        %1123 = vdwg.mxu0
        %v1125 = vsel %vm709, %v590, 0
        %v1128 = vsel %vm709, %v622, 0
        %1130 = vmatprep.subr.bf16.mxu0 0
        %1131 = vmatpush1.bf16.xpose.msra.mxu0 %v1128
        %1132 = vmatprep.subr.bf16.mxu0 0
        %1133 = vmatpush1.bf16.xpose.msra.mxu0 0
        %1134 = vmatprep.subr.bf16.mxu0 0
        %1135 = vmatpush1.bf16.xpose.msra.mxu0 0
        %1136 = vmatprep.subr.bf16.mxu0 0
        %1137 = vmatpush1.bf16.xpose.msra.mxu0 0
        %1138 = vmatprep.subr.bf16.mxu0 0
        %1139 = vmatpush1.bf16.xpose.msra.mxu0 0
        %1140 = vmatprep.subr.bf16.mxu0 0
        %1141 = vmatpush1.bf16.xpose.msra.mxu0 0
        %1142 = vmatprep.subr.bf16.mxu0 0
        %1143 = vmatpush1.bf16.xpose.msra.mxu0 0
        %1144 = vmatprep.subr.bf16.mxu0 0
        %1145 = vmatpush1.bf16.xpose.msra.mxu0 0
        %1146 = vmatprep.subr.bf16.mxu0 0
        %1147 = vmatpush1.bf16.xpose.msra.mxu0 0
        %1148 = vmatprep.subr.bf16.mxu0 0
        %1149 = vmatpush1.bf16.xpose.msra.mxu0 0
        %1150 = vmatprep.subr.bf16.mxu0 0
        %1151 = vmatpush1.bf16.xpose.msra.mxu0 0
        %1152 = vmatprep.subr.bf16.mxu0 0
        %1153 = vmatpush1.bf16.xpose.msra.mxu0 0
        %1154 = vmatprep.subr.bf16.mxu0 0
        %1155 = vmatpush1.bf16.xpose.msra.mxu0 0
        %1156 = vmatprep.subr.bf16.mxu0 0
        %1157 = vmatpush1.bf16.xpose.msra.mxu0 0
        %1158 = vmatprep.subr.bf16.mxu0 0
        %1159 = vmatpush1.bf16.xpose.msra.mxu0 0
        %1160 = vmatprep.subr.bf16.mxu0 0
        %1161 = vmatpush1.bf16.xpose.msra.mxu0 0
        %1162 = vmatprep.mubr.bf16.mxu0 0
        %1163 = vmatmul.mubr.bf16.gmra.mrb[0].mxu0 %v1125
        %v1164 = vpop.f32.mrb[0].mxu0
        %v1165 = vadd.f32 %v702, %v1164
        %v1166 = vpop.f32.mrb[0].mxu0
        %v1167 = vpop.f32.mrb[0].mxu0
        %v1168 = vpop.f32.mrb[0].mxu0
        %1169 = vdwg.mxu0
        %v1171 = vsel %vm709, %v591, 0
        %v1174 = vsel %vm709, %v623, 0
        %1176 = vmatprep.subr.bf16.mxu0 0
        %1177 = vmatpush1.bf16.xpose.msra.mxu0 %v1174
        %1178 = vmatprep.subr.bf16.mxu0 0
        %1179 = vmatpush1.bf16.xpose.msra.mxu0 0
        %1180 = vmatprep.subr.bf16.mxu0 0
        %1181 = vmatpush1.bf16.xpose.msra.mxu0 0
        %1182 = vmatprep.subr.bf16.mxu0 0
        %1183 = vmatpush1.bf16.xpose.msra.mxu0 0
        %1184 = vmatprep.subr.bf16.mxu0 0
        %1185 = vmatpush1.bf16.xpose.msra.mxu0 0
        %1186 = vmatprep.subr.bf16.mxu0 0
        %1187 = vmatpush1.bf16.xpose.msra.mxu0 0
        %1188 = vmatprep.subr.bf16.mxu0 0
        %1189 = vmatpush1.bf16.xpose.msra.mxu0 0
        %1190 = vmatprep.subr.bf16.mxu0 0
        %1191 = vmatpush1.bf16.xpose.msra.mxu0 0
        %1192 = vmatprep.subr.bf16.mxu0 0
        %1193 = vmatpush1.bf16.xpose.msra.mxu0 0
        %1194 = vmatprep.subr.bf16.mxu0 0
        %1195 = vmatpush1.bf16.xpose.msra.mxu0 0
        %1196 = vmatprep.subr.bf16.mxu0 0
        %1197 = vmatpush1.bf16.xpose.msra.mxu0 0
        %1198 = vmatprep.subr.bf16.mxu0 0
        %1199 = vmatpush1.bf16.xpose.msra.mxu0 0
        %1200 = vmatprep.subr.bf16.mxu0 0
        %1201 = vmatpush1.bf16.xpose.msra.mxu0 0
        %1202 = vmatprep.subr.bf16.mxu0 0
        %1203 = vmatpush1.bf16.xpose.msra.mxu0 0
        %1204 = vmatprep.subr.bf16.mxu0 0
        %1205 = vmatpush1.bf16.xpose.msra.mxu0 0
        %1206 = vmatprep.subr.bf16.mxu0 0
        %1207 = vmatpush1.bf16.xpose.msra.mxu0 0
        %1208 = vmatprep.mubr.bf16.mxu0 0
        %1209 = vmatmul.mubr.bf16.gmra.mrb[0].mxu0 %v1171
        %v1210 = vpop.f32.mrb[0].mxu0
        %v1211 = vadd.f32 %v703, %v1210
        %v1212 = vpop.f32.mrb[0].mxu0
        %v1213 = vpop.f32.mrb[0].mxu0
        %v1214 = vpop.f32.mrb[0].mxu0
        %1215 = vdwg.mxu0
        %v1217 = vsel %vm709, %v592, 0
        %v1220 = vsel %vm709, %v624, 0
        %1222 = vmatprep.subr.bf16.mxu0 0
        %1223 = vmatpush1.bf16.xpose.msra.mxu0 %v1220
        %1224 = vmatprep.subr.bf16.mxu0 0
        %1225 = vmatpush1.bf16.xpose.msra.mxu0 0
        %1226 = vmatprep.subr.bf16.mxu0 0
        %1227 = vmatpush1.bf16.xpose.msra.mxu0 0
        %1228 = vmatprep.subr.bf16.mxu0 0
        %1229 = vmatpush1.bf16.xpose.msra.mxu0 0
        %1230 = vmatprep.subr.bf16.mxu0 0
        %1231 = vmatpush1.bf16.xpose.msra.mxu0 0
        %1232 = vmatprep.subr.bf16.mxu0 0
        %1233 = vmatpush1.bf16.xpose.msra.mxu0 0
        %1234 = vmatprep.subr.bf16.mxu0 0
        %1235 = vmatpush1.bf16.xpose.msra.mxu0 0
        %1236 = vmatprep.subr.bf16.mxu0 0
        %1237 = vmatpush1.bf16.xpose.msra.mxu0 0
        %1238 = vmatprep.subr.bf16.mxu0 0
        %1239 = vmatpush1.bf16.xpose.msra.mxu0 0
        %1240 = vmatprep.subr.bf16.mxu0 0
        %1241 = vmatpush1.bf16.xpose.msra.mxu0 0
        %1242 = vmatprep.subr.bf16.mxu0 0
        %1243 = vmatpush1.bf16.xpose.msra.mxu0 0
        %1244 = vmatprep.subr.bf16.mxu0 0
        %1245 = vmatpush1.bf16.xpose.msra.mxu0 0
        %1246 = vmatprep.subr.bf16.mxu0 0
        %1247 = vmatpush1.bf16.xpose.msra.mxu0 0
        %1248 = vmatprep.subr.bf16.mxu0 0
        %1249 = vmatpush1.bf16.xpose.msra.mxu0 0
        %1250 = vmatprep.subr.bf16.mxu0 0
        %1251 = vmatpush1.bf16.xpose.msra.mxu0 0
        %1252 = vmatprep.subr.bf16.mxu0 0
        %1253 = vmatpush1.bf16.xpose.msra.mxu0 0
        %1254 = vmatprep.mubr.bf16.mxu0 0
        %1255 = vmatmul.mubr.bf16.gmra.mrb[0].mxu0 %v1217
        %v1256 = vpop.f32.mrb[0].mxu0
        %v1257 = vadd.f32 %v704, %v1256
        %v1258 = vpop.f32.mrb[0].mxu0
        %v1259 = vpop.f32.mrb[0].mxu0
        %v1260 = vpop.f32.mrb[0].mxu0
        %1261 = vdwg.mxu0
        %v1263 = vsel %vm709, %v593, 0
        %v1266 = vsel %vm709, %v625, 0
        %1268 = vmatprep.subr.bf16.mxu0 0
        %1269 = vmatpush1.bf16.xpose.msra.mxu0 %v1266
        %1270 = vmatprep.subr.bf16.mxu0 0
        %1271 = vmatpush1.bf16.xpose.msra.mxu0 0
        %1272 = vmatprep.subr.bf16.mxu0 0
        %1273 = vmatpush1.bf16.xpose.msra.mxu0 0
        %1274 = vmatprep.subr.bf16.mxu0 0
        %1275 = vmatpush1.bf16.xpose.msra.mxu0 0
        %1276 = vmatprep.subr.bf16.mxu0 0
        %1277 = vmatpush1.bf16.xpose.msra.mxu0 0
        %1278 = vmatprep.subr.bf16.mxu0 0
        %1279 = vmatpush1.bf16.xpose.msra.mxu0 0
        %1280 = vmatprep.subr.bf16.mxu0 0
        %1281 = vmatpush1.bf16.xpose.msra.mxu0 0
        %1282 = vmatprep.subr.bf16.mxu0 0
        %1283 = vmatpush1.bf16.xpose.msra.mxu0 0
        %1284 = vmatprep.subr.bf16.mxu0 0
        %1285 = vmatpush1.bf16.xpose.msra.mxu0 0
        %1286 = vmatprep.subr.bf16.mxu0 0
        %1287 = vmatpush1.bf16.xpose.msra.mxu0 0
        %1288 = vmatprep.subr.bf16.mxu0 0
        %1289 = vmatpush1.bf16.xpose.msra.mxu0 0
        %1290 = vmatprep.subr.bf16.mxu0 0
        %1291 = vmatpush1.bf16.xpose.msra.mxu0 0
        %1292 = vmatprep.subr.bf16.mxu0 0
        %1293 = vmatpush1.bf16.xpose.msra.mxu0 0
        %1294 = vmatprep.subr.bf16.mxu0 0
        %1295 = vmatpush1.bf16.xpose.msra.mxu0 0
        %1296 = vmatprep.subr.bf16.mxu0 0
        %1297 = vmatpush1.bf16.xpose.msra.mxu0 0
        %1298 = vmatprep.subr.bf16.mxu0 0
        %1299 = vmatpush1.bf16.xpose.msra.mxu0 0
        %1300 = vmatprep.mubr.bf16.mxu0 0
        %1301 = vmatmul.mubr.bf16.gmra.mrb[0].mxu0 %v1263
        %v1302 = vpop.f32.mrb[0].mxu0
        %v1303 = vadd.f32 %v705, %v1302
        %v1304 = vpop.f32.mrb[0].mxu0
        %v1305 = vpop.f32.mrb[0].mxu0
        %v1306 = vpop.f32.mrb[0].mxu0
        %1307 = vdwg.mxu0
        %v1309 = vsel %vm709, %v594, 0
        %v1312 = vsel %vm709, %v626, 0
        %1314 = vmatprep.subr.bf16.mxu0 0
        %1315 = vmatpush1.bf16.xpose.msra.mxu0 %v1312
        %1316 = vmatprep.subr.bf16.mxu0 0
        %1317 = vmatpush1.bf16.xpose.msra.mxu0 0
        %1318 = vmatprep.subr.bf16.mxu0 0
        %1319 = vmatpush1.bf16.xpose.msra.mxu0 0
        %1320 = vmatprep.subr.bf16.mxu0 0
        %1321 = vmatpush1.bf16.xpose.msra.mxu0 0
        %1322 = vmatprep.subr.bf16.mxu0 0
        %1323 = vmatpush1.bf16.xpose.msra.mxu0 0
        %1324 = vmatprep.subr.bf16.mxu0 0
        %1325 = vmatpush1.bf16.xpose.msra.mxu0 0
        %1326 = vmatprep.subr.bf16.mxu0 0
        %1327 = vmatpush1.bf16.xpose.msra.mxu0 0
        %1328 = vmatprep.subr.bf16.mxu0 0
        %1329 = vmatpush1.bf16.xpose.msra.mxu0 0
        %1330 = vmatprep.subr.bf16.mxu0 0
        %1331 = vmatpush1.bf16.xpose.msra.mxu0 0
        %1332 = vmatprep.subr.bf16.mxu0 0
        %1333 = vmatpush1.bf16.xpose.msra.mxu0 0
        %1334 = vmatprep.subr.bf16.mxu0 0
        %1335 = vmatpush1.bf16.xpose.msra.mxu0 0
        %1336 = vmatprep.subr.bf16.mxu0 0
        %1337 = vmatpush1.bf16.xpose.msra.mxu0 0
        %1338 = vmatprep.subr.bf16.mxu0 0
        %1339 = vmatpush1.bf16.xpose.msra.mxu0 0
        %1340 = vmatprep.subr.bf16.mxu0 0
        %1341 = vmatpush1.bf16.xpose.msra.mxu0 0
        %1342 = vmatprep.subr.bf16.mxu0 0
        %1343 = vmatpush1.bf16.xpose.msra.mxu0 0
        %1344 = vmatprep.subr.bf16.mxu0 0
        %1345 = vmatpush1.bf16.xpose.msra.mxu0 0
        %1346 = vmatprep.mubr.bf16.mxu0 0
        %1347 = vmatmul.mubr.bf16.gmra.mrb[0].mxu0 %v1309
        %v1348 = vpop.f32.mrb[0].mxu0
        %v1349 = vadd.f32 %v706, %v1348
        %v1350 = vpop.f32.mrb[0].mxu0
        %v1351 = vpop.f32.mrb[0].mxu0
        %v1352 = vpop.f32.mrb[0].mxu0
        %1353 = vdwg.mxu0
        %v1355 = vsel %vm709, %v595, 0
        %v1358 = vsel %vm709, %v627, 0
        %1360 = vmatprep.subr.bf16.mxu0 0
        %1361 = vmatpush1.bf16.xpose.msra.mxu0 %v1358
        %1362 = vmatprep.subr.bf16.mxu0 0
        %1363 = vmatpush1.bf16.xpose.msra.mxu0 0
        %1364 = vmatprep.subr.bf16.mxu0 0
        %1365 = vmatpush1.bf16.xpose.msra.mxu0 0
        %1366 = vmatprep.subr.bf16.mxu0 0
        %1367 = vmatpush1.bf16.xpose.msra.mxu0 0
        %1368 = vmatprep.subr.bf16.mxu0 0
        %1369 = vmatpush1.bf16.xpose.msra.mxu0 0
        %1370 = vmatprep.subr.bf16.mxu0 0
        %1371 = vmatpush1.bf16.xpose.msra.mxu0 0
        %1372 = vmatprep.subr.bf16.mxu0 0
        %1373 = vmatpush1.bf16.xpose.msra.mxu0 0
        %1374 = vmatprep.subr.bf16.mxu0 0
        %1375 = vmatpush1.bf16.xpose.msra.mxu0 0
        %1376 = vmatprep.subr.bf16.mxu0 0
        %1377 = vmatpush1.bf16.xpose.msra.mxu0 0
        %1378 = vmatprep.subr.bf16.mxu0 0
        %1379 = vmatpush1.bf16.xpose.msra.mxu0 0
        %1380 = vmatprep.subr.bf16.mxu0 0
        %1381 = vmatpush1.bf16.xpose.msra.mxu0 0
        %1382 = vmatprep.subr.bf16.mxu0 0
        %1383 = vmatpush1.bf16.xpose.msra.mxu0 0
        %1384 = vmatprep.subr.bf16.mxu0 0
        %1385 = vmatpush1.bf16.xpose.msra.mxu0 0
        %1386 = vmatprep.subr.bf16.mxu0 0
        %1387 = vmatpush1.bf16.xpose.msra.mxu0 0
        %1388 = vmatprep.subr.bf16.mxu0 0
        %1389 = vmatpush1.bf16.xpose.msra.mxu0 0
        %1390 = vmatprep.subr.bf16.mxu0 0
        %1391 = vmatpush1.bf16.xpose.msra.mxu0 0
        %1392 = vmatprep.mubr.bf16.mxu0 0
        %1393 = vmatmul.mubr.bf16.gmra.mrb[0].mxu0 %v1355
        %v1394 = vpop.f32.mrb[0].mxu0
        %v1395 = vadd.f32 %v707, %v1394
        %v1396 = vpop.f32.mrb[0].mxu0
        %v1397 = vpop.f32.mrb[0].mxu0
        %v1398 = vpop.f32.mrb[0].mxu0
        %1399 = vdwg.mxu0
        %v1401 = vsel %vm709, %v596, 0
        %v1404 = vsel %vm709, %v628, 0
        %1406 = vmatprep.subr.bf16.mxu0 0
        %1407 = vmatpush1.bf16.xpose.msra.mxu0 %v1404
        %1408 = vmatprep.subr.bf16.mxu0 0
        %1409 = vmatpush1.bf16.xpose.msra.mxu0 0
        %1410 = vmatprep.subr.bf16.mxu0 0
        %1411 = vmatpush1.bf16.xpose.msra.mxu0 0
        %1412 = vmatprep.subr.bf16.mxu0 0
        %1413 = vmatpush1.bf16.xpose.msra.mxu0 0
        %1414 = vmatprep.subr.bf16.mxu0 0
        %1415 = vmatpush1.bf16.xpose.msra.mxu0 0
        %1416 = vmatprep.subr.bf16.mxu0 0
        %1417 = vmatpush1.bf16.xpose.msra.mxu0 0
        %1418 = vmatprep.subr.bf16.mxu0 0
        %1419 = vmatpush1.bf16.xpose.msra.mxu0 0
        %1420 = vmatprep.subr.bf16.mxu0 0
        %1421 = vmatpush1.bf16.xpose.msra.mxu0 0
        %1422 = vmatprep.subr.bf16.mxu0 0
        %1423 = vmatpush1.bf16.xpose.msra.mxu0 0
        %1424 = vmatprep.subr.bf16.mxu0 0
        %1425 = vmatpush1.bf16.xpose.msra.mxu0 0
        %1426 = vmatprep.subr.bf16.mxu0 0
        %1427 = vmatpush1.bf16.xpose.msra.mxu0 0
        %1428 = vmatprep.subr.bf16.mxu0 0
        %1429 = vmatpush1.bf16.xpose.msra.mxu0 0
        %1430 = vmatprep.subr.bf16.mxu0 0
        %1431 = vmatpush1.bf16.xpose.msra.mxu0 0
        %1432 = vmatprep.subr.bf16.mxu0 0
        %1433 = vmatpush1.bf16.xpose.msra.mxu0 0
        %1434 = vmatprep.subr.bf16.mxu0 0
        %1435 = vmatpush1.bf16.xpose.msra.mxu0 0
        %1436 = vmatprep.subr.bf16.mxu0 0
        %1437 = vmatpush1.bf16.xpose.msra.mxu0 0
        %1438 = vmatprep.mubr.bf16.mxu0 0
        %1439 = vmatmul.mubr.bf16.gmra.mrb[0].mxu0 %v1401
        %v1440 = vpop.f32.mrb[0].mxu0
        %v1441 = vadd.f32 %v708, %v1440
        %v1442 = vpop.f32.mrb[0].mxu0
        %v1443 = vpop.f32.mrb[0].mxu0
        %v1444 = vpop.f32.mrb[0].mxu0
        %1445 = vdwg.mxu0
        %vm1446 = vcmask 64512
        %v1447 = vsel %vm1446, %v751, -inf
        %1448 = vmax.xlane.f32.xlu0 %v1447
        %v1449 = vpop.xlane.xlu0 %1448
        %v1450 = vsel %vm1446, %v797, -inf
        %1451 = vmax.xlane.f32.xlu0 %v1450
        %v1452 = vpop.xlane.xlu0 %1451
        %v1453 = vsel %vm1446, %v843, -inf
        %1454 = vmax.xlane.f32.xlu0 %v1453
        %v1455 = vpop.xlane.xlu0 %1454
        %v1456 = vsel %vm1446, %v889, -inf
        %1457 = vmax.xlane.f32.xlu0 %v1456
        %v1458 = vpop.xlane.xlu0 %1457
        %v1459 = vsel %vm1446, %v935, -inf
        %1460 = vmax.xlane.f32.xlu0 %v1459
        %v1461 = vpop.xlane.xlu0 %1460
        %v1462 = vsel %vm1446, %v981, -inf
        %1463 = vmax.xlane.f32.xlu0 %v1462
        %v1464 = vpop.xlane.xlu0 %1463
        %v1465 = vsel %vm1446, %v1027, -inf
        %1466 = vmax.xlane.f32.xlu0 %v1465
        %v1467 = vpop.xlane.xlu0 %1466
        %v1468 = vsel %vm1446, %v1073, -inf
        %1469 = vmax.xlane.f32.xlu0 %v1468
        %v1470 = vpop.xlane.xlu0 %1469
        %v1471 = vsel %vm1446, %v1119, -inf
        %1472 = vmax.xlane.f32.xlu0 %v1471
        %v1473 = vpop.xlane.xlu0 %1472
        %v1474 = vsel %vm1446, %v1165, -inf
        %1475 = vmax.xlane.f32.xlu0 %v1474
        %v1476 = vpop.xlane.xlu0 %1475
        %v1477 = vsel %vm1446, %v1211, -inf
        %1478 = vmax.xlane.f32.xlu0 %v1477
        %v1479 = vpop.xlane.xlu0 %1478
        %v1480 = vsel %vm1446, %v1257, -inf
        %1481 = vmax.xlane.f32.xlu0 %v1480
        %v1482 = vpop.xlane.xlu0 %1481
        %v1483 = vsel %vm1446, %v1303, -inf
        %1484 = vmax.xlane.f32.xlu0 %v1483
        %v1485 = vpop.xlane.xlu0 %1484
        %v1486 = vsel %vm1446, %v1349, -inf
        %1487 = vmax.xlane.f32.xlu0 %v1486
        %v1488 = vpop.xlane.xlu0 %1487
        %v1489 = vsel %vm1446, %v1395, -inf
        %1490 = vmax.xlane.f32.xlu0 %v1489
        %v1491 = vpop.xlane.xlu0 %1490
        %v1492 = vsel %vm1446, %v1441, -inf
        %1493 = vmax.xlane.f32.xlu0 %v1492
        %v1494 = vpop.xlane.xlu0 %1493
        %v1495 = vsub.f32 %v751, %v1449
        %v1496 = vsub.f32 %v797, %v1452
        %v1497 = vsub.f32 %v843, %v1455
        %v1498 = vsub.f32 %v889, %v1458
        %v1499 = vsub.f32 %v935, %v1461
        %v1500 = vsub.f32 %v981, %v1464
        %v1501 = vsub.f32 %v1027, %v1467
        %v1502 = vsub.f32 %v1073, %v1470
        %v1503 = vsub.f32 %v1119, %v1473
        %v1504 = vsub.f32 %v1165, %v1476
        %v1505 = vsub.f32 %v1211, %v1479
        %v1506 = vsub.f32 %v1257, %v1482
        %v1507 = vsub.f32 %v1303, %v1485
        %v1508 = vsub.f32 %v1349, %v1488
        %v1509 = vsub.f32 %v1395, %v1491
        %v1510 = vsub.f32 %v1441, %v1494
        %v1511 = vmul.f32 %v1495, 1.442695
        %v1512 = vpow.pop %v1511
        %v1513 = vmul.f32 %v1496, 1.442695
        %v1514 = vpow.pop %v1513
        %v1515 = vmul.f32 %v1497, 1.442695
        %v1516 = vpow.pop %v1515
        %v1517 = vmul.f32 %v1498, 1.442695
        %v1518 = vpow.pop %v1517
        %v1519 = vmul.f32 %v1499, 1.442695
        %v1520 = vpow.pop %v1519
        %v1521 = vmul.f32 %v1500, 1.442695
        %v1522 = vpow.pop %v1521
        %v1523 = vmul.f32 %v1501, 1.442695
        %v1524 = vpow.pop %v1523
        %v1525 = vmul.f32 %v1502, 1.442695
        %v1526 = vpow.pop %v1525
        %v1527 = vmul.f32 %v1503, 1.442695
        %v1528 = vpow.pop %v1527
        %v1529 = vmul.f32 %v1504, 1.442695
        %v1530 = vpow.pop %v1529
        %v1531 = vmul.f32 %v1505, 1.442695
        %v1532 = vpow.pop %v1531
        %v1533 = vmul.f32 %v1506, 1.442695
        %v1534 = vpow.pop %v1533
        %v1535 = vmul.f32 %v1507, 1.442695
        %v1536 = vpow.pop %v1535
        %v1537 = vmul.f32 %v1508, 1.442695
        %v1538 = vpow.pop %v1537
        %v1539 = vmul.f32 %v1509, 1.442695
        %v1540 = vpow.pop %v1539
        %v1541 = vmul.f32 %v1510, 1.442695
        %v1542 = vpow.pop %v1541
        %v1543 = vsel %vm1446, %v1512, 0.0
        %1544 = vadd.xlane.f32.xlu0 %v1543
        %v1545 = vpop.xlane.xlu0 %1544
        %v1546 = vsel %vm1446, %v1514, 0.0
        %1547 = vadd.xlane.f32.xlu0 %v1546
        %v1548 = vpop.xlane.xlu0 %1547
        %v1549 = vsel %vm1446, %v1516, 0.0
        %1550 = vadd.xlane.f32.xlu0 %v1549
        %v1551 = vpop.xlane.xlu0 %1550
        %v1552 = vsel %vm1446, %v1518, 0.0
        %1553 = vadd.xlane.f32.xlu0 %v1552
        %v1554 = vpop.xlane.xlu0 %1553
        %v1555 = vsel %vm1446, %v1520, 0.0
        %1556 = vadd.xlane.f32.xlu0 %v1555
        %v1557 = vpop.xlane.xlu0 %1556
        %v1558 = vsel %vm1446, %v1522, 0.0
        %1559 = vadd.xlane.f32.xlu0 %v1558
        %v1560 = vpop.xlane.xlu0 %1559
        %v1561 = vsel %vm1446, %v1524, 0.0
        %1562 = vadd.xlane.f32.xlu0 %v1561
        %v1563 = vpop.xlane.xlu0 %1562
        %v1564 = vsel %vm1446, %v1526, 0.0
        %1565 = vadd.xlane.f32.xlu0 %v1564
        %v1566 = vpop.xlane.xlu0 %1565
        %v1567 = vsel %vm1446, %v1528, 0.0
        %1568 = vadd.xlane.f32.xlu0 %v1567
        %v1569 = vpop.xlane.xlu0 %1568
        %v1570 = vsel %vm1446, %v1530, 0.0
        %1571 = vadd.xlane.f32.xlu0 %v1570
        %v1572 = vpop.xlane.xlu0 %1571
        %v1573 = vsel %vm1446, %v1532, 0.0
        %1574 = vadd.xlane.f32.xlu0 %v1573
        %v1575 = vpop.xlane.xlu0 %1574
        %v1576 = vsel %vm1446, %v1534, 0.0
        %1577 = vadd.xlane.f32.xlu0 %v1576
        %v1578 = vpop.xlane.xlu0 %1577
        %v1579 = vsel %vm1446, %v1536, 0.0
        %1580 = vadd.xlane.f32.xlu0 %v1579
        %v1581 = vpop.xlane.xlu0 %1580
        %v1582 = vsel %vm1446, %v1538, 0.0
        %1583 = vadd.xlane.f32.xlu0 %v1582
        %v1584 = vpop.xlane.xlu0 %1583
        %v1585 = vsel %vm1446, %v1540, 0.0
        %1586 = vadd.xlane.f32.xlu0 %v1585
        %v1587 = vpop.xlane.xlu0 %1586
        %v1588 = vsel %vm1446, %v1542, 0.0
        %1589 = vadd.xlane.f32.xlu0 %v1588
        %v1590 = vpop.xlane.xlu0 %1589
        %v1591 = vrcp.pop %v1545
        %v1592 = vrcp.pop %v1548
        %v1593 = vrcp.pop %v1551
        %v1594 = vrcp.pop %v1554
        %v1595 = vrcp.pop %v1557
        %v1596 = vrcp.pop %v1560
        %v1597 = vrcp.pop %v1563
        %v1598 = vrcp.pop %v1566
        %v1599 = vrcp.pop %v1569
        %v1600 = vrcp.pop %v1572
        %v1601 = vrcp.pop %v1575
        %v1602 = vrcp.pop %v1578
        %v1603 = vrcp.pop %v1581
        %v1604 = vrcp.pop %v1584
        %v1605 = vrcp.pop %v1587
        %v1606 = vrcp.pop %v1590
        %v1607 = vmul.f32 %v1512, %v1591
        %v1608 = vmul.f32 %v1514, %v1592
        %v1609 = vmul.f32 %v1516, %v1593
        %v1610 = vmul.f32 %v1518, %v1594
        %v1611 = vmul.f32 %v1520, %v1595
        %v1612 = vmul.f32 %v1522, %v1596
        %v1613 = vmul.f32 %v1524, %v1597
        %v1614 = vmul.f32 %v1526, %v1598
        %v1615 = vmul.f32 %v1528, %v1599
        %v1616 = vmul.f32 %v1530, %v1600
        %v1617 = vmul.f32 %v1532, %v1601
        %v1618 = vmul.f32 %v1534, %v1602
        %v1619 = vmul.f32 %v1536, %v1603
        %v1620 = vmul.f32 %v1538, %v1604
        %v1621 = vmul.f32 %v1540, %v1605
        %v1622 = vmul.f32 %v1542, %v1606
        %v1623 = vpack.c.bf16 %v1607, %v1607
        %v1624 = vpack.c.bf16 %v1608, %v1608
        %v1625 = vpack.c.bf16 %v1609, %v1609
        %v1626 = vpack.c.bf16 %v1610, %v1610
        %v1627 = vpack.c.bf16 %v1611, %v1611
        %v1628 = vpack.c.bf16 %v1612, %v1612
        %v1629 = vpack.c.bf16 %v1613, %v1613
        %v1630 = vpack.c.bf16 %v1614, %v1614
        %v1631 = vpack.c.bf16 %v1615, %v1615
        %v1632 = vpack.c.bf16 %v1616, %v1616
        %v1633 = vpack.c.bf16 %v1617, %v1617
        %v1634 = vpack.c.bf16 %v1618, %v1618
        %v1635 = vpack.c.bf16 %v1619, %v1619
        %v1636 = vpack.c.bf16 %v1620, %v1620
        %v1637 = vpack.c.bf16 %v1621, %v1621
        %v1638 = vpack.c.bf16 %v1622, %v1622
        %v1640 = vsel %vm1446, %v1623, 0
        %vm1642 = vcmask 1043456
        %v1644 = vsel %vm1642, %v645, 0
        %1646 = vmatprep.subr.bf16.mxu0 0
        %1647 = vmatpush1.bf16.msra.mxu0 %v1644
        %1648 = vmatprep.subr.bf16.mxu0 0
        %1649 = vmatpush1.bf16.msra.mxu0 0
        %1650 = vmatprep.subr.bf16.mxu0 0
        %1651 = vmatpush1.bf16.msra.mxu0 0
        %1652 = vmatprep.subr.bf16.mxu0 0
        %1653 = vmatpush1.bf16.msra.mxu0 0
        %1654 = vmatprep.subr.bf16.mxu0 0
        %1655 = vmatpush1.bf16.msra.mxu0 0
        %1656 = vmatprep.subr.bf16.mxu0 0
        %1657 = vmatpush1.bf16.msra.mxu0 0
        %1658 = vmatprep.subr.bf16.mxu0 0
        %1659 = vmatpush1.bf16.msra.mxu0 0
        %1660 = vmatprep.subr.bf16.mxu0 0
        %1661 = vmatpush1.bf16.msra.mxu0 0
        %1662 = vmatprep.subr.bf16.mxu0 0
        %1663 = vmatpush1.bf16.msra.mxu0 0
        %1664 = vmatprep.subr.bf16.mxu0 0
        %1665 = vmatpush1.bf16.msra.mxu0 0
        %1666 = vmatprep.subr.bf16.mxu0 0
        %1667 = vmatpush1.bf16.msra.mxu0 0
        %1668 = vmatprep.subr.bf16.mxu0 0
        %1669 = vmatpush1.bf16.msra.mxu0 0
        %1670 = vmatprep.subr.bf16.mxu0 0
        %1671 = vmatpush1.bf16.msra.mxu0 0
        %1672 = vmatprep.subr.bf16.mxu0 0
        %1673 = vmatpush1.bf16.msra.mxu0 0
        %1674 = vmatprep.subr.bf16.mxu0 0
        %1675 = vmatpush1.bf16.msra.mxu0 0
        %1676 = vmatprep.subr.bf16.mxu0 0
        %1677 = vmatpush1.bf16.msra.mxu0 0
        %1678 = vmatprep.mubr.bf16.mxu0 0
        %1679 = vmatmul.mubr.bf16.gmra.mrb[0].mxu0 %v1640
        %v1680 = vpop.f32.mrb[0].mxu0
        %v1681 = vadd.f32 0.0, %v1680
        %v1682 = vpop.f32.mrb[0].mxu0
        %v1683 = vpop.f32.mrb[0].mxu0
        %v1684 = vpop.f32.mrb[0].mxu0
        %1685 = vdwg.mxu0
        %v1687 = vsel %vm1446, %v1624, 0
        %v1690 = vsel %vm1642, %v646, 0
        %1692 = vmatprep.subr.bf16.mxu0 0
        %1693 = vmatpush1.bf16.msra.mxu0 %v1690
        %1694 = vmatprep.subr.bf16.mxu0 0
        %1695 = vmatpush1.bf16.msra.mxu0 0
        %1696 = vmatprep.subr.bf16.mxu0 0
        %1697 = vmatpush1.bf16.msra.mxu0 0
        %1698 = vmatprep.subr.bf16.mxu0 0
        %1699 = vmatpush1.bf16.msra.mxu0 0
        %1700 = vmatprep.subr.bf16.mxu0 0
        %1701 = vmatpush1.bf16.msra.mxu0 0
        %1702 = vmatprep.subr.bf16.mxu0 0
        %1703 = vmatpush1.bf16.msra.mxu0 0
        %1704 = vmatprep.subr.bf16.mxu0 0
        %1705 = vmatpush1.bf16.msra.mxu0 0
        %1706 = vmatprep.subr.bf16.mxu0 0
        %1707 = vmatpush1.bf16.msra.mxu0 0
        %1708 = vmatprep.subr.bf16.mxu0 0
        %1709 = vmatpush1.bf16.msra.mxu0 0
        %1710 = vmatprep.subr.bf16.mxu0 0
        %1711 = vmatpush1.bf16.msra.mxu0 0
        %1712 = vmatprep.subr.bf16.mxu0 0
        %1713 = vmatpush1.bf16.msra.mxu0 0
        %1714 = vmatprep.subr.bf16.mxu0 0
        %1715 = vmatpush1.bf16.msra.mxu0 0
        %1716 = vmatprep.subr.bf16.mxu0 0
        %1717 = vmatpush1.bf16.msra.mxu0 0
        %1718 = vmatprep.subr.bf16.mxu0 0
        %1719 = vmatpush1.bf16.msra.mxu0 0
        %1720 = vmatprep.subr.bf16.mxu0 0
        %1721 = vmatpush1.bf16.msra.mxu0 0
        %1722 = vmatprep.subr.bf16.mxu0 0
        %1723 = vmatpush1.bf16.msra.mxu0 0
        %1724 = vmatprep.mubr.bf16.mxu0 0
        %1725 = vmatmul.mubr.bf16.gmra.mrb[0].mxu0 %v1687
        %v1726 = vpop.f32.mrb[0].mxu0
        %v1727 = vadd.f32 0.0, %v1726
        %v1728 = vpop.f32.mrb[0].mxu0
        %v1729 = vpop.f32.mrb[0].mxu0
        %v1730 = vpop.f32.mrb[0].mxu0
        %1731 = vdwg.mxu0
        %v1733 = vsel %vm1446, %v1625, 0
        %v1736 = vsel %vm1642, %v647, 0
        %1738 = vmatprep.subr.bf16.mxu0 0
        %1739 = vmatpush1.bf16.msra.mxu0 %v1736
        %1740 = vmatprep.subr.bf16.mxu0 0
        %1741 = vmatpush1.bf16.msra.mxu0 0
        %1742 = vmatprep.subr.bf16.mxu0 0
        %1743 = vmatpush1.bf16.msra.mxu0 0
        %1744 = vmatprep.subr.bf16.mxu0 0
        %1745 = vmatpush1.bf16.msra.mxu0 0
        %1746 = vmatprep.subr.bf16.mxu0 0
        %1747 = vmatpush1.bf16.msra.mxu0 0
        %1748 = vmatprep.subr.bf16.mxu0 0
        %1749 = vmatpush1.bf16.msra.mxu0 0
        %1750 = vmatprep.subr.bf16.mxu0 0
        %1751 = vmatpush1.bf16.msra.mxu0 0
        %1752 = vmatprep.subr.bf16.mxu0 0
        %1753 = vmatpush1.bf16.msra.mxu0 0
        %1754 = vmatprep.subr.bf16.mxu0 0
        %1755 = vmatpush1.bf16.msra.mxu0 0
        %1756 = vmatprep.subr.bf16.mxu0 0
        %1757 = vmatpush1.bf16.msra.mxu0 0
        %1758 = vmatprep.subr.bf16.mxu0 0
        %1759 = vmatpush1.bf16.msra.mxu0 0
        %1760 = vmatprep.subr.bf16.mxu0 0
        %1761 = vmatpush1.bf16.msra.mxu0 0
        %1762 = vmatprep.subr.bf16.mxu0 0
        %1763 = vmatpush1.bf16.msra.mxu0 0
        %1764 = vmatprep.subr.bf16.mxu0 0
        %1765 = vmatpush1.bf16.msra.mxu0 0
        %1766 = vmatprep.subr.bf16.mxu0 0
        %1767 = vmatpush1.bf16.msra.mxu0 0
        %1768 = vmatprep.subr.bf16.mxu0 0
        %1769 = vmatpush1.bf16.msra.mxu0 0
        %1770 = vmatprep.mubr.bf16.mxu0 0
        %1771 = vmatmul.mubr.bf16.gmra.mrb[0].mxu0 %v1733
        %v1772 = vpop.f32.mrb[0].mxu0
        %v1773 = vadd.f32 0.0, %v1772
        %v1774 = vpop.f32.mrb[0].mxu0
        %v1775 = vpop.f32.mrb[0].mxu0
        %v1776 = vpop.f32.mrb[0].mxu0
        %1777 = vdwg.mxu0
        %v1779 = vsel %vm1446, %v1626, 0
        %v1782 = vsel %vm1642, %v648, 0
        %1784 = vmatprep.subr.bf16.mxu0 0
        %1785 = vmatpush1.bf16.msra.mxu0 %v1782
        %1786 = vmatprep.subr.bf16.mxu0 0
        %1787 = vmatpush1.bf16.msra.mxu0 0
        %1788 = vmatprep.subr.bf16.mxu0 0
        %1789 = vmatpush1.bf16.msra.mxu0 0
        %1790 = vmatprep.subr.bf16.mxu0 0
        %1791 = vmatpush1.bf16.msra.mxu0 0
        %1792 = vmatprep.subr.bf16.mxu0 0
        %1793 = vmatpush1.bf16.msra.mxu0 0
        %1794 = vmatprep.subr.bf16.mxu0 0
        %1795 = vmatpush1.bf16.msra.mxu0 0
        %1796 = vmatprep.subr.bf16.mxu0 0
        %1797 = vmatpush1.bf16.msra.mxu0 0
        %1798 = vmatprep.subr.bf16.mxu0 0
        %1799 = vmatpush1.bf16.msra.mxu0 0
        %1800 = vmatprep.subr.bf16.mxu0 0
        %1801 = vmatpush1.bf16.msra.mxu0 0
        %1802 = vmatprep.subr.bf16.mxu0 0
        %1803 = vmatpush1.bf16.msra.mxu0 0
        %1804 = vmatprep.subr.bf16.mxu0 0
        %1805 = vmatpush1.bf16.msra.mxu0 0
        %1806 = vmatprep.subr.bf16.mxu0 0
        %1807 = vmatpush1.bf16.msra.mxu0 0
        %1808 = vmatprep.subr.bf16.mxu0 0
        %1809 = vmatpush1.bf16.msra.mxu0 0
        %1810 = vmatprep.subr.bf16.mxu0 0
        %1811 = vmatpush1.bf16.msra.mxu0 0
        %1812 = vmatprep.subr.bf16.mxu0 0
        %1813 = vmatpush1.bf16.msra.mxu0 0
        %1814 = vmatprep.subr.bf16.mxu0 0
        %1815 = vmatpush1.bf16.msra.mxu0 0
        %1816 = vmatprep.mubr.bf16.mxu0 0
        %1817 = vmatmul.mubr.bf16.gmra.mrb[0].mxu0 %v1779
        %v1818 = vpop.f32.mrb[0].mxu0
        %v1819 = vadd.f32 0.0, %v1818
        %v1820 = vpop.f32.mrb[0].mxu0
        %v1821 = vpop.f32.mrb[0].mxu0
        %v1822 = vpop.f32.mrb[0].mxu0
        %1823 = vdwg.mxu0
        %v1825 = vsel %vm1446, %v1627, 0
        %v1828 = vsel %vm1642, %v649, 0
        %1830 = vmatprep.subr.bf16.mxu0 0
        %1831 = vmatpush1.bf16.msra.mxu0 %v1828
        %1832 = vmatprep.subr.bf16.mxu0 0
        %1833 = vmatpush1.bf16.msra.mxu0 0
        %1834 = vmatprep.subr.bf16.mxu0 0
        %1835 = vmatpush1.bf16.msra.mxu0 0
        %1836 = vmatprep.subr.bf16.mxu0 0
        %1837 = vmatpush1.bf16.msra.mxu0 0
        %1838 = vmatprep.subr.bf16.mxu0 0
        %1839 = vmatpush1.bf16.msra.mxu0 0
        %1840 = vmatprep.subr.bf16.mxu0 0
        %1841 = vmatpush1.bf16.msra.mxu0 0
        %1842 = vmatprep.subr.bf16.mxu0 0
        %1843 = vmatpush1.bf16.msra.mxu0 0
        %1844 = vmatprep.subr.bf16.mxu0 0
        %1845 = vmatpush1.bf16.msra.mxu0 0
        %1846 = vmatprep.subr.bf16.mxu0 0
        %1847 = vmatpush1.bf16.msra.mxu0 0
        %1848 = vmatprep.subr.bf16.mxu0 0
        %1849 = vmatpush1.bf16.msra.mxu0 0
        %1850 = vmatprep.subr.bf16.mxu0 0
        %1851 = vmatpush1.bf16.msra.mxu0 0
        %1852 = vmatprep.subr.bf16.mxu0 0
        %1853 = vmatpush1.bf16.msra.mxu0 0
        %1854 = vmatprep.subr.bf16.mxu0 0
        %1855 = vmatpush1.bf16.msra.mxu0 0
        %1856 = vmatprep.subr.bf16.mxu0 0
        %1857 = vmatpush1.bf16.msra.mxu0 0
        %1858 = vmatprep.subr.bf16.mxu0 0
        %1859 = vmatpush1.bf16.msra.mxu0 0
        %1860 = vmatprep.subr.bf16.mxu0 0
        %1861 = vmatpush1.bf16.msra.mxu0 0
        %1862 = vmatprep.mubr.bf16.mxu0 0
        %1863 = vmatmul.mubr.bf16.gmra.mrb[0].mxu0 %v1825
        %v1864 = vpop.f32.mrb[0].mxu0
        %v1865 = vadd.f32 0.0, %v1864
        %v1866 = vpop.f32.mrb[0].mxu0
        %v1867 = vpop.f32.mrb[0].mxu0
        %v1868 = vpop.f32.mrb[0].mxu0
        %1869 = vdwg.mxu0
        %v1871 = vsel %vm1446, %v1628, 0
        %v1874 = vsel %vm1642, %v650, 0
        %1876 = vmatprep.subr.bf16.mxu0 0
        %1877 = vmatpush1.bf16.msra.mxu0 %v1874
        %1878 = vmatprep.subr.bf16.mxu0 0
        %1879 = vmatpush1.bf16.msra.mxu0 0
        %1880 = vmatprep.subr.bf16.mxu0 0
        %1881 = vmatpush1.bf16.msra.mxu0 0
        %1882 = vmatprep.subr.bf16.mxu0 0
        %1883 = vmatpush1.bf16.msra.mxu0 0
        %1884 = vmatprep.subr.bf16.mxu0 0
        %1885 = vmatpush1.bf16.msra.mxu0 0
        %1886 = vmatprep.subr.bf16.mxu0 0
        %1887 = vmatpush1.bf16.msra.mxu0 0
        %1888 = vmatprep.subr.bf16.mxu0 0
        %1889 = vmatpush1.bf16.msra.mxu0 0
        %1890 = vmatprep.subr.bf16.mxu0 0
        %1891 = vmatpush1.bf16.msra.mxu0 0
        %1892 = vmatprep.subr.bf16.mxu0 0
        %1893 = vmatpush1.bf16.msra.mxu0 0
        %1894 = vmatprep.subr.bf16.mxu0 0
        %1895 = vmatpush1.bf16.msra.mxu0 0
        %1896 = vmatprep.subr.bf16.mxu0 0
        %1897 = vmatpush1.bf16.msra.mxu0 0
        %1898 = vmatprep.subr.bf16.mxu0 0
        %1899 = vmatpush1.bf16.msra.mxu0 0
        %1900 = vmatprep.subr.bf16.mxu0 0
        %1901 = vmatpush1.bf16.msra.mxu0 0
        %1902 = vmatprep.subr.bf16.mxu0 0
        %1903 = vmatpush1.bf16.msra.mxu0 0
        %1904 = vmatprep.subr.bf16.mxu0 0
        %1905 = vmatpush1.bf16.msra.mxu0 0
        %1906 = vmatprep.subr.bf16.mxu0 0
        %1907 = vmatpush1.bf16.msra.mxu0 0
        %1908 = vmatprep.mubr.bf16.mxu0 0
        %1909 = vmatmul.mubr.bf16.gmra.mrb[0].mxu0 %v1871
        %v1910 = vpop.f32.mrb[0].mxu0
        %v1911 = vadd.f32 0.0, %v1910
        %v1912 = vpop.f32.mrb[0].mxu0
        %v1913 = vpop.f32.mrb[0].mxu0
        %v1914 = vpop.f32.mrb[0].mxu0
        %1915 = vdwg.mxu0
        %v1917 = vsel %vm1446, %v1629, 0
        %v1920 = vsel %vm1642, %v651, 0
        %1922 = vmatprep.subr.bf16.mxu0 0
        %1923 = vmatpush1.bf16.msra.mxu0 %v1920
        %1924 = vmatprep.subr.bf16.mxu0 0
        %1925 = vmatpush1.bf16.msra.mxu0 0
        %1926 = vmatprep.subr.bf16.mxu0 0
        %1927 = vmatpush1.bf16.msra.mxu0 0
        %1928 = vmatprep.subr.bf16.mxu0 0
        %1929 = vmatpush1.bf16.msra.mxu0 0
        %1930 = vmatprep.subr.bf16.mxu0 0
        %1931 = vmatpush1.bf16.msra.mxu0 0
        %1932 = vmatprep.subr.bf16.mxu0 0
        %1933 = vmatpush1.bf16.msra.mxu0 0
        %1934 = vmatprep.subr.bf16.mxu0 0
        %1935 = vmatpush1.bf16.msra.mxu0 0
        %1936 = vmatprep.subr.bf16.mxu0 0
        %1937 = vmatpush1.bf16.msra.mxu0 0
        %1938 = vmatprep.subr.bf16.mxu0 0
        %1939 = vmatpush1.bf16.msra.mxu0 0
        %1940 = vmatprep.subr.bf16.mxu0 0
        %1941 = vmatpush1.bf16.msra.mxu0 0
        %1942 = vmatprep.subr.bf16.mxu0 0
        %1943 = vmatpush1.bf16.msra.mxu0 0
        %1944 = vmatprep.subr.bf16.mxu0 0
        %1945 = vmatpush1.bf16.msra.mxu0 0
        %1946 = vmatprep.subr.bf16.mxu0 0
        %1947 = vmatpush1.bf16.msra.mxu0 0
        %1948 = vmatprep.subr.bf16.mxu0 0
        %1949 = vmatpush1.bf16.msra.mxu0 0
        %1950 = vmatprep.subr.bf16.mxu0 0
        %1951 = vmatpush1.bf16.msra.mxu0 0
        %1952 = vmatprep.subr.bf16.mxu0 0
        %1953 = vmatpush1.bf16.msra.mxu0 0
        %1954 = vmatprep.mubr.bf16.mxu0 0
        %1955 = vmatmul.mubr.bf16.gmra.mrb[0].mxu0 %v1917
        %v1956 = vpop.f32.mrb[0].mxu0
        %v1957 = vadd.f32 0.0, %v1956
        %v1958 = vpop.f32.mrb[0].mxu0
        %v1959 = vpop.f32.mrb[0].mxu0
        %v1960 = vpop.f32.mrb[0].mxu0
        %1961 = vdwg.mxu0
        %v1963 = vsel %vm1446, %v1630, 0
        %v1966 = vsel %vm1642, %v652, 0
        %1968 = vmatprep.subr.bf16.mxu0 0
        %1969 = vmatpush1.bf16.msra.mxu0 %v1966
        %1970 = vmatprep.subr.bf16.mxu0 0
        %1971 = vmatpush1.bf16.msra.mxu0 0
        %1972 = vmatprep.subr.bf16.mxu0 0
        %1973 = vmatpush1.bf16.msra.mxu0 0
        %1974 = vmatprep.subr.bf16.mxu0 0
        %1975 = vmatpush1.bf16.msra.mxu0 0
        %1976 = vmatprep.subr.bf16.mxu0 0
        %1977 = vmatpush1.bf16.msra.mxu0 0
        %1978 = vmatprep.subr.bf16.mxu0 0
        %1979 = vmatpush1.bf16.msra.mxu0 0
        %1980 = vmatprep.subr.bf16.mxu0 0
        %1981 = vmatpush1.bf16.msra.mxu0 0
        %1982 = vmatprep.subr.bf16.mxu0 0
        %1983 = vmatpush1.bf16.msra.mxu0 0
        %1984 = vmatprep.subr.bf16.mxu0 0
        %1985 = vmatpush1.bf16.msra.mxu0 0
        %1986 = vmatprep.subr.bf16.mxu0 0
        %1987 = vmatpush1.bf16.msra.mxu0 0
        %1988 = vmatprep.subr.bf16.mxu0 0
        %1989 = vmatpush1.bf16.msra.mxu0 0
        %1990 = vmatprep.subr.bf16.mxu0 0
        %1991 = vmatpush1.bf16.msra.mxu0 0
        %1992 = vmatprep.subr.bf16.mxu0 0
        %1993 = vmatpush1.bf16.msra.mxu0 0
        %1994 = vmatprep.subr.bf16.mxu0 0
        %1995 = vmatpush1.bf16.msra.mxu0 0
        %1996 = vmatprep.subr.bf16.mxu0 0
        %1997 = vmatpush1.bf16.msra.mxu0 0
        %1998 = vmatprep.subr.bf16.mxu0 0
        %1999 = vmatpush1.bf16.msra.mxu0 0
        %2000 = vmatprep.mubr.bf16.mxu0 0
        %2001 = vmatmul.mubr.bf16.gmra.mrb[0].mxu0 %v1963
        %v2002 = vpop.f32.mrb[0].mxu0
        %v2003 = vadd.f32 0.0, %v2002
        %v2004 = vpop.f32.mrb[0].mxu0
        %v2005 = vpop.f32.mrb[0].mxu0
        %v2006 = vpop.f32.mrb[0].mxu0
        %2007 = vdwg.mxu0
        %v2009 = vsel %vm1446, %v1631, 0
        %v2012 = vsel %vm1642, %v653, 0
        %2014 = vmatprep.subr.bf16.mxu0 0
        %2015 = vmatpush1.bf16.msra.mxu0 %v2012
        %2016 = vmatprep.subr.bf16.mxu0 0
        %2017 = vmatpush1.bf16.msra.mxu0 0
        %2018 = vmatprep.subr.bf16.mxu0 0
        %2019 = vmatpush1.bf16.msra.mxu0 0
        %2020 = vmatprep.subr.bf16.mxu0 0
        %2021 = vmatpush1.bf16.msra.mxu0 0
        %2022 = vmatprep.subr.bf16.mxu0 0
        %2023 = vmatpush1.bf16.msra.mxu0 0
        %2024 = vmatprep.subr.bf16.mxu0 0
        %2025 = vmatpush1.bf16.msra.mxu0 0
        %2026 = vmatprep.subr.bf16.mxu0 0
        %2027 = vmatpush1.bf16.msra.mxu0 0
        %2028 = vmatprep.subr.bf16.mxu0 0
        %2029 = vmatpush1.bf16.msra.mxu0 0
        %2030 = vmatprep.subr.bf16.mxu0 0
        %2031 = vmatpush1.bf16.msra.mxu0 0
        %2032 = vmatprep.subr.bf16.mxu0 0
        %2033 = vmatpush1.bf16.msra.mxu0 0
        %2034 = vmatprep.subr.bf16.mxu0 0
        %2035 = vmatpush1.bf16.msra.mxu0 0
        %2036 = vmatprep.subr.bf16.mxu0 0
        %2037 = vmatpush1.bf16.msra.mxu0 0
        %2038 = vmatprep.subr.bf16.mxu0 0
        %2039 = vmatpush1.bf16.msra.mxu0 0
        %2040 = vmatprep.subr.bf16.mxu0 0
        %2041 = vmatpush1.bf16.msra.mxu0 0
        %2042 = vmatprep.subr.bf16.mxu0 0
        %2043 = vmatpush1.bf16.msra.mxu0 0
        %2044 = vmatprep.subr.bf16.mxu0 0
        %2045 = vmatpush1.bf16.msra.mxu0 0
        %2046 = vmatprep.mubr.bf16.mxu0 0
        %2047 = vmatmul.mubr.bf16.gmra.mrb[0].mxu0 %v2009
        %v2048 = vpop.f32.mrb[0].mxu0
        %v2049 = vadd.f32 0.0, %v2048
        %v2050 = vpop.f32.mrb[0].mxu0
        %v2051 = vpop.f32.mrb[0].mxu0
        %v2052 = vpop.f32.mrb[0].mxu0
        %2053 = vdwg.mxu0
        %v2055 = vsel %vm1446, %v1632, 0
        %v2058 = vsel %vm1642, %v654, 0
        %2060 = vmatprep.subr.bf16.mxu0 0
        %2061 = vmatpush1.bf16.msra.mxu0 %v2058
        %2062 = vmatprep.subr.bf16.mxu0 0
        %2063 = vmatpush1.bf16.msra.mxu0 0
        %2064 = vmatprep.subr.bf16.mxu0 0
        %2065 = vmatpush1.bf16.msra.mxu0 0
        %2066 = vmatprep.subr.bf16.mxu0 0
        %2067 = vmatpush1.bf16.msra.mxu0 0
        %2068 = vmatprep.subr.bf16.mxu0 0
        %2069 = vmatpush1.bf16.msra.mxu0 0
        %2070 = vmatprep.subr.bf16.mxu0 0
        %2071 = vmatpush1.bf16.msra.mxu0 0
        %2072 = vmatprep.subr.bf16.mxu0 0
        %2073 = vmatpush1.bf16.msra.mxu0 0
        %2074 = vmatprep.subr.bf16.mxu0 0
        %2075 = vmatpush1.bf16.msra.mxu0 0
        %2076 = vmatprep.subr.bf16.mxu0 0
        %2077 = vmatpush1.bf16.msra.mxu0 0
        %2078 = vmatprep.subr.bf16.mxu0 0
        %2079 = vmatpush1.bf16.msra.mxu0 0
        %2080 = vmatprep.subr.bf16.mxu0 0
        %2081 = vmatpush1.bf16.msra.mxu0 0
        %2082 = vmatprep.subr.bf16.mxu0 0
        %2083 = vmatpush1.bf16.msra.mxu0 0
        %2084 = vmatprep.subr.bf16.mxu0 0
        %2085 = vmatpush1.bf16.msra.mxu0 0
        %2086 = vmatprep.subr.bf16.mxu0 0
        %2087 = vmatpush1.bf16.msra.mxu0 0
        %2088 = vmatprep.subr.bf16.mxu0 0
        %2089 = vmatpush1.bf16.msra.mxu0 0
        %2090 = vmatprep.subr.bf16.mxu0 0
        %2091 = vmatpush1.bf16.msra.mxu0 0
        %2092 = vmatprep.mubr.bf16.mxu0 0
        %2093 = vmatmul.mubr.bf16.gmra.mrb[0].mxu0 %v2055
        %v2094 = vpop.f32.mrb[0].mxu0
        %v2095 = vadd.f32 0.0, %v2094
        %v2096 = vpop.f32.mrb[0].mxu0
        %v2097 = vpop.f32.mrb[0].mxu0
        %v2098 = vpop.f32.mrb[0].mxu0
        %2099 = vdwg.mxu0
        %v2101 = vsel %vm1446, %v1633, 0
        %v2104 = vsel %vm1642, %v655, 0
        %2106 = vmatprep.subr.bf16.mxu0 0
        %2107 = vmatpush1.bf16.msra.mxu0 %v2104
        %2108 = vmatprep.subr.bf16.mxu0 0
        %2109 = vmatpush1.bf16.msra.mxu0 0
        %2110 = vmatprep.subr.bf16.mxu0 0
        %2111 = vmatpush1.bf16.msra.mxu0 0
        %2112 = vmatprep.subr.bf16.mxu0 0
        %2113 = vmatpush1.bf16.msra.mxu0 0
        %2114 = vmatprep.subr.bf16.mxu0 0
        %2115 = vmatpush1.bf16.msra.mxu0 0
        %2116 = vmatprep.subr.bf16.mxu0 0
        %2117 = vmatpush1.bf16.msra.mxu0 0
        %2118 = vmatprep.subr.bf16.mxu0 0
        %2119 = vmatpush1.bf16.msra.mxu0 0
        %2120 = vmatprep.subr.bf16.mxu0 0
        %2121 = vmatpush1.bf16.msra.mxu0 0
        %2122 = vmatprep.subr.bf16.mxu0 0
        %2123 = vmatpush1.bf16.msra.mxu0 0
        %2124 = vmatprep.subr.bf16.mxu0 0
        %2125 = vmatpush1.bf16.msra.mxu0 0
        %2126 = vmatprep.subr.bf16.mxu0 0
        %2127 = vmatpush1.bf16.msra.mxu0 0
        %2128 = vmatprep.subr.bf16.mxu0 0
        %2129 = vmatpush1.bf16.msra.mxu0 0
        %2130 = vmatprep.subr.bf16.mxu0 0
        %2131 = vmatpush1.bf16.msra.mxu0 0
        %2132 = vmatprep.subr.bf16.mxu0 0
        %2133 = vmatpush1.bf16.msra.mxu0 0
        %2134 = vmatprep.subr.bf16.mxu0 0
        %2135 = vmatpush1.bf16.msra.mxu0 0
        %2136 = vmatprep.subr.bf16.mxu0 0
        %2137 = vmatpush1.bf16.msra.mxu0 0
        %2138 = vmatprep.mubr.bf16.mxu0 0
        %2139 = vmatmul.mubr.bf16.gmra.mrb[0].mxu0 %v2101
        %v2140 = vpop.f32.mrb[0].mxu0
        %v2141 = vadd.f32 0.0, %v2140
        %v2142 = vpop.f32.mrb[0].mxu0
        %v2143 = vpop.f32.mrb[0].mxu0
        %v2144 = vpop.f32.mrb[0].mxu0
        %2145 = vdwg.mxu0
        %v2147 = vsel %vm1446, %v1634, 0
        %v2150 = vsel %vm1642, %v656, 0
        %2152 = vmatprep.subr.bf16.mxu0 0
        %2153 = vmatpush1.bf16.msra.mxu0 %v2150
        %2154 = vmatprep.subr.bf16.mxu0 0
        %2155 = vmatpush1.bf16.msra.mxu0 0
        %2156 = vmatprep.subr.bf16.mxu0 0
        %2157 = vmatpush1.bf16.msra.mxu0 0
        %2158 = vmatprep.subr.bf16.mxu0 0
        %2159 = vmatpush1.bf16.msra.mxu0 0
        %2160 = vmatprep.subr.bf16.mxu0 0
        %2161 = vmatpush1.bf16.msra.mxu0 0
        %2162 = vmatprep.subr.bf16.mxu0 0
        %2163 = vmatpush1.bf16.msra.mxu0 0
        %2164 = vmatprep.subr.bf16.mxu0 0
        %2165 = vmatpush1.bf16.msra.mxu0 0
        %2166 = vmatprep.subr.bf16.mxu0 0
        %2167 = vmatpush1.bf16.msra.mxu0 0
        %2168 = vmatprep.subr.bf16.mxu0 0
        %2169 = vmatpush1.bf16.msra.mxu0 0
        %2170 = vmatprep.subr.bf16.mxu0 0
        %2171 = vmatpush1.bf16.msra.mxu0 0
        %2172 = vmatprep.subr.bf16.mxu0 0
        %2173 = vmatpush1.bf16.msra.mxu0 0
        %2174 = vmatprep.subr.bf16.mxu0 0
        %2175 = vmatpush1.bf16.msra.mxu0 0
        %2176 = vmatprep.subr.bf16.mxu0 0
        %2177 = vmatpush1.bf16.msra.mxu0 0
        %2178 = vmatprep.subr.bf16.mxu0 0
        %2179 = vmatpush1.bf16.msra.mxu0 0
        %2180 = vmatprep.subr.bf16.mxu0 0
        %2181 = vmatpush1.bf16.msra.mxu0 0
        %2182 = vmatprep.subr.bf16.mxu0 0
        %2183 = vmatpush1.bf16.msra.mxu0 0
        %2184 = vmatprep.mubr.bf16.mxu0 0
        %2185 = vmatmul.mubr.bf16.gmra.mrb[0].mxu0 %v2147
        %v2186 = vpop.f32.mrb[0].mxu0
        %v2187 = vadd.f32 0.0, %v2186
        %v2188 = vpop.f32.mrb[0].mxu0
        %v2189 = vpop.f32.mrb[0].mxu0
        %v2190 = vpop.f32.mrb[0].mxu0
        %2191 = vdwg.mxu0
        %v2193 = vsel %vm1446, %v1635, 0
        %v2196 = vsel %vm1642, %v657, 0
        %2198 = vmatprep.subr.bf16.mxu0 0
        %2199 = vmatpush1.bf16.msra.mxu0 %v2196
        %2200 = vmatprep.subr.bf16.mxu0 0
        %2201 = vmatpush1.bf16.msra.mxu0 0
        %2202 = vmatprep.subr.bf16.mxu0 0
        %2203 = vmatpush1.bf16.msra.mxu0 0
        %2204 = vmatprep.subr.bf16.mxu0 0
        %2205 = vmatpush1.bf16.msra.mxu0 0
        %2206 = vmatprep.subr.bf16.mxu0 0
        %2207 = vmatpush1.bf16.msra.mxu0 0
        %2208 = vmatprep.subr.bf16.mxu0 0
        %2209 = vmatpush1.bf16.msra.mxu0 0
        %2210 = vmatprep.subr.bf16.mxu0 0
        %2211 = vmatpush1.bf16.msra.mxu0 0
        %2212 = vmatprep.subr.bf16.mxu0 0
        %2213 = vmatpush1.bf16.msra.mxu0 0
        %2214 = vmatprep.subr.bf16.mxu0 0
        %2215 = vmatpush1.bf16.msra.mxu0 0
        %2216 = vmatprep.subr.bf16.mxu0 0
        %2217 = vmatpush1.bf16.msra.mxu0 0
        %2218 = vmatprep.subr.bf16.mxu0 0
        %2219 = vmatpush1.bf16.msra.mxu0 0
        %2220 = vmatprep.subr.bf16.mxu0 0
        %2221 = vmatpush1.bf16.msra.mxu0 0
        %2222 = vmatprep.subr.bf16.mxu0 0
        %2223 = vmatpush1.bf16.msra.mxu0 0
        %2224 = vmatprep.subr.bf16.mxu0 0
        %2225 = vmatpush1.bf16.msra.mxu0 0
        %2226 = vmatprep.subr.bf16.mxu0 0
        %2227 = vmatpush1.bf16.msra.mxu0 0
        %2228 = vmatprep.subr.bf16.mxu0 0
        %2229 = vmatpush1.bf16.msra.mxu0 0
        %2230 = vmatprep.mubr.bf16.mxu0 0
        %2231 = vmatmul.mubr.bf16.gmra.mrb[0].mxu0 %v2193
        %v2232 = vpop.f32.mrb[0].mxu0
        %v2233 = vadd.f32 0.0, %v2232
        %v2234 = vpop.f32.mrb[0].mxu0
        %v2235 = vpop.f32.mrb[0].mxu0
        %v2236 = vpop.f32.mrb[0].mxu0
        %2237 = vdwg.mxu0
        %v2239 = vsel %vm1446, %v1636, 0
        %v2242 = vsel %vm1642, %v658, 0
        %2244 = vmatprep.subr.bf16.mxu0 0
        %2245 = vmatpush1.bf16.msra.mxu0 %v2242
        %2246 = vmatprep.subr.bf16.mxu0 0
        %2247 = vmatpush1.bf16.msra.mxu0 0
        %2248 = vmatprep.subr.bf16.mxu0 0
        %2249 = vmatpush1.bf16.msra.mxu0 0
        %2250 = vmatprep.subr.bf16.mxu0 0
        %2251 = vmatpush1.bf16.msra.mxu0 0
        %2252 = vmatprep.subr.bf16.mxu0 0
        %2253 = vmatpush1.bf16.msra.mxu0 0
        %2254 = vmatprep.subr.bf16.mxu0 0
        %2255 = vmatpush1.bf16.msra.mxu0 0
        %2256 = vmatprep.subr.bf16.mxu0 0
        %2257 = vmatpush1.bf16.msra.mxu0 0
        %2258 = vmatprep.subr.bf16.mxu0 0
        %2259 = vmatpush1.bf16.msra.mxu0 0
        %2260 = vmatprep.subr.bf16.mxu0 0
        %2261 = vmatpush1.bf16.msra.mxu0 0
        %2262 = vmatprep.subr.bf16.mxu0 0
        %2263 = vmatpush1.bf16.msra.mxu0 0
        %2264 = vmatprep.subr.bf16.mxu0 0
        %2265 = vmatpush1.bf16.msra.mxu0 0
        %2266 = vmatprep.subr.bf16.mxu0 0
        %2267 = vmatpush1.bf16.msra.mxu0 0
        %2268 = vmatprep.subr.bf16.mxu0 0
        %2269 = vmatpush1.bf16.msra.mxu0 0
        %2270 = vmatprep.subr.bf16.mxu0 0
        %2271 = vmatpush1.bf16.msra.mxu0 0
        %2272 = vmatprep.subr.bf16.mxu0 0
        %2273 = vmatpush1.bf16.msra.mxu0 0
        %2274 = vmatprep.subr.bf16.mxu0 0
        %2275 = vmatpush1.bf16.msra.mxu0 0
        %2276 = vmatprep.mubr.bf16.mxu0 0
        %2277 = vmatmul.mubr.bf16.gmra.mrb[0].mxu0 %v2239
        %v2278 = vpop.f32.mrb[0].mxu0
        %v2279 = vadd.f32 0.0, %v2278
        %v2280 = vpop.f32.mrb[0].mxu0
        %v2281 = vpop.f32.mrb[0].mxu0
        %v2282 = vpop.f32.mrb[0].mxu0
        %2283 = vdwg.mxu0
        %v2285 = vsel %vm1446, %v1637, 0
        %v2288 = vsel %vm1642, %v659, 0
        %2290 = vmatprep.subr.bf16.mxu0 0
        %2291 = vmatpush1.bf16.msra.mxu0 %v2288
        %2292 = vmatprep.subr.bf16.mxu0 0
        %2293 = vmatpush1.bf16.msra.mxu0 0
        %2294 = vmatprep.subr.bf16.mxu0 0
        %2295 = vmatpush1.bf16.msra.mxu0 0
        %2296 = vmatprep.subr.bf16.mxu0 0
        %2297 = vmatpush1.bf16.msra.mxu0 0
        %2298 = vmatprep.subr.bf16.mxu0 0
        %2299 = vmatpush1.bf16.msra.mxu0 0
        %2300 = vmatprep.subr.bf16.mxu0 0
        %2301 = vmatpush1.bf16.msra.mxu0 0
        %2302 = vmatprep.subr.bf16.mxu0 0
        %2303 = vmatpush1.bf16.msra.mxu0 0
        %2304 = vmatprep.subr.bf16.mxu0 0
        %2305 = vmatpush1.bf16.msra.mxu0 0
        %2306 = vmatprep.subr.bf16.mxu0 0
        %2307 = vmatpush1.bf16.msra.mxu0 0
        %2308 = vmatprep.subr.bf16.mxu0 0
        %2309 = vmatpush1.bf16.msra.mxu0 0
        %2310 = vmatprep.subr.bf16.mxu0 0
        %2311 = vmatpush1.bf16.msra.mxu0 0
        %2312 = vmatprep.subr.bf16.mxu0 0
        %2313 = vmatpush1.bf16.msra.mxu0 0
        %2314 = vmatprep.subr.bf16.mxu0 0
        %2315 = vmatpush1.bf16.msra.mxu0 0
        %2316 = vmatprep.subr.bf16.mxu0 0
        %2317 = vmatpush1.bf16.msra.mxu0 0
        %2318 = vmatprep.subr.bf16.mxu0 0
        %2319 = vmatpush1.bf16.msra.mxu0 0
        %2320 = vmatprep.subr.bf16.mxu0 0
        %2321 = vmatpush1.bf16.msra.mxu0 0
        %2322 = vmatprep.mubr.bf16.mxu0 0
        %2323 = vmatmul.mubr.bf16.gmra.mrb[0].mxu0 %v2285
        %v2324 = vpop.f32.mrb[0].mxu0
        %v2325 = vadd.f32 0.0, %v2324
        %v2326 = vpop.f32.mrb[0].mxu0
        %v2327 = vpop.f32.mrb[0].mxu0
        %v2328 = vpop.f32.mrb[0].mxu0
        %2329 = vdwg.mxu0
        %v2331 = vsel %vm1446, %v1638, 0
        %v2334 = vsel %vm1642, %v660, 0
        %2336 = vmatprep.subr.bf16.mxu0 0
        %2337 = vmatpush1.bf16.msra.mxu0 %v2334
        %2338 = vmatprep.subr.bf16.mxu0 0
        %2339 = vmatpush1.bf16.msra.mxu0 0
        %2340 = vmatprep.subr.bf16.mxu0 0
        %2341 = vmatpush1.bf16.msra.mxu0 0
        %2342 = vmatprep.subr.bf16.mxu0 0
        %2343 = vmatpush1.bf16.msra.mxu0 0
        %2344 = vmatprep.subr.bf16.mxu0 0
        %2345 = vmatpush1.bf16.msra.mxu0 0
        %2346 = vmatprep.subr.bf16.mxu0 0
        %2347 = vmatpush1.bf16.msra.mxu0 0
        %2348 = vmatprep.subr.bf16.mxu0 0
        %2349 = vmatpush1.bf16.msra.mxu0 0
        %2350 = vmatprep.subr.bf16.mxu0 0
        %2351 = vmatpush1.bf16.msra.mxu0 0
        %2352 = vmatprep.subr.bf16.mxu0 0
        %2353 = vmatpush1.bf16.msra.mxu0 0
        %2354 = vmatprep.subr.bf16.mxu0 0
        %2355 = vmatpush1.bf16.msra.mxu0 0
        %2356 = vmatprep.subr.bf16.mxu0 0
        %2357 = vmatpush1.bf16.msra.mxu0 0
        %2358 = vmatprep.subr.bf16.mxu0 0
        %2359 = vmatpush1.bf16.msra.mxu0 0
        %2360 = vmatprep.subr.bf16.mxu0 0
        %2361 = vmatpush1.bf16.msra.mxu0 0
        %2362 = vmatprep.subr.bf16.mxu0 0
        %2363 = vmatpush1.bf16.msra.mxu0 0
        %2364 = vmatprep.subr.bf16.mxu0 0
        %2365 = vmatpush1.bf16.msra.mxu0 0
        %2366 = vmatprep.subr.bf16.mxu0 0
        %2367 = vmatpush1.bf16.msra.mxu0 0
        %2368 = vmatprep.mubr.bf16.mxu0 0
        %2369 = vmatmul.mubr.bf16.gmra.mrb[0].mxu0 %v2331
        %v2370 = vpop.f32.mrb[0].mxu0
        %v2371 = vadd.f32 0.0, %v2370
        %v2372 = vpop.f32.mrb[0].mxu0
        %v2373 = vpop.f32.mrb[0].mxu0
        %v2374 = vpop.f32.mrb[0].mxu0
        %2375 = vdwg.mxu0
        %v2376 = vpack.c.bf16 %v1727, %v1681
        %v2377 = vpack.c.bf16 %v1819, %v1773
        %v2378 = vpack.c.bf16 %v1911, %v1865
        %v2379 = vpack.c.bf16 %v2003, %v1957
        %v2380 = vpack.c.bf16 %v2095, %v2049
        %v2381 = vpack.c.bf16 %v2187, %v2141
        %v2382 = vpack.c.bf16 %v2279, %v2233
        %v2383 = vpack.c.bf16 %v2371, %v2325
        %v2384 = vld [vmem:[%s4] sm:$0xf]
        %v2385 = vld [vmem:[%s4 + $0x4] sm:$0xf]
        %v2386 = vld [vmem:[%s4 + $0x8] sm:$0xf]
        %v2387 = vld [vmem:[%s4 + $0xc] sm:$0xf]
        %2389 = vrot.lane.b32.xlu0 %v581, 96
        %v2390 = vpop.permute.xlu0 %2389
        %2392 = vrot.lane.b32.xlu0 %v613, 96
        %v2393 = vpop.permute.xlu0 %2392
        %v2395 = vsel %vm709, %v2390, 0
        %v2398 = vsel %vm709, %v2393, 0
        %2400 = vmatprep.subr.bf16.mxu0 0
        %2401 = vmatpush1.bf16.xpose.msra.mxu0 %v2398
        %2402 = vmatprep.subr.bf16.mxu0 0
        %2403 = vmatpush1.bf16.xpose.msra.mxu0 0
        %2404 = vmatprep.subr.bf16.mxu0 0
        %2405 = vmatpush1.bf16.xpose.msra.mxu0 0
        %2406 = vmatprep.subr.bf16.mxu0 0
        %2407 = vmatpush1.bf16.xpose.msra.mxu0 0
        %2408 = vmatprep.subr.bf16.mxu0 0
        %2409 = vmatpush1.bf16.xpose.msra.mxu0 0
        %2410 = vmatprep.subr.bf16.mxu0 0
        %2411 = vmatpush1.bf16.xpose.msra.mxu0 0
        %2412 = vmatprep.subr.bf16.mxu0 0
        %2413 = vmatpush1.bf16.xpose.msra.mxu0 0
        %2414 = vmatprep.subr.bf16.mxu0 0
        %2415 = vmatpush1.bf16.xpose.msra.mxu0 0
        %2416 = vmatprep.subr.bf16.mxu0 0
        %2417 = vmatpush1.bf16.xpose.msra.mxu0 0
        %2418 = vmatprep.subr.bf16.mxu0 0
        %2419 = vmatpush1.bf16.xpose.msra.mxu0 0
        %2420 = vmatprep.subr.bf16.mxu0 0
        %2421 = vmatpush1.bf16.xpose.msra.mxu0 0
        %2422 = vmatprep.subr.bf16.mxu0 0
        %2423 = vmatpush1.bf16.xpose.msra.mxu0 0
        %2424 = vmatprep.subr.bf16.mxu0 0
        %2425 = vmatpush1.bf16.xpose.msra.mxu0 0
        %2426 = vmatprep.subr.bf16.mxu0 0
        %2427 = vmatpush1.bf16.xpose.msra.mxu0 0
        %2428 = vmatprep.subr.bf16.mxu0 0
        %2429 = vmatpush1.bf16.xpose.msra.mxu0 0
        %2430 = vmatprep.subr.bf16.mxu0 0
        %2431 = vmatpush1.bf16.xpose.msra.mxu0 0
        %2432 = vmatprep.mubr.bf16.mxu0 0
        %2433 = vmatmul.mubr.bf16.gmra.mrb[0].mxu0 %v2395
        %v2434 = vpop.f32.mrb[0].mxu0
        %v2435 = vadd.f32 %v693, %v2434
        %v2436 = vpop.f32.mrb[0].mxu0
        %v2437 = vpop.f32.mrb[0].mxu0
        %v2438 = vpop.f32.mrb[0].mxu0
        %2439 = vdwg.mxu0
        %2441 = vrot.lane.b32.xlu0 %v582, 96
        %v2442 = vpop.permute.xlu0 %2441
        %2444 = vrot.lane.b32.xlu0 %v614, 96
        %v2445 = vpop.permute.xlu0 %2444
        %v2447 = vsel %vm709, %v2442, 0
        %v2450 = vsel %vm709, %v2445, 0
        %2452 = vmatprep.subr.bf16.mxu0 0
        %2453 = vmatpush1.bf16.xpose.msra.mxu0 %v2450
        %2454 = vmatprep.subr.bf16.mxu0 0
        %2455 = vmatpush1.bf16.xpose.msra.mxu0 0
        %2456 = vmatprep.subr.bf16.mxu0 0
        %2457 = vmatpush1.bf16.xpose.msra.mxu0 0
        %2458 = vmatprep.subr.bf16.mxu0 0
        %2459 = vmatpush1.bf16.xpose.msra.mxu0 0
        %2460 = vmatprep.subr.bf16.mxu0 0
        %2461 = vmatpush1.bf16.xpose.msra.mxu0 0
        %2462 = vmatprep.subr.bf16.mxu0 0
        %2463 = vmatpush1.bf16.xpose.msra.mxu0 0
        %2464 = vmatprep.subr.bf16.mxu0 0
        %2465 = vmatpush1.bf16.xpose.msra.mxu0 0
        %2466 = vmatprep.subr.bf16.mxu0 0
        %2467 = vmatpush1.bf16.xpose.msra.mxu0 0
        %2468 = vmatprep.subr.bf16.mxu0 0
        %2469 = vmatpush1.bf16.xpose.msra.mxu0 0
        %2470 = vmatprep.subr.bf16.mxu0 0
        %2471 = vmatpush1.bf16.xpose.msra.mxu0 0
        %2472 = vmatprep.subr.bf16.mxu0 0
        %2473 = vmatpush1.bf16.xpose.msra.mxu0 0
        %2474 = vmatprep.subr.bf16.mxu0 0
        %2475 = vmatpush1.bf16.xpose.msra.mxu0 0
        %2476 = vmatprep.subr.bf16.mxu0 0
        %2477 = vmatpush1.bf16.xpose.msra.mxu0 0
        %2478 = vmatprep.subr.bf16.mxu0 0
        %2479 = vmatpush1.bf16.xpose.msra.mxu0 0
        %2480 = vmatprep.subr.bf16.mxu0 0
        %2481 = vmatpush1.bf16.xpose.msra.mxu0 0
        %2482 = vmatprep.subr.bf16.mxu0 0
        %2483 = vmatpush1.bf16.xpose.msra.mxu0 0
        %2484 = vmatprep.mubr.bf16.mxu0 0
        %2485 = vmatmul.mubr.bf16.gmra.mrb[0].mxu0 %v2447
        %v2486 = vpop.f32.mrb[0].mxu0
        %v2487 = vadd.f32 %v694, %v2486
        %v2488 = vpop.f32.mrb[0].mxu0
        %v2489 = vpop.f32.mrb[0].mxu0
        %v2490 = vpop.f32.mrb[0].mxu0
        %2491 = vdwg.mxu0
        %2493 = vrot.lane.b32.xlu0 %v583, 96
        %v2494 = vpop.permute.xlu0 %2493
        %2496 = vrot.lane.b32.xlu0 %v615, 96
        %v2497 = vpop.permute.xlu0 %2496
        %v2499 = vsel %vm709, %v2494, 0
        %v2502 = vsel %vm709, %v2497, 0
        %2504 = vmatprep.subr.bf16.mxu0 0
        %2505 = vmatpush1.bf16.xpose.msra.mxu0 %v2502
        %2506 = vmatprep.subr.bf16.mxu0 0
        %2507 = vmatpush1.bf16.xpose.msra.mxu0 0
        %2508 = vmatprep.subr.bf16.mxu0 0
        %2509 = vmatpush1.bf16.xpose.msra.mxu0 0
        %2510 = vmatprep.subr.bf16.mxu0 0
        %2511 = vmatpush1.bf16.xpose.msra.mxu0 0
        %2512 = vmatprep.subr.bf16.mxu0 0
        %2513 = vmatpush1.bf16.xpose.msra.mxu0 0
        %2514 = vmatprep.subr.bf16.mxu0 0
        %2515 = vmatpush1.bf16.xpose.msra.mxu0 0
        %2516 = vmatprep.subr.bf16.mxu0 0
        %2517 = vmatpush1.bf16.xpose.msra.mxu0 0
        %2518 = vmatprep.subr.bf16.mxu0 0
        %2519 = vmatpush1.bf16.xpose.msra.mxu0 0
        %2520 = vmatprep.subr.bf16.mxu0 0
        %2521 = vmatpush1.bf16.xpose.msra.mxu0 0
        %2522 = vmatprep.subr.bf16.mxu0 0
        %2523 = vmatpush1.bf16.xpose.msra.mxu0 0
        %2524 = vmatprep.subr.bf16.mxu0 0
        %2525 = vmatpush1.bf16.xpose.msra.mxu0 0
        %2526 = vmatprep.subr.bf16.mxu0 0
        %2527 = vmatpush1.bf16.xpose.msra.mxu0 0
        %2528 = vmatprep.subr.bf16.mxu0 0
        %2529 = vmatpush1.bf16.xpose.msra.mxu0 0
        %2530 = vmatprep.subr.bf16.mxu0 0
        %2531 = vmatpush1.bf16.xpose.msra.mxu0 0
        %2532 = vmatprep.subr.bf16.mxu0 0
        %2533 = vmatpush1.bf16.xpose.msra.mxu0 0
        %2534 = vmatprep.subr.bf16.mxu0 0
        %2535 = vmatpush1.bf16.xpose.msra.mxu0 0
        %2536 = vmatprep.mubr.bf16.mxu0 0
        %2537 = vmatmul.mubr.bf16.gmra.mrb[0].mxu0 %v2499
        %v2538 = vpop.f32.mrb[0].mxu0
        %v2539 = vadd.f32 %v695, %v2538
        %v2540 = vpop.f32.mrb[0].mxu0
        %v2541 = vpop.f32.mrb[0].mxu0
        %v2542 = vpop.f32.mrb[0].mxu0
        %2543 = vdwg.mxu0
        %2545 = vrot.lane.b32.xlu0 %v584, 96
        %v2546 = vpop.permute.xlu0 %2545
        %2548 = vrot.lane.b32.xlu0 %v616, 96
        %v2549 = vpop.permute.xlu0 %2548
        %v2551 = vsel %vm709, %v2546, 0
        %v2554 = vsel %vm709, %v2549, 0
        %2556 = vmatprep.subr.bf16.mxu0 0
        %2557 = vmatpush1.bf16.xpose.msra.mxu0 %v2554
        %2558 = vmatprep.subr.bf16.mxu0 0
        %2559 = vmatpush1.bf16.xpose.msra.mxu0 0
        %2560 = vmatprep.subr.bf16.mxu0 0
        %2561 = vmatpush1.bf16.xpose.msra.mxu0 0
        %2562 = vmatprep.subr.bf16.mxu0 0
        %2563 = vmatpush1.bf16.xpose.msra.mxu0 0
        %2564 = vmatprep.subr.bf16.mxu0 0
        %2565 = vmatpush1.bf16.xpose.msra.mxu0 0
        %2566 = vmatprep.subr.bf16.mxu0 0
        %2567 = vmatpush1.bf16.xpose.msra.mxu0 0
        %2568 = vmatprep.subr.bf16.mxu0 0
        %2569 = vmatpush1.bf16.xpose.msra.mxu0 0
        %2570 = vmatprep.subr.bf16.mxu0 0
        %2571 = vmatpush1.bf16.xpose.msra.mxu0 0
        %2572 = vmatprep.subr.bf16.mxu0 0
        %2573 = vmatpush1.bf16.xpose.msra.mxu0 0
        %2574 = vmatprep.subr.bf16.mxu0 0
        %2575 = vmatpush1.bf16.xpose.msra.mxu0 0
        %2576 = vmatprep.subr.bf16.mxu0 0
        %2577 = vmatpush1.bf16.xpose.msra.mxu0 0
        %2578 = vmatprep.subr.bf16.mxu0 0
        %2579 = vmatpush1.bf16.xpose.msra.mxu0 0
        %2580 = vmatprep.subr.bf16.mxu0 0
        %2581 = vmatpush1.bf16.xpose.msra.mxu0 0
        %2582 = vmatprep.subr.bf16.mxu0 0
        %2583 = vmatpush1.bf16.xpose.msra.mxu0 0
        %2584 = vmatprep.subr.bf16.mxu0 0
        %2585 = vmatpush1.bf16.xpose.msra.mxu0 0
        %2586 = vmatprep.subr.bf16.mxu0 0
        %2587 = vmatpush1.bf16.xpose.msra.mxu0 0
        %2588 = vmatprep.mubr.bf16.mxu0 0
        %2589 = vmatmul.mubr.bf16.gmra.mrb[0].mxu0 %v2551
        %v2590 = vpop.f32.mrb[0].mxu0
        %v2591 = vadd.f32 %v696, %v2590
        %v2592 = vpop.f32.mrb[0].mxu0
        %v2593 = vpop.f32.mrb[0].mxu0
        %v2594 = vpop.f32.mrb[0].mxu0
        %2595 = vdwg.mxu0
        %2597 = vrot.lane.b32.xlu0 %v585, 96
        %v2598 = vpop.permute.xlu0 %2597
        %2600 = vrot.lane.b32.xlu0 %v617, 96
        %v2601 = vpop.permute.xlu0 %2600
        %v2603 = vsel %vm709, %v2598, 0
        %v2606 = vsel %vm709, %v2601, 0
        %2608 = vmatprep.subr.bf16.mxu0 0
        %2609 = vmatpush1.bf16.xpose.msra.mxu0 %v2606
        %2610 = vmatprep.subr.bf16.mxu0 0
        %2611 = vmatpush1.bf16.xpose.msra.mxu0 0
        %2612 = vmatprep.subr.bf16.mxu0 0
        %2613 = vmatpush1.bf16.xpose.msra.mxu0 0
        %2614 = vmatprep.subr.bf16.mxu0 0
        %2615 = vmatpush1.bf16.xpose.msra.mxu0 0
        %2616 = vmatprep.subr.bf16.mxu0 0
        %2617 = vmatpush1.bf16.xpose.msra.mxu0 0
        %2618 = vmatprep.subr.bf16.mxu0 0
        %2619 = vmatpush1.bf16.xpose.msra.mxu0 0
        %2620 = vmatprep.subr.bf16.mxu0 0
        %2621 = vmatpush1.bf16.xpose.msra.mxu0 0
        %2622 = vmatprep.subr.bf16.mxu0 0
        %2623 = vmatpush1.bf16.xpose.msra.mxu0 0
        %2624 = vmatprep.subr.bf16.mxu0 0
        %2625 = vmatpush1.bf16.xpose.msra.mxu0 0
        %2626 = vmatprep.subr.bf16.mxu0 0
        %2627 = vmatpush1.bf16.xpose.msra.mxu0 0
        %2628 = vmatprep.subr.bf16.mxu0 0
        %2629 = vmatpush1.bf16.xpose.msra.mxu0 0
        %2630 = vmatprep.subr.bf16.mxu0 0
        %2631 = vmatpush1.bf16.xpose.msra.mxu0 0
        %2632 = vmatprep.subr.bf16.mxu0 0
        %2633 = vmatpush1.bf16.xpose.msra.mxu0 0
        %2634 = vmatprep.subr.bf16.mxu0 0
        %2635 = vmatpush1.bf16.xpose.msra.mxu0 0
        %2636 = vmatprep.subr.bf16.mxu0 0
        %2637 = vmatpush1.bf16.xpose.msra.mxu0 0
        %2638 = vmatprep.subr.bf16.mxu0 0
        %2639 = vmatpush1.bf16.xpose.msra.mxu0 0
        %2640 = vmatprep.mubr.bf16.mxu0 0
        %2641 = vmatmul.mubr.bf16.gmra.mrb[0].mxu0 %v2603
        %v2642 = vpop.f32.mrb[0].mxu0
        %v2643 = vadd.f32 %v697, %v2642
        %v2644 = vpop.f32.mrb[0].mxu0
        %v2645 = vpop.f32.mrb[0].mxu0
        %v2646 = vpop.f32.mrb[0].mxu0
        %2647 = vdwg.mxu0
        %2649 = vrot.lane.b32.xlu0 %v586, 96
        %v2650 = vpop.permute.xlu0 %2649
        %2652 = vrot.lane.b32.xlu0 %v618, 96
        %v2653 = vpop.permute.xlu0 %2652
        %v2655 = vsel %vm709, %v2650, 0
        %v2658 = vsel %vm709, %v2653, 0
        %2660 = vmatprep.subr.bf16.mxu0 0
        %2661 = vmatpush1.bf16.xpose.msra.mxu0 %v2658
        %2662 = vmatprep.subr.bf16.mxu0 0
        %2663 = vmatpush1.bf16.xpose.msra.mxu0 0
        %2664 = vmatprep.subr.bf16.mxu0 0
        %2665 = vmatpush1.bf16.xpose.msra.mxu0 0
        %2666 = vmatprep.subr.bf16.mxu0 0
        %2667 = vmatpush1.bf16.xpose.msra.mxu0 0
        %2668 = vmatprep.subr.bf16.mxu0 0
        %2669 = vmatpush1.bf16.xpose.msra.mxu0 0
        %2670 = vmatprep.subr.bf16.mxu0 0
        %2671 = vmatpush1.bf16.xpose.msra.mxu0 0
        %2672 = vmatprep.subr.bf16.mxu0 0
        %2673 = vmatpush1.bf16.xpose.msra.mxu0 0
        %2674 = vmatprep.subr.bf16.mxu0 0
        %2675 = vmatpush1.bf16.xpose.msra.mxu0 0
        %2676 = vmatprep.subr.bf16.mxu0 0
        %2677 = vmatpush1.bf16.xpose.msra.mxu0 0
        %2678 = vmatprep.subr.bf16.mxu0 0
        %2679 = vmatpush1.bf16.xpose.msra.mxu0 0
        %2680 = vmatprep.subr.bf16.mxu0 0
        %2681 = vmatpush1.bf16.xpose.msra.mxu0 0
        %2682 = vmatprep.subr.bf16.mxu0 0
        %2683 = vmatpush1.bf16.xpose.msra.mxu0 0
        %2684 = vmatprep.subr.bf16.mxu0 0
        %2685 = vmatpush1.bf16.xpose.msra.mxu0 0
        %2686 = vmatprep.subr.bf16.mxu0 0
        %2687 = vmatpush1.bf16.xpose.msra.mxu0 0
        %2688 = vmatprep.subr.bf16.mxu0 0
        %2689 = vmatpush1.bf16.xpose.msra.mxu0 0
        %2690 = vmatprep.subr.bf16.mxu0 0
        %2691 = vmatpush1.bf16.xpose.msra.mxu0 0
        %2692 = vmatprep.mubr.bf16.mxu0 0
        %2693 = vmatmul.mubr.bf16.gmra.mrb[0].mxu0 %v2655
        %v2694 = vpop.f32.mrb[0].mxu0
        %v2695 = vadd.f32 %v698, %v2694
        %v2696 = vpop.f32.mrb[0].mxu0
        %v2697 = vpop.f32.mrb[0].mxu0
        %v2698 = vpop.f32.mrb[0].mxu0
        %2699 = vdwg.mxu0
        %2701 = vrot.lane.b32.xlu0 %v587, 96
        %v2702 = vpop.permute.xlu0 %2701
        %2704 = vrot.lane.b32.xlu0 %v619, 96
        %v2705 = vpop.permute.xlu0 %2704
        %v2707 = vsel %vm709, %v2702, 0
        %v2710 = vsel %vm709, %v2705, 0
        %2712 = vmatprep.subr.bf16.mxu0 0
        %2713 = vmatpush1.bf16.xpose.msra.mxu0 %v2710
        %2714 = vmatprep.subr.bf16.mxu0 0
        %2715 = vmatpush1.bf16.xpose.msra.mxu0 0
        %2716 = vmatprep.subr.bf16.mxu0 0
        %2717 = vmatpush1.bf16.xpose.msra.mxu0 0
        %2718 = vmatprep.subr.bf16.mxu0 0
        %2719 = vmatpush1.bf16.xpose.msra.mxu0 0
        %2720 = vmatprep.subr.bf16.mxu0 0
        %2721 = vmatpush1.bf16.xpose.msra.mxu0 0
        %2722 = vmatprep.subr.bf16.mxu0 0
        %2723 = vmatpush1.bf16.xpose.msra.mxu0 0
        %2724 = vmatprep.subr.bf16.mxu0 0
        %2725 = vmatpush1.bf16.xpose.msra.mxu0 0
        %2726 = vmatprep.subr.bf16.mxu0 0
        %2727 = vmatpush1.bf16.xpose.msra.mxu0 0
        %2728 = vmatprep.subr.bf16.mxu0 0
        %2729 = vmatpush1.bf16.xpose.msra.mxu0 0
        %2730 = vmatprep.subr.bf16.mxu0 0
        %2731 = vmatpush1.bf16.xpose.msra.mxu0 0
        %2732 = vmatprep.subr.bf16.mxu0 0
        %2733 = vmatpush1.bf16.xpose.msra.mxu0 0
        %2734 = vmatprep.subr.bf16.mxu0 0
        %2735 = vmatpush1.bf16.xpose.msra.mxu0 0
        %2736 = vmatprep.subr.bf16.mxu0 0
        %2737 = vmatpush1.bf16.xpose.msra.mxu0 0
        %2738 = vmatprep.subr.bf16.mxu0 0
        %2739 = vmatpush1.bf16.xpose.msra.mxu0 0
        %2740 = vmatprep.subr.bf16.mxu0 0
        %2741 = vmatpush1.bf16.xpose.msra.mxu0 0
        %2742 = vmatprep.subr.bf16.mxu0 0
        %2743 = vmatpush1.bf16.xpose.msra.mxu0 0
        %2744 = vmatprep.mubr.bf16.mxu0 0
        %2745 = vmatmul.mubr.bf16.gmra.mrb[0].mxu0 %v2707
        %v2746 = vpop.f32.mrb[0].mxu0
        %v2747 = vadd.f32 %v699, %v2746
        %v2748 = vpop.f32.mrb[0].mxu0
        %v2749 = vpop.f32.mrb[0].mxu0
        %v2750 = vpop.f32.mrb[0].mxu0
        %2751 = vdwg.mxu0
        %2753 = vrot.lane.b32.xlu0 %v588, 96
        %v2754 = vpop.permute.xlu0 %2753
        %2756 = vrot.lane.b32.xlu0 %v620, 96
        %v2757 = vpop.permute.xlu0 %2756
        %v2759 = vsel %vm709, %v2754, 0
        %v2762 = vsel %vm709, %v2757, 0
        %2764 = vmatprep.subr.bf16.mxu0 0
        %2765 = vmatpush1.bf16.xpose.msra.mxu0 %v2762
        %2766 = vmatprep.subr.bf16.mxu0 0
        %2767 = vmatpush1.bf16.xpose.msra.mxu0 0
        %2768 = vmatprep.subr.bf16.mxu0 0
        %2769 = vmatpush1.bf16.xpose.msra.mxu0 0
        %2770 = vmatprep.subr.bf16.mxu0 0
        %2771 = vmatpush1.bf16.xpose.msra.mxu0 0
        %2772 = vmatprep.subr.bf16.mxu0 0
        %2773 = vmatpush1.bf16.xpose.msra.mxu0 0
        %2774 = vmatprep.subr.bf16.mxu0 0
        %2775 = vmatpush1.bf16.xpose.msra.mxu0 0
        %2776 = vmatprep.subr.bf16.mxu0 0
        %2777 = vmatpush1.bf16.xpose.msra.mxu0 0
        %2778 = vmatprep.subr.bf16.mxu0 0
        %2779 = vmatpush1.bf16.xpose.msra.mxu0 0
        %2780 = vmatprep.subr.bf16.mxu0 0
        %2781 = vmatpush1.bf16.xpose.msra.mxu0 0
        %2782 = vmatprep.subr.bf16.mxu0 0
        %2783 = vmatpush1.bf16.xpose.msra.mxu0 0
        %2784 = vmatprep.subr.bf16.mxu0 0
        %2785 = vmatpush1.bf16.xpose.msra.mxu0 0
        %2786 = vmatprep.subr.bf16.mxu0 0
        %2787 = vmatpush1.bf16.xpose.msra.mxu0 0
        %2788 = vmatprep.subr.bf16.mxu0 0
        %2789 = vmatpush1.bf16.xpose.msra.mxu0 0
        %2790 = vmatprep.subr.bf16.mxu0 0
        %2791 = vmatpush1.bf16.xpose.msra.mxu0 0
        %2792 = vmatprep.subr.bf16.mxu0 0
        %2793 = vmatpush1.bf16.xpose.msra.mxu0 0
        %2794 = vmatprep.subr.bf16.mxu0 0
        %2795 = vmatpush1.bf16.xpose.msra.mxu0 0
        %2796 = vmatprep.mubr.bf16.mxu0 0
        %2797 = vmatmul.mubr.bf16.gmra.mrb[0].mxu0 %v2759
        %v2798 = vpop.f32.mrb[0].mxu0
        %v2799 = vadd.f32 %v700, %v2798
        %v2800 = vpop.f32.mrb[0].mxu0
        %v2801 = vpop.f32.mrb[0].mxu0
        %v2802 = vpop.f32.mrb[0].mxu0
        %2803 = vdwg.mxu0
        %2805 = vrot.lane.b32.xlu0 %v589, 96
        %v2806 = vpop.permute.xlu0 %2805
        %2808 = vrot.lane.b32.xlu0 %v621, 96
        %v2809 = vpop.permute.xlu0 %2808
        %v2811 = vsel %vm709, %v2806, 0
        %v2814 = vsel %vm709, %v2809, 0
        %2816 = vmatprep.subr.bf16.mxu0 0
        %2817 = vmatpush1.bf16.xpose.msra.mxu0 %v2814
        %2818 = vmatprep.subr.bf16.mxu0 0
        %2819 = vmatpush1.bf16.xpose.msra.mxu0 0
        %2820 = vmatprep.subr.bf16.mxu0 0
        %2821 = vmatpush1.bf16.xpose.msra.mxu0 0
        %2822 = vmatprep.subr.bf16.mxu0 0
        %2823 = vmatpush1.bf16.xpose.msra.mxu0 0
        %2824 = vmatprep.subr.bf16.mxu0 0
        %2825 = vmatpush1.bf16.xpose.msra.mxu0 0
        %2826 = vmatprep.subr.bf16.mxu0 0
        %2827 = vmatpush1.bf16.xpose.msra.mxu0 0
        %2828 = vmatprep.subr.bf16.mxu0 0
        %2829 = vmatpush1.bf16.xpose.msra.mxu0 0
        %2830 = vmatprep.subr.bf16.mxu0 0
        %2831 = vmatpush1.bf16.xpose.msra.mxu0 0
        %2832 = vmatprep.subr.bf16.mxu0 0
        %2833 = vmatpush1.bf16.xpose.msra.mxu0 0
        %2834 = vmatprep.subr.bf16.mxu0 0
        %2835 = vmatpush1.bf16.xpose.msra.mxu0 0
        %2836 = vmatprep.subr.bf16.mxu0 0
        %2837 = vmatpush1.bf16.xpose.msra.mxu0 0
        %2838 = vmatprep.subr.bf16.mxu0 0
        %2839 = vmatpush1.bf16.xpose.msra.mxu0 0
        %2840 = vmatprep.subr.bf16.mxu0 0
        %2841 = vmatpush1.bf16.xpose.msra.mxu0 0
        %2842 = vmatprep.subr.bf16.mxu0 0
        %2843 = vmatpush1.bf16.xpose.msra.mxu0 0
        %2844 = vmatprep.subr.bf16.mxu0 0
        %2845 = vmatpush1.bf16.xpose.msra.mxu0 0
        %2846 = vmatprep.subr.bf16.mxu0 0
        %2847 = vmatpush1.bf16.xpose.msra.mxu0 0
        %2848 = vmatprep.mubr.bf16.mxu0 0
        %2849 = vmatmul.mubr.bf16.gmra.mrb[0].mxu0 %v2811
        %v2850 = vpop.f32.mrb[0].mxu0
        %v2851 = vadd.f32 %v701, %v2850
        %v2852 = vpop.f32.mrb[0].mxu0
        %v2853 = vpop.f32.mrb[0].mxu0
        %v2854 = vpop.f32.mrb[0].mxu0
        %2855 = vdwg.mxu0
        %2857 = vrot.lane.b32.xlu0 %v590, 96
        %v2858 = vpop.permute.xlu0 %2857
        %2860 = vrot.lane.b32.xlu0 %v622, 96
        %v2861 = vpop.permute.xlu0 %2860
        %v2863 = vsel %vm709, %v2858, 0
        %v2866 = vsel %vm709, %v2861, 0
        %2868 = vmatprep.subr.bf16.mxu0 0
        %2869 = vmatpush1.bf16.xpose.msra.mxu0 %v2866
        %2870 = vmatprep.subr.bf16.mxu0 0
        %2871 = vmatpush1.bf16.xpose.msra.mxu0 0
        %2872 = vmatprep.subr.bf16.mxu0 0
        %2873 = vmatpush1.bf16.xpose.msra.mxu0 0
        %2874 = vmatprep.subr.bf16.mxu0 0
        %2875 = vmatpush1.bf16.xpose.msra.mxu0 0
        %2876 = vmatprep.subr.bf16.mxu0 0
        %2877 = vmatpush1.bf16.xpose.msra.mxu0 0
        %2878 = vmatprep.subr.bf16.mxu0 0
        %2879 = vmatpush1.bf16.xpose.msra.mxu0 0
        %2880 = vmatprep.subr.bf16.mxu0 0
        %2881 = vmatpush1.bf16.xpose.msra.mxu0 0
        %2882 = vmatprep.subr.bf16.mxu0 0
        %2883 = vmatpush1.bf16.xpose.msra.mxu0 0
        %2884 = vmatprep.subr.bf16.mxu0 0
        %2885 = vmatpush1.bf16.xpose.msra.mxu0 0
        %2886 = vmatprep.subr.bf16.mxu0 0
        %2887 = vmatpush1.bf16.xpose.msra.mxu0 0
        %2888 = vmatprep.subr.bf16.mxu0 0
        %2889 = vmatpush1.bf16.xpose.msra.mxu0 0
        %2890 = vmatprep.subr.bf16.mxu0 0
        %2891 = vmatpush1.bf16.xpose.msra.mxu0 0
        %2892 = vmatprep.subr.bf16.mxu0 0
        %2893 = vmatpush1.bf16.xpose.msra.mxu0 0
        %2894 = vmatprep.subr.bf16.mxu0 0
        %2895 = vmatpush1.bf16.xpose.msra.mxu0 0
        %2896 = vmatprep.subr.bf16.mxu0 0
        %2897 = vmatpush1.bf16.xpose.msra.mxu0 0
        %2898 = vmatprep.subr.bf16.mxu0 0
        %2899 = vmatpush1.bf16.xpose.msra.mxu0 0
        %2900 = vmatprep.mubr.bf16.mxu0 0
        %2901 = vmatmul.mubr.bf16.gmra.mrb[0].mxu0 %v2863
        %v2902 = vpop.f32.mrb[0].mxu0
        %v2903 = vadd.f32 %v702, %v2902
        %v2904 = vpop.f32.mrb[0].mxu0
        %v2905 = vpop.f32.mrb[0].mxu0
        %v2906 = vpop.f32.mrb[0].mxu0
        %2907 = vdwg.mxu0
        %2909 = vrot.lane.b32.xlu0 %v591, 96
        %v2910 = vpop.permute.xlu0 %2909
        %2912 = vrot.lane.b32.xlu0 %v623, 96
        %v2913 = vpop.permute.xlu0 %2912
        %v2915 = vsel %vm709, %v2910, 0
        %v2918 = vsel %vm709, %v2913, 0
        %2920 = vmatprep.subr.bf16.mxu0 0
        %2921 = vmatpush1.bf16.xpose.msra.mxu0 %v2918
        %2922 = vmatprep.subr.bf16.mxu0 0
        %2923 = vmatpush1.bf16.xpose.msra.mxu0 0
        %2924 = vmatprep.subr.bf16.mxu0 0
        %2925 = vmatpush1.bf16.xpose.msra.mxu0 0
        %2926 = vmatprep.subr.bf16.mxu0 0
        %2927 = vmatpush1.bf16.xpose.msra.mxu0 0
        %2928 = vmatprep.subr.bf16.mxu0 0
        %2929 = vmatpush1.bf16.xpose.msra.mxu0 0
        %2930 = vmatprep.subr.bf16.mxu0 0
        %2931 = vmatpush1.bf16.xpose.msra.mxu0 0
        %2932 = vmatprep.subr.bf16.mxu0 0
        %2933 = vmatpush1.bf16.xpose.msra.mxu0 0
        %2934 = vmatprep.subr.bf16.mxu0 0
        %2935 = vmatpush1.bf16.xpose.msra.mxu0 0
        %2936 = vmatprep.subr.bf16.mxu0 0
        %2937 = vmatpush1.bf16.xpose.msra.mxu0 0
        %2938 = vmatprep.subr.bf16.mxu0 0
        %2939 = vmatpush1.bf16.xpose.msra.mxu0 0
        %2940 = vmatprep.subr.bf16.mxu0 0
        %2941 = vmatpush1.bf16.xpose.msra.mxu0 0
        %2942 = vmatprep.subr.bf16.mxu0 0
        %2943 = vmatpush1.bf16.xpose.msra.mxu0 0
        %2944 = vmatprep.subr.bf16.mxu0 0
        %2945 = vmatpush1.bf16.xpose.msra.mxu0 0
        %2946 = vmatprep.subr.bf16.mxu0 0
        %2947 = vmatpush1.bf16.xpose.msra.mxu0 0
        %2948 = vmatprep.subr.bf16.mxu0 0
        %2949 = vmatpush1.bf16.xpose.msra.mxu0 0
        %2950 = vmatprep.subr.bf16.mxu0 0
        %2951 = vmatpush1.bf16.xpose.msra.mxu0 0
        %2952 = vmatprep.mubr.bf16.mxu0 0
        %2953 = vmatmul.mubr.bf16.gmra.mrb[0].mxu0 %v2915
        %v2954 = vpop.f32.mrb[0].mxu0
        %v2955 = vadd.f32 %v703, %v2954
        %v2956 = vpop.f32.mrb[0].mxu0
        %v2957 = vpop.f32.mrb[0].mxu0
        %v2958 = vpop.f32.mrb[0].mxu0
        %2959 = vdwg.mxu0
        %2961 = vrot.lane.b32.xlu0 %v592, 96
        %v2962 = vpop.permute.xlu0 %2961
        %2964 = vrot.lane.b32.xlu0 %v624, 96
        %v2965 = vpop.permute.xlu0 %2964
        %v2967 = vsel %vm709, %v2962, 0
        %v2970 = vsel %vm709, %v2965, 0
        %2972 = vmatprep.subr.bf16.mxu0 0
        %2973 = vmatpush1.bf16.xpose.msra.mxu0 %v2970
        %2974 = vmatprep.subr.bf16.mxu0 0
        %2975 = vmatpush1.bf16.xpose.msra.mxu0 0
        %2976 = vmatprep.subr.bf16.mxu0 0
        %2977 = vmatpush1.bf16.xpose.msra.mxu0 0
        %2978 = vmatprep.subr.bf16.mxu0 0
        %2979 = vmatpush1.bf16.xpose.msra.mxu0 0
        %2980 = vmatprep.subr.bf16.mxu0 0
        %2981 = vmatpush1.bf16.xpose.msra.mxu0 0
        %2982 = vmatprep.subr.bf16.mxu0 0
        %2983 = vmatpush1.bf16.xpose.msra.mxu0 0
        %2984 = vmatprep.subr.bf16.mxu0 0
        %2985 = vmatpush1.bf16.xpose.msra.mxu0 0
        %2986 = vmatprep.subr.bf16.mxu0 0
        %2987 = vmatpush1.bf16.xpose.msra.mxu0 0
        %2988 = vmatprep.subr.bf16.mxu0 0
        %2989 = vmatpush1.bf16.xpose.msra.mxu0 0
        %2990 = vmatprep.subr.bf16.mxu0 0
        %2991 = vmatpush1.bf16.xpose.msra.mxu0 0
        %2992 = vmatprep.subr.bf16.mxu0 0
        %2993 = vmatpush1.bf16.xpose.msra.mxu0 0
        %2994 = vmatprep.subr.bf16.mxu0 0
        %2995 = vmatpush1.bf16.xpose.msra.mxu0 0
        %2996 = vmatprep.subr.bf16.mxu0 0
        %2997 = vmatpush1.bf16.xpose.msra.mxu0 0
        %2998 = vmatprep.subr.bf16.mxu0 0
        %2999 = vmatpush1.bf16.xpose.msra.mxu0 0
        %3000 = vmatprep.subr.bf16.mxu0 0
        %3001 = vmatpush1.bf16.xpose.msra.mxu0 0
        %3002 = vmatprep.subr.bf16.mxu0 0
        %3003 = vmatpush1.bf16.xpose.msra.mxu0 0
        %3004 = vmatprep.mubr.bf16.mxu0 0
        %3005 = vmatmul.mubr.bf16.gmra.mrb[0].mxu0 %v2967
        %v3006 = vpop.f32.mrb[0].mxu0
        %v3007 = vadd.f32 %v704, %v3006
        %v3008 = vpop.f32.mrb[0].mxu0
        %v3009 = vpop.f32.mrb[0].mxu0
        %v3010 = vpop.f32.mrb[0].mxu0
        %3011 = vdwg.mxu0
        %3013 = vrot.lane.b32.xlu0 %v593, 96
        %v3014 = vpop.permute.xlu0 %3013
        %3016 = vrot.lane.b32.xlu0 %v625, 96
        %v3017 = vpop.permute.xlu0 %3016
        %v3019 = vsel %vm709, %v3014, 0
        %v3022 = vsel %vm709, %v3017, 0
        %3024 = vmatprep.subr.bf16.mxu0 0
        %3025 = vmatpush1.bf16.xpose.msra.mxu0 %v3022
        %3026 = vmatprep.subr.bf16.mxu0 0
        %3027 = vmatpush1.bf16.xpose.msra.mxu0 0
        %3028 = vmatprep.subr.bf16.mxu0 0
        %3029 = vmatpush1.bf16.xpose.msra.mxu0 0
        %3030 = vmatprep.subr.bf16.mxu0 0
        %3031 = vmatpush1.bf16.xpose.msra.mxu0 0
        %3032 = vmatprep.subr.bf16.mxu0 0
        %3033 = vmatpush1.bf16.xpose.msra.mxu0 0
        %3034 = vmatprep.subr.bf16.mxu0 0
        %3035 = vmatpush1.bf16.xpose.msra.mxu0 0
        %3036 = vmatprep.subr.bf16.mxu0 0
        %3037 = vmatpush1.bf16.xpose.msra.mxu0 0
        %3038 = vmatprep.subr.bf16.mxu0 0
        %3039 = vmatpush1.bf16.xpose.msra.mxu0 0
        %3040 = vmatprep.subr.bf16.mxu0 0
        %3041 = vmatpush1.bf16.xpose.msra.mxu0 0
        %3042 = vmatprep.subr.bf16.mxu0 0
        %3043 = vmatpush1.bf16.xpose.msra.mxu0 0
        %3044 = vmatprep.subr.bf16.mxu0 0
        %3045 = vmatpush1.bf16.xpose.msra.mxu0 0
        %3046 = vmatprep.subr.bf16.mxu0 0
        %3047 = vmatpush1.bf16.xpose.msra.mxu0 0
        %3048 = vmatprep.subr.bf16.mxu0 0
        %3049 = vmatpush1.bf16.xpose.msra.mxu0 0
        %3050 = vmatprep.subr.bf16.mxu0 0
        %3051 = vmatpush1.bf16.xpose.msra.mxu0 0
        %3052 = vmatprep.subr.bf16.mxu0 0
        %3053 = vmatpush1.bf16.xpose.msra.mxu0 0
        %3054 = vmatprep.subr.bf16.mxu0 0
        %3055 = vmatpush1.bf16.xpose.msra.mxu0 0
        %3056 = vmatprep.mubr.bf16.mxu0 0
        %3057 = vmatmul.mubr.bf16.gmra.mrb[0].mxu0 %v3019
        %v3058 = vpop.f32.mrb[0].mxu0
        %v3059 = vadd.f32 %v705, %v3058
        %v3060 = vpop.f32.mrb[0].mxu0
        %v3061 = vpop.f32.mrb[0].mxu0
        %v3062 = vpop.f32.mrb[0].mxu0
        %3063 = vdwg.mxu0
        %3065 = vrot.lane.b32.xlu0 %v594, 96
        %v3066 = vpop.permute.xlu0 %3065
        %3068 = vrot.lane.b32.xlu0 %v626, 96
        %v3069 = vpop.permute.xlu0 %3068
        %v3071 = vsel %vm709, %v3066, 0
        %v3074 = vsel %vm709, %v3069, 0
        %3076 = vmatprep.subr.bf16.mxu0 0
        %3077 = vmatpush1.bf16.xpose.msra.mxu0 %v3074
        %3078 = vmatprep.subr.bf16.mxu0 0
        %3079 = vmatpush1.bf16.xpose.msra.mxu0 0
        %3080 = vmatprep.subr.bf16.mxu0 0
        %3081 = vmatpush1.bf16.xpose.msra.mxu0 0
        %3082 = vmatprep.subr.bf16.mxu0 0
        %3083 = vmatpush1.bf16.xpose.msra.mxu0 0
        %3084 = vmatprep.subr.bf16.mxu0 0
        %3085 = vmatpush1.bf16.xpose.msra.mxu0 0
        %3086 = vmatprep.subr.bf16.mxu0 0
        %3087 = vmatpush1.bf16.xpose.msra.mxu0 0
        %3088 = vmatprep.subr.bf16.mxu0 0
        %3089 = vmatpush1.bf16.xpose.msra.mxu0 0
        %3090 = vmatprep.subr.bf16.mxu0 0
        %3091 = vmatpush1.bf16.xpose.msra.mxu0 0
        %3092 = vmatprep.subr.bf16.mxu0 0
        %3093 = vmatpush1.bf16.xpose.msra.mxu0 0
        %3094 = vmatprep.subr.bf16.mxu0 0
        %3095 = vmatpush1.bf16.xpose.msra.mxu0 0
        %3096 = vmatprep.subr.bf16.mxu0 0
        %3097 = vmatpush1.bf16.xpose.msra.mxu0 0
        %3098 = vmatprep.subr.bf16.mxu0 0
        %3099 = vmatpush1.bf16.xpose.msra.mxu0 0
        %3100 = vmatprep.subr.bf16.mxu0 0
        %3101 = vmatpush1.bf16.xpose.msra.mxu0 0
        %3102 = vmatprep.subr.bf16.mxu0 0
        %3103 = vmatpush1.bf16.xpose.msra.mxu0 0
        %3104 = vmatprep.subr.bf16.mxu0 0
        %3105 = vmatpush1.bf16.xpose.msra.mxu0 0
        %3106 = vmatprep.subr.bf16.mxu0 0
        %3107 = vmatpush1.bf16.xpose.msra.mxu0 0
        %3108 = vmatprep.mubr.bf16.mxu0 0
        %3109 = vmatmul.mubr.bf16.gmra.mrb[0].mxu0 %v3071
        %v3110 = vpop.f32.mrb[0].mxu0
        %v3111 = vadd.f32 %v706, %v3110
        %v3112 = vpop.f32.mrb[0].mxu0
        %v3113 = vpop.f32.mrb[0].mxu0
        %v3114 = vpop.f32.mrb[0].mxu0
        %3115 = vdwg.mxu0
        %3117 = vrot.lane.b32.xlu0 %v595, 96
        %v3118 = vpop.permute.xlu0 %3117
        %3120 = vrot.lane.b32.xlu0 %v627, 96
        %v3121 = vpop.permute.xlu0 %3120
        %v3123 = vsel %vm709, %v3118, 0
        %v3126 = vsel %vm709, %v3121, 0
        %3128 = vmatprep.subr.bf16.mxu0 0
        %3129 = vmatpush1.bf16.xpose.msra.mxu0 %v3126
        %3130 = vmatprep.subr.bf16.mxu0 0
        %3131 = vmatpush1.bf16.xpose.msra.mxu0 0
        %3132 = vmatprep.subr.bf16.mxu0 0
        %3133 = vmatpush1.bf16.xpose.msra.mxu0 0
        %3134 = vmatprep.subr.bf16.mxu0 0
        %3135 = vmatpush1.bf16.xpose.msra.mxu0 0
        %3136 = vmatprep.subr.bf16.mxu0 0
        %3137 = vmatpush1.bf16.xpose.msra.mxu0 0
        %3138 = vmatprep.subr.bf16.mxu0 0
        %3139 = vmatpush1.bf16.xpose.msra.mxu0 0
        %3140 = vmatprep.subr.bf16.mxu0 0
        %3141 = vmatpush1.bf16.xpose.msra.mxu0 0
        %3142 = vmatprep.subr.bf16.mxu0 0
        %3143 = vmatpush1.bf16.xpose.msra.mxu0 0
        %3144 = vmatprep.subr.bf16.mxu0 0
        %3145 = vmatpush1.bf16.xpose.msra.mxu0 0
        %3146 = vmatprep.subr.bf16.mxu0 0
        %3147 = vmatpush1.bf16.xpose.msra.mxu0 0
        %3148 = vmatprep.subr.bf16.mxu0 0
        %3149 = vmatpush1.bf16.xpose.msra.mxu0 0
        %3150 = vmatprep.subr.bf16.mxu0 0
        %3151 = vmatpush1.bf16.xpose.msra.mxu0 0
        %3152 = vmatprep.subr.bf16.mxu0 0
        %3153 = vmatpush1.bf16.xpose.msra.mxu0 0
        %3154 = vmatprep.subr.bf16.mxu0 0
        %3155 = vmatpush1.bf16.xpose.msra.mxu0 0
        %3156 = vmatprep.subr.bf16.mxu0 0
        %3157 = vmatpush1.bf16.xpose.msra.mxu0 0
        %3158 = vmatprep.subr.bf16.mxu0 0
        %3159 = vmatpush1.bf16.xpose.msra.mxu0 0
        %3160 = vmatprep.mubr.bf16.mxu0 0
        %3161 = vmatmul.mubr.bf16.gmra.mrb[0].mxu0 %v3123
        %v3162 = vpop.f32.mrb[0].mxu0
        %v3163 = vadd.f32 %v707, %v3162
        %v3164 = vpop.f32.mrb[0].mxu0
        %v3165 = vpop.f32.mrb[0].mxu0
        %v3166 = vpop.f32.mrb[0].mxu0
        %3167 = vdwg.mxu0
        %3169 = vrot.lane.b32.xlu0 %v596, 96
        %v3170 = vpop.permute.xlu0 %3169
        %3172 = vrot.lane.b32.xlu0 %v628, 96
        %v3173 = vpop.permute.xlu0 %3172
        %v3175 = vsel %vm709, %v3170, 0
        %v3178 = vsel %vm709, %v3173, 0
        %3180 = vmatprep.subr.bf16.mxu0 0
        %3181 = vmatpush1.bf16.xpose.msra.mxu0 %v3178
        %3182 = vmatprep.subr.bf16.mxu0 0
        %3183 = vmatpush1.bf16.xpose.msra.mxu0 0
        %3184 = vmatprep.subr.bf16.mxu0 0
        %3185 = vmatpush1.bf16.xpose.msra.mxu0 0
        %3186 = vmatprep.subr.bf16.mxu0 0
        %3187 = vmatpush1.bf16.xpose.msra.mxu0 0
        %3188 = vmatprep.subr.bf16.mxu0 0
        %3189 = vmatpush1.bf16.xpose.msra.mxu0 0
        %3190 = vmatprep.subr.bf16.mxu0 0
        %3191 = vmatpush1.bf16.xpose.msra.mxu0 0
        %3192 = vmatprep.subr.bf16.mxu0 0
        %3193 = vmatpush1.bf16.xpose.msra.mxu0 0
        %3194 = vmatprep.subr.bf16.mxu0 0
        %3195 = vmatpush1.bf16.xpose.msra.mxu0 0
        %3196 = vmatprep.subr.bf16.mxu0 0
        %3197 = vmatpush1.bf16.xpose.msra.mxu0 0
        %3198 = vmatprep.subr.bf16.mxu0 0
        %3199 = vmatpush1.bf16.xpose.msra.mxu0 0
        %3200 = vmatprep.subr.bf16.mxu0 0
        %3201 = vmatpush1.bf16.xpose.msra.mxu0 0
        %3202 = vmatprep.subr.bf16.mxu0 0
        %3203 = vmatpush1.bf16.xpose.msra.mxu0 0
        %3204 = vmatprep.subr.bf16.mxu0 0
        %3205 = vmatpush1.bf16.xpose.msra.mxu0 0
        %3206 = vmatprep.subr.bf16.mxu0 0
        %3207 = vmatpush1.bf16.xpose.msra.mxu0 0
        %3208 = vmatprep.subr.bf16.mxu0 0
        %3209 = vmatpush1.bf16.xpose.msra.mxu0 0
        %3210 = vmatprep.subr.bf16.mxu0 0
        %3211 = vmatpush1.bf16.xpose.msra.mxu0 0
        %3212 = vmatprep.mubr.bf16.mxu0 0
        %3213 = vmatmul.mubr.bf16.gmra.mrb[0].mxu0 %v3175
        %v3214 = vpop.f32.mrb[0].mxu0
        %v3215 = vadd.f32 %v708, %v3214
        %v3216 = vpop.f32.mrb[0].mxu0
        %v3217 = vpop.f32.mrb[0].mxu0
        %v3218 = vpop.f32.mrb[0].mxu0
        %3219 = vdwg.mxu0
        %v3220 = vsel %vm1446, %v2435, -inf
        %3221 = vmax.xlane.f32.xlu0 %v3220
        %v3222 = vpop.xlane.xlu0 %3221
        %v3223 = vsel %vm1446, %v2487, -inf
        %3224 = vmax.xlane.f32.xlu0 %v3223
        %v3225 = vpop.xlane.xlu0 %3224
        %v3226 = vsel %vm1446, %v2539, -inf
        %3227 = vmax.xlane.f32.xlu0 %v3226
        %v3228 = vpop.xlane.xlu0 %3227
        %v3229 = vsel %vm1446, %v2591, -inf
        %3230 = vmax.xlane.f32.xlu0 %v3229
        %v3231 = vpop.xlane.xlu0 %3230
        %v3232 = vsel %vm1446, %v2643, -inf
        %3233 = vmax.xlane.f32.xlu0 %v3232
        %v3234 = vpop.xlane.xlu0 %3233
        %v3235 = vsel %vm1446, %v2695, -inf
        %3236 = vmax.xlane.f32.xlu0 %v3235
        %v3237 = vpop.xlane.xlu0 %3236
        %v3238 = vsel %vm1446, %v2747, -inf
        %3239 = vmax.xlane.f32.xlu0 %v3238
        %v3240 = vpop.xlane.xlu0 %3239
        %v3241 = vsel %vm1446, %v2799, -inf
        %3242 = vmax.xlane.f32.xlu0 %v3241
        %v3243 = vpop.xlane.xlu0 %3242
        %v3244 = vsel %vm1446, %v2851, -inf
        %3245 = vmax.xlane.f32.xlu0 %v3244
        %v3246 = vpop.xlane.xlu0 %3245
        %v3247 = vsel %vm1446, %v2903, -inf
        %3248 = vmax.xlane.f32.xlu0 %v3247
        %v3249 = vpop.xlane.xlu0 %3248
        %v3250 = vsel %vm1446, %v2955, -inf
        %3251 = vmax.xlane.f32.xlu0 %v3250
        %v3252 = vpop.xlane.xlu0 %3251
        %v3253 = vsel %vm1446, %v3007, -inf
        %3254 = vmax.xlane.f32.xlu0 %v3253
        %v3255 = vpop.xlane.xlu0 %3254
        %v3256 = vsel %vm1446, %v3059, -inf
        %3257 = vmax.xlane.f32.xlu0 %v3256
        %v3258 = vpop.xlane.xlu0 %3257
        %v3259 = vsel %vm1446, %v3111, -inf
        %3260 = vmax.xlane.f32.xlu0 %v3259
        %v3261 = vpop.xlane.xlu0 %3260
        %v3262 = vsel %vm1446, %v3163, -inf
        %3263 = vmax.xlane.f32.xlu0 %v3262
        %v3264 = vpop.xlane.xlu0 %3263
        %v3265 = vsel %vm1446, %v3215, -inf
        %3266 = vmax.xlane.f32.xlu0 %v3265
        %v3267 = vpop.xlane.xlu0 %3266
        %v3268 = vsub.f32 %v2435, %v3222
        %v3269 = vsub.f32 %v2487, %v3225
        %v3270 = vsub.f32 %v2539, %v3228
        %v3271 = vsub.f32 %v2591, %v3231
        %v3272 = vsub.f32 %v2643, %v3234
        %v3273 = vsub.f32 %v2695, %v3237
        %v3274 = vsub.f32 %v2747, %v3240
        %v3275 = vsub.f32 %v2799, %v3243
        %v3276 = vsub.f32 %v2851, %v3246
        %v3277 = vsub.f32 %v2903, %v3249
        %v3278 = vsub.f32 %v2955, %v3252
        %v3279 = vsub.f32 %v3007, %v3255
        %v3280 = vsub.f32 %v3059, %v3258
        %v3281 = vsub.f32 %v3111, %v3261
        %v3282 = vsub.f32 %v3163, %v3264
        %v3283 = vsub.f32 %v3215, %v3267
        %v3284 = vmul.f32 %v3268, 1.442695
        %v3285 = vpow.pop %v3284
        %v3286 = vmul.f32 %v3269, 1.442695
        %v3287 = vpow.pop %v3286
        %v3288 = vmul.f32 %v3270, 1.442695
        %v3289 = vpow.pop %v3288
        %v3290 = vmul.f32 %v3271, 1.442695
        %v3291 = vpow.pop %v3290
        %v3292 = vmul.f32 %v3272, 1.442695
        %v3293 = vpow.pop %v3292
        %v3294 = vmul.f32 %v3273, 1.442695
        %v3295 = vpow.pop %v3294
        %v3296 = vmul.f32 %v3274, 1.442695
        %v3297 = vpow.pop %v3296
        %v3298 = vmul.f32 %v3275, 1.442695
        %v3299 = vpow.pop %v3298
        %v3300 = vmul.f32 %v3276, 1.442695
        %v3301 = vpow.pop %v3300
        %v3302 = vmul.f32 %v3277, 1.442695
        %v3303 = vpow.pop %v3302
        %v3304 = vmul.f32 %v3278, 1.442695
        %v3305 = vpow.pop %v3304
        %v3306 = vmul.f32 %v3279, 1.442695
        %v3307 = vpow.pop %v3306
        %v3308 = vmul.f32 %v3280, 1.442695
        %v3309 = vpow.pop %v3308
        %v3310 = vmul.f32 %v3281, 1.442695
        %v3311 = vpow.pop %v3310
        %v3312 = vmul.f32 %v3282, 1.442695
        %v3313 = vpow.pop %v3312
        %v3314 = vmul.f32 %v3283, 1.442695
        %v3315 = vpow.pop %v3314
        %v3316 = vsel %vm1446, %v3285, 0.0
        %3317 = vadd.xlane.f32.xlu0 %v3316
        %v3318 = vpop.xlane.xlu0 %3317
        %v3319 = vsel %vm1446, %v3287, 0.0
        %3320 = vadd.xlane.f32.xlu0 %v3319
        %v3321 = vpop.xlane.xlu0 %3320
        %v3322 = vsel %vm1446, %v3289, 0.0
        %3323 = vadd.xlane.f32.xlu0 %v3322
        %v3324 = vpop.xlane.xlu0 %3323
        %v3325 = vsel %vm1446, %v3291, 0.0
        %3326 = vadd.xlane.f32.xlu0 %v3325
        %v3327 = vpop.xlane.xlu0 %3326
        %v3328 = vsel %vm1446, %v3293, 0.0
        %3329 = vadd.xlane.f32.xlu0 %v3328
        %v3330 = vpop.xlane.xlu0 %3329
        %v3331 = vsel %vm1446, %v3295, 0.0
        %3332 = vadd.xlane.f32.xlu0 %v3331
        %v3333 = vpop.xlane.xlu0 %3332
        %v3334 = vsel %vm1446, %v3297, 0.0
        %3335 = vadd.xlane.f32.xlu0 %v3334
        %v3336 = vpop.xlane.xlu0 %3335
        %v3337 = vsel %vm1446, %v3299, 0.0
        %3338 = vadd.xlane.f32.xlu0 %v3337
        %v3339 = vpop.xlane.xlu0 %3338
        %v3340 = vsel %vm1446, %v3301, 0.0
        %3341 = vadd.xlane.f32.xlu0 %v3340
        %v3342 = vpop.xlane.xlu0 %3341
        %v3343 = vsel %vm1446, %v3303, 0.0
        %3344 = vadd.xlane.f32.xlu0 %v3343
        %v3345 = vpop.xlane.xlu0 %3344
        %v3346 = vsel %vm1446, %v3305, 0.0
        %3347 = vadd.xlane.f32.xlu0 %v3346
        %v3348 = vpop.xlane.xlu0 %3347
        %v3349 = vsel %vm1446, %v3307, 0.0
        %3350 = vadd.xlane.f32.xlu0 %v3349
        %v3351 = vpop.xlane.xlu0 %3350
        %v3352 = vsel %vm1446, %v3309, 0.0
        %3353 = vadd.xlane.f32.xlu0 %v3352
        %v3354 = vpop.xlane.xlu0 %3353
        %v3355 = vsel %vm1446, %v3311, 0.0
        %3356 = vadd.xlane.f32.xlu0 %v3355
        %v3357 = vpop.xlane.xlu0 %3356
        %v3358 = vsel %vm1446, %v3313, 0.0
        %3359 = vadd.xlane.f32.xlu0 %v3358
        %v3360 = vpop.xlane.xlu0 %3359
        %v3361 = vsel %vm1446, %v3315, 0.0
        %3362 = vadd.xlane.f32.xlu0 %v3361
        %v3363 = vpop.xlane.xlu0 %3362
        %v3364 = vrcp.pop %v3318
        %v3365 = vrcp.pop %v3321
        %v3366 = vrcp.pop %v3324
        %v3367 = vrcp.pop %v3327
        %v3368 = vrcp.pop %v3330
        %v3369 = vrcp.pop %v3333
        %v3370 = vrcp.pop %v3336
        %v3371 = vrcp.pop %v3339
        %v3372 = vrcp.pop %v3342
        %v3373 = vrcp.pop %v3345
        %v3374 = vrcp.pop %v3348
        %v3375 = vrcp.pop %v3351
        %v3376 = vrcp.pop %v3354
        %v3377 = vrcp.pop %v3357
        %v3378 = vrcp.pop %v3360
        %v3379 = vrcp.pop %v3363
        %v3380 = vmul.f32 %v3285, %v3364
        %v3381 = vmul.f32 %v3287, %v3365
        %v3382 = vmul.f32 %v3289, %v3366
        %v3383 = vmul.f32 %v3291, %v3367
        %v3384 = vmul.f32 %v3293, %v3368
        %v3385 = vmul.f32 %v3295, %v3369
        %v3386 = vmul.f32 %v3297, %v3370
        %v3387 = vmul.f32 %v3299, %v3371
        %v3388 = vmul.f32 %v3301, %v3372
        %v3389 = vmul.f32 %v3303, %v3373
        %v3390 = vmul.f32 %v3305, %v3374
        %v3391 = vmul.f32 %v3307, %v3375
        %v3392 = vmul.f32 %v3309, %v3376
        %v3393 = vmul.f32 %v3311, %v3377
        %v3394 = vmul.f32 %v3313, %v3378
        %v3395 = vmul.f32 %v3315, %v3379
        %v3396 = vpack.c.bf16 %v3380, %v3380
        %v3397 = vpack.c.bf16 %v3381, %v3381
        %v3398 = vpack.c.bf16 %v3382, %v3382
        %v3399 = vpack.c.bf16 %v3383, %v3383
        %v3400 = vpack.c.bf16 %v3384, %v3384
        %v3401 = vpack.c.bf16 %v3385, %v3385
        %v3402 = vpack.c.bf16 %v3386, %v3386
        %v3403 = vpack.c.bf16 %v3387, %v3387
        %v3404 = vpack.c.bf16 %v3388, %v3388
        %v3405 = vpack.c.bf16 %v3389, %v3389
        %v3406 = vpack.c.bf16 %v3390, %v3390
        %v3407 = vpack.c.bf16 %v3391, %v3391
        %v3408 = vpack.c.bf16 %v3392, %v3392
        %v3409 = vpack.c.bf16 %v3393, %v3393
        %v3410 = vpack.c.bf16 %v3394, %v3394
        %v3411 = vpack.c.bf16 %v3395, %v3395
        %3413 = vrot.lane.b32.xlu0 %v645, 96
        %v3414 = vpop.permute.xlu0 %3413
        %v3416 = vsel %vm1446, %v3396, 0
        %v3419 = vsel %vm1642, %v3414, 0
        %3421 = vmatprep.subr.bf16.mxu0 0
        %3422 = vmatpush1.bf16.msra.mxu0 %v3419
        %3423 = vmatprep.subr.bf16.mxu0 0
        %3424 = vmatpush1.bf16.msra.mxu0 0
        %3425 = vmatprep.subr.bf16.mxu0 0
        %3426 = vmatpush1.bf16.msra.mxu0 0
        %3427 = vmatprep.subr.bf16.mxu0 0
        %3428 = vmatpush1.bf16.msra.mxu0 0
        %3429 = vmatprep.subr.bf16.mxu0 0
        %3430 = vmatpush1.bf16.msra.mxu0 0
        %3431 = vmatprep.subr.bf16.mxu0 0
        %3432 = vmatpush1.bf16.msra.mxu0 0
        %3433 = vmatprep.subr.bf16.mxu0 0
        %3434 = vmatpush1.bf16.msra.mxu0 0
        %3435 = vmatprep.subr.bf16.mxu0 0
        %3436 = vmatpush1.bf16.msra.mxu0 0
        %3437 = vmatprep.subr.bf16.mxu0 0
        %3438 = vmatpush1.bf16.msra.mxu0 0
        %3439 = vmatprep.subr.bf16.mxu0 0
        %3440 = vmatpush1.bf16.msra.mxu0 0
        %3441 = vmatprep.subr.bf16.mxu0 0
        %3442 = vmatpush1.bf16.msra.mxu0 0
        %3443 = vmatprep.subr.bf16.mxu0 0
        %3444 = vmatpush1.bf16.msra.mxu0 0
        %3445 = vmatprep.subr.bf16.mxu0 0
        %3446 = vmatpush1.bf16.msra.mxu0 0
        %3447 = vmatprep.subr.bf16.mxu0 0
        %3448 = vmatpush1.bf16.msra.mxu0 0
        %3449 = vmatprep.subr.bf16.mxu0 0
        %3450 = vmatpush1.bf16.msra.mxu0 0
        %3451 = vmatprep.subr.bf16.mxu0 0
        %3452 = vmatpush1.bf16.msra.mxu0 0
        %3453 = vmatprep.mubr.bf16.mxu0 0
        %3454 = vmatmul.mubr.bf16.gmra.mrb[0].mxu0 %v3416
        %v3455 = vpop.f32.mrb[0].mxu0
        %v3456 = vadd.f32 0.0, %v3455
        %v3457 = vpop.f32.mrb[0].mxu0
        %v3458 = vpop.f32.mrb[0].mxu0
        %v3459 = vpop.f32.mrb[0].mxu0
        %3460 = vdwg.mxu0
        %3462 = vrot.lane.b32.xlu0 %v646, 96
        %v3463 = vpop.permute.xlu0 %3462
        %v3465 = vsel %vm1446, %v3397, 0
        %v3468 = vsel %vm1642, %v3463, 0
        %3470 = vmatprep.subr.bf16.mxu0 0
        %3471 = vmatpush1.bf16.msra.mxu0 %v3468
        %3472 = vmatprep.subr.bf16.mxu0 0
        %3473 = vmatpush1.bf16.msra.mxu0 0
        %3474 = vmatprep.subr.bf16.mxu0 0
        %3475 = vmatpush1.bf16.msra.mxu0 0
        %3476 = vmatprep.subr.bf16.mxu0 0
        %3477 = vmatpush1.bf16.msra.mxu0 0
        %3478 = vmatprep.subr.bf16.mxu0 0
        %3479 = vmatpush1.bf16.msra.mxu0 0
        %3480 = vmatprep.subr.bf16.mxu0 0
        %3481 = vmatpush1.bf16.msra.mxu0 0
        %3482 = vmatprep.subr.bf16.mxu0 0
        %3483 = vmatpush1.bf16.msra.mxu0 0
        %3484 = vmatprep.subr.bf16.mxu0 0
        %3485 = vmatpush1.bf16.msra.mxu0 0
        %3486 = vmatprep.subr.bf16.mxu0 0
        %3487 = vmatpush1.bf16.msra.mxu0 0
        %3488 = vmatprep.subr.bf16.mxu0 0
        %3489 = vmatpush1.bf16.msra.mxu0 0
        %3490 = vmatprep.subr.bf16.mxu0 0
        %3491 = vmatpush1.bf16.msra.mxu0 0
        %3492 = vmatprep.subr.bf16.mxu0 0
        %3493 = vmatpush1.bf16.msra.mxu0 0
        %3494 = vmatprep.subr.bf16.mxu0 0
        %3495 = vmatpush1.bf16.msra.mxu0 0
        %3496 = vmatprep.subr.bf16.mxu0 0
        %3497 = vmatpush1.bf16.msra.mxu0 0
        %3498 = vmatprep.subr.bf16.mxu0 0
        %3499 = vmatpush1.bf16.msra.mxu0 0
        %3500 = vmatprep.subr.bf16.mxu0 0
        %3501 = vmatpush1.bf16.msra.mxu0 0
        %3502 = vmatprep.mubr.bf16.mxu0 0
        %3503 = vmatmul.mubr.bf16.gmra.mrb[0].mxu0 %v3465
        %v3504 = vpop.f32.mrb[0].mxu0
        %v3505 = vadd.f32 0.0, %v3504
        %v3506 = vpop.f32.mrb[0].mxu0
        %v3507 = vpop.f32.mrb[0].mxu0
        %v3508 = vpop.f32.mrb[0].mxu0
        %3509 = vdwg.mxu0
        %3511 = vrot.lane.b32.xlu0 %v647, 96
        %v3512 = vpop.permute.xlu0 %3511
        %v3514 = vsel %vm1446, %v3398, 0
        %v3517 = vsel %vm1642, %v3512, 0
        %3519 = vmatprep.subr.bf16.mxu0 0
        %3520 = vmatpush1.bf16.msra.mxu0 %v3517
        %3521 = vmatprep.subr.bf16.mxu0 0
        %3522 = vmatpush1.bf16.msra.mxu0 0
        %3523 = vmatprep.subr.bf16.mxu0 0
        %3524 = vmatpush1.bf16.msra.mxu0 0
        %3525 = vmatprep.subr.bf16.mxu0 0
        %3526 = vmatpush1.bf16.msra.mxu0 0
        %3527 = vmatprep.subr.bf16.mxu0 0
        %3528 = vmatpush1.bf16.msra.mxu0 0
        %3529 = vmatprep.subr.bf16.mxu0 0
        %3530 = vmatpush1.bf16.msra.mxu0 0
        %3531 = vmatprep.subr.bf16.mxu0 0
        %3532 = vmatpush1.bf16.msra.mxu0 0
        %3533 = vmatprep.subr.bf16.mxu0 0
        %3534 = vmatpush1.bf16.msra.mxu0 0
        %3535 = vmatprep.subr.bf16.mxu0 0
        %3536 = vmatpush1.bf16.msra.mxu0 0
        %3537 = vmatprep.subr.bf16.mxu0 0
        %3538 = vmatpush1.bf16.msra.mxu0 0
        %3539 = vmatprep.subr.bf16.mxu0 0
        %3540 = vmatpush1.bf16.msra.mxu0 0
        %3541 = vmatprep.subr.bf16.mxu0 0
        %3542 = vmatpush1.bf16.msra.mxu0 0
        %3543 = vmatprep.subr.bf16.mxu0 0
        %3544 = vmatpush1.bf16.msra.mxu0 0
        %3545 = vmatprep.subr.bf16.mxu0 0
        %3546 = vmatpush1.bf16.msra.mxu0 0
        %3547 = vmatprep.subr.bf16.mxu0 0
        %3548 = vmatpush1.bf16.msra.mxu0 0
        %3549 = vmatprep.subr.bf16.mxu0 0
        %3550 = vmatpush1.bf16.msra.mxu0 0
        %3551 = vmatprep.mubr.bf16.mxu0 0
        %3552 = vmatmul.mubr.bf16.gmra.mrb[0].mxu0 %v3514
        %v3553 = vpop.f32.mrb[0].mxu0
        %v3554 = vadd.f32 0.0, %v3553
        %v3555 = vpop.f32.mrb[0].mxu0
        %v3556 = vpop.f32.mrb[0].mxu0
        %v3557 = vpop.f32.mrb[0].mxu0
        %3558 = vdwg.mxu0
        %3560 = vrot.lane.b32.xlu0 %v648, 96
        %v3561 = vpop.permute.xlu0 %3560
        %v3563 = vsel %vm1446, %v3399, 0
        %v3566 = vsel %vm1642, %v3561, 0
        %3568 = vmatprep.subr.bf16.mxu0 0
        %3569 = vmatpush1.bf16.msra.mxu0 %v3566
        %3570 = vmatprep.subr.bf16.mxu0 0
        %3571 = vmatpush1.bf16.msra.mxu0 0
        %3572 = vmatprep.subr.bf16.mxu0 0
        %3573 = vmatpush1.bf16.msra.mxu0 0
        %3574 = vmatprep.subr.bf16.mxu0 0
        %3575 = vmatpush1.bf16.msra.mxu0 0
        %3576 = vmatprep.subr.bf16.mxu0 0
        %3577 = vmatpush1.bf16.msra.mxu0 0
        %3578 = vmatprep.subr.bf16.mxu0 0
        %3579 = vmatpush1.bf16.msra.mxu0 0
        %3580 = vmatprep.subr.bf16.mxu0 0
        %3581 = vmatpush1.bf16.msra.mxu0 0
        %3582 = vmatprep.subr.bf16.mxu0 0
        %3583 = vmatpush1.bf16.msra.mxu0 0
        %3584 = vmatprep.subr.bf16.mxu0 0
        %3585 = vmatpush1.bf16.msra.mxu0 0
        %3586 = vmatprep.subr.bf16.mxu0 0
        %3587 = vmatpush1.bf16.msra.mxu0 0
        %3588 = vmatprep.subr.bf16.mxu0 0
        %3589 = vmatpush1.bf16.msra.mxu0 0
        %3590 = vmatprep.subr.bf16.mxu0 0
        %3591 = vmatpush1.bf16.msra.mxu0 0
        %3592 = vmatprep.subr.bf16.mxu0 0
        %3593 = vmatpush1.bf16.msra.mxu0 0
        %3594 = vmatprep.subr.bf16.mxu0 0
        %3595 = vmatpush1.bf16.msra.mxu0 0
        %3596 = vmatprep.subr.bf16.mxu0 0
        %3597 = vmatpush1.bf16.msra.mxu0 0
        %3598 = vmatprep.subr.bf16.mxu0 0
        %3599 = vmatpush1.bf16.msra.mxu0 0
        %3600 = vmatprep.mubr.bf16.mxu0 0
        %3601 = vmatmul.mubr.bf16.gmra.mrb[0].mxu0 %v3563
        %v3602 = vpop.f32.mrb[0].mxu0
        %v3603 = vadd.f32 0.0, %v3602
        %v3604 = vpop.f32.mrb[0].mxu0
        %v3605 = vpop.f32.mrb[0].mxu0
        %v3606 = vpop.f32.mrb[0].mxu0
        %3607 = vdwg.mxu0
        %3609 = vrot.lane.b32.xlu0 %v649, 96
        %v3610 = vpop.permute.xlu0 %3609
        %v3612 = vsel %vm1446, %v3400, 0
        %v3615 = vsel %vm1642, %v3610, 0
        %3617 = vmatprep.subr.bf16.mxu0 0
        %3618 = vmatpush1.bf16.msra.mxu0 %v3615
        %3619 = vmatprep.subr.bf16.mxu0 0
        %3620 = vmatpush1.bf16.msra.mxu0 0
        %3621 = vmatprep.subr.bf16.mxu0 0
        %3622 = vmatpush1.bf16.msra.mxu0 0
        %3623 = vmatprep.subr.bf16.mxu0 0
        %3624 = vmatpush1.bf16.msra.mxu0 0
        %3625 = vmatprep.subr.bf16.mxu0 0
        %3626 = vmatpush1.bf16.msra.mxu0 0
        %3627 = vmatprep.subr.bf16.mxu0 0
        %3628 = vmatpush1.bf16.msra.mxu0 0
        %3629 = vmatprep.subr.bf16.mxu0 0
        %3630 = vmatpush1.bf16.msra.mxu0 0
        %3631 = vmatprep.subr.bf16.mxu0 0
        %3632 = vmatpush1.bf16.msra.mxu0 0
        %3633 = vmatprep.subr.bf16.mxu0 0
        %3634 = vmatpush1.bf16.msra.mxu0 0
        %3635 = vmatprep.subr.bf16.mxu0 0
        %3636 = vmatpush1.bf16.msra.mxu0 0
        %3637 = vmatprep.subr.bf16.mxu0 0
        %3638 = vmatpush1.bf16.msra.mxu0 0
        %3639 = vmatprep.subr.bf16.mxu0 0
        %3640 = vmatpush1.bf16.msra.mxu0 0
        %3641 = vmatprep.subr.bf16.mxu0 0
        %3642 = vmatpush1.bf16.msra.mxu0 0
        %3643 = vmatprep.subr.bf16.mxu0 0
        %3644 = vmatpush1.bf16.msra.mxu0 0
        %3645 = vmatprep.subr.bf16.mxu0 0
        %3646 = vmatpush1.bf16.msra.mxu0 0
        %3647 = vmatprep.subr.bf16.mxu0 0
        %3648 = vmatpush1.bf16.msra.mxu0 0
        %3649 = vmatprep.mubr.bf16.mxu0 0
        %3650 = vmatmul.mubr.bf16.gmra.mrb[0].mxu0 %v3612
        %v3651 = vpop.f32.mrb[0].mxu0
        %v3652 = vadd.f32 0.0, %v3651
        %v3653 = vpop.f32.mrb[0].mxu0
        %v3654 = vpop.f32.mrb[0].mxu0
        %v3655 = vpop.f32.mrb[0].mxu0
        %3656 = vdwg.mxu0
        %3658 = vrot.lane.b32.xlu0 %v650, 96
        %v3659 = vpop.permute.xlu0 %3658
        %v3661 = vsel %vm1446, %v3401, 0
        %v3664 = vsel %vm1642, %v3659, 0
        %3666 = vmatprep.subr.bf16.mxu0 0
        %3667 = vmatpush1.bf16.msra.mxu0 %v3664
        %3668 = vmatprep.subr.bf16.mxu0 0
        %3669 = vmatpush1.bf16.msra.mxu0 0
        %3670 = vmatprep.subr.bf16.mxu0 0
        %3671 = vmatpush1.bf16.msra.mxu0 0
        %3672 = vmatprep.subr.bf16.mxu0 0
        %3673 = vmatpush1.bf16.msra.mxu0 0
        %3674 = vmatprep.subr.bf16.mxu0 0
        %3675 = vmatpush1.bf16.msra.mxu0 0
        %3676 = vmatprep.subr.bf16.mxu0 0
        %3677 = vmatpush1.bf16.msra.mxu0 0
        %3678 = vmatprep.subr.bf16.mxu0 0
        %3679 = vmatpush1.bf16.msra.mxu0 0
        %3680 = vmatprep.subr.bf16.mxu0 0
        %3681 = vmatpush1.bf16.msra.mxu0 0
        %3682 = vmatprep.subr.bf16.mxu0 0
        %3683 = vmatpush1.bf16.msra.mxu0 0
        %3684 = vmatprep.subr.bf16.mxu0 0
        %3685 = vmatpush1.bf16.msra.mxu0 0
        %3686 = vmatprep.subr.bf16.mxu0 0
        %3687 = vmatpush1.bf16.msra.mxu0 0
        %3688 = vmatprep.subr.bf16.mxu0 0
        %3689 = vmatpush1.bf16.msra.mxu0 0
        %3690 = vmatprep.subr.bf16.mxu0 0
        %3691 = vmatpush1.bf16.msra.mxu0 0
        %3692 = vmatprep.subr.bf16.mxu0 0
        %3693 = vmatpush1.bf16.msra.mxu0 0
        %3694 = vmatprep.subr.bf16.mxu0 0
        %3695 = vmatpush1.bf16.msra.mxu0 0
        %3696 = vmatprep.subr.bf16.mxu0 0
        %3697 = vmatpush1.bf16.msra.mxu0 0
        %3698 = vmatprep.mubr.bf16.mxu0 0
        %3699 = vmatmul.mubr.bf16.gmra.mrb[0].mxu0 %v3661
        %v3700 = vpop.f32.mrb[0].mxu0
        %v3701 = vadd.f32 0.0, %v3700
        %v3702 = vpop.f32.mrb[0].mxu0
        %v3703 = vpop.f32.mrb[0].mxu0
        %v3704 = vpop.f32.mrb[0].mxu0
        %3705 = vdwg.mxu0
        %3707 = vrot.lane.b32.xlu0 %v651, 96
        %v3708 = vpop.permute.xlu0 %3707
        %v3710 = vsel %vm1446, %v3402, 0
        %v3713 = vsel %vm1642, %v3708, 0
        %3715 = vmatprep.subr.bf16.mxu0 0
        %3716 = vmatpush1.bf16.msra.mxu0 %v3713
        %3717 = vmatprep.subr.bf16.mxu0 0
        %3718 = vmatpush1.bf16.msra.mxu0 0
        %3719 = vmatprep.subr.bf16.mxu0 0
        %3720 = vmatpush1.bf16.msra.mxu0 0
        %3721 = vmatprep.subr.bf16.mxu0 0
        %3722 = vmatpush1.bf16.msra.mxu0 0
        %3723 = vmatprep.subr.bf16.mxu0 0
        %3724 = vmatpush1.bf16.msra.mxu0 0
        %3725 = vmatprep.subr.bf16.mxu0 0
        %3726 = vmatpush1.bf16.msra.mxu0 0
        %3727 = vmatprep.subr.bf16.mxu0 0
        %3728 = vmatpush1.bf16.msra.mxu0 0
        %3729 = vmatprep.subr.bf16.mxu0 0
        %3730 = vmatpush1.bf16.msra.mxu0 0
        %3731 = vmatprep.subr.bf16.mxu0 0
        %3732 = vmatpush1.bf16.msra.mxu0 0
        %3733 = vmatprep.subr.bf16.mxu0 0
        %3734 = vmatpush1.bf16.msra.mxu0 0
        %3735 = vmatprep.subr.bf16.mxu0 0
        %3736 = vmatpush1.bf16.msra.mxu0 0
        %3737 = vmatprep.subr.bf16.mxu0 0
        %3738 = vmatpush1.bf16.msra.mxu0 0
        %3739 = vmatprep.subr.bf16.mxu0 0
        %3740 = vmatpush1.bf16.msra.mxu0 0
        %3741 = vmatprep.subr.bf16.mxu0 0
        %3742 = vmatpush1.bf16.msra.mxu0 0
        %3743 = vmatprep.subr.bf16.mxu0 0
        %3744 = vmatpush1.bf16.msra.mxu0 0
        %3745 = vmatprep.subr.bf16.mxu0 0
        %3746 = vmatpush1.bf16.msra.mxu0 0
        %3747 = vmatprep.mubr.bf16.mxu0 0
        %3748 = vmatmul.mubr.bf16.gmra.mrb[0].mxu0 %v3710
        %v3749 = vpop.f32.mrb[0].mxu0
        %v3750 = vadd.f32 0.0, %v3749
        %v3751 = vpop.f32.mrb[0].mxu0
        %v3752 = vpop.f32.mrb[0].mxu0
        %v3753 = vpop.f32.mrb[0].mxu0
        %3754 = vdwg.mxu0
        %3756 = vrot.lane.b32.xlu0 %v652, 96
        %v3757 = vpop.permute.xlu0 %3756
        %v3759 = vsel %vm1446, %v3403, 0
        %v3762 = vsel %vm1642, %v3757, 0
        %3764 = vmatprep.subr.bf16.mxu0 0
        %3765 = vmatpush1.bf16.msra.mxu0 %v3762
        %3766 = vmatprep.subr.bf16.mxu0 0
        %3767 = vmatpush1.bf16.msra.mxu0 0
        %3768 = vmatprep.subr.bf16.mxu0 0
        %3769 = vmatpush1.bf16.msra.mxu0 0
        %3770 = vmatprep.subr.bf16.mxu0 0
        %3771 = vmatpush1.bf16.msra.mxu0 0
        %3772 = vmatprep.subr.bf16.mxu0 0
        %3773 = vmatpush1.bf16.msra.mxu0 0
        %3774 = vmatprep.subr.bf16.mxu0 0
        %3775 = vmatpush1.bf16.msra.mxu0 0
        %3776 = vmatprep.subr.bf16.mxu0 0
        %3777 = vmatpush1.bf16.msra.mxu0 0
        %3778 = vmatprep.subr.bf16.mxu0 0
        %3779 = vmatpush1.bf16.msra.mxu0 0
        %3780 = vmatprep.subr.bf16.mxu0 0
        %3781 = vmatpush1.bf16.msra.mxu0 0
        %3782 = vmatprep.subr.bf16.mxu0 0
        %3783 = vmatpush1.bf16.msra.mxu0 0
        %3784 = vmatprep.subr.bf16.mxu0 0
        %3785 = vmatpush1.bf16.msra.mxu0 0
        %3786 = vmatprep.subr.bf16.mxu0 0
        %3787 = vmatpush1.bf16.msra.mxu0 0
        %3788 = vmatprep.subr.bf16.mxu0 0
        %3789 = vmatpush1.bf16.msra.mxu0 0
        %3790 = vmatprep.subr.bf16.mxu0 0
        %3791 = vmatpush1.bf16.msra.mxu0 0
        %3792 = vmatprep.subr.bf16.mxu0 0
        %3793 = vmatpush1.bf16.msra.mxu0 0
        %3794 = vmatprep.subr.bf16.mxu0 0
        %3795 = vmatpush1.bf16.msra.mxu0 0
        %3796 = vmatprep.mubr.bf16.mxu0 0
        %3797 = vmatmul.mubr.bf16.gmra.mrb[0].mxu0 %v3759
        %v3798 = vpop.f32.mrb[0].mxu0
        %v3799 = vadd.f32 0.0, %v3798
        %v3800 = vpop.f32.mrb[0].mxu0
        %v3801 = vpop.f32.mrb[0].mxu0
        %v3802 = vpop.f32.mrb[0].mxu0
        %3803 = vdwg.mxu0
        %3805 = vrot.lane.b32.xlu0 %v653, 96
        %v3806 = vpop.permute.xlu0 %3805
        %v3808 = vsel %vm1446, %v3404, 0
        %v3811 = vsel %vm1642, %v3806, 0
        %3813 = vmatprep.subr.bf16.mxu0 0
        %3814 = vmatpush1.bf16.msra.mxu0 %v3811
        %3815 = vmatprep.subr.bf16.mxu0 0
        %3816 = vmatpush1.bf16.msra.mxu0 0
        %3817 = vmatprep.subr.bf16.mxu0 0
        %3818 = vmatpush1.bf16.msra.mxu0 0
        %3819 = vmatprep.subr.bf16.mxu0 0
        %3820 = vmatpush1.bf16.msra.mxu0 0
        %3821 = vmatprep.subr.bf16.mxu0 0
        %3822 = vmatpush1.bf16.msra.mxu0 0
        %3823 = vmatprep.subr.bf16.mxu0 0
        %3824 = vmatpush1.bf16.msra.mxu0 0
        %3825 = vmatprep.subr.bf16.mxu0 0
        %3826 = vmatpush1.bf16.msra.mxu0 0
        %3827 = vmatprep.subr.bf16.mxu0 0
        %3828 = vmatpush1.bf16.msra.mxu0 0
        %3829 = vmatprep.subr.bf16.mxu0 0
        %3830 = vmatpush1.bf16.msra.mxu0 0
        %3831 = vmatprep.subr.bf16.mxu0 0
        %3832 = vmatpush1.bf16.msra.mxu0 0
        %3833 = vmatprep.subr.bf16.mxu0 0
        %3834 = vmatpush1.bf16.msra.mxu0 0
        %3835 = vmatprep.subr.bf16.mxu0 0
        %3836 = vmatpush1.bf16.msra.mxu0 0
        %3837 = vmatprep.subr.bf16.mxu0 0
        %3838 = vmatpush1.bf16.msra.mxu0 0
        %3839 = vmatprep.subr.bf16.mxu0 0
        %3840 = vmatpush1.bf16.msra.mxu0 0
        %3841 = vmatprep.subr.bf16.mxu0 0
        %3842 = vmatpush1.bf16.msra.mxu0 0
        %3843 = vmatprep.subr.bf16.mxu0 0
        %3844 = vmatpush1.bf16.msra.mxu0 0
        %3845 = vmatprep.mubr.bf16.mxu0 0
        %3846 = vmatmul.mubr.bf16.gmra.mrb[0].mxu0 %v3808
        %v3847 = vpop.f32.mrb[0].mxu0
        %v3848 = vadd.f32 0.0, %v3847
        %v3849 = vpop.f32.mrb[0].mxu0
        %v3850 = vpop.f32.mrb[0].mxu0
        %v3851 = vpop.f32.mrb[0].mxu0
        %3852 = vdwg.mxu0
        %3854 = vrot.lane.b32.xlu0 %v654, 96
        %v3855 = vpop.permute.xlu0 %3854
        %v3857 = vsel %vm1446, %v3405, 0
        %v3860 = vsel %vm1642, %v3855, 0
        %3862 = vmatprep.subr.bf16.mxu0 0
        %3863 = vmatpush1.bf16.msra.mxu0 %v3860
        %3864 = vmatprep.subr.bf16.mxu0 0
        %3865 = vmatpush1.bf16.msra.mxu0 0
        %3866 = vmatprep.subr.bf16.mxu0 0
        %3867 = vmatpush1.bf16.msra.mxu0 0
        %3868 = vmatprep.subr.bf16.mxu0 0
        %3869 = vmatpush1.bf16.msra.mxu0 0
        %3870 = vmatprep.subr.bf16.mxu0 0
        %3871 = vmatpush1.bf16.msra.mxu0 0
        %3872 = vmatprep.subr.bf16.mxu0 0
        %3873 = vmatpush1.bf16.msra.mxu0 0
        %3874 = vmatprep.subr.bf16.mxu0 0
        %3875 = vmatpush1.bf16.msra.mxu0 0
        %3876 = vmatprep.subr.bf16.mxu0 0
        %3877 = vmatpush1.bf16.msra.mxu0 0
        %3878 = vmatprep.subr.bf16.mxu0 0
        %3879 = vmatpush1.bf16.msra.mxu0 0
        %3880 = vmatprep.subr.bf16.mxu0 0
        %3881 = vmatpush1.bf16.msra.mxu0 0
        %3882 = vmatprep.subr.bf16.mxu0 0
        %3883 = vmatpush1.bf16.msra.mxu0 0
        %3884 = vmatprep.subr.bf16.mxu0 0
        %3885 = vmatpush1.bf16.msra.mxu0 0
        %3886 = vmatprep.subr.bf16.mxu0 0
        %3887 = vmatpush1.bf16.msra.mxu0 0
        %3888 = vmatprep.subr.bf16.mxu0 0
        %3889 = vmatpush1.bf16.msra.mxu0 0
        %3890 = vmatprep.subr.bf16.mxu0 0
        %3891 = vmatpush1.bf16.msra.mxu0 0
        %3892 = vmatprep.subr.bf16.mxu0 0
        %3893 = vmatpush1.bf16.msra.mxu0 0
        %3894 = vmatprep.mubr.bf16.mxu0 0
        %3895 = vmatmul.mubr.bf16.gmra.mrb[0].mxu0 %v3857
        %v3896 = vpop.f32.mrb[0].mxu0
        %v3897 = vadd.f32 0.0, %v3896
        %v3898 = vpop.f32.mrb[0].mxu0
        %v3899 = vpop.f32.mrb[0].mxu0
        %v3900 = vpop.f32.mrb[0].mxu0
        %3901 = vdwg.mxu0
        %3903 = vrot.lane.b32.xlu0 %v655, 96
        %v3904 = vpop.permute.xlu0 %3903
        %v3906 = vsel %vm1446, %v3406, 0
        %v3909 = vsel %vm1642, %v3904, 0
        %3911 = vmatprep.subr.bf16.mxu0 0
        %3912 = vmatpush1.bf16.msra.mxu0 %v3909
        %3913 = vmatprep.subr.bf16.mxu0 0
        %3914 = vmatpush1.bf16.msra.mxu0 0
        %3915 = vmatprep.subr.bf16.mxu0 0
        %3916 = vmatpush1.bf16.msra.mxu0 0
        %3917 = vmatprep.subr.bf16.mxu0 0
        %3918 = vmatpush1.bf16.msra.mxu0 0
        %3919 = vmatprep.subr.bf16.mxu0 0
        %3920 = vmatpush1.bf16.msra.mxu0 0
        %3921 = vmatprep.subr.bf16.mxu0 0
        %3922 = vmatpush1.bf16.msra.mxu0 0
        %3923 = vmatprep.subr.bf16.mxu0 0
        %3924 = vmatpush1.bf16.msra.mxu0 0
        %3925 = vmatprep.subr.bf16.mxu0 0
        %3926 = vmatpush1.bf16.msra.mxu0 0
        %3927 = vmatprep.subr.bf16.mxu0 0
        %3928 = vmatpush1.bf16.msra.mxu0 0
        %3929 = vmatprep.subr.bf16.mxu0 0
        %3930 = vmatpush1.bf16.msra.mxu0 0
        %3931 = vmatprep.subr.bf16.mxu0 0
        %3932 = vmatpush1.bf16.msra.mxu0 0
        %3933 = vmatprep.subr.bf16.mxu0 0
        %3934 = vmatpush1.bf16.msra.mxu0 0
        %3935 = vmatprep.subr.bf16.mxu0 0
        %3936 = vmatpush1.bf16.msra.mxu0 0
        %3937 = vmatprep.subr.bf16.mxu0 0
        %3938 = vmatpush1.bf16.msra.mxu0 0
        %3939 = vmatprep.subr.bf16.mxu0 0
        %3940 = vmatpush1.bf16.msra.mxu0 0
        %3941 = vmatprep.subr.bf16.mxu0 0
        %3942 = vmatpush1.bf16.msra.mxu0 0
        %3943 = vmatprep.mubr.bf16.mxu0 0
        %3944 = vmatmul.mubr.bf16.gmra.mrb[0].mxu0 %v3906
        %v3945 = vpop.f32.mrb[0].mxu0
        %v3946 = vadd.f32 0.0, %v3945
        %v3947 = vpop.f32.mrb[0].mxu0
        %v3948 = vpop.f32.mrb[0].mxu0
        %v3949 = vpop.f32.mrb[0].mxu0
        %3950 = vdwg.mxu0
        %3952 = vrot.lane.b32.xlu0 %v656, 96
        %v3953 = vpop.permute.xlu0 %3952
        %v3955 = vsel %vm1446, %v3407, 0
        %v3958 = vsel %vm1642, %v3953, 0
        %3960 = vmatprep.subr.bf16.mxu0 0
        %3961 = vmatpush1.bf16.msra.mxu0 %v3958
        %3962 = vmatprep.subr.bf16.mxu0 0
        %3963 = vmatpush1.bf16.msra.mxu0 0
        %3964 = vmatprep.subr.bf16.mxu0 0
        %3965 = vmatpush1.bf16.msra.mxu0 0
        %3966 = vmatprep.subr.bf16.mxu0 0
        %3967 = vmatpush1.bf16.msra.mxu0 0
        %3968 = vmatprep.subr.bf16.mxu0 0
        %3969 = vmatpush1.bf16.msra.mxu0 0
        %3970 = vmatprep.subr.bf16.mxu0 0
        %3971 = vmatpush1.bf16.msra.mxu0 0
        %3972 = vmatprep.subr.bf16.mxu0 0
        %3973 = vmatpush1.bf16.msra.mxu0 0
        %3974 = vmatprep.subr.bf16.mxu0 0
        %3975 = vmatpush1.bf16.msra.mxu0 0
        %3976 = vmatprep.subr.bf16.mxu0 0
        %3977 = vmatpush1.bf16.msra.mxu0 0
        %3978 = vmatprep.subr.bf16.mxu0 0
        %3979 = vmatpush1.bf16.msra.mxu0 0
        %3980 = vmatprep.subr.bf16.mxu0 0
        %3981 = vmatpush1.bf16.msra.mxu0 0
        %3982 = vmatprep.subr.bf16.mxu0 0
        %3983 = vmatpush1.bf16.msra.mxu0 0
        %3984 = vmatprep.subr.bf16.mxu0 0
        %3985 = vmatpush1.bf16.msra.mxu0 0
        %3986 = vmatprep.subr.bf16.mxu0 0
        %3987 = vmatpush1.bf16.msra.mxu0 0
        %3988 = vmatprep.subr.bf16.mxu0 0
        %3989 = vmatpush1.bf16.msra.mxu0 0
        %3990 = vmatprep.subr.bf16.mxu0 0
        %3991 = vmatpush1.bf16.msra.mxu0 0
        %3992 = vmatprep.mubr.bf16.mxu0 0
        %3993 = vmatmul.mubr.bf16.gmra.mrb[0].mxu0 %v3955
        %v3994 = vpop.f32.mrb[0].mxu0
        %v3995 = vadd.f32 0.0, %v3994
        %v3996 = vpop.f32.mrb[0].mxu0
        %v3997 = vpop.f32.mrb[0].mxu0
        %v3998 = vpop.f32.mrb[0].mxu0
        %3999 = vdwg.mxu0
        %4001 = vrot.lane.b32.xlu0 %v657, 96
        %v4002 = vpop.permute.xlu0 %4001
        %v4004 = vsel %vm1446, %v3408, 0
        %v4007 = vsel %vm1642, %v4002, 0
        %4009 = vmatprep.subr.bf16.mxu0 0
        %4010 = vmatpush1.bf16.msra.mxu0 %v4007
        %4011 = vmatprep.subr.bf16.mxu0 0
        %4012 = vmatpush1.bf16.msra.mxu0 0
        %4013 = vmatprep.subr.bf16.mxu0 0
        %4014 = vmatpush1.bf16.msra.mxu0 0
        %4015 = vmatprep.subr.bf16.mxu0 0
        %4016 = vmatpush1.bf16.msra.mxu0 0
        %4017 = vmatprep.subr.bf16.mxu0 0
        %4018 = vmatpush1.bf16.msra.mxu0 0
        %4019 = vmatprep.subr.bf16.mxu0 0
        %4020 = vmatpush1.bf16.msra.mxu0 0
        %4021 = vmatprep.subr.bf16.mxu0 0
        %4022 = vmatpush1.bf16.msra.mxu0 0
        %4023 = vmatprep.subr.bf16.mxu0 0
        %4024 = vmatpush1.bf16.msra.mxu0 0
        %4025 = vmatprep.subr.bf16.mxu0 0
        %4026 = vmatpush1.bf16.msra.mxu0 0
        %4027 = vmatprep.subr.bf16.mxu0 0
        %4028 = vmatpush1.bf16.msra.mxu0 0
        %4029 = vmatprep.subr.bf16.mxu0 0
        %4030 = vmatpush1.bf16.msra.mxu0 0
        %4031 = vmatprep.subr.bf16.mxu0 0
        %4032 = vmatpush1.bf16.msra.mxu0 0
        %4033 = vmatprep.subr.bf16.mxu0 0
        %4034 = vmatpush1.bf16.msra.mxu0 0
        %4035 = vmatprep.subr.bf16.mxu0 0
        %4036 = vmatpush1.bf16.msra.mxu0 0
        %4037 = vmatprep.subr.bf16.mxu0 0
        %4038 = vmatpush1.bf16.msra.mxu0 0
        %4039 = vmatprep.subr.bf16.mxu0 0
        %4040 = vmatpush1.bf16.msra.mxu0 0
        %4041 = vmatprep.mubr.bf16.mxu0 0
        %4042 = vmatmul.mubr.bf16.gmra.mrb[0].mxu0 %v4004
        %v4043 = vpop.f32.mrb[0].mxu0
        %v4044 = vadd.f32 0.0, %v4043
        %v4045 = vpop.f32.mrb[0].mxu0
        %v4046 = vpop.f32.mrb[0].mxu0
        %v4047 = vpop.f32.mrb[0].mxu0
        %4048 = vdwg.mxu0
        %4050 = vrot.lane.b32.xlu0 %v658, 96
        %v4051 = vpop.permute.xlu0 %4050
        %v4053 = vsel %vm1446, %v3409, 0
        %v4056 = vsel %vm1642, %v4051, 0
        %4058 = vmatprep.subr.bf16.mxu0 0
        %4059 = vmatpush1.bf16.msra.mxu0 %v4056
        %4060 = vmatprep.subr.bf16.mxu0 0
        %4061 = vmatpush1.bf16.msra.mxu0 0
        %4062 = vmatprep.subr.bf16.mxu0 0
        %4063 = vmatpush1.bf16.msra.mxu0 0
        %4064 = vmatprep.subr.bf16.mxu0 0
        %4065 = vmatpush1.bf16.msra.mxu0 0
        %4066 = vmatprep.subr.bf16.mxu0 0
        %4067 = vmatpush1.bf16.msra.mxu0 0
        %4068 = vmatprep.subr.bf16.mxu0 0
        %4069 = vmatpush1.bf16.msra.mxu0 0
        %4070 = vmatprep.subr.bf16.mxu0 0
        %4071 = vmatpush1.bf16.msra.mxu0 0
        %4072 = vmatprep.subr.bf16.mxu0 0
        %4073 = vmatpush1.bf16.msra.mxu0 0
        %4074 = vmatprep.subr.bf16.mxu0 0
        %4075 = vmatpush1.bf16.msra.mxu0 0
        %4076 = vmatprep.subr.bf16.mxu0 0
        %4077 = vmatpush1.bf16.msra.mxu0 0
        %4078 = vmatprep.subr.bf16.mxu0 0
        %4079 = vmatpush1.bf16.msra.mxu0 0
        %4080 = vmatprep.subr.bf16.mxu0 0
        %4081 = vmatpush1.bf16.msra.mxu0 0
        %4082 = vmatprep.subr.bf16.mxu0 0
        %4083 = vmatpush1.bf16.msra.mxu0 0
        %4084 = vmatprep.subr.bf16.mxu0 0
        %4085 = vmatpush1.bf16.msra.mxu0 0
        %4086 = vmatprep.subr.bf16.mxu0 0
        %4087 = vmatpush1.bf16.msra.mxu0 0
        %4088 = vmatprep.subr.bf16.mxu0 0
        %4089 = vmatpush1.bf16.msra.mxu0 0
        %4090 = vmatprep.mubr.bf16.mxu0 0
        %4091 = vmatmul.mubr.bf16.gmra.mrb[0].mxu0 %v4053
        %v4092 = vpop.f32.mrb[0].mxu0
        %v4093 = vadd.f32 0.0, %v4092
        %v4094 = vpop.f32.mrb[0].mxu0
        %v4095 = vpop.f32.mrb[0].mxu0
        %v4096 = vpop.f32.mrb[0].mxu0
        %4097 = vdwg.mxu0
        %4099 = vrot.lane.b32.xlu0 %v659, 96
        %v4100 = vpop.permute.xlu0 %4099
        %v4102 = vsel %vm1446, %v3410, 0
        %v4105 = vsel %vm1642, %v4100, 0
        %4107 = vmatprep.subr.bf16.mxu0 0
        %4108 = vmatpush1.bf16.msra.mxu0 %v4105
        %4109 = vmatprep.subr.bf16.mxu0 0
        %4110 = vmatpush1.bf16.msra.mxu0 0
        %4111 = vmatprep.subr.bf16.mxu0 0
        %4112 = vmatpush1.bf16.msra.mxu0 0
        %4113 = vmatprep.subr.bf16.mxu0 0
        %4114 = vmatpush1.bf16.msra.mxu0 0
        %4115 = vmatprep.subr.bf16.mxu0 0
        %4116 = vmatpush1.bf16.msra.mxu0 0
        %4117 = vmatprep.subr.bf16.mxu0 0
        %4118 = vmatpush1.bf16.msra.mxu0 0
        %4119 = vmatprep.subr.bf16.mxu0 0
        %4120 = vmatpush1.bf16.msra.mxu0 0
        %4121 = vmatprep.subr.bf16.mxu0 0
        %4122 = vmatpush1.bf16.msra.mxu0 0
        %4123 = vmatprep.subr.bf16.mxu0 0
        %4124 = vmatpush1.bf16.msra.mxu0 0
        %4125 = vmatprep.subr.bf16.mxu0 0
        %4126 = vmatpush1.bf16.msra.mxu0 0
        %4127 = vmatprep.subr.bf16.mxu0 0
        %4128 = vmatpush1.bf16.msra.mxu0 0
        %4129 = vmatprep.subr.bf16.mxu0 0
        %4130 = vmatpush1.bf16.msra.mxu0 0
        %4131 = vmatprep.subr.bf16.mxu0 0
        %4132 = vmatpush1.bf16.msra.mxu0 0
        %4133 = vmatprep.subr.bf16.mxu0 0
        %4134 = vmatpush1.bf16.msra.mxu0 0
        %4135 = vmatprep.subr.bf16.mxu0 0
        %4136 = vmatpush1.bf16.msra.mxu0 0
        %4137 = vmatprep.subr.bf16.mxu0 0
        %4138 = vmatpush1.bf16.msra.mxu0 0
        %4139 = vmatprep.mubr.bf16.mxu0 0
        %4140 = vmatmul.mubr.bf16.gmra.mrb[0].mxu0 %v4102
        %v4141 = vpop.f32.mrb[0].mxu0
        %v4142 = vadd.f32 0.0, %v4141
        %v4143 = vpop.f32.mrb[0].mxu0
        %v4144 = vpop.f32.mrb[0].mxu0
        %v4145 = vpop.f32.mrb[0].mxu0
        %4146 = vdwg.mxu0
        %4148 = vrot.lane.b32.xlu0 %v660, 96
        %v4149 = vpop.permute.xlu0 %4148
        %v4151 = vsel %vm1446, %v3411, 0
        %v4154 = vsel %vm1642, %v4149, 0
        %4156 = vmatprep.subr.bf16.mxu0 0
        %4157 = vmatpush1.bf16.msra.mxu0 %v4154
        %4158 = vmatprep.subr.bf16.mxu0 0
        %4159 = vmatpush1.bf16.msra.mxu0 0
        %4160 = vmatprep.subr.bf16.mxu0 0
        %4161 = vmatpush1.bf16.msra.mxu0 0
        %4162 = vmatprep.subr.bf16.mxu0 0
        %4163 = vmatpush1.bf16.msra.mxu0 0
        %4164 = vmatprep.subr.bf16.mxu0 0
        %4165 = vmatpush1.bf16.msra.mxu0 0
        %4166 = vmatprep.subr.bf16.mxu0 0
        %4167 = vmatpush1.bf16.msra.mxu0 0
        %4168 = vmatprep.subr.bf16.mxu0 0
        %4169 = vmatpush1.bf16.msra.mxu0 0
        %4170 = vmatprep.subr.bf16.mxu0 0
        %4171 = vmatpush1.bf16.msra.mxu0 0
        %4172 = vmatprep.subr.bf16.mxu0 0
        %4173 = vmatpush1.bf16.msra.mxu0 0
        %4174 = vmatprep.subr.bf16.mxu0 0
        %4175 = vmatpush1.bf16.msra.mxu0 0
        %4176 = vmatprep.subr.bf16.mxu0 0
        %4177 = vmatpush1.bf16.msra.mxu0 0
        %4178 = vmatprep.subr.bf16.mxu0 0
        %4179 = vmatpush1.bf16.msra.mxu0 0
        %4180 = vmatprep.subr.bf16.mxu0 0
        %4181 = vmatpush1.bf16.msra.mxu0 0
        %4182 = vmatprep.subr.bf16.mxu0 0
        %4183 = vmatpush1.bf16.msra.mxu0 0
        %4184 = vmatprep.subr.bf16.mxu0 0
        %4185 = vmatpush1.bf16.msra.mxu0 0
        %4186 = vmatprep.subr.bf16.mxu0 0
        %4187 = vmatpush1.bf16.msra.mxu0 0
        %4188 = vmatprep.mubr.bf16.mxu0 0
        %4189 = vmatmul.mubr.bf16.gmra.mrb[0].mxu0 %v4151
        %v4190 = vpop.f32.mrb[0].mxu0
        %v4191 = vadd.f32 0.0, %v4190
        %v4192 = vpop.f32.mrb[0].mxu0
        %v4193 = vpop.f32.mrb[0].mxu0
        %v4194 = vpop.f32.mrb[0].mxu0
        %4195 = vdwg.mxu0
        %v4196 = vpack.c.bf16 %v3505, %v3456
        %v4197 = vpack.c.bf16 %v3603, %v3554
        %v4198 = vpack.c.bf16 %v3701, %v3652
        %v4199 = vpack.c.bf16 %v3799, %v3750
        %v4200 = vpack.c.bf16 %v3897, %v3848
        %v4201 = vpack.c.bf16 %v3995, %v3946
        %v4202 = vpack.c.bf16 %v4093, %v4044
        %v4203 = vpack.c.bf16 %v4191, %v4142
        %v4204 = vld [vmem:[%s4 + $0x10] sm:$0xf]
        %v4205 = vld [vmem:[%s4 + $0x14] sm:$0xf]
        %v4206 = vld [vmem:[%s4 + $0x18] sm:$0xf]
        %v4207 = vld [vmem:[%s4 + $0x1c] sm:$0xf]
        %v4212 = vunpack.c.l.b16 %v4204
        %v4213 = vunpack.c.l.b16 %v4205
        %v4214 = vunpack.c.l.b16 %v4206
        %v4215 = vunpack.c.l.b16 %v4207
        %v4216 = vpack.c.b16 %v4213, %v4212
        %v4217 = vpack.c.b16 %v4215, %v4214
        %v4221 = vsel %vm709, %v4196, 0
        %v4224 = vsel %vm709, %v4197, 0
        %v4227 = vsel %vm709, %v4198, 0
        %v4230 = vsel %vm709, %v4199, 0
        %v4233 = vsel %vm709, %v4200, 0
        %v4236 = vsel %vm709, %v4201, 0
        %v4239 = vsel %vm709, %v4202, 0
        %v4242 = vsel %vm709, %v4203, 0
        %4244 = vmatprep.subr.bf16.mxu0 0
        %4245 = vmatpush1.bf16.msra.mxu0 %v4216
        %4246 = vmatprep.subr.bf16.mxu0 0
        %4247 = vmatpush1.bf16.msra.mxu0 %v4217
        %4248 = vmatprep.subr.bf16.mxu0 0
        %4249 = vmatpush1.bf16.msra.mxu0 0
        %4250 = vmatprep.subr.bf16.mxu0 0
        %4251 = vmatpush1.bf16.msra.mxu0 0
        %4252 = vmatprep.subr.bf16.mxu0 0
        %4253 = vmatpush1.bf16.msra.mxu0 0
        %4254 = vmatprep.subr.bf16.mxu0 0
        %4255 = vmatpush1.bf16.msra.mxu0 0
        %4256 = vmatprep.subr.bf16.mxu0 0
        %4257 = vmatpush1.bf16.msra.mxu0 0
        %4258 = vmatprep.subr.bf16.mxu0 0
        %4259 = vmatpush1.bf16.msra.mxu0 0
        %4260 = vmatprep.subr.bf16.mxu0 0
        %4261 = vmatpush1.bf16.msra.mxu0 0
        %4262 = vmatprep.subr.bf16.mxu0 0
        %4263 = vmatpush1.bf16.msra.mxu0 0
        %4264 = vmatprep.subr.bf16.mxu0 0
        %4265 = vmatpush1.bf16.msra.mxu0 0
        %4266 = vmatprep.subr.bf16.mxu0 0
        %4267 = vmatpush1.bf16.msra.mxu0 0
        %4268 = vmatprep.subr.bf16.mxu0 0
        %4269 = vmatpush1.bf16.msra.mxu0 0
        %4270 = vmatprep.subr.bf16.mxu0 0
        %4271 = vmatpush1.bf16.msra.mxu0 0
        %4272 = vmatprep.subr.bf16.mxu0 0
        %4273 = vmatpush1.bf16.msra.mxu0 0
        %4274 = vmatprep.subr.bf16.mxu0 0
        %4275 = vmatpush1.bf16.msra.mxu0 0
        %4276 = vmatprep.mubr.bf16.mxu0 0
        %4277 = vmatmul.mubr.bf16.gmra.mrb[0].mxu0 %v4221
        %v4278 = vpop.f32.mrb[0].mxu0
        %v4279 = vadd.f32 0.0, %v4278
        %v4280 = vpop.f32.mrb[0].mxu0
        %v4281 = vpop.f32.mrb[0].mxu0
        %v4282 = vadd.f32 0.0, %v4281
        %v4283 = vpop.f32.mrb[0].mxu0
        %4284 = vmatprep.mubr.bf16.mxu0 0
        %4285 = vmatmul.mubr.bf16.gmra.mrb[0].mxu0 %v4224
        %v4286 = vpop.f32.mrb[0].mxu0
        %v4287 = vadd.f32 0.0, %v4286
        %v4288 = vpop.f32.mrb[0].mxu0
        %v4289 = vpop.f32.mrb[0].mxu0
        %v4290 = vadd.f32 0.0, %v4289
        %v4291 = vpop.f32.mrb[0].mxu0
        %4292 = vmatprep.mubr.bf16.mxu0 0
        %4293 = vmatmul.mubr.bf16.gmra.mrb[0].mxu0 %v4227
        %v4294 = vpop.f32.mrb[0].mxu0
        %v4295 = vadd.f32 0.0, %v4294
        %v4296 = vpop.f32.mrb[0].mxu0
        %v4297 = vpop.f32.mrb[0].mxu0
        %v4298 = vadd.f32 0.0, %v4297
        %v4299 = vpop.f32.mrb[0].mxu0
        %4300 = vmatprep.mubr.bf16.mxu0 0
        %4301 = vmatmul.mubr.bf16.gmra.mrb[0].mxu0 %v4230
        %v4302 = vpop.f32.mrb[0].mxu0
        %v4303 = vadd.f32 0.0, %v4302
        %v4304 = vpop.f32.mrb[0].mxu0
        %v4305 = vpop.f32.mrb[0].mxu0
        %v4306 = vadd.f32 0.0, %v4305
        %v4307 = vpop.f32.mrb[0].mxu0
        %4308 = vmatprep.mubr.bf16.mxu0 0
        %4309 = vmatmul.mubr.bf16.gmra.mrb[0].mxu0 %v4233
        %v4310 = vpop.f32.mrb[0].mxu0
        %v4311 = vadd.f32 0.0, %v4310
        %v4312 = vpop.f32.mrb[0].mxu0
        %v4313 = vpop.f32.mrb[0].mxu0
        %v4314 = vadd.f32 0.0, %v4313
        %v4315 = vpop.f32.mrb[0].mxu0
        %4316 = vmatprep.mubr.bf16.mxu0 0
        %4317 = vmatmul.mubr.bf16.gmra.mrb[0].mxu0 %v4236
        %v4318 = vpop.f32.mrb[0].mxu0
        %v4319 = vadd.f32 0.0, %v4318
        %v4320 = vpop.f32.mrb[0].mxu0
        %v4321 = vpop.f32.mrb[0].mxu0
        %v4322 = vadd.f32 0.0, %v4321
        %v4323 = vpop.f32.mrb[0].mxu0
        %4324 = vmatprep.mubr.bf16.mxu0 0
        %4325 = vmatmul.mubr.bf16.gmra.mrb[0].mxu0 %v4239
        %v4326 = vpop.f32.mrb[0].mxu0
        %v4327 = vadd.f32 0.0, %v4326
        %v4328 = vpop.f32.mrb[0].mxu0
        %v4329 = vpop.f32.mrb[0].mxu0
        %v4330 = vadd.f32 0.0, %v4329
        %v4331 = vpop.f32.mrb[0].mxu0
        %4332 = vmatprep.mubr.bf16.mxu0 0
        %4333 = vmatmul.mubr.bf16.gmra.mrb[0].mxu0 %v4242
        %v4334 = vpop.f32.mrb[0].mxu0
        %v4335 = vadd.f32 0.0, %v4334
        %v4336 = vpop.f32.mrb[0].mxu0
        %v4337 = vpop.f32.mrb[0].mxu0
        %v4338 = vadd.f32 0.0, %v4337
        %v4339 = vpop.f32.mrb[0].mxu0
        %4340 = vdwg.mxu0
        %v4345 = vunpack.c.l.b16 %v2384
        %v4346 = vunpack.c.l.b16 %v2385
        %v4347 = vunpack.c.l.b16 %v2386
        %v4348 = vunpack.c.l.b16 %v2387
        %v4349 = vpack.c.b16 %v4346, %v4345
        %v4350 = vpack.c.b16 %v4348, %v4347
        %v4354 = vsel %vm709, %v2376, 0
        %v4357 = vsel %vm709, %v2377, 0
        %v4360 = vsel %vm709, %v2378, 0
        %v4363 = vsel %vm709, %v2379, 0
        %v4366 = vsel %vm709, %v2380, 0
        %v4369 = vsel %vm709, %v2381, 0
        %v4372 = vsel %vm709, %v2382, 0
        %v4375 = vsel %vm709, %v2383, 0
        %4377 = vmatprep.subr.bf16.mxu0 0
        %4378 = vmatpush1.bf16.msra.mxu0 %v4349
        %4379 = vmatprep.subr.bf16.mxu0 0
        %4380 = vmatpush1.bf16.msra.mxu0 %v4350
        %4381 = vmatprep.subr.bf16.mxu0 0
        %4382 = vmatpush1.bf16.msra.mxu0 0
        %4383 = vmatprep.subr.bf16.mxu0 0
        %4384 = vmatpush1.bf16.msra.mxu0 0
        %4385 = vmatprep.subr.bf16.mxu0 0
        %4386 = vmatpush1.bf16.msra.mxu0 0
        %4387 = vmatprep.subr.bf16.mxu0 0
        %4388 = vmatpush1.bf16.msra.mxu0 0
        %4389 = vmatprep.subr.bf16.mxu0 0
        %4390 = vmatpush1.bf16.msra.mxu0 0
        %4391 = vmatprep.subr.bf16.mxu0 0
        %4392 = vmatpush1.bf16.msra.mxu0 0
        %4393 = vmatprep.subr.bf16.mxu0 0
        %4394 = vmatpush1.bf16.msra.mxu0 0
        %4395 = vmatprep.subr.bf16.mxu0 0
        %4396 = vmatpush1.bf16.msra.mxu0 0
        %4397 = vmatprep.subr.bf16.mxu0 0
        %4398 = vmatpush1.bf16.msra.mxu0 0
        %4399 = vmatprep.subr.bf16.mxu0 0
        %4400 = vmatpush1.bf16.msra.mxu0 0
        %4401 = vmatprep.subr.bf16.mxu0 0
        %4402 = vmatpush1.bf16.msra.mxu0 0
        %4403 = vmatprep.subr.bf16.mxu0 0
        %4404 = vmatpush1.bf16.msra.mxu0 0
        %4405 = vmatprep.subr.bf16.mxu0 0
        %4406 = vmatpush1.bf16.msra.mxu0 0
        %4407 = vmatprep.subr.bf16.mxu0 0
        %4408 = vmatpush1.bf16.msra.mxu0 0
        %4409 = vmatprep.mubr.bf16.mxu0 0
        %4410 = vmatmul.mubr.bf16.gmra.mrb[0].mxu0 %v4354
        %v4411 = vpop.f32.mrb[0].mxu0
        %v4412 = vadd.f32 %v4279, %v4411
        %v4413 = vpop.f32.mrb[0].mxu0
        %v4414 = vpop.f32.mrb[0].mxu0
        %v4415 = vadd.f32 %v4282, %v4414
        %v4416 = vpop.f32.mrb[0].mxu0
        %4417 = vmatprep.mubr.bf16.mxu0 0
        %4418 = vmatmul.mubr.bf16.gmra.mrb[0].mxu0 %v4357
        %v4419 = vpop.f32.mrb[0].mxu0
        %v4420 = vadd.f32 %v4287, %v4419
        %v4421 = vpop.f32.mrb[0].mxu0
        %v4422 = vpop.f32.mrb[0].mxu0
        %v4423 = vadd.f32 %v4290, %v4422
        %v4424 = vpop.f32.mrb[0].mxu0
        %4425 = vmatprep.mubr.bf16.mxu0 0
        %4426 = vmatmul.mubr.bf16.gmra.mrb[0].mxu0 %v4360
        %v4427 = vpop.f32.mrb[0].mxu0
        %v4428 = vadd.f32 %v4295, %v4427
        %v4429 = vpop.f32.mrb[0].mxu0
        %v4430 = vpop.f32.mrb[0].mxu0
        %v4431 = vadd.f32 %v4298, %v4430
        %v4432 = vpop.f32.mrb[0].mxu0
        %4433 = vmatprep.mubr.bf16.mxu0 0
        %4434 = vmatmul.mubr.bf16.gmra.mrb[0].mxu0 %v4363
        %v4435 = vpop.f32.mrb[0].mxu0
        %v4436 = vadd.f32 %v4303, %v4435
        %v4437 = vpop.f32.mrb[0].mxu0
        %v4438 = vpop.f32.mrb[0].mxu0
        %v4439 = vadd.f32 %v4306, %v4438
        %v4440 = vpop.f32.mrb[0].mxu0
        %4441 = vmatprep.mubr.bf16.mxu0 0
        %4442 = vmatmul.mubr.bf16.gmra.mrb[0].mxu0 %v4366
        %v4443 = vpop.f32.mrb[0].mxu0
        %v4444 = vadd.f32 %v4311, %v4443
        %v4445 = vpop.f32.mrb[0].mxu0
        %v4446 = vpop.f32.mrb[0].mxu0
        %v4447 = vadd.f32 %v4314, %v4446
        %v4448 = vpop.f32.mrb[0].mxu0
        %4449 = vmatprep.mubr.bf16.mxu0 0
        %4450 = vmatmul.mubr.bf16.gmra.mrb[0].mxu0 %v4369
        %v4451 = vpop.f32.mrb[0].mxu0
        %v4452 = vadd.f32 %v4319, %v4451
        %v4453 = vpop.f32.mrb[0].mxu0
        %v4454 = vpop.f32.mrb[0].mxu0
        %v4455 = vadd.f32 %v4322, %v4454
        %v4456 = vpop.f32.mrb[0].mxu0
        %4457 = vmatprep.mubr.bf16.mxu0 0
        %4458 = vmatmul.mubr.bf16.gmra.mrb[0].mxu0 %v4372
        %v4459 = vpop.f32.mrb[0].mxu0
        %v4460 = vadd.f32 %v4327, %v4459
        %v4461 = vpop.f32.mrb[0].mxu0
        %v4462 = vpop.f32.mrb[0].mxu0
        %v4463 = vadd.f32 %v4330, %v4462
        %v4464 = vpop.f32.mrb[0].mxu0
        %4465 = vmatprep.mubr.bf16.mxu0 0
        %4466 = vmatmul.mubr.bf16.gmra.mrb[0].mxu0 %v4375
        %v4467 = vpop.f32.mrb[0].mxu0
        %v4468 = vadd.f32 %v4335, %v4467
        %v4469 = vpop.f32.mrb[0].mxu0
        %v4470 = vpop.f32.mrb[0].mxu0
        %v4471 = vadd.f32 %v4338, %v4470
        %v4472 = vpop.f32.mrb[0].mxu0
        %4473 = vdwg.mxu0
        %4474 = vrot.lane.b32.xlu0 %v581, 64
        %v4475 = vpop.permute.xlu0 %4474
        %4476 = vrot.lane.b32.xlu0 %v613, 64
        %v4477 = vpop.permute.xlu0 %4476
        %v4479 = vsel %vm709, %v4475, 0
        %v4482 = vsel %vm709, %v4477, 0
        %4484 = vmatprep.subr.bf16.mxu0 0
        %4485 = vmatpush1.bf16.xpose.msra.mxu0 %v4482
        %4486 = vmatprep.subr.bf16.mxu0 0
        %4487 = vmatpush1.bf16.xpose.msra.mxu0 0
        %4488 = vmatprep.subr.bf16.mxu0 0
        %4489 = vmatpush1.bf16.xpose.msra.mxu0 0
        %4490 = vmatprep.subr.bf16.mxu0 0
        %4491 = vmatpush1.bf16.xpose.msra.mxu0 0
        %4492 = vmatprep.subr.bf16.mxu0 0
        %4493 = vmatpush1.bf16.xpose.msra.mxu0 0
        %4494 = vmatprep.subr.bf16.mxu0 0
        %4495 = vmatpush1.bf16.xpose.msra.mxu0 0
        %4496 = vmatprep.subr.bf16.mxu0 0
        %4497 = vmatpush1.bf16.xpose.msra.mxu0 0
        %4498 = vmatprep.subr.bf16.mxu0 0
        %4499 = vmatpush1.bf16.xpose.msra.mxu0 0
        %4500 = vmatprep.subr.bf16.mxu0 0
        %4501 = vmatpush1.bf16.xpose.msra.mxu0 0
        %4502 = vmatprep.subr.bf16.mxu0 0
        %4503 = vmatpush1.bf16.xpose.msra.mxu0 0
        %4504 = vmatprep.subr.bf16.mxu0 0
        %4505 = vmatpush1.bf16.xpose.msra.mxu0 0
        %4506 = vmatprep.subr.bf16.mxu0 0
        %4507 = vmatpush1.bf16.xpose.msra.mxu0 0
        %4508 = vmatprep.subr.bf16.mxu0 0
        %4509 = vmatpush1.bf16.xpose.msra.mxu0 0
        %4510 = vmatprep.subr.bf16.mxu0 0
        %4511 = vmatpush1.bf16.xpose.msra.mxu0 0
        %4512 = vmatprep.subr.bf16.mxu0 0
        %4513 = vmatpush1.bf16.xpose.msra.mxu0 0
        %4514 = vmatprep.subr.bf16.mxu0 0
        %4515 = vmatpush1.bf16.xpose.msra.mxu0 0
        %4516 = vmatprep.mubr.bf16.mxu0 0
        %4517 = vmatmul.mubr.bf16.gmra.mrb[0].mxu0 %v4479
        %v4518 = vpop.f32.mrb[0].mxu0
        %v4519 = vadd.f32 %v693, %v4518
        %v4520 = vpop.f32.mrb[0].mxu0
        %v4521 = vpop.f32.mrb[0].mxu0
        %v4522 = vpop.f32.mrb[0].mxu0
        %4523 = vdwg.mxu0
        %4524 = vrot.lane.b32.xlu0 %v582, 64
        %v4525 = vpop.permute.xlu0 %4524
        %4526 = vrot.lane.b32.xlu0 %v614, 64
        %v4527 = vpop.permute.xlu0 %4526
        %v4529 = vsel %vm709, %v4525, 0
        %v4532 = vsel %vm709, %v4527, 0
        %4534 = vmatprep.subr.bf16.mxu0 0
        %4535 = vmatpush1.bf16.xpose.msra.mxu0 %v4532
        %4536 = vmatprep.subr.bf16.mxu0 0
        %4537 = vmatpush1.bf16.xpose.msra.mxu0 0
        %4538 = vmatprep.subr.bf16.mxu0 0
        %4539 = vmatpush1.bf16.xpose.msra.mxu0 0
        %4540 = vmatprep.subr.bf16.mxu0 0
        %4541 = vmatpush1.bf16.xpose.msra.mxu0 0
        %4542 = vmatprep.subr.bf16.mxu0 0
        %4543 = vmatpush1.bf16.xpose.msra.mxu0 0
        %4544 = vmatprep.subr.bf16.mxu0 0
        %4545 = vmatpush1.bf16.xpose.msra.mxu0 0
        %4546 = vmatprep.subr.bf16.mxu0 0
        %4547 = vmatpush1.bf16.xpose.msra.mxu0 0
        %4548 = vmatprep.subr.bf16.mxu0 0
        %4549 = vmatpush1.bf16.xpose.msra.mxu0 0
        %4550 = vmatprep.subr.bf16.mxu0 0
        %4551 = vmatpush1.bf16.xpose.msra.mxu0 0
        %4552 = vmatprep.subr.bf16.mxu0 0
        %4553 = vmatpush1.bf16.xpose.msra.mxu0 0
        %4554 = vmatprep.subr.bf16.mxu0 0
        %4555 = vmatpush1.bf16.xpose.msra.mxu0 0
        %4556 = vmatprep.subr.bf16.mxu0 0
        %4557 = vmatpush1.bf16.xpose.msra.mxu0 0
        %4558 = vmatprep.subr.bf16.mxu0 0
        %4559 = vmatpush1.bf16.xpose.msra.mxu0 0
        %4560 = vmatprep.subr.bf16.mxu0 0
        %4561 = vmatpush1.bf16.xpose.msra.mxu0 0
        %4562 = vmatprep.subr.bf16.mxu0 0
        %4563 = vmatpush1.bf16.xpose.msra.mxu0 0
        %4564 = vmatprep.subr.bf16.mxu0 0
        %4565 = vmatpush1.bf16.xpose.msra.mxu0 0
        %4566 = vmatprep.mubr.bf16.mxu0 0
        %4567 = vmatmul.mubr.bf16.gmra.mrb[0].mxu0 %v4529
        %v4568 = vpop.f32.mrb[0].mxu0
        %v4569 = vadd.f32 %v694, %v4568
        %v4570 = vpop.f32.mrb[0].mxu0
        %v4571 = vpop.f32.mrb[0].mxu0
        %v4572 = vpop.f32.mrb[0].mxu0
        %4573 = vdwg.mxu0
        %4574 = vrot.lane.b32.xlu0 %v583, 64
        %v4575 = vpop.permute.xlu0 %4574
        %4576 = vrot.lane.b32.xlu0 %v615, 64
        %v4577 = vpop.permute.xlu0 %4576
        %v4579 = vsel %vm709, %v4575, 0
        %v4582 = vsel %vm709, %v4577, 0
        %4584 = vmatprep.subr.bf16.mxu0 0
        %4585 = vmatpush1.bf16.xpose.msra.mxu0 %v4582
        %4586 = vmatprep.subr.bf16.mxu0 0
        %4587 = vmatpush1.bf16.xpose.msra.mxu0 0
        %4588 = vmatprep.subr.bf16.mxu0 0
        %4589 = vmatpush1.bf16.xpose.msra.mxu0 0
        %4590 = vmatprep.subr.bf16.mxu0 0
        %4591 = vmatpush1.bf16.xpose.msra.mxu0 0
        %4592 = vmatprep.subr.bf16.mxu0 0
        %4593 = vmatpush1.bf16.xpose.msra.mxu0 0
        %4594 = vmatprep.subr.bf16.mxu0 0
        %4595 = vmatpush1.bf16.xpose.msra.mxu0 0
        %4596 = vmatprep.subr.bf16.mxu0 0
        %4597 = vmatpush1.bf16.xpose.msra.mxu0 0
        %4598 = vmatprep.subr.bf16.mxu0 0
        %4599 = vmatpush1.bf16.xpose.msra.mxu0 0
        %4600 = vmatprep.subr.bf16.mxu0 0
        %4601 = vmatpush1.bf16.xpose.msra.mxu0 0
        %4602 = vmatprep.subr.bf16.mxu0 0
        %4603 = vmatpush1.bf16.xpose.msra.mxu0 0
        %4604 = vmatprep.subr.bf16.mxu0 0
        %4605 = vmatpush1.bf16.xpose.msra.mxu0 0
        %4606 = vmatprep.subr.bf16.mxu0 0
        %4607 = vmatpush1.bf16.xpose.msra.mxu0 0
        %4608 = vmatprep.subr.bf16.mxu0 0
        %4609 = vmatpush1.bf16.xpose.msra.mxu0 0
        %4610 = vmatprep.subr.bf16.mxu0 0
        %4611 = vmatpush1.bf16.xpose.msra.mxu0 0
        %4612 = vmatprep.subr.bf16.mxu0 0
        %4613 = vmatpush1.bf16.xpose.msra.mxu0 0
        %4614 = vmatprep.subr.bf16.mxu0 0
        %4615 = vmatpush1.bf16.xpose.msra.mxu0 0
        %4616 = vmatprep.mubr.bf16.mxu0 0
        %4617 = vmatmul.mubr.bf16.gmra.mrb[0].mxu0 %v4579
        %v4618 = vpop.f32.mrb[0].mxu0
        %v4619 = vadd.f32 %v695, %v4618
        %v4620 = vpop.f32.mrb[0].mxu0
        %v4621 = vpop.f32.mrb[0].mxu0
        %v4622 = vpop.f32.mrb[0].mxu0
        %4623 = vdwg.mxu0
        %4624 = vrot.lane.b32.xlu0 %v584, 64
        %v4625 = vpop.permute.xlu0 %4624
        %4626 = vrot.lane.b32.xlu0 %v616, 64
        %v4627 = vpop.permute.xlu0 %4626
        %v4629 = vsel %vm709, %v4625, 0
        %v4632 = vsel %vm709, %v4627, 0
        %4634 = vmatprep.subr.bf16.mxu0 0
        %4635 = vmatpush1.bf16.xpose.msra.mxu0 %v4632
        %4636 = vmatprep.subr.bf16.mxu0 0
        %4637 = vmatpush1.bf16.xpose.msra.mxu0 0
        %4638 = vmatprep.subr.bf16.mxu0 0
        %4639 = vmatpush1.bf16.xpose.msra.mxu0 0
        %4640 = vmatprep.subr.bf16.mxu0 0
        %4641 = vmatpush1.bf16.xpose.msra.mxu0 0
        %4642 = vmatprep.subr.bf16.mxu0 0
        %4643 = vmatpush1.bf16.xpose.msra.mxu0 0
        %4644 = vmatprep.subr.bf16.mxu0 0
        %4645 = vmatpush1.bf16.xpose.msra.mxu0 0
        %4646 = vmatprep.subr.bf16.mxu0 0
        %4647 = vmatpush1.bf16.xpose.msra.mxu0 0
        %4648 = vmatprep.subr.bf16.mxu0 0
        %4649 = vmatpush1.bf16.xpose.msra.mxu0 0
        %4650 = vmatprep.subr.bf16.mxu0 0
        %4651 = vmatpush1.bf16.xpose.msra.mxu0 0
        %4652 = vmatprep.subr.bf16.mxu0 0
        %4653 = vmatpush1.bf16.xpose.msra.mxu0 0
        %4654 = vmatprep.subr.bf16.mxu0 0
        %4655 = vmatpush1.bf16.xpose.msra.mxu0 0
        %4656 = vmatprep.subr.bf16.mxu0 0
        %4657 = vmatpush1.bf16.xpose.msra.mxu0 0
        %4658 = vmatprep.subr.bf16.mxu0 0
        %4659 = vmatpush1.bf16.xpose.msra.mxu0 0
        %4660 = vmatprep.subr.bf16.mxu0 0
        %4661 = vmatpush1.bf16.xpose.msra.mxu0 0
        %4662 = vmatprep.subr.bf16.mxu0 0
        %4663 = vmatpush1.bf16.xpose.msra.mxu0 0
        %4664 = vmatprep.subr.bf16.mxu0 0
        %4665 = vmatpush1.bf16.xpose.msra.mxu0 0
        %4666 = vmatprep.mubr.bf16.mxu0 0
        %4667 = vmatmul.mubr.bf16.gmra.mrb[0].mxu0 %v4629
        %v4668 = vpop.f32.mrb[0].mxu0
        %v4669 = vadd.f32 %v696, %v4668
        %v4670 = vpop.f32.mrb[0].mxu0
        %v4671 = vpop.f32.mrb[0].mxu0
        %v4672 = vpop.f32.mrb[0].mxu0
        %4673 = vdwg.mxu0
        %4674 = vrot.lane.b32.xlu0 %v585, 64
        %v4675 = vpop.permute.xlu0 %4674
        %4676 = vrot.lane.b32.xlu0 %v617, 64
        %v4677 = vpop.permute.xlu0 %4676
        %v4679 = vsel %vm709, %v4675, 0
        %v4682 = vsel %vm709, %v4677, 0
        %4684 = vmatprep.subr.bf16.mxu0 0
        %4685 = vmatpush1.bf16.xpose.msra.mxu0 %v4682
        %4686 = vmatprep.subr.bf16.mxu0 0
        %4687 = vmatpush1.bf16.xpose.msra.mxu0 0
        %4688 = vmatprep.subr.bf16.mxu0 0
        %4689 = vmatpush1.bf16.xpose.msra.mxu0 0
        %4690 = vmatprep.subr.bf16.mxu0 0
        %4691 = vmatpush1.bf16.xpose.msra.mxu0 0
        %4692 = vmatprep.subr.bf16.mxu0 0
        %4693 = vmatpush1.bf16.xpose.msra.mxu0 0
        %4694 = vmatprep.subr.bf16.mxu0 0
        %4695 = vmatpush1.bf16.xpose.msra.mxu0 0
        %4696 = vmatprep.subr.bf16.mxu0 0
        %4697 = vmatpush1.bf16.xpose.msra.mxu0 0
        %4698 = vmatprep.subr.bf16.mxu0 0
        %4699 = vmatpush1.bf16.xpose.msra.mxu0 0
        %4700 = vmatprep.subr.bf16.mxu0 0
        %4701 = vmatpush1.bf16.xpose.msra.mxu0 0
        %4702 = vmatprep.subr.bf16.mxu0 0
        %4703 = vmatpush1.bf16.xpose.msra.mxu0 0
        %4704 = vmatprep.subr.bf16.mxu0 0
        %4705 = vmatpush1.bf16.xpose.msra.mxu0 0
        %4706 = vmatprep.subr.bf16.mxu0 0
        %4707 = vmatpush1.bf16.xpose.msra.mxu0 0
        %4708 = vmatprep.subr.bf16.mxu0 0
        %4709 = vmatpush1.bf16.xpose.msra.mxu0 0
        %4710 = vmatprep.subr.bf16.mxu0 0
        %4711 = vmatpush1.bf16.xpose.msra.mxu0 0
        %4712 = vmatprep.subr.bf16.mxu0 0
        %4713 = vmatpush1.bf16.xpose.msra.mxu0 0
        %4714 = vmatprep.subr.bf16.mxu0 0
        %4715 = vmatpush1.bf16.xpose.msra.mxu0 0
        %4716 = vmatprep.mubr.bf16.mxu0 0
        %4717 = vmatmul.mubr.bf16.gmra.mrb[0].mxu0 %v4679
        %v4718 = vpop.f32.mrb[0].mxu0
        %v4719 = vadd.f32 %v697, %v4718
        %v4720 = vpop.f32.mrb[0].mxu0
        %v4721 = vpop.f32.mrb[0].mxu0
        %v4722 = vpop.f32.mrb[0].mxu0
        %4723 = vdwg.mxu0
        %4724 = vrot.lane.b32.xlu0 %v586, 64
        %v4725 = vpop.permute.xlu0 %4724
        %4726 = vrot.lane.b32.xlu0 %v618, 64
        %v4727 = vpop.permute.xlu0 %4726
        %v4729 = vsel %vm709, %v4725, 0
        %v4732 = vsel %vm709, %v4727, 0
        %4734 = vmatprep.subr.bf16.mxu0 0
        %4735 = vmatpush1.bf16.xpose.msra.mxu0 %v4732
        %4736 = vmatprep.subr.bf16.mxu0 0
        %4737 = vmatpush1.bf16.xpose.msra.mxu0 0
        %4738 = vmatprep.subr.bf16.mxu0 0
        %4739 = vmatpush1.bf16.xpose.msra.mxu0 0
        %4740 = vmatprep.subr.bf16.mxu0 0
        %4741 = vmatpush1.bf16.xpose.msra.mxu0 0
        %4742 = vmatprep.subr.bf16.mxu0 0
        %4743 = vmatpush1.bf16.xpose.msra.mxu0 0
        %4744 = vmatprep.subr.bf16.mxu0 0
        %4745 = vmatpush1.bf16.xpose.msra.mxu0 0
        %4746 = vmatprep.subr.bf16.mxu0 0
        %4747 = vmatpush1.bf16.xpose.msra.mxu0 0
        %4748 = vmatprep.subr.bf16.mxu0 0
        %4749 = vmatpush1.bf16.xpose.msra.mxu0 0
        %4750 = vmatprep.subr.bf16.mxu0 0
        %4751 = vmatpush1.bf16.xpose.msra.mxu0 0
        %4752 = vmatprep.subr.bf16.mxu0 0
        %4753 = vmatpush1.bf16.xpose.msra.mxu0 0
        %4754 = vmatprep.subr.bf16.mxu0 0
        %4755 = vmatpush1.bf16.xpose.msra.mxu0 0
        %4756 = vmatprep.subr.bf16.mxu0 0
        %4757 = vmatpush1.bf16.xpose.msra.mxu0 0
        %4758 = vmatprep.subr.bf16.mxu0 0
        %4759 = vmatpush1.bf16.xpose.msra.mxu0 0
        %4760 = vmatprep.subr.bf16.mxu0 0
        %4761 = vmatpush1.bf16.xpose.msra.mxu0 0
        %4762 = vmatprep.subr.bf16.mxu0 0
        %4763 = vmatpush1.bf16.xpose.msra.mxu0 0
        %4764 = vmatprep.subr.bf16.mxu0 0
        %4765 = vmatpush1.bf16.xpose.msra.mxu0 0
        %4766 = vmatprep.mubr.bf16.mxu0 0
        %4767 = vmatmul.mubr.bf16.gmra.mrb[0].mxu0 %v4729
        %v4768 = vpop.f32.mrb[0].mxu0
        %v4769 = vadd.f32 %v698, %v4768
        %v4770 = vpop.f32.mrb[0].mxu0
        %v4771 = vpop.f32.mrb[0].mxu0
        %v4772 = vpop.f32.mrb[0].mxu0
        %4773 = vdwg.mxu0
        %4774 = vrot.lane.b32.xlu0 %v587, 64
        %v4775 = vpop.permute.xlu0 %4774
        %4776 = vrot.lane.b32.xlu0 %v619, 64
        %v4777 = vpop.permute.xlu0 %4776
        %v4779 = vsel %vm709, %v4775, 0
        %v4782 = vsel %vm709, %v4777, 0
        %4784 = vmatprep.subr.bf16.mxu0 0
        %4785 = vmatpush1.bf16.xpose.msra.mxu0 %v4782
        %4786 = vmatprep.subr.bf16.mxu0 0
        %4787 = vmatpush1.bf16.xpose.msra.mxu0 0
        %4788 = vmatprep.subr.bf16.mxu0 0
        %4789 = vmatpush1.bf16.xpose.msra.mxu0 0
        %4790 = vmatprep.subr.bf16.mxu0 0
        %4791 = vmatpush1.bf16.xpose.msra.mxu0 0
        %4792 = vmatprep.subr.bf16.mxu0 0
        %4793 = vmatpush1.bf16.xpose.msra.mxu0 0
        %4794 = vmatprep.subr.bf16.mxu0 0
        %4795 = vmatpush1.bf16.xpose.msra.mxu0 0
        %4796 = vmatprep.subr.bf16.mxu0 0
        %4797 = vmatpush1.bf16.xpose.msra.mxu0 0
        %4798 = vmatprep.subr.bf16.mxu0 0
        %4799 = vmatpush1.bf16.xpose.msra.mxu0 0
        %4800 = vmatprep.subr.bf16.mxu0 0
        %4801 = vmatpush1.bf16.xpose.msra.mxu0 0
        %4802 = vmatprep.subr.bf16.mxu0 0
        %4803 = vmatpush1.bf16.xpose.msra.mxu0 0
        %4804 = vmatprep.subr.bf16.mxu0 0
        %4805 = vmatpush1.bf16.xpose.msra.mxu0 0
        %4806 = vmatprep.subr.bf16.mxu0 0
        %4807 = vmatpush1.bf16.xpose.msra.mxu0 0
        %4808 = vmatprep.subr.bf16.mxu0 0
        %4809 = vmatpush1.bf16.xpose.msra.mxu0 0
        %4810 = vmatprep.subr.bf16.mxu0 0
        %4811 = vmatpush1.bf16.xpose.msra.mxu0 0
        %4812 = vmatprep.subr.bf16.mxu0 0
        %4813 = vmatpush1.bf16.xpose.msra.mxu0 0
        %4814 = vmatprep.subr.bf16.mxu0 0
        %4815 = vmatpush1.bf16.xpose.msra.mxu0 0
        %4816 = vmatprep.mubr.bf16.mxu0 0
        %4817 = vmatmul.mubr.bf16.gmra.mrb[0].mxu0 %v4779
        %v4818 = vpop.f32.mrb[0].mxu0
        %v4819 = vadd.f32 %v699, %v4818
        %v4820 = vpop.f32.mrb[0].mxu0
        %v4821 = vpop.f32.mrb[0].mxu0
        %v4822 = vpop.f32.mrb[0].mxu0
        %4823 = vdwg.mxu0
        %4824 = vrot.lane.b32.xlu0 %v588, 64
        %v4825 = vpop.permute.xlu0 %4824
        %4826 = vrot.lane.b32.xlu0 %v620, 64
        %v4827 = vpop.permute.xlu0 %4826
        %v4829 = vsel %vm709, %v4825, 0
        %v4832 = vsel %vm709, %v4827, 0
        %4834 = vmatprep.subr.bf16.mxu0 0
        %4835 = vmatpush1.bf16.xpose.msra.mxu0 %v4832
        %4836 = vmatprep.subr.bf16.mxu0 0
        %4837 = vmatpush1.bf16.xpose.msra.mxu0 0
        %4838 = vmatprep.subr.bf16.mxu0 0
        %4839 = vmatpush1.bf16.xpose.msra.mxu0 0
        %4840 = vmatprep.subr.bf16.mxu0 0
        %4841 = vmatpush1.bf16.xpose.msra.mxu0 0
        %4842 = vmatprep.subr.bf16.mxu0 0
        %4843 = vmatpush1.bf16.xpose.msra.mxu0 0
        %4844 = vmatprep.subr.bf16.mxu0 0
        %4845 = vmatpush1.bf16.xpose.msra.mxu0 0
        %4846 = vmatprep.subr.bf16.mxu0 0
        %4847 = vmatpush1.bf16.xpose.msra.mxu0 0
        %4848 = vmatprep.subr.bf16.mxu0 0
        %4849 = vmatpush1.bf16.xpose.msra.mxu0 0
        %4850 = vmatprep.subr.bf16.mxu0 0
        %4851 = vmatpush1.bf16.xpose.msra.mxu0 0
        %4852 = vmatprep.subr.bf16.mxu0 0
        %4853 = vmatpush1.bf16.xpose.msra.mxu0 0
        %4854 = vmatprep.subr.bf16.mxu0 0
        %4855 = vmatpush1.bf16.xpose.msra.mxu0 0
        %4856 = vmatprep.subr.bf16.mxu0 0
        %4857 = vmatpush1.bf16.xpose.msra.mxu0 0
        %4858 = vmatprep.subr.bf16.mxu0 0
        %4859 = vmatpush1.bf16.xpose.msra.mxu0 0
        %4860 = vmatprep.subr.bf16.mxu0 0
        %4861 = vmatpush1.bf16.xpose.msra.mxu0 0
        %4862 = vmatprep.subr.bf16.mxu0 0
        %4863 = vmatpush1.bf16.xpose.msra.mxu0 0
        %4864 = vmatprep.subr.bf16.mxu0 0
        %4865 = vmatpush1.bf16.xpose.msra.mxu0 0
        %4866 = vmatprep.mubr.bf16.mxu0 0
        %4867 = vmatmul.mubr.bf16.gmra.mrb[0].mxu0 %v4829
        %v4868 = vpop.f32.mrb[0].mxu0
        %v4869 = vadd.f32 %v700, %v4868
        %v4870 = vpop.f32.mrb[0].mxu0
        %v4871 = vpop.f32.mrb[0].mxu0
        %v4872 = vpop.f32.mrb[0].mxu0
        %4873 = vdwg.mxu0
        %4874 = vrot.lane.b32.xlu0 %v589, 64
        %v4875 = vpop.permute.xlu0 %4874
        %4876 = vrot.lane.b32.xlu0 %v621, 64
        %v4877 = vpop.permute.xlu0 %4876
        %v4879 = vsel %vm709, %v4875, 0
        %v4882 = vsel %vm709, %v4877, 0
        %4884 = vmatprep.subr.bf16.mxu0 0
        %4885 = vmatpush1.bf16.xpose.msra.mxu0 %v4882
        %4886 = vmatprep.subr.bf16.mxu0 0
        %4887 = vmatpush1.bf16.xpose.msra.mxu0 0
        %4888 = vmatprep.subr.bf16.mxu0 0
        %4889 = vmatpush1.bf16.xpose.msra.mxu0 0
        %4890 = vmatprep.subr.bf16.mxu0 0
        %4891 = vmatpush1.bf16.xpose.msra.mxu0 0
        %4892 = vmatprep.subr.bf16.mxu0 0
        %4893 = vmatpush1.bf16.xpose.msra.mxu0 0
        %4894 = vmatprep.subr.bf16.mxu0 0
        %4895 = vmatpush1.bf16.xpose.msra.mxu0 0
        %4896 = vmatprep.subr.bf16.mxu0 0
        %4897 = vmatpush1.bf16.xpose.msra.mxu0 0
        %4898 = vmatprep.subr.bf16.mxu0 0
        %4899 = vmatpush1.bf16.xpose.msra.mxu0 0
        %4900 = vmatprep.subr.bf16.mxu0 0
        %4901 = vmatpush1.bf16.xpose.msra.mxu0 0
        %4902 = vmatprep.subr.bf16.mxu0 0
        %4903 = vmatpush1.bf16.xpose.msra.mxu0 0
        %4904 = vmatprep.subr.bf16.mxu0 0
        %4905 = vmatpush1.bf16.xpose.msra.mxu0 0
        %4906 = vmatprep.subr.bf16.mxu0 0
        %4907 = vmatpush1.bf16.xpose.msra.mxu0 0
        %4908 = vmatprep.subr.bf16.mxu0 0
        %4909 = vmatpush1.bf16.xpose.msra.mxu0 0
        %4910 = vmatprep.subr.bf16.mxu0 0
        %4911 = vmatpush1.bf16.xpose.msra.mxu0 0
        %4912 = vmatprep.subr.bf16.mxu0 0
        %4913 = vmatpush1.bf16.xpose.msra.mxu0 0
        %4914 = vmatprep.subr.bf16.mxu0 0
        %4915 = vmatpush1.bf16.xpose.msra.mxu0 0
        %4916 = vmatprep.mubr.bf16.mxu0 0
        %4917 = vmatmul.mubr.bf16.gmra.mrb[0].mxu0 %v4879
        %v4918 = vpop.f32.mrb[0].mxu0
        %v4919 = vadd.f32 %v701, %v4918
        %v4920 = vpop.f32.mrb[0].mxu0
        %v4921 = vpop.f32.mrb[0].mxu0
        %v4922 = vpop.f32.mrb[0].mxu0
        %4923 = vdwg.mxu0
        %4924 = vrot.lane.b32.xlu0 %v590, 64
        %v4925 = vpop.permute.xlu0 %4924
        %4926 = vrot.lane.b32.xlu0 %v622, 64
        %v4927 = vpop.permute.xlu0 %4926
        %v4929 = vsel %vm709, %v4925, 0
        %v4932 = vsel %vm709, %v4927, 0
        %4934 = vmatprep.subr.bf16.mxu0 0
        %4935 = vmatpush1.bf16.xpose.msra.mxu0 %v4932
        %4936 = vmatprep.subr.bf16.mxu0 0
        %4937 = vmatpush1.bf16.xpose.msra.mxu0 0
        %4938 = vmatprep.subr.bf16.mxu0 0
        %4939 = vmatpush1.bf16.xpose.msra.mxu0 0
        %4940 = vmatprep.subr.bf16.mxu0 0
        %4941 = vmatpush1.bf16.xpose.msra.mxu0 0
        %4942 = vmatprep.subr.bf16.mxu0 0
        %4943 = vmatpush1.bf16.xpose.msra.mxu0 0
        %4944 = vmatprep.subr.bf16.mxu0 0
        %4945 = vmatpush1.bf16.xpose.msra.mxu0 0
        %4946 = vmatprep.subr.bf16.mxu0 0
        %4947 = vmatpush1.bf16.xpose.msra.mxu0 0
        %4948 = vmatprep.subr.bf16.mxu0 0
        %4949 = vmatpush1.bf16.xpose.msra.mxu0 0
        %4950 = vmatprep.subr.bf16.mxu0 0
        %4951 = vmatpush1.bf16.xpose.msra.mxu0 0
        %4952 = vmatprep.subr.bf16.mxu0 0
        %4953 = vmatpush1.bf16.xpose.msra.mxu0 0
        %4954 = vmatprep.subr.bf16.mxu0 0
        %4955 = vmatpush1.bf16.xpose.msra.mxu0 0
        %4956 = vmatprep.subr.bf16.mxu0 0
        %4957 = vmatpush1.bf16.xpose.msra.mxu0 0
        %4958 = vmatprep.subr.bf16.mxu0 0
        %4959 = vmatpush1.bf16.xpose.msra.mxu0 0
        %4960 = vmatprep.subr.bf16.mxu0 0
        %4961 = vmatpush1.bf16.xpose.msra.mxu0 0
        %4962 = vmatprep.subr.bf16.mxu0 0
        %4963 = vmatpush1.bf16.xpose.msra.mxu0 0
        %4964 = vmatprep.subr.bf16.mxu0 0
        %4965 = vmatpush1.bf16.xpose.msra.mxu0 0
        %4966 = vmatprep.mubr.bf16.mxu0 0
        %4967 = vmatmul.mubr.bf16.gmra.mrb[0].mxu0 %v4929
        %v4968 = vpop.f32.mrb[0].mxu0
        %v4969 = vadd.f32 %v702, %v4968
        %v4970 = vpop.f32.mrb[0].mxu0
        %v4971 = vpop.f32.mrb[0].mxu0
        %v4972 = vpop.f32.mrb[0].mxu0
        %4973 = vdwg.mxu0
        %4974 = vrot.lane.b32.xlu0 %v591, 64
        %v4975 = vpop.permute.xlu0 %4974
        %4976 = vrot.lane.b32.xlu0 %v623, 64
        %v4977 = vpop.permute.xlu0 %4976
        %v4979 = vsel %vm709, %v4975, 0
        %v4982 = vsel %vm709, %v4977, 0
        %4984 = vmatprep.subr.bf16.mxu0 0
        %4985 = vmatpush1.bf16.xpose.msra.mxu0 %v4982
        %4986 = vmatprep.subr.bf16.mxu0 0
        %4987 = vmatpush1.bf16.xpose.msra.mxu0 0
        %4988 = vmatprep.subr.bf16.mxu0 0
        %4989 = vmatpush1.bf16.xpose.msra.mxu0 0
        %4990 = vmatprep.subr.bf16.mxu0 0
        %4991 = vmatpush1.bf16.xpose.msra.mxu0 0
        %4992 = vmatprep.subr.bf16.mxu0 0
        %4993 = vmatpush1.bf16.xpose.msra.mxu0 0
        %4994 = vmatprep.subr.bf16.mxu0 0
        %4995 = vmatpush1.bf16.xpose.msra.mxu0 0
        %4996 = vmatprep.subr.bf16.mxu0 0
        %4997 = vmatpush1.bf16.xpose.msra.mxu0 0
        %4998 = vmatprep.subr.bf16.mxu0 0
        %4999 = vmatpush1.bf16.xpose.msra.mxu0 0
        %5000 = vmatprep.subr.bf16.mxu0 0
        %5001 = vmatpush1.bf16.xpose.msra.mxu0 0
        %5002 = vmatprep.subr.bf16.mxu0 0
        %5003 = vmatpush1.bf16.xpose.msra.mxu0 0
        %5004 = vmatprep.subr.bf16.mxu0 0
        %5005 = vmatpush1.bf16.xpose.msra.mxu0 0
        %5006 = vmatprep.subr.bf16.mxu0 0
        %5007 = vmatpush1.bf16.xpose.msra.mxu0 0
        %5008 = vmatprep.subr.bf16.mxu0 0
        %5009 = vmatpush1.bf16.xpose.msra.mxu0 0
        %5010 = vmatprep.subr.bf16.mxu0 0
        %5011 = vmatpush1.bf16.xpose.msra.mxu0 0
        %5012 = vmatprep.subr.bf16.mxu0 0
        %5013 = vmatpush1.bf16.xpose.msra.mxu0 0
        %5014 = vmatprep.subr.bf16.mxu0 0
        %5015 = vmatpush1.bf16.xpose.msra.mxu0 0
        %5016 = vmatprep.mubr.bf16.mxu0 0
        %5017 = vmatmul.mubr.bf16.gmra.mrb[0].mxu0 %v4979
        %v5018 = vpop.f32.mrb[0].mxu0
        %v5019 = vadd.f32 %v703, %v5018
        %v5020 = vpop.f32.mrb[0].mxu0
        %v5021 = vpop.f32.mrb[0].mxu0
        %v5022 = vpop.f32.mrb[0].mxu0
        %5023 = vdwg.mxu0
        %5024 = vrot.lane.b32.xlu0 %v592, 64
        %v5025 = vpop.permute.xlu0 %5024
        %5026 = vrot.lane.b32.xlu0 %v624, 64
        %v5027 = vpop.permute.xlu0 %5026
        %v5029 = vsel %vm709, %v5025, 0
        %v5032 = vsel %vm709, %v5027, 0
        %5034 = vmatprep.subr.bf16.mxu0 0
        %5035 = vmatpush1.bf16.xpose.msra.mxu0 %v5032
        %5036 = vmatprep.subr.bf16.mxu0 0
        %5037 = vmatpush1.bf16.xpose.msra.mxu0 0
        %5038 = vmatprep.subr.bf16.mxu0 0
        %5039 = vmatpush1.bf16.xpose.msra.mxu0 0
        %5040 = vmatprep.subr.bf16.mxu0 0
        %5041 = vmatpush1.bf16.xpose.msra.mxu0 0
        %5042 = vmatprep.subr.bf16.mxu0 0
        %5043 = vmatpush1.bf16.xpose.msra.mxu0 0
        %5044 = vmatprep.subr.bf16.mxu0 0
        %5045 = vmatpush1.bf16.xpose.msra.mxu0 0
        %5046 = vmatprep.subr.bf16.mxu0 0
        %5047 = vmatpush1.bf16.xpose.msra.mxu0 0
        %5048 = vmatprep.subr.bf16.mxu0 0
        %5049 = vmatpush1.bf16.xpose.msra.mxu0 0
        %5050 = vmatprep.subr.bf16.mxu0 0
        %5051 = vmatpush1.bf16.xpose.msra.mxu0 0
        %5052 = vmatprep.subr.bf16.mxu0 0
        %5053 = vmatpush1.bf16.xpose.msra.mxu0 0
        %5054 = vmatprep.subr.bf16.mxu0 0
        %5055 = vmatpush1.bf16.xpose.msra.mxu0 0
        %5056 = vmatprep.subr.bf16.mxu0 0
        %5057 = vmatpush1.bf16.xpose.msra.mxu0 0
        %5058 = vmatprep.subr.bf16.mxu0 0
        %5059 = vmatpush1.bf16.xpose.msra.mxu0 0
        %5060 = vmatprep.subr.bf16.mxu0 0
        %5061 = vmatpush1.bf16.xpose.msra.mxu0 0
        %5062 = vmatprep.subr.bf16.mxu0 0
        %5063 = vmatpush1.bf16.xpose.msra.mxu0 0
        %5064 = vmatprep.subr.bf16.mxu0 0
        %5065 = vmatpush1.bf16.xpose.msra.mxu0 0
        %5066 = vmatprep.mubr.bf16.mxu0 0
        %5067 = vmatmul.mubr.bf16.gmra.mrb[0].mxu0 %v5029
        %v5068 = vpop.f32.mrb[0].mxu0
        %v5069 = vadd.f32 %v704, %v5068
        %v5070 = vpop.f32.mrb[0].mxu0
        %v5071 = vpop.f32.mrb[0].mxu0
        %v5072 = vpop.f32.mrb[0].mxu0
        %5073 = vdwg.mxu0
        %5074 = vrot.lane.b32.xlu0 %v593, 64
        %v5075 = vpop.permute.xlu0 %5074
        %5076 = vrot.lane.b32.xlu0 %v625, 64
        %v5077 = vpop.permute.xlu0 %5076
        %v5079 = vsel %vm709, %v5075, 0
        %v5082 = vsel %vm709, %v5077, 0
        %5084 = vmatprep.subr.bf16.mxu0 0
        %5085 = vmatpush1.bf16.xpose.msra.mxu0 %v5082
        %5086 = vmatprep.subr.bf16.mxu0 0
        %5087 = vmatpush1.bf16.xpose.msra.mxu0 0
        %5088 = vmatprep.subr.bf16.mxu0 0
        %5089 = vmatpush1.bf16.xpose.msra.mxu0 0
        %5090 = vmatprep.subr.bf16.mxu0 0
        %5091 = vmatpush1.bf16.xpose.msra.mxu0 0
        %5092 = vmatprep.subr.bf16.mxu0 0
        %5093 = vmatpush1.bf16.xpose.msra.mxu0 0
        %5094 = vmatprep.subr.bf16.mxu0 0
        %5095 = vmatpush1.bf16.xpose.msra.mxu0 0
        %5096 = vmatprep.subr.bf16.mxu0 0
        %5097 = vmatpush1.bf16.xpose.msra.mxu0 0
        %5098 = vmatprep.subr.bf16.mxu0 0
        %5099 = vmatpush1.bf16.xpose.msra.mxu0 0
        %5100 = vmatprep.subr.bf16.mxu0 0
        %5101 = vmatpush1.bf16.xpose.msra.mxu0 0
        %5102 = vmatprep.subr.bf16.mxu0 0
        %5103 = vmatpush1.bf16.xpose.msra.mxu0 0
        %5104 = vmatprep.subr.bf16.mxu0 0
        %5105 = vmatpush1.bf16.xpose.msra.mxu0 0
        %5106 = vmatprep.subr.bf16.mxu0 0
        %5107 = vmatpush1.bf16.xpose.msra.mxu0 0
        %5108 = vmatprep.subr.bf16.mxu0 0
        %5109 = vmatpush1.bf16.xpose.msra.mxu0 0
        %5110 = vmatprep.subr.bf16.mxu0 0
        %5111 = vmatpush1.bf16.xpose.msra.mxu0 0
        %5112 = vmatprep.subr.bf16.mxu0 0
        %5113 = vmatpush1.bf16.xpose.msra.mxu0 0
        %5114 = vmatprep.subr.bf16.mxu0 0
        %5115 = vmatpush1.bf16.xpose.msra.mxu0 0
        %5116 = vmatprep.mubr.bf16.mxu0 0
        %5117 = vmatmul.mubr.bf16.gmra.mrb[0].mxu0 %v5079
        %v5118 = vpop.f32.mrb[0].mxu0
        %v5119 = vadd.f32 %v705, %v5118
        %v5120 = vpop.f32.mrb[0].mxu0
        %v5121 = vpop.f32.mrb[0].mxu0
        %v5122 = vpop.f32.mrb[0].mxu0
        %5123 = vdwg.mxu0
        %5124 = vrot.lane.b32.xlu0 %v594, 64
        %v5125 = vpop.permute.xlu0 %5124
        %5126 = vrot.lane.b32.xlu0 %v626, 64
        %v5127 = vpop.permute.xlu0 %5126
        %v5129 = vsel %vm709, %v5125, 0
        %v5132 = vsel %vm709, %v5127, 0
        %5134 = vmatprep.subr.bf16.mxu0 0
        %5135 = vmatpush1.bf16.xpose.msra.mxu0 %v5132
        %5136 = vmatprep.subr.bf16.mxu0 0
        %5137 = vmatpush1.bf16.xpose.msra.mxu0 0
        %5138 = vmatprep.subr.bf16.mxu0 0
        %5139 = vmatpush1.bf16.xpose.msra.mxu0 0
        %5140 = vmatprep.subr.bf16.mxu0 0
        %5141 = vmatpush1.bf16.xpose.msra.mxu0 0
        %5142 = vmatprep.subr.bf16.mxu0 0
        %5143 = vmatpush1.bf16.xpose.msra.mxu0 0
        %5144 = vmatprep.subr.bf16.mxu0 0
        %5145 = vmatpush1.bf16.xpose.msra.mxu0 0
        %5146 = vmatprep.subr.bf16.mxu0 0
        %5147 = vmatpush1.bf16.xpose.msra.mxu0 0
        %5148 = vmatprep.subr.bf16.mxu0 0
        %5149 = vmatpush1.bf16.xpose.msra.mxu0 0
        %5150 = vmatprep.subr.bf16.mxu0 0
        %5151 = vmatpush1.bf16.xpose.msra.mxu0 0
        %5152 = vmatprep.subr.bf16.mxu0 0
        %5153 = vmatpush1.bf16.xpose.msra.mxu0 0
        %5154 = vmatprep.subr.bf16.mxu0 0
        %5155 = vmatpush1.bf16.xpose.msra.mxu0 0
        %5156 = vmatprep.subr.bf16.mxu0 0
        %5157 = vmatpush1.bf16.xpose.msra.mxu0 0
        %5158 = vmatprep.subr.bf16.mxu0 0
        %5159 = vmatpush1.bf16.xpose.msra.mxu0 0
        %5160 = vmatprep.subr.bf16.mxu0 0
        %5161 = vmatpush1.bf16.xpose.msra.mxu0 0
        %5162 = vmatprep.subr.bf16.mxu0 0
        %5163 = vmatpush1.bf16.xpose.msra.mxu0 0
        %5164 = vmatprep.subr.bf16.mxu0 0
        %5165 = vmatpush1.bf16.xpose.msra.mxu0 0
        %5166 = vmatprep.mubr.bf16.mxu0 0
        %5167 = vmatmul.mubr.bf16.gmra.mrb[0].mxu0 %v5129
        %v5168 = vpop.f32.mrb[0].mxu0
        %v5169 = vadd.f32 %v706, %v5168
        %v5170 = vpop.f32.mrb[0].mxu0
        %v5171 = vpop.f32.mrb[0].mxu0
        %v5172 = vpop.f32.mrb[0].mxu0
        %5173 = vdwg.mxu0
        %5174 = vrot.lane.b32.xlu0 %v595, 64
        %v5175 = vpop.permute.xlu0 %5174
        %5176 = vrot.lane.b32.xlu0 %v627, 64
        %v5177 = vpop.permute.xlu0 %5176
        %v5179 = vsel %vm709, %v5175, 0
        %v5182 = vsel %vm709, %v5177, 0
        %5184 = vmatprep.subr.bf16.mxu0 0
        %5185 = vmatpush1.bf16.xpose.msra.mxu0 %v5182
        %5186 = vmatprep.subr.bf16.mxu0 0
        %5187 = vmatpush1.bf16.xpose.msra.mxu0 0
        %5188 = vmatprep.subr.bf16.mxu0 0
        %5189 = vmatpush1.bf16.xpose.msra.mxu0 0
        %5190 = vmatprep.subr.bf16.mxu0 0
        %5191 = vmatpush1.bf16.xpose.msra.mxu0 0
        %5192 = vmatprep.subr.bf16.mxu0 0
        %5193 = vmatpush1.bf16.xpose.msra.mxu0 0
        %5194 = vmatprep.subr.bf16.mxu0 0
        %5195 = vmatpush1.bf16.xpose.msra.mxu0 0
        %5196 = vmatprep.subr.bf16.mxu0 0
        %5197 = vmatpush1.bf16.xpose.msra.mxu0 0
        %5198 = vmatprep.subr.bf16.mxu0 0
        %5199 = vmatpush1.bf16.xpose.msra.mxu0 0
        %5200 = vmatprep.subr.bf16.mxu0 0
        %5201 = vmatpush1.bf16.xpose.msra.mxu0 0
        %5202 = vmatprep.subr.bf16.mxu0 0
        %5203 = vmatpush1.bf16.xpose.msra.mxu0 0
        %5204 = vmatprep.subr.bf16.mxu0 0
        %5205 = vmatpush1.bf16.xpose.msra.mxu0 0
        %5206 = vmatprep.subr.bf16.mxu0 0
        %5207 = vmatpush1.bf16.xpose.msra.mxu0 0
        %5208 = vmatprep.subr.bf16.mxu0 0
        %5209 = vmatpush1.bf16.xpose.msra.mxu0 0
        %5210 = vmatprep.subr.bf16.mxu0 0
        %5211 = vmatpush1.bf16.xpose.msra.mxu0 0
        %5212 = vmatprep.subr.bf16.mxu0 0
        %5213 = vmatpush1.bf16.xpose.msra.mxu0 0
        %5214 = vmatprep.subr.bf16.mxu0 0
        %5215 = vmatpush1.bf16.xpose.msra.mxu0 0
        %5216 = vmatprep.mubr.bf16.mxu0 0
        %5217 = vmatmul.mubr.bf16.gmra.mrb[0].mxu0 %v5179
        %v5218 = vpop.f32.mrb[0].mxu0
        %v5219 = vadd.f32 %v707, %v5218
        %v5220 = vpop.f32.mrb[0].mxu0
        %v5221 = vpop.f32.mrb[0].mxu0
        %v5222 = vpop.f32.mrb[0].mxu0
        %5223 = vdwg.mxu0
        %5224 = vrot.lane.b32.xlu0 %v596, 64
        %v5225 = vpop.permute.xlu0 %5224
        %5226 = vrot.lane.b32.xlu0 %v628, 64
        %v5227 = vpop.permute.xlu0 %5226
        %v5229 = vsel %vm709, %v5225, 0
        %v5232 = vsel %vm709, %v5227, 0
        %5234 = vmatprep.subr.bf16.mxu0 0
        %5235 = vmatpush1.bf16.xpose.msra.mxu0 %v5232
        %5236 = vmatprep.subr.bf16.mxu0 0
        %5237 = vmatpush1.bf16.xpose.msra.mxu0 0
        %5238 = vmatprep.subr.bf16.mxu0 0
        %5239 = vmatpush1.bf16.xpose.msra.mxu0 0
        %5240 = vmatprep.subr.bf16.mxu0 0
        %5241 = vmatpush1.bf16.xpose.msra.mxu0 0
        %5242 = vmatprep.subr.bf16.mxu0 0
        %5243 = vmatpush1.bf16.xpose.msra.mxu0 0
        %5244 = vmatprep.subr.bf16.mxu0 0
        %5245 = vmatpush1.bf16.xpose.msra.mxu0 0
        %5246 = vmatprep.subr.bf16.mxu0 0
        %5247 = vmatpush1.bf16.xpose.msra.mxu0 0
        %5248 = vmatprep.subr.bf16.mxu0 0
        %5249 = vmatpush1.bf16.xpose.msra.mxu0 0
        %5250 = vmatprep.subr.bf16.mxu0 0
        %5251 = vmatpush1.bf16.xpose.msra.mxu0 0
        %5252 = vmatprep.subr.bf16.mxu0 0
        %5253 = vmatpush1.bf16.xpose.msra.mxu0 0
        %5254 = vmatprep.subr.bf16.mxu0 0
        %5255 = vmatpush1.bf16.xpose.msra.mxu0 0
        %5256 = vmatprep.subr.bf16.mxu0 0
        %5257 = vmatpush1.bf16.xpose.msra.mxu0 0
        %5258 = vmatprep.subr.bf16.mxu0 0
        %5259 = vmatpush1.bf16.xpose.msra.mxu0 0
        %5260 = vmatprep.subr.bf16.mxu0 0
        %5261 = vmatpush1.bf16.xpose.msra.mxu0 0
        %5262 = vmatprep.subr.bf16.mxu0 0
        %5263 = vmatpush1.bf16.xpose.msra.mxu0 0
        %5264 = vmatprep.subr.bf16.mxu0 0
        %5265 = vmatpush1.bf16.xpose.msra.mxu0 0
        %5266 = vmatprep.mubr.bf16.mxu0 0
        %5267 = vmatmul.mubr.bf16.gmra.mrb[0].mxu0 %v5229
        %v5268 = vpop.f32.mrb[0].mxu0
        %v5269 = vadd.f32 %v708, %v5268
        %v5270 = vpop.f32.mrb[0].mxu0
        %v5271 = vpop.f32.mrb[0].mxu0
        %v5272 = vpop.f32.mrb[0].mxu0
        %5273 = vdwg.mxu0
        %v5274 = vsel %vm1446, %v4519, -inf
        %5275 = vmax.xlane.f32.xlu0 %v5274
        %v5276 = vpop.xlane.xlu0 %5275
        %v5277 = vsel %vm1446, %v4569, -inf
        %5278 = vmax.xlane.f32.xlu0 %v5277
        %v5279 = vpop.xlane.xlu0 %5278
        %v5280 = vsel %vm1446, %v4619, -inf
        %5281 = vmax.xlane.f32.xlu0 %v5280
        %v5282 = vpop.xlane.xlu0 %5281
        %v5283 = vsel %vm1446, %v4669, -inf
        %5284 = vmax.xlane.f32.xlu0 %v5283
        %v5285 = vpop.xlane.xlu0 %5284
        %v5286 = vsel %vm1446, %v4719, -inf
        %5287 = vmax.xlane.f32.xlu0 %v5286
        %v5288 = vpop.xlane.xlu0 %5287
        %v5289 = vsel %vm1446, %v4769, -inf
        %5290 = vmax.xlane.f32.xlu0 %v5289
        %v5291 = vpop.xlane.xlu0 %5290
        %v5292 = vsel %vm1446, %v4819, -inf
        %5293 = vmax.xlane.f32.xlu0 %v5292
        %v5294 = vpop.xlane.xlu0 %5293
        %v5295 = vsel %vm1446, %v4869, -inf
        %5296 = vmax.xlane.f32.xlu0 %v5295
        %v5297 = vpop.xlane.xlu0 %5296
        %v5298 = vsel %vm1446, %v4919, -inf
        %5299 = vmax.xlane.f32.xlu0 %v5298
        %v5300 = vpop.xlane.xlu0 %5299
        %v5301 = vsel %vm1446, %v4969, -inf
        %5302 = vmax.xlane.f32.xlu0 %v5301
        %v5303 = vpop.xlane.xlu0 %5302
        %v5304 = vsel %vm1446, %v5019, -inf
        %5305 = vmax.xlane.f32.xlu0 %v5304
        %v5306 = vpop.xlane.xlu0 %5305
        %v5307 = vsel %vm1446, %v5069, -inf
        %5308 = vmax.xlane.f32.xlu0 %v5307
        %v5309 = vpop.xlane.xlu0 %5308
        %v5310 = vsel %vm1446, %v5119, -inf
        %5311 = vmax.xlane.f32.xlu0 %v5310
        %v5312 = vpop.xlane.xlu0 %5311
        %v5313 = vsel %vm1446, %v5169, -inf
        %5314 = vmax.xlane.f32.xlu0 %v5313
        %v5315 = vpop.xlane.xlu0 %5314
        %v5316 = vsel %vm1446, %v5219, -inf
        %5317 = vmax.xlane.f32.xlu0 %v5316
        %v5318 = vpop.xlane.xlu0 %5317
        %v5319 = vsel %vm1446, %v5269, -inf
        %5320 = vmax.xlane.f32.xlu0 %v5319
        %v5321 = vpop.xlane.xlu0 %5320
        %v5322 = vsub.f32 %v4519, %v5276
        %v5323 = vsub.f32 %v4569, %v5279
        %v5324 = vsub.f32 %v4619, %v5282
        %v5325 = vsub.f32 %v4669, %v5285
        %v5326 = vsub.f32 %v4719, %v5288
        %v5327 = vsub.f32 %v4769, %v5291
        %v5328 = vsub.f32 %v4819, %v5294
        %v5329 = vsub.f32 %v4869, %v5297
        %v5330 = vsub.f32 %v4919, %v5300
        %v5331 = vsub.f32 %v4969, %v5303
        %v5332 = vsub.f32 %v5019, %v5306
        %v5333 = vsub.f32 %v5069, %v5309
        %v5334 = vsub.f32 %v5119, %v5312
        %v5335 = vsub.f32 %v5169, %v5315
        %v5336 = vsub.f32 %v5219, %v5318
        %v5337 = vsub.f32 %v5269, %v5321
        %v5338 = vmul.f32 %v5322, 1.442695
        %v5339 = vpow.pop %v5338
        %v5340 = vmul.f32 %v5323, 1.442695
        %v5341 = vpow.pop %v5340
        %v5342 = vmul.f32 %v5324, 1.442695
        %v5343 = vpow.pop %v5342
        %v5344 = vmul.f32 %v5325, 1.442695
        %v5345 = vpow.pop %v5344
        %v5346 = vmul.f32 %v5326, 1.442695
        %v5347 = vpow.pop %v5346
        %v5348 = vmul.f32 %v5327, 1.442695
        %v5349 = vpow.pop %v5348
        %v5350 = vmul.f32 %v5328, 1.442695
        %v5351 = vpow.pop %v5350
        %v5352 = vmul.f32 %v5329, 1.442695
        %v5353 = vpow.pop %v5352
        %v5354 = vmul.f32 %v5330, 1.442695
        %v5355 = vpow.pop %v5354
        %v5356 = vmul.f32 %v5331, 1.442695
        %v5357 = vpow.pop %v5356
        %v5358 = vmul.f32 %v5332, 1.442695
        %v5359 = vpow.pop %v5358
        %v5360 = vmul.f32 %v5333, 1.442695
        %v5361 = vpow.pop %v5360
        %v5362 = vmul.f32 %v5334, 1.442695
        %v5363 = vpow.pop %v5362
        %v5364 = vmul.f32 %v5335, 1.442695
        %v5365 = vpow.pop %v5364
        %v5366 = vmul.f32 %v5336, 1.442695
        %v5367 = vpow.pop %v5366
        %v5368 = vmul.f32 %v5337, 1.442695
        %v5369 = vpow.pop %v5368
        %v5370 = vsel %vm1446, %v5339, 0.0
        %5371 = vadd.xlane.f32.xlu0 %v5370
        %v5372 = vpop.xlane.xlu0 %5371
        %v5373 = vsel %vm1446, %v5341, 0.0
        %5374 = vadd.xlane.f32.xlu0 %v5373
        %v5375 = vpop.xlane.xlu0 %5374
        %v5376 = vsel %vm1446, %v5343, 0.0
        %5377 = vadd.xlane.f32.xlu0 %v5376
        %v5378 = vpop.xlane.xlu0 %5377
        %v5379 = vsel %vm1446, %v5345, 0.0
        %5380 = vadd.xlane.f32.xlu0 %v5379
        %v5381 = vpop.xlane.xlu0 %5380
        %v5382 = vsel %vm1446, %v5347, 0.0
        %5383 = vadd.xlane.f32.xlu0 %v5382
        %v5384 = vpop.xlane.xlu0 %5383
        %v5385 = vsel %vm1446, %v5349, 0.0
        %5386 = vadd.xlane.f32.xlu0 %v5385
        %v5387 = vpop.xlane.xlu0 %5386
        %v5388 = vsel %vm1446, %v5351, 0.0
        %5389 = vadd.xlane.f32.xlu0 %v5388
        %v5390 = vpop.xlane.xlu0 %5389
        %v5391 = vsel %vm1446, %v5353, 0.0
        %5392 = vadd.xlane.f32.xlu0 %v5391
        %v5393 = vpop.xlane.xlu0 %5392
        %v5394 = vsel %vm1446, %v5355, 0.0
        %5395 = vadd.xlane.f32.xlu0 %v5394
        %v5396 = vpop.xlane.xlu0 %5395
        %v5397 = vsel %vm1446, %v5357, 0.0
        %5398 = vadd.xlane.f32.xlu0 %v5397
        %v5399 = vpop.xlane.xlu0 %5398
        %v5400 = vsel %vm1446, %v5359, 0.0
        %5401 = vadd.xlane.f32.xlu0 %v5400
        %v5402 = vpop.xlane.xlu0 %5401
        %v5403 = vsel %vm1446, %v5361, 0.0
        %5404 = vadd.xlane.f32.xlu0 %v5403
        %v5405 = vpop.xlane.xlu0 %5404
        %v5406 = vsel %vm1446, %v5363, 0.0
        %5407 = vadd.xlane.f32.xlu0 %v5406
        %v5408 = vpop.xlane.xlu0 %5407
        %v5409 = vsel %vm1446, %v5365, 0.0
        %5410 = vadd.xlane.f32.xlu0 %v5409
        %v5411 = vpop.xlane.xlu0 %5410
        %v5412 = vsel %vm1446, %v5367, 0.0
        %5413 = vadd.xlane.f32.xlu0 %v5412
        %v5414 = vpop.xlane.xlu0 %5413
        %v5415 = vsel %vm1446, %v5369, 0.0
        %5416 = vadd.xlane.f32.xlu0 %v5415
        %v5417 = vpop.xlane.xlu0 %5416
        %v5418 = vrcp.pop %v5372
        %v5419 = vrcp.pop %v5375
        %v5420 = vrcp.pop %v5378
        %v5421 = vrcp.pop %v5381
        %v5422 = vrcp.pop %v5384
        %v5423 = vrcp.pop %v5387
        %v5424 = vrcp.pop %v5390
        %v5425 = vrcp.pop %v5393
        %v5426 = vrcp.pop %v5396
        %v5427 = vrcp.pop %v5399
        %v5428 = vrcp.pop %v5402
        %v5429 = vrcp.pop %v5405
        %v5430 = vrcp.pop %v5408
        %v5431 = vrcp.pop %v5411
        %v5432 = vrcp.pop %v5414
        %v5433 = vrcp.pop %v5417
        %v5434 = vmul.f32 %v5339, %v5418
        %v5435 = vmul.f32 %v5341, %v5419
        %v5436 = vmul.f32 %v5343, %v5420
        %v5437 = vmul.f32 %v5345, %v5421
        %v5438 = vmul.f32 %v5347, %v5422
        %v5439 = vmul.f32 %v5349, %v5423
        %v5440 = vmul.f32 %v5351, %v5424
        %v5441 = vmul.f32 %v5353, %v5425
        %v5442 = vmul.f32 %v5355, %v5426
        %v5443 = vmul.f32 %v5357, %v5427
        %v5444 = vmul.f32 %v5359, %v5428
        %v5445 = vmul.f32 %v5361, %v5429
        %v5446 = vmul.f32 %v5363, %v5430
        %v5447 = vmul.f32 %v5365, %v5431
        %v5448 = vmul.f32 %v5367, %v5432
        %v5449 = vmul.f32 %v5369, %v5433
        %v5450 = vpack.c.bf16 %v5434, %v5434
        %v5451 = vpack.c.bf16 %v5435, %v5435
        %v5452 = vpack.c.bf16 %v5436, %v5436
        %v5453 = vpack.c.bf16 %v5437, %v5437
        %v5454 = vpack.c.bf16 %v5438, %v5438
        %v5455 = vpack.c.bf16 %v5439, %v5439
        %v5456 = vpack.c.bf16 %v5440, %v5440
        %v5457 = vpack.c.bf16 %v5441, %v5441
        %v5458 = vpack.c.bf16 %v5442, %v5442
        %v5459 = vpack.c.bf16 %v5443, %v5443
        %v5460 = vpack.c.bf16 %v5444, %v5444
        %v5461 = vpack.c.bf16 %v5445, %v5445
        %v5462 = vpack.c.bf16 %v5446, %v5446
        %v5463 = vpack.c.bf16 %v5447, %v5447
        %v5464 = vpack.c.bf16 %v5448, %v5448
        %v5465 = vpack.c.bf16 %v5449, %v5449
        %5466 = vrot.lane.b32.xlu0 %v645, 64
        %v5467 = vpop.permute.xlu0 %5466
        %v5469 = vsel %vm1446, %v5450, 0
        %v5472 = vsel %vm1642, %v5467, 0
        %5474 = vmatprep.subr.bf16.mxu0 0
        %5475 = vmatpush1.bf16.msra.mxu0 %v5472
        %5476 = vmatprep.subr.bf16.mxu0 0
        %5477 = vmatpush1.bf16.msra.mxu0 0
        %5478 = vmatprep.subr.bf16.mxu0 0
        %5479 = vmatpush1.bf16.msra.mxu0 0
        %5480 = vmatprep.subr.bf16.mxu0 0
        %5481 = vmatpush1.bf16.msra.mxu0 0
        %5482 = vmatprep.subr.bf16.mxu0 0
        %5483 = vmatpush1.bf16.msra.mxu0 0
        %5484 = vmatprep.subr.bf16.mxu0 0
        %5485 = vmatpush1.bf16.msra.mxu0 0
        %5486 = vmatprep.subr.bf16.mxu0 0
        %5487 = vmatpush1.bf16.msra.mxu0 0
        %5488 = vmatprep.subr.bf16.mxu0 0
        %5489 = vmatpush1.bf16.msra.mxu0 0
        %5490 = vmatprep.subr.bf16.mxu0 0
        %5491 = vmatpush1.bf16.msra.mxu0 0
        %5492 = vmatprep.subr.bf16.mxu0 0
        %5493 = vmatpush1.bf16.msra.mxu0 0
        %5494 = vmatprep.subr.bf16.mxu0 0
        %5495 = vmatpush1.bf16.msra.mxu0 0
        %5496 = vmatprep.subr.bf16.mxu0 0
        %5497 = vmatpush1.bf16.msra.mxu0 0
        %5498 = vmatprep.subr.bf16.mxu0 0
        %5499 = vmatpush1.bf16.msra.mxu0 0
        %5500 = vmatprep.subr.bf16.mxu0 0
        %5501 = vmatpush1.bf16.msra.mxu0 0
        %5502 = vmatprep.subr.bf16.mxu0 0
        %5503 = vmatpush1.bf16.msra.mxu0 0
        %5504 = vmatprep.subr.bf16.mxu0 0
        %5505 = vmatpush1.bf16.msra.mxu0 0
        %5506 = vmatprep.mubr.bf16.mxu0 0
        %5507 = vmatmul.mubr.bf16.gmra.mrb[0].mxu0 %v5469
        %v5508 = vpop.f32.mrb[0].mxu0
        %v5509 = vadd.f32 0.0, %v5508
        %v5510 = vpop.f32.mrb[0].mxu0
        %v5511 = vpop.f32.mrb[0].mxu0
        %v5512 = vpop.f32.mrb[0].mxu0
        %5513 = vdwg.mxu0
        %5514 = vrot.lane.b32.xlu0 %v646, 64
        %v5515 = vpop.permute.xlu0 %5514
        %v5517 = vsel %vm1446, %v5451, 0
        %v5520 = vsel %vm1642, %v5515, 0
        %5522 = vmatprep.subr.bf16.mxu0 0
        %5523 = vmatpush1.bf16.msra.mxu0 %v5520
        %5524 = vmatprep.subr.bf16.mxu0 0
        %5525 = vmatpush1.bf16.msra.mxu0 0
        %5526 = vmatprep.subr.bf16.mxu0 0
        %5527 = vmatpush1.bf16.msra.mxu0 0
        %5528 = vmatprep.subr.bf16.mxu0 0
        %5529 = vmatpush1.bf16.msra.mxu0 0
        %5530 = vmatprep.subr.bf16.mxu0 0
        %5531 = vmatpush1.bf16.msra.mxu0 0
        %5532 = vmatprep.subr.bf16.mxu0 0
        %5533 = vmatpush1.bf16.msra.mxu0 0
        %5534 = vmatprep.subr.bf16.mxu0 0
        %5535 = vmatpush1.bf16.msra.mxu0 0
        %5536 = vmatprep.subr.bf16.mxu0 0
        %5537 = vmatpush1.bf16.msra.mxu0 0
        %5538 = vmatprep.subr.bf16.mxu0 0
        %5539 = vmatpush1.bf16.msra.mxu0 0
        %5540 = vmatprep.subr.bf16.mxu0 0
        %5541 = vmatpush1.bf16.msra.mxu0 0
        %5542 = vmatprep.subr.bf16.mxu0 0
        %5543 = vmatpush1.bf16.msra.mxu0 0
        %5544 = vmatprep.subr.bf16.mxu0 0
        %5545 = vmatpush1.bf16.msra.mxu0 0
        %5546 = vmatprep.subr.bf16.mxu0 0
        %5547 = vmatpush1.bf16.msra.mxu0 0
        %5548 = vmatprep.subr.bf16.mxu0 0
        %5549 = vmatpush1.bf16.msra.mxu0 0
        %5550 = vmatprep.subr.bf16.mxu0 0
        %5551 = vmatpush1.bf16.msra.mxu0 0
        %5552 = vmatprep.subr.bf16.mxu0 0
        %5553 = vmatpush1.bf16.msra.mxu0 0
        %5554 = vmatprep.mubr.bf16.mxu0 0
        %5555 = vmatmul.mubr.bf16.gmra.mrb[0].mxu0 %v5517
        %v5556 = vpop.f32.mrb[0].mxu0
        %v5557 = vadd.f32 0.0, %v5556
        %v5558 = vpop.f32.mrb[0].mxu0
        %v5559 = vpop.f32.mrb[0].mxu0
        %v5560 = vpop.f32.mrb[0].mxu0
        %5561 = vdwg.mxu0
        %5562 = vrot.lane.b32.xlu0 %v647, 64
        %v5563 = vpop.permute.xlu0 %5562
        %v5565 = vsel %vm1446, %v5452, 0
        %v5568 = vsel %vm1642, %v5563, 0
        %5570 = vmatprep.subr.bf16.mxu0 0
        %5571 = vmatpush1.bf16.msra.mxu0 %v5568
        %5572 = vmatprep.subr.bf16.mxu0 0
        %5573 = vmatpush1.bf16.msra.mxu0 0
        %5574 = vmatprep.subr.bf16.mxu0 0
        %5575 = vmatpush1.bf16.msra.mxu0 0
        %5576 = vmatprep.subr.bf16.mxu0 0
        %5577 = vmatpush1.bf16.msra.mxu0 0
        %5578 = vmatprep.subr.bf16.mxu0 0
        %5579 = vmatpush1.bf16.msra.mxu0 0
        %5580 = vmatprep.subr.bf16.mxu0 0
        %5581 = vmatpush1.bf16.msra.mxu0 0
        %5582 = vmatprep.subr.bf16.mxu0 0
        %5583 = vmatpush1.bf16.msra.mxu0 0
        %5584 = vmatprep.subr.bf16.mxu0 0
        %5585 = vmatpush1.bf16.msra.mxu0 0
        %5586 = vmatprep.subr.bf16.mxu0 0
        %5587 = vmatpush1.bf16.msra.mxu0 0
        %5588 = vmatprep.subr.bf16.mxu0 0
        %5589 = vmatpush1.bf16.msra.mxu0 0
        %5590 = vmatprep.subr.bf16.mxu0 0
        %5591 = vmatpush1.bf16.msra.mxu0 0
        %5592 = vmatprep.subr.bf16.mxu0 0
        %5593 = vmatpush1.bf16.msra.mxu0 0
        %5594 = vmatprep.subr.bf16.mxu0 0
        %5595 = vmatpush1.bf16.msra.mxu0 0
        %5596 = vmatprep.subr.bf16.mxu0 0
        %5597 = vmatpush1.bf16.msra.mxu0 0
        %5598 = vmatprep.subr.bf16.mxu0 0
        %5599 = vmatpush1.bf16.msra.mxu0 0
        %5600 = vmatprep.subr.bf16.mxu0 0
        %5601 = vmatpush1.bf16.msra.mxu0 0
        %5602 = vmatprep.mubr.bf16.mxu0 0
        %5603 = vmatmul.mubr.bf16.gmra.mrb[0].mxu0 %v5565
        %v5604 = vpop.f32.mrb[0].mxu0
        %v5605 = vadd.f32 0.0, %v5604
        %v5606 = vpop.f32.mrb[0].mxu0
        %v5607 = vpop.f32.mrb[0].mxu0
        %v5608 = vpop.f32.mrb[0].mxu0
        %5609 = vdwg.mxu0
        %5610 = vrot.lane.b32.xlu0 %v648, 64
        %v5611 = vpop.permute.xlu0 %5610
        %v5613 = vsel %vm1446, %v5453, 0
        %v5616 = vsel %vm1642, %v5611, 0
        %5618 = vmatprep.subr.bf16.mxu0 0
        %5619 = vmatpush1.bf16.msra.mxu0 %v5616
        %5620 = vmatprep.subr.bf16.mxu0 0
        %5621 = vmatpush1.bf16.msra.mxu0 0
        %5622 = vmatprep.subr.bf16.mxu0 0
        %5623 = vmatpush1.bf16.msra.mxu0 0
        %5624 = vmatprep.subr.bf16.mxu0 0
        %5625 = vmatpush1.bf16.msra.mxu0 0
        %5626 = vmatprep.subr.bf16.mxu0 0
        %5627 = vmatpush1.bf16.msra.mxu0 0
        %5628 = vmatprep.subr.bf16.mxu0 0
        %5629 = vmatpush1.bf16.msra.mxu0 0
        %5630 = vmatprep.subr.bf16.mxu0 0
        %5631 = vmatpush1.bf16.msra.mxu0 0
        %5632 = vmatprep.subr.bf16.mxu0 0
        %5633 = vmatpush1.bf16.msra.mxu0 0
        %5634 = vmatprep.subr.bf16.mxu0 0
        %5635 = vmatpush1.bf16.msra.mxu0 0
        %5636 = vmatprep.subr.bf16.mxu0 0
        %5637 = vmatpush1.bf16.msra.mxu0 0
        %5638 = vmatprep.subr.bf16.mxu0 0
        %5639 = vmatpush1.bf16.msra.mxu0 0
        %5640 = vmatprep.subr.bf16.mxu0 0
        %5641 = vmatpush1.bf16.msra.mxu0 0
        %5642 = vmatprep.subr.bf16.mxu0 0
        %5643 = vmatpush1.bf16.msra.mxu0 0
        %5644 = vmatprep.subr.bf16.mxu0 0
        %5645 = vmatpush1.bf16.msra.mxu0 0
        %5646 = vmatprep.subr.bf16.mxu0 0
        %5647 = vmatpush1.bf16.msra.mxu0 0
        %5648 = vmatprep.subr.bf16.mxu0 0
        %5649 = vmatpush1.bf16.msra.mxu0 0
        %5650 = vmatprep.mubr.bf16.mxu0 0
        %5651 = vmatmul.mubr.bf16.gmra.mrb[0].mxu0 %v5613
        %v5652 = vpop.f32.mrb[0].mxu0
        %v5653 = vadd.f32 0.0, %v5652
        %v5654 = vpop.f32.mrb[0].mxu0
        %v5655 = vpop.f32.mrb[0].mxu0
        %v5656 = vpop.f32.mrb[0].mxu0
        %5657 = vdwg.mxu0
        %5658 = vrot.lane.b32.xlu0 %v649, 64
        %v5659 = vpop.permute.xlu0 %5658
        %v5661 = vsel %vm1446, %v5454, 0
        %v5664 = vsel %vm1642, %v5659, 0
        %5666 = vmatprep.subr.bf16.mxu0 0
        %5667 = vmatpush1.bf16.msra.mxu0 %v5664
        %5668 = vmatprep.subr.bf16.mxu0 0
        %5669 = vmatpush1.bf16.msra.mxu0 0
        %5670 = vmatprep.subr.bf16.mxu0 0
        %5671 = vmatpush1.bf16.msra.mxu0 0
        %5672 = vmatprep.subr.bf16.mxu0 0
        %5673 = vmatpush1.bf16.msra.mxu0 0
        %5674 = vmatprep.subr.bf16.mxu0 0
        %5675 = vmatpush1.bf16.msra.mxu0 0
        %5676 = vmatprep.subr.bf16.mxu0 0
        %5677 = vmatpush1.bf16.msra.mxu0 0
        %5678 = vmatprep.subr.bf16.mxu0 0
        %5679 = vmatpush1.bf16.msra.mxu0 0
        %5680 = vmatprep.subr.bf16.mxu0 0
        %5681 = vmatpush1.bf16.msra.mxu0 0
        %5682 = vmatprep.subr.bf16.mxu0 0
        %5683 = vmatpush1.bf16.msra.mxu0 0
        %5684 = vmatprep.subr.bf16.mxu0 0
        %5685 = vmatpush1.bf16.msra.mxu0 0
        %5686 = vmatprep.subr.bf16.mxu0 0
        %5687 = vmatpush1.bf16.msra.mxu0 0
        %5688 = vmatprep.subr.bf16.mxu0 0
        %5689 = vmatpush1.bf16.msra.mxu0 0
        %5690 = vmatprep.subr.bf16.mxu0 0
        %5691 = vmatpush1.bf16.msra.mxu0 0
        %5692 = vmatprep.subr.bf16.mxu0 0
        %5693 = vmatpush1.bf16.msra.mxu0 0
        %5694 = vmatprep.subr.bf16.mxu0 0
        %5695 = vmatpush1.bf16.msra.mxu0 0
        %5696 = vmatprep.subr.bf16.mxu0 0
        %5697 = vmatpush1.bf16.msra.mxu0 0
        %5698 = vmatprep.mubr.bf16.mxu0 0
        %5699 = vmatmul.mubr.bf16.gmra.mrb[0].mxu0 %v5661
        %v5700 = vpop.f32.mrb[0].mxu0
        %v5701 = vadd.f32 0.0, %v5700
        %v5702 = vpop.f32.mrb[0].mxu0
        %v5703 = vpop.f32.mrb[0].mxu0
        %v5704 = vpop.f32.mrb[0].mxu0
        %5705 = vdwg.mxu0
        %5706 = vrot.lane.b32.xlu0 %v650, 64
        %v5707 = vpop.permute.xlu0 %5706
        %v5709 = vsel %vm1446, %v5455, 0
        %v5712 = vsel %vm1642, %v5707, 0
        %5714 = vmatprep.subr.bf16.mxu0 0
        %5715 = vmatpush1.bf16.msra.mxu0 %v5712
        %5716 = vmatprep.subr.bf16.mxu0 0
        %5717 = vmatpush1.bf16.msra.mxu0 0
        %5718 = vmatprep.subr.bf16.mxu0 0
        %5719 = vmatpush1.bf16.msra.mxu0 0
        %5720 = vmatprep.subr.bf16.mxu0 0
        %5721 = vmatpush1.bf16.msra.mxu0 0
        %5722 = vmatprep.subr.bf16.mxu0 0
        %5723 = vmatpush1.bf16.msra.mxu0 0
        %5724 = vmatprep.subr.bf16.mxu0 0
        %5725 = vmatpush1.bf16.msra.mxu0 0
        %5726 = vmatprep.subr.bf16.mxu0 0
        %5727 = vmatpush1.bf16.msra.mxu0 0
        %5728 = vmatprep.subr.bf16.mxu0 0
        %5729 = vmatpush1.bf16.msra.mxu0 0
        %5730 = vmatprep.subr.bf16.mxu0 0
        %5731 = vmatpush1.bf16.msra.mxu0 0
        %5732 = vmatprep.subr.bf16.mxu0 0
        %5733 = vmatpush1.bf16.msra.mxu0 0
        %5734 = vmatprep.subr.bf16.mxu0 0
        %5735 = vmatpush1.bf16.msra.mxu0 0
        %5736 = vmatprep.subr.bf16.mxu0 0
        %5737 = vmatpush1.bf16.msra.mxu0 0
        %5738 = vmatprep.subr.bf16.mxu0 0
        %5739 = vmatpush1.bf16.msra.mxu0 0
        %5740 = vmatprep.subr.bf16.mxu0 0
        %5741 = vmatpush1.bf16.msra.mxu0 0
        %5742 = vmatprep.subr.bf16.mxu0 0
        %5743 = vmatpush1.bf16.msra.mxu0 0
        %5744 = vmatprep.subr.bf16.mxu0 0
        %5745 = vmatpush1.bf16.msra.mxu0 0
        %5746 = vmatprep.mubr.bf16.mxu0 0
        %5747 = vmatmul.mubr.bf16.gmra.mrb[0].mxu0 %v5709
        %v5748 = vpop.f32.mrb[0].mxu0
        %v5749 = vadd.f32 0.0, %v5748
        %v5750 = vpop.f32.mrb[0].mxu0
        %v5751 = vpop.f32.mrb[0].mxu0
        %v5752 = vpop.f32.mrb[0].mxu0
        %5753 = vdwg.mxu0
        %5754 = vrot.lane.b32.xlu0 %v651, 64
        %v5755 = vpop.permute.xlu0 %5754
        %v5757 = vsel %vm1446, %v5456, 0
        %v5760 = vsel %vm1642, %v5755, 0
        %5762 = vmatprep.subr.bf16.mxu0 0
        %5763 = vmatpush1.bf16.msra.mxu0 %v5760
        %5764 = vmatprep.subr.bf16.mxu0 0
        %5765 = vmatpush1.bf16.msra.mxu0 0
        %5766 = vmatprep.subr.bf16.mxu0 0
        %5767 = vmatpush1.bf16.msra.mxu0 0
        %5768 = vmatprep.subr.bf16.mxu0 0
        %5769 = vmatpush1.bf16.msra.mxu0 0
        %5770 = vmatprep.subr.bf16.mxu0 0
        %5771 = vmatpush1.bf16.msra.mxu0 0
        %5772 = vmatprep.subr.bf16.mxu0 0
        %5773 = vmatpush1.bf16.msra.mxu0 0
        %5774 = vmatprep.subr.bf16.mxu0 0
        %5775 = vmatpush1.bf16.msra.mxu0 0
        %5776 = vmatprep.subr.bf16.mxu0 0
        %5777 = vmatpush1.bf16.msra.mxu0 0
        %5778 = vmatprep.subr.bf16.mxu0 0
        %5779 = vmatpush1.bf16.msra.mxu0 0
        %5780 = vmatprep.subr.bf16.mxu0 0
        %5781 = vmatpush1.bf16.msra.mxu0 0
        %5782 = vmatprep.subr.bf16.mxu0 0
        %5783 = vmatpush1.bf16.msra.mxu0 0
        %5784 = vmatprep.subr.bf16.mxu0 0
        %5785 = vmatpush1.bf16.msra.mxu0 0
        %5786 = vmatprep.subr.bf16.mxu0 0
        %5787 = vmatpush1.bf16.msra.mxu0 0
        %5788 = vmatprep.subr.bf16.mxu0 0
        %5789 = vmatpush1.bf16.msra.mxu0 0
        %5790 = vmatprep.subr.bf16.mxu0 0
        %5791 = vmatpush1.bf16.msra.mxu0 0
        %5792 = vmatprep.subr.bf16.mxu0 0
        %5793 = vmatpush1.bf16.msra.mxu0 0
        %5794 = vmatprep.mubr.bf16.mxu0 0
        %5795 = vmatmul.mubr.bf16.gmra.mrb[0].mxu0 %v5757
        %v5796 = vpop.f32.mrb[0].mxu0
        %v5797 = vadd.f32 0.0, %v5796
        %v5798 = vpop.f32.mrb[0].mxu0
        %v5799 = vpop.f32.mrb[0].mxu0
        %v5800 = vpop.f32.mrb[0].mxu0
        %5801 = vdwg.mxu0
        %5802 = vrot.lane.b32.xlu0 %v652, 64
        %v5803 = vpop.permute.xlu0 %5802
        %v5805 = vsel %vm1446, %v5457, 0
        %v5808 = vsel %vm1642, %v5803, 0
        %5810 = vmatprep.subr.bf16.mxu0 0
        %5811 = vmatpush1.bf16.msra.mxu0 %v5808
        %5812 = vmatprep.subr.bf16.mxu0 0
        %5813 = vmatpush1.bf16.msra.mxu0 0
        %5814 = vmatprep.subr.bf16.mxu0 0
        %5815 = vmatpush1.bf16.msra.mxu0 0
        %5816 = vmatprep.subr.bf16.mxu0 0
        %5817 = vmatpush1.bf16.msra.mxu0 0
        %5818 = vmatprep.subr.bf16.mxu0 0
        %5819 = vmatpush1.bf16.msra.mxu0 0
        %5820 = vmatprep.subr.bf16.mxu0 0
        %5821 = vmatpush1.bf16.msra.mxu0 0
        %5822 = vmatprep.subr.bf16.mxu0 0
        %5823 = vmatpush1.bf16.msra.mxu0 0
        %5824 = vmatprep.subr.bf16.mxu0 0
        %5825 = vmatpush1.bf16.msra.mxu0 0
        %5826 = vmatprep.subr.bf16.mxu0 0
        %5827 = vmatpush1.bf16.msra.mxu0 0
        %5828 = vmatprep.subr.bf16.mxu0 0
        %5829 = vmatpush1.bf16.msra.mxu0 0
        %5830 = vmatprep.subr.bf16.mxu0 0
        %5831 = vmatpush1.bf16.msra.mxu0 0
        %5832 = vmatprep.subr.bf16.mxu0 0
        %5833 = vmatpush1.bf16.msra.mxu0 0
        %5834 = vmatprep.subr.bf16.mxu0 0
        %5835 = vmatpush1.bf16.msra.mxu0 0
        %5836 = vmatprep.subr.bf16.mxu0 0
        %5837 = vmatpush1.bf16.msra.mxu0 0
        %5838 = vmatprep.subr.bf16.mxu0 0
        %5839 = vmatpush1.bf16.msra.mxu0 0
        %5840 = vmatprep.subr.bf16.mxu0 0
        %5841 = vmatpush1.bf16.msra.mxu0 0
        %5842 = vmatprep.mubr.bf16.mxu0 0
        %5843 = vmatmul.mubr.bf16.gmra.mrb[0].mxu0 %v5805
        %v5844 = vpop.f32.mrb[0].mxu0
        %v5845 = vadd.f32 0.0, %v5844
        %v5846 = vpop.f32.mrb[0].mxu0
        %v5847 = vpop.f32.mrb[0].mxu0
        %v5848 = vpop.f32.mrb[0].mxu0
        %5849 = vdwg.mxu0
        %5850 = vrot.lane.b32.xlu0 %v653, 64
        %v5851 = vpop.permute.xlu0 %5850
        %v5853 = vsel %vm1446, %v5458, 0
        %v5856 = vsel %vm1642, %v5851, 0
        %5858 = vmatprep.subr.bf16.mxu0 0
        %5859 = vmatpush1.bf16.msra.mxu0 %v5856
        %5860 = vmatprep.subr.bf16.mxu0 0
        %5861 = vmatpush1.bf16.msra.mxu0 0
        %5862 = vmatprep.subr.bf16.mxu0 0
        %5863 = vmatpush1.bf16.msra.mxu0 0
        %5864 = vmatprep.subr.bf16.mxu0 0
        %5865 = vmatpush1.bf16.msra.mxu0 0
        %5866 = vmatprep.subr.bf16.mxu0 0
        %5867 = vmatpush1.bf16.msra.mxu0 0
        %5868 = vmatprep.subr.bf16.mxu0 0
        %5869 = vmatpush1.bf16.msra.mxu0 0
        %5870 = vmatprep.subr.bf16.mxu0 0
        %5871 = vmatpush1.bf16.msra.mxu0 0
        %5872 = vmatprep.subr.bf16.mxu0 0
        %5873 = vmatpush1.bf16.msra.mxu0 0
        %5874 = vmatprep.subr.bf16.mxu0 0
        %5875 = vmatpush1.bf16.msra.mxu0 0
        %5876 = vmatprep.subr.bf16.mxu0 0
        %5877 = vmatpush1.bf16.msra.mxu0 0
        %5878 = vmatprep.subr.bf16.mxu0 0
        %5879 = vmatpush1.bf16.msra.mxu0 0
        %5880 = vmatprep.subr.bf16.mxu0 0
        %5881 = vmatpush1.bf16.msra.mxu0 0
        %5882 = vmatprep.subr.bf16.mxu0 0
        %5883 = vmatpush1.bf16.msra.mxu0 0
        %5884 = vmatprep.subr.bf16.mxu0 0
        %5885 = vmatpush1.bf16.msra.mxu0 0
        %5886 = vmatprep.subr.bf16.mxu0 0
        %5887 = vmatpush1.bf16.msra.mxu0 0
        %5888 = vmatprep.subr.bf16.mxu0 0
        %5889 = vmatpush1.bf16.msra.mxu0 0
        %5890 = vmatprep.mubr.bf16.mxu0 0
        %5891 = vmatmul.mubr.bf16.gmra.mrb[0].mxu0 %v5853
        %v5892 = vpop.f32.mrb[0].mxu0
        %v5893 = vadd.f32 0.0, %v5892
        %v5894 = vpop.f32.mrb[0].mxu0
        %v5895 = vpop.f32.mrb[0].mxu0
        %v5896 = vpop.f32.mrb[0].mxu0
        %5897 = vdwg.mxu0
        %5898 = vrot.lane.b32.xlu0 %v654, 64
        %v5899 = vpop.permute.xlu0 %5898
        %v5901 = vsel %vm1446, %v5459, 0
        %v5904 = vsel %vm1642, %v5899, 0
        %5906 = vmatprep.subr.bf16.mxu0 0
        %5907 = vmatpush1.bf16.msra.mxu0 %v5904
        %5908 = vmatprep.subr.bf16.mxu0 0
        %5909 = vmatpush1.bf16.msra.mxu0 0
        %5910 = vmatprep.subr.bf16.mxu0 0
        %5911 = vmatpush1.bf16.msra.mxu0 0
        %5912 = vmatprep.subr.bf16.mxu0 0
        %5913 = vmatpush1.bf16.msra.mxu0 0
        %5914 = vmatprep.subr.bf16.mxu0 0
        %5915 = vmatpush1.bf16.msra.mxu0 0
        %5916 = vmatprep.subr.bf16.mxu0 0
        %5917 = vmatpush1.bf16.msra.mxu0 0
        %5918 = vmatprep.subr.bf16.mxu0 0
        %5919 = vmatpush1.bf16.msra.mxu0 0
        %5920 = vmatprep.subr.bf16.mxu0 0
        %5921 = vmatpush1.bf16.msra.mxu0 0
        %5922 = vmatprep.subr.bf16.mxu0 0
        %5923 = vmatpush1.bf16.msra.mxu0 0
        %5924 = vmatprep.subr.bf16.mxu0 0
        %5925 = vmatpush1.bf16.msra.mxu0 0
        %5926 = vmatprep.subr.bf16.mxu0 0
        %5927 = vmatpush1.bf16.msra.mxu0 0
        %5928 = vmatprep.subr.bf16.mxu0 0
        %5929 = vmatpush1.bf16.msra.mxu0 0
        %5930 = vmatprep.subr.bf16.mxu0 0
        %5931 = vmatpush1.bf16.msra.mxu0 0
        %5932 = vmatprep.subr.bf16.mxu0 0
        %5933 = vmatpush1.bf16.msra.mxu0 0
        %5934 = vmatprep.subr.bf16.mxu0 0
        %5935 = vmatpush1.bf16.msra.mxu0 0
        %5936 = vmatprep.subr.bf16.mxu0 0
        %5937 = vmatpush1.bf16.msra.mxu0 0
        %5938 = vmatprep.mubr.bf16.mxu0 0
        %5939 = vmatmul.mubr.bf16.gmra.mrb[0].mxu0 %v5901
        %v5940 = vpop.f32.mrb[0].mxu0
        %v5941 = vadd.f32 0.0, %v5940
        %v5942 = vpop.f32.mrb[0].mxu0
        %v5943 = vpop.f32.mrb[0].mxu0
        %v5944 = vpop.f32.mrb[0].mxu0
        %5945 = vdwg.mxu0
        %5946 = vrot.lane.b32.xlu0 %v655, 64
        %v5947 = vpop.permute.xlu0 %5946
        %v5949 = vsel %vm1446, %v5460, 0
        %v5952 = vsel %vm1642, %v5947, 0
        %5954 = vmatprep.subr.bf16.mxu0 0
        %5955 = vmatpush1.bf16.msra.mxu0 %v5952
        %5956 = vmatprep.subr.bf16.mxu0 0
        %5957 = vmatpush1.bf16.msra.mxu0 0
        %5958 = vmatprep.subr.bf16.mxu0 0
        %5959 = vmatpush1.bf16.msra.mxu0 0
        %5960 = vmatprep.subr.bf16.mxu0 0
        %5961 = vmatpush1.bf16.msra.mxu0 0
        %5962 = vmatprep.subr.bf16.mxu0 0
        %5963 = vmatpush1.bf16.msra.mxu0 0
        %5964 = vmatprep.subr.bf16.mxu0 0
        %5965 = vmatpush1.bf16.msra.mxu0 0
        %5966 = vmatprep.subr.bf16.mxu0 0
        %5967 = vmatpush1.bf16.msra.mxu0 0
        %5968 = vmatprep.subr.bf16.mxu0 0
        %5969 = vmatpush1.bf16.msra.mxu0 0
        %5970 = vmatprep.subr.bf16.mxu0 0
        %5971 = vmatpush1.bf16.msra.mxu0 0
        %5972 = vmatprep.subr.bf16.mxu0 0
        %5973 = vmatpush1.bf16.msra.mxu0 0
        %5974 = vmatprep.subr.bf16.mxu0 0
        %5975 = vmatpush1.bf16.msra.mxu0 0
        %5976 = vmatprep.subr.bf16.mxu0 0
        %5977 = vmatpush1.bf16.msra.mxu0 0
        %5978 = vmatprep.subr.bf16.mxu0 0
        %5979 = vmatpush1.bf16.msra.mxu0 0
        %5980 = vmatprep.subr.bf16.mxu0 0
        %5981 = vmatpush1.bf16.msra.mxu0 0
        %5982 = vmatprep.subr.bf16.mxu0 0
        %5983 = vmatpush1.bf16.msra.mxu0 0
        %5984 = vmatprep.subr.bf16.mxu0 0
        %5985 = vmatpush1.bf16.msra.mxu0 0
        %5986 = vmatprep.mubr.bf16.mxu0 0
        %5987 = vmatmul.mubr.bf16.gmra.mrb[0].mxu0 %v5949
        %v5988 = vpop.f32.mrb[0].mxu0
        %v5989 = vadd.f32 0.0, %v5988
        %v5990 = vpop.f32.mrb[0].mxu0
        %v5991 = vpop.f32.mrb[0].mxu0
        %v5992 = vpop.f32.mrb[0].mxu0
        %5993 = vdwg.mxu0
        %5994 = vrot.lane.b32.xlu0 %v656, 64
        %v5995 = vpop.permute.xlu0 %5994
        %v5997 = vsel %vm1446, %v5461, 0
        %v6000 = vsel %vm1642, %v5995, 0
        %6002 = vmatprep.subr.bf16.mxu0 0
        %6003 = vmatpush1.bf16.msra.mxu0 %v6000
        %6004 = vmatprep.subr.bf16.mxu0 0
        %6005 = vmatpush1.bf16.msra.mxu0 0
        %6006 = vmatprep.subr.bf16.mxu0 0
        %6007 = vmatpush1.bf16.msra.mxu0 0
        %6008 = vmatprep.subr.bf16.mxu0 0
        %6009 = vmatpush1.bf16.msra.mxu0 0
        %6010 = vmatprep.subr.bf16.mxu0 0
        %6011 = vmatpush1.bf16.msra.mxu0 0
        %6012 = vmatprep.subr.bf16.mxu0 0
        %6013 = vmatpush1.bf16.msra.mxu0 0
        %6014 = vmatprep.subr.bf16.mxu0 0
        %6015 = vmatpush1.bf16.msra.mxu0 0
        %6016 = vmatprep.subr.bf16.mxu0 0
        %6017 = vmatpush1.bf16.msra.mxu0 0
        %6018 = vmatprep.subr.bf16.mxu0 0
        %6019 = vmatpush1.bf16.msra.mxu0 0
        %6020 = vmatprep.subr.bf16.mxu0 0
        %6021 = vmatpush1.bf16.msra.mxu0 0
        %6022 = vmatprep.subr.bf16.mxu0 0
        %6023 = vmatpush1.bf16.msra.mxu0 0
        %6024 = vmatprep.subr.bf16.mxu0 0
        %6025 = vmatpush1.bf16.msra.mxu0 0
        %6026 = vmatprep.subr.bf16.mxu0 0
        %6027 = vmatpush1.bf16.msra.mxu0 0
        %6028 = vmatprep.subr.bf16.mxu0 0
        %6029 = vmatpush1.bf16.msra.mxu0 0
        %6030 = vmatprep.subr.bf16.mxu0 0
        %6031 = vmatpush1.bf16.msra.mxu0 0
        %6032 = vmatprep.subr.bf16.mxu0 0
        %6033 = vmatpush1.bf16.msra.mxu0 0
        %6034 = vmatprep.mubr.bf16.mxu0 0
        %6035 = vmatmul.mubr.bf16.gmra.mrb[0].mxu0 %v5997
        %v6036 = vpop.f32.mrb[0].mxu0
        %v6037 = vadd.f32 0.0, %v6036
        %v6038 = vpop.f32.mrb[0].mxu0
        %v6039 = vpop.f32.mrb[0].mxu0
        %v6040 = vpop.f32.mrb[0].mxu0
        %6041 = vdwg.mxu0
        %6042 = vrot.lane.b32.xlu0 %v657, 64
        %v6043 = vpop.permute.xlu0 %6042
        %v6045 = vsel %vm1446, %v5462, 0
        %v6048 = vsel %vm1642, %v6043, 0
        %6050 = vmatprep.subr.bf16.mxu0 0
        %6051 = vmatpush1.bf16.msra.mxu0 %v6048
        %6052 = vmatprep.subr.bf16.mxu0 0
        %6053 = vmatpush1.bf16.msra.mxu0 0
        %6054 = vmatprep.subr.bf16.mxu0 0
        %6055 = vmatpush1.bf16.msra.mxu0 0
        %6056 = vmatprep.subr.bf16.mxu0 0
        %6057 = vmatpush1.bf16.msra.mxu0 0
        %6058 = vmatprep.subr.bf16.mxu0 0
        %6059 = vmatpush1.bf16.msra.mxu0 0
        %6060 = vmatprep.subr.bf16.mxu0 0
        %6061 = vmatpush1.bf16.msra.mxu0 0
        %6062 = vmatprep.subr.bf16.mxu0 0
        %6063 = vmatpush1.bf16.msra.mxu0 0
        %6064 = vmatprep.subr.bf16.mxu0 0
        %6065 = vmatpush1.bf16.msra.mxu0 0
        %6066 = vmatprep.subr.bf16.mxu0 0
        %6067 = vmatpush1.bf16.msra.mxu0 0
        %6068 = vmatprep.subr.bf16.mxu0 0
        %6069 = vmatpush1.bf16.msra.mxu0 0
        %6070 = vmatprep.subr.bf16.mxu0 0
        %6071 = vmatpush1.bf16.msra.mxu0 0
        %6072 = vmatprep.subr.bf16.mxu0 0
        %6073 = vmatpush1.bf16.msra.mxu0 0
        %6074 = vmatprep.subr.bf16.mxu0 0
        %6075 = vmatpush1.bf16.msra.mxu0 0
        %6076 = vmatprep.subr.bf16.mxu0 0
        %6077 = vmatpush1.bf16.msra.mxu0 0
        %6078 = vmatprep.subr.bf16.mxu0 0
        %6079 = vmatpush1.bf16.msra.mxu0 0
        %6080 = vmatprep.subr.bf16.mxu0 0
        %6081 = vmatpush1.bf16.msra.mxu0 0
        %6082 = vmatprep.mubr.bf16.mxu0 0
        %6083 = vmatmul.mubr.bf16.gmra.mrb[0].mxu0 %v6045
        %v6084 = vpop.f32.mrb[0].mxu0
        %v6085 = vadd.f32 0.0, %v6084
        %v6086 = vpop.f32.mrb[0].mxu0
        %v6087 = vpop.f32.mrb[0].mxu0
        %v6088 = vpop.f32.mrb[0].mxu0
        %6089 = vdwg.mxu0
        %6090 = vrot.lane.b32.xlu0 %v658, 64
        %v6091 = vpop.permute.xlu0 %6090
        %v6093 = vsel %vm1446, %v5463, 0
        %v6096 = vsel %vm1642, %v6091, 0
        %6098 = vmatprep.subr.bf16.mxu0 0
        %6099 = vmatpush1.bf16.msra.mxu0 %v6096
        %6100 = vmatprep.subr.bf16.mxu0 0
        %6101 = vmatpush1.bf16.msra.mxu0 0
        %6102 = vmatprep.subr.bf16.mxu0 0
        %6103 = vmatpush1.bf16.msra.mxu0 0
        %6104 = vmatprep.subr.bf16.mxu0 0
        %6105 = vmatpush1.bf16.msra.mxu0 0
        %6106 = vmatprep.subr.bf16.mxu0 0
        %6107 = vmatpush1.bf16.msra.mxu0 0
        %6108 = vmatprep.subr.bf16.mxu0 0
        %6109 = vmatpush1.bf16.msra.mxu0 0
        %6110 = vmatprep.subr.bf16.mxu0 0
        %6111 = vmatpush1.bf16.msra.mxu0 0
        %6112 = vmatprep.subr.bf16.mxu0 0
        %6113 = vmatpush1.bf16.msra.mxu0 0
        %6114 = vmatprep.subr.bf16.mxu0 0
        %6115 = vmatpush1.bf16.msra.mxu0 0
        %6116 = vmatprep.subr.bf16.mxu0 0
        %6117 = vmatpush1.bf16.msra.mxu0 0
        %6118 = vmatprep.subr.bf16.mxu0 0
        %6119 = vmatpush1.bf16.msra.mxu0 0
        %6120 = vmatprep.subr.bf16.mxu0 0
        %6121 = vmatpush1.bf16.msra.mxu0 0
        %6122 = vmatprep.subr.bf16.mxu0 0
        %6123 = vmatpush1.bf16.msra.mxu0 0
        %6124 = vmatprep.subr.bf16.mxu0 0
        %6125 = vmatpush1.bf16.msra.mxu0 0
        %6126 = vmatprep.subr.bf16.mxu0 0
        %6127 = vmatpush1.bf16.msra.mxu0 0
        %6128 = vmatprep.subr.bf16.mxu0 0
        %6129 = vmatpush1.bf16.msra.mxu0 0
        %6130 = vmatprep.mubr.bf16.mxu0 0
        %6131 = vmatmul.mubr.bf16.gmra.mrb[0].mxu0 %v6093
        %v6132 = vpop.f32.mrb[0].mxu0
        %v6133 = vadd.f32 0.0, %v6132
        %v6134 = vpop.f32.mrb[0].mxu0
        %v6135 = vpop.f32.mrb[0].mxu0
        %v6136 = vpop.f32.mrb[0].mxu0
        %6137 = vdwg.mxu0
        %6138 = vrot.lane.b32.xlu0 %v659, 64
        %v6139 = vpop.permute.xlu0 %6138
        %v6141 = vsel %vm1446, %v5464, 0
        %v6144 = vsel %vm1642, %v6139, 0
        %6146 = vmatprep.subr.bf16.mxu0 0
        %6147 = vmatpush1.bf16.msra.mxu0 %v6144
        %6148 = vmatprep.subr.bf16.mxu0 0
        %6149 = vmatpush1.bf16.msra.mxu0 0
        %6150 = vmatprep.subr.bf16.mxu0 0
        %6151 = vmatpush1.bf16.msra.mxu0 0
        %6152 = vmatprep.subr.bf16.mxu0 0
        %6153 = vmatpush1.bf16.msra.mxu0 0
        %6154 = vmatprep.subr.bf16.mxu0 0
        %6155 = vmatpush1.bf16.msra.mxu0 0
        %6156 = vmatprep.subr.bf16.mxu0 0
        %6157 = vmatpush1.bf16.msra.mxu0 0
        %6158 = vmatprep.subr.bf16.mxu0 0
        %6159 = vmatpush1.bf16.msra.mxu0 0
        %6160 = vmatprep.subr.bf16.mxu0 0
        %6161 = vmatpush1.bf16.msra.mxu0 0
        %6162 = vmatprep.subr.bf16.mxu0 0
        %6163 = vmatpush1.bf16.msra.mxu0 0
        %6164 = vmatprep.subr.bf16.mxu0 0
        %6165 = vmatpush1.bf16.msra.mxu0 0
        %6166 = vmatprep.subr.bf16.mxu0 0
        %6167 = vmatpush1.bf16.msra.mxu0 0
        %6168 = vmatprep.subr.bf16.mxu0 0
        %6169 = vmatpush1.bf16.msra.mxu0 0
        %6170 = vmatprep.subr.bf16.mxu0 0
        %6171 = vmatpush1.bf16.msra.mxu0 0
        %6172 = vmatprep.subr.bf16.mxu0 0
        %6173 = vmatpush1.bf16.msra.mxu0 0
        %6174 = vmatprep.subr.bf16.mxu0 0
        %6175 = vmatpush1.bf16.msra.mxu0 0
        %6176 = vmatprep.subr.bf16.mxu0 0
        %6177 = vmatpush1.bf16.msra.mxu0 0
        %6178 = vmatprep.mubr.bf16.mxu0 0
        %6179 = vmatmul.mubr.bf16.gmra.mrb[0].mxu0 %v6141
        %v6180 = vpop.f32.mrb[0].mxu0
        %v6181 = vadd.f32 0.0, %v6180
        %v6182 = vpop.f32.mrb[0].mxu0
        %v6183 = vpop.f32.mrb[0].mxu0
        %v6184 = vpop.f32.mrb[0].mxu0
        %6185 = vdwg.mxu0
        %6186 = vrot.lane.b32.xlu0 %v660, 64
        %v6187 = vpop.permute.xlu0 %6186
        %v6189 = vsel %vm1446, %v5465, 0
        %v6192 = vsel %vm1642, %v6187, 0
        %6194 = vmatprep.subr.bf16.mxu0 0
        %6195 = vmatpush1.bf16.msra.mxu0 %v6192
        %6196 = vmatprep.subr.bf16.mxu0 0
        %6197 = vmatpush1.bf16.msra.mxu0 0
        %6198 = vmatprep.subr.bf16.mxu0 0
        %6199 = vmatpush1.bf16.msra.mxu0 0
        %6200 = vmatprep.subr.bf16.mxu0 0
        %6201 = vmatpush1.bf16.msra.mxu0 0
        %6202 = vmatprep.subr.bf16.mxu0 0
        %6203 = vmatpush1.bf16.msra.mxu0 0
        %6204 = vmatprep.subr.bf16.mxu0 0
        %6205 = vmatpush1.bf16.msra.mxu0 0
        %6206 = vmatprep.subr.bf16.mxu0 0
        %6207 = vmatpush1.bf16.msra.mxu0 0
        %6208 = vmatprep.subr.bf16.mxu0 0
        %6209 = vmatpush1.bf16.msra.mxu0 0
        %6210 = vmatprep.subr.bf16.mxu0 0
        %6211 = vmatpush1.bf16.msra.mxu0 0
        %6212 = vmatprep.subr.bf16.mxu0 0
        %6213 = vmatpush1.bf16.msra.mxu0 0
        %6214 = vmatprep.subr.bf16.mxu0 0
        %6215 = vmatpush1.bf16.msra.mxu0 0
        %6216 = vmatprep.subr.bf16.mxu0 0
        %6217 = vmatpush1.bf16.msra.mxu0 0
        %6218 = vmatprep.subr.bf16.mxu0 0
        %6219 = vmatpush1.bf16.msra.mxu0 0
        %6220 = vmatprep.subr.bf16.mxu0 0
        %6221 = vmatpush1.bf16.msra.mxu0 0
        %6222 = vmatprep.subr.bf16.mxu0 0
        %6223 = vmatpush1.bf16.msra.mxu0 0
        %6224 = vmatprep.subr.bf16.mxu0 0
        %6225 = vmatpush1.bf16.msra.mxu0 0
        %6226 = vmatprep.mubr.bf16.mxu0 0
        %6227 = vmatmul.mubr.bf16.gmra.mrb[0].mxu0 %v6189
        %v6228 = vpop.f32.mrb[0].mxu0
        %v6229 = vadd.f32 0.0, %v6228
        %v6230 = vpop.f32.mrb[0].mxu0
        %v6231 = vpop.f32.mrb[0].mxu0
        %v6232 = vpop.f32.mrb[0].mxu0
        %6233 = vdwg.mxu0
        %v6234 = vpack.c.bf16 %v5557, %v5509
        %v6235 = vpack.c.bf16 %v5653, %v5605
        %v6236 = vpack.c.bf16 %v5749, %v5701
        %v6237 = vpack.c.bf16 %v5845, %v5797
        %v6238 = vpack.c.bf16 %v5941, %v5893
        %v6239 = vpack.c.bf16 %v6037, %v5989
        %v6240 = vpack.c.bf16 %v6133, %v6085
        %v6241 = vpack.c.bf16 %v6229, %v6181
        %v6242 = vld [vmem:[%s4 + $0x20] sm:$0xf]
        %v6243 = vld [vmem:[%s4 + $0x24] sm:$0xf]
        %v6244 = vld [vmem:[%s4 + $0x28] sm:$0xf]
        %v6245 = vld [vmem:[%s4 + $0x2c] sm:$0xf]
        %v6250 = vunpack.c.l.b16 %v6242
        %v6251 = vunpack.c.l.b16 %v6243
        %v6252 = vunpack.c.l.b16 %v6244
        %v6253 = vunpack.c.l.b16 %v6245
        %v6254 = vpack.c.b16 %v6251, %v6250
        %v6255 = vpack.c.b16 %v6253, %v6252
        %v6259 = vsel %vm709, %v6234, 0
        %v6262 = vsel %vm709, %v6235, 0
        %v6265 = vsel %vm709, %v6236, 0
        %v6268 = vsel %vm709, %v6237, 0
        %v6271 = vsel %vm709, %v6238, 0
        %v6274 = vsel %vm709, %v6239, 0
        %v6277 = vsel %vm709, %v6240, 0
        %v6280 = vsel %vm709, %v6241, 0
        %6282 = vmatprep.subr.bf16.mxu0 0
        %6283 = vmatpush1.bf16.msra.mxu0 %v6254
        %6284 = vmatprep.subr.bf16.mxu0 0
        %6285 = vmatpush1.bf16.msra.mxu0 %v6255
        %6286 = vmatprep.subr.bf16.mxu0 0
        %6287 = vmatpush1.bf16.msra.mxu0 0
        %6288 = vmatprep.subr.bf16.mxu0 0
        %6289 = vmatpush1.bf16.msra.mxu0 0
        %6290 = vmatprep.subr.bf16.mxu0 0
        %6291 = vmatpush1.bf16.msra.mxu0 0
        %6292 = vmatprep.subr.bf16.mxu0 0
        %6293 = vmatpush1.bf16.msra.mxu0 0
        %6294 = vmatprep.subr.bf16.mxu0 0
        %6295 = vmatpush1.bf16.msra.mxu0 0
        %6296 = vmatprep.subr.bf16.mxu0 0
        %6297 = vmatpush1.bf16.msra.mxu0 0
        %6298 = vmatprep.subr.bf16.mxu0 0
        %6299 = vmatpush1.bf16.msra.mxu0 0
        %6300 = vmatprep.subr.bf16.mxu0 0
        %6301 = vmatpush1.bf16.msra.mxu0 0
        %6302 = vmatprep.subr.bf16.mxu0 0
        %6303 = vmatpush1.bf16.msra.mxu0 0
        %6304 = vmatprep.subr.bf16.mxu0 0
        %6305 = vmatpush1.bf16.msra.mxu0 0
        %6306 = vmatprep.subr.bf16.mxu0 0
        %6307 = vmatpush1.bf16.msra.mxu0 0
        %6308 = vmatprep.subr.bf16.mxu0 0
        %6309 = vmatpush1.bf16.msra.mxu0 0
        %6310 = vmatprep.subr.bf16.mxu0 0
        %6311 = vmatpush1.bf16.msra.mxu0 0
        %6312 = vmatprep.subr.bf16.mxu0 0
        %6313 = vmatpush1.bf16.msra.mxu0 0
        %6314 = vmatprep.mubr.bf16.mxu0 0
        %6315 = vmatmul.mubr.bf16.gmra.mrb[0].mxu0 %v6259
        %v6316 = vpop.f32.mrb[0].mxu0
        %v6317 = vadd.f32 0.0, %v6316
        %v6318 = vpop.f32.mrb[0].mxu0
        %v6319 = vpop.f32.mrb[0].mxu0
        %v6320 = vadd.f32 0.0, %v6319
        %v6321 = vpop.f32.mrb[0].mxu0
        %6322 = vmatprep.mubr.bf16.mxu0 0
        %6323 = vmatmul.mubr.bf16.gmra.mrb[0].mxu0 %v6262
        %v6324 = vpop.f32.mrb[0].mxu0
        %v6325 = vadd.f32 0.0, %v6324
        %v6326 = vpop.f32.mrb[0].mxu0
        %v6327 = vpop.f32.mrb[0].mxu0
        %v6328 = vadd.f32 0.0, %v6327
        %v6329 = vpop.f32.mrb[0].mxu0
        %6330 = vmatprep.mubr.bf16.mxu0 0
        %6331 = vmatmul.mubr.bf16.gmra.mrb[0].mxu0 %v6265
        %v6332 = vpop.f32.mrb[0].mxu0
        %v6333 = vadd.f32 0.0, %v6332
        %v6334 = vpop.f32.mrb[0].mxu0
        %v6335 = vpop.f32.mrb[0].mxu0
        %v6336 = vadd.f32 0.0, %v6335
        %v6337 = vpop.f32.mrb[0].mxu0
        %6338 = vmatprep.mubr.bf16.mxu0 0
        %6339 = vmatmul.mubr.bf16.gmra.mrb[0].mxu0 %v6268
        %v6340 = vpop.f32.mrb[0].mxu0
        %v6341 = vadd.f32 0.0, %v6340
        %v6342 = vpop.f32.mrb[0].mxu0
        %v6343 = vpop.f32.mrb[0].mxu0
        %v6344 = vadd.f32 0.0, %v6343
        %v6345 = vpop.f32.mrb[0].mxu0
        %6346 = vmatprep.mubr.bf16.mxu0 0
        %6347 = vmatmul.mubr.bf16.gmra.mrb[0].mxu0 %v6271
        %v6348 = vpop.f32.mrb[0].mxu0
        %v6349 = vadd.f32 0.0, %v6348
        %v6350 = vpop.f32.mrb[0].mxu0
        %v6351 = vpop.f32.mrb[0].mxu0
        %v6352 = vadd.f32 0.0, %v6351
        %v6353 = vpop.f32.mrb[0].mxu0
        %6354 = vmatprep.mubr.bf16.mxu0 0
        %6355 = vmatmul.mubr.bf16.gmra.mrb[0].mxu0 %v6274
        %v6356 = vpop.f32.mrb[0].mxu0
        %v6357 = vadd.f32 0.0, %v6356
        %v6358 = vpop.f32.mrb[0].mxu0
        %v6359 = vpop.f32.mrb[0].mxu0
        %v6360 = vadd.f32 0.0, %v6359
        %v6361 = vpop.f32.mrb[0].mxu0
        %6362 = vmatprep.mubr.bf16.mxu0 0
        %6363 = vmatmul.mubr.bf16.gmra.mrb[0].mxu0 %v6277
        %v6364 = vpop.f32.mrb[0].mxu0
        %v6365 = vadd.f32 0.0, %v6364
        %v6366 = vpop.f32.mrb[0].mxu0
        %v6367 = vpop.f32.mrb[0].mxu0
        %v6368 = vadd.f32 0.0, %v6367
        %v6369 = vpop.f32.mrb[0].mxu0
        %6370 = vmatprep.mubr.bf16.mxu0 0
        %6371 = vmatmul.mubr.bf16.gmra.mrb[0].mxu0 %v6280
        %v6372 = vpop.f32.mrb[0].mxu0
        %v6373 = vadd.f32 0.0, %v6372
        %v6374 = vpop.f32.mrb[0].mxu0
        %v6375 = vpop.f32.mrb[0].mxu0
        %v6376 = vadd.f32 0.0, %v6375
        %v6377 = vpop.f32.mrb[0].mxu0
        %6378 = vdwg.mxu0
        %v6379 = vadd.f32 %v4412, %v6317
        %v6380 = vadd.f32 %v4415, %v6320
        %v6381 = vadd.f32 %v4420, %v6325
        %v6382 = vadd.f32 %v4423, %v6328
        %v6383 = vadd.f32 %v4428, %v6333
        %v6384 = vadd.f32 %v4431, %v6336
        %v6385 = vadd.f32 %v4436, %v6341
        %v6386 = vadd.f32 %v4439, %v6344
        %v6387 = vadd.f32 %v4444, %v6349
        %v6388 = vadd.f32 %v4447, %v6352
        %v6389 = vadd.f32 %v4452, %v6357
        %v6390 = vadd.f32 %v4455, %v6360
        %v6391 = vadd.f32 %v4460, %v6365
        %v6392 = vadd.f32 %v4463, %v6368
        %v6393 = vadd.f32 %v4468, %v6373
        %v6394 = vadd.f32 %v4471, %v6376
        %6395 = vrot.lane.b32.xlu0 %v581, 32
        %v6396 = vpop.permute.xlu0 %6395
        %6397 = vrot.lane.b32.xlu0 %v613, 32
        %v6398 = vpop.permute.xlu0 %6397
        %v6400 = vsel %vm709, %v6396, 0
        %v6403 = vsel %vm709, %v6398, 0
        %6405 = vmatprep.subr.bf16.mxu0 0
        %6406 = vmatpush1.bf16.xpose.msra.mxu0 %v6403
        %6407 = vmatprep.subr.bf16.mxu0 0
        %6408 = vmatpush1.bf16.xpose.msra.mxu0 0
        %6409 = vmatprep.subr.bf16.mxu0 0
        %6410 = vmatpush1.bf16.xpose.msra.mxu0 0
        %6411 = vmatprep.subr.bf16.mxu0 0
        %6412 = vmatpush1.bf16.xpose.msra.mxu0 0
        %6413 = vmatprep.subr.bf16.mxu0 0
        %6414 = vmatpush1.bf16.xpose.msra.mxu0 0
        %6415 = vmatprep.subr.bf16.mxu0 0
        %6416 = vmatpush1.bf16.xpose.msra.mxu0 0
        %6417 = vmatprep.subr.bf16.mxu0 0
        %6418 = vmatpush1.bf16.xpose.msra.mxu0 0
        %6419 = vmatprep.subr.bf16.mxu0 0
        %6420 = vmatpush1.bf16.xpose.msra.mxu0 0
        %6421 = vmatprep.subr.bf16.mxu0 0
        %6422 = vmatpush1.bf16.xpose.msra.mxu0 0
        %6423 = vmatprep.subr.bf16.mxu0 0
        %6424 = vmatpush1.bf16.xpose.msra.mxu0 0
        %6425 = vmatprep.subr.bf16.mxu0 0
        %6426 = vmatpush1.bf16.xpose.msra.mxu0 0
        %6427 = vmatprep.subr.bf16.mxu0 0
        %6428 = vmatpush1.bf16.xpose.msra.mxu0 0
        %6429 = vmatprep.subr.bf16.mxu0 0
        %6430 = vmatpush1.bf16.xpose.msra.mxu0 0
        %6431 = vmatprep.subr.bf16.mxu0 0
        %6432 = vmatpush1.bf16.xpose.msra.mxu0 0
        %6433 = vmatprep.subr.bf16.mxu0 0
        %6434 = vmatpush1.bf16.xpose.msra.mxu0 0
        %6435 = vmatprep.subr.bf16.mxu0 0
        %6436 = vmatpush1.bf16.xpose.msra.mxu0 0
        %6437 = vmatprep.mubr.bf16.mxu0 0
        %6438 = vmatmul.mubr.bf16.gmra.mrb[0].mxu0 %v6400
        %v6439 = vpop.f32.mrb[0].mxu0
        %v6440 = vadd.f32 %v693, %v6439
        %v6441 = vpop.f32.mrb[0].mxu0
        %v6442 = vpop.f32.mrb[0].mxu0
        %v6443 = vpop.f32.mrb[0].mxu0
        %6444 = vdwg.mxu0
        %6445 = vrot.lane.b32.xlu0 %v582, 32
        %v6446 = vpop.permute.xlu0 %6445
        %6447 = vrot.lane.b32.xlu0 %v614, 32
        %v6448 = vpop.permute.xlu0 %6447
        %v6450 = vsel %vm709, %v6446, 0
        %v6453 = vsel %vm709, %v6448, 0
        %6455 = vmatprep.subr.bf16.mxu0 0
        %6456 = vmatpush1.bf16.xpose.msra.mxu0 %v6453
        %6457 = vmatprep.subr.bf16.mxu0 0
        %6458 = vmatpush1.bf16.xpose.msra.mxu0 0
        %6459 = vmatprep.subr.bf16.mxu0 0
        %6460 = vmatpush1.bf16.xpose.msra.mxu0 0
        %6461 = vmatprep.subr.bf16.mxu0 0
        %6462 = vmatpush1.bf16.xpose.msra.mxu0 0
        %6463 = vmatprep.subr.bf16.mxu0 0
        %6464 = vmatpush1.bf16.xpose.msra.mxu0 0
        %6465 = vmatprep.subr.bf16.mxu0 0
        %6466 = vmatpush1.bf16.xpose.msra.mxu0 0
        %6467 = vmatprep.subr.bf16.mxu0 0
        %6468 = vmatpush1.bf16.xpose.msra.mxu0 0
        %6469 = vmatprep.subr.bf16.mxu0 0
        %6470 = vmatpush1.bf16.xpose.msra.mxu0 0
        %6471 = vmatprep.subr.bf16.mxu0 0
        %6472 = vmatpush1.bf16.xpose.msra.mxu0 0
        %6473 = vmatprep.subr.bf16.mxu0 0
        %6474 = vmatpush1.bf16.xpose.msra.mxu0 0
        %6475 = vmatprep.subr.bf16.mxu0 0
        %6476 = vmatpush1.bf16.xpose.msra.mxu0 0
        %6477 = vmatprep.subr.bf16.mxu0 0
        %6478 = vmatpush1.bf16.xpose.msra.mxu0 0
        %6479 = vmatprep.subr.bf16.mxu0 0
        %6480 = vmatpush1.bf16.xpose.msra.mxu0 0
        %6481 = vmatprep.subr.bf16.mxu0 0
        %6482 = vmatpush1.bf16.xpose.msra.mxu0 0
        %6483 = vmatprep.subr.bf16.mxu0 0
        %6484 = vmatpush1.bf16.xpose.msra.mxu0 0
        %6485 = vmatprep.subr.bf16.mxu0 0
        %6486 = vmatpush1.bf16.xpose.msra.mxu0 0
        %6487 = vmatprep.mubr.bf16.mxu0 0
        %6488 = vmatmul.mubr.bf16.gmra.mrb[0].mxu0 %v6450
        %v6489 = vpop.f32.mrb[0].mxu0
        %v6490 = vadd.f32 %v694, %v6489
        %v6491 = vpop.f32.mrb[0].mxu0
        %v6492 = vpop.f32.mrb[0].mxu0
        %v6493 = vpop.f32.mrb[0].mxu0
        %6494 = vdwg.mxu0
        %6495 = vrot.lane.b32.xlu0 %v583, 32
        %v6496 = vpop.permute.xlu0 %6495
        %6497 = vrot.lane.b32.xlu0 %v615, 32
        %v6498 = vpop.permute.xlu0 %6497
        %v6500 = vsel %vm709, %v6496, 0
        %v6503 = vsel %vm709, %v6498, 0
        %6505 = vmatprep.subr.bf16.mxu0 0
        %6506 = vmatpush1.bf16.xpose.msra.mxu0 %v6503
        %6507 = vmatprep.subr.bf16.mxu0 0
        %6508 = vmatpush1.bf16.xpose.msra.mxu0 0
        %6509 = vmatprep.subr.bf16.mxu0 0
        %6510 = vmatpush1.bf16.xpose.msra.mxu0 0
        %6511 = vmatprep.subr.bf16.mxu0 0
        %6512 = vmatpush1.bf16.xpose.msra.mxu0 0
        %6513 = vmatprep.subr.bf16.mxu0 0
        %6514 = vmatpush1.bf16.xpose.msra.mxu0 0
        %6515 = vmatprep.subr.bf16.mxu0 0
        %6516 = vmatpush1.bf16.xpose.msra.mxu0 0
        %6517 = vmatprep.subr.bf16.mxu0 0
        %6518 = vmatpush1.bf16.xpose.msra.mxu0 0
        %6519 = vmatprep.subr.bf16.mxu0 0
        %6520 = vmatpush1.bf16.xpose.msra.mxu0 0
        %6521 = vmatprep.subr.bf16.mxu0 0
        %6522 = vmatpush1.bf16.xpose.msra.mxu0 0
        %6523 = vmatprep.subr.bf16.mxu0 0
        %6524 = vmatpush1.bf16.xpose.msra.mxu0 0
        %6525 = vmatprep.subr.bf16.mxu0 0
        %6526 = vmatpush1.bf16.xpose.msra.mxu0 0
        %6527 = vmatprep.subr.bf16.mxu0 0
        %6528 = vmatpush1.bf16.xpose.msra.mxu0 0
        %6529 = vmatprep.subr.bf16.mxu0 0
        %6530 = vmatpush1.bf16.xpose.msra.mxu0 0
        %6531 = vmatprep.subr.bf16.mxu0 0
        %6532 = vmatpush1.bf16.xpose.msra.mxu0 0
        %6533 = vmatprep.subr.bf16.mxu0 0
        %6534 = vmatpush1.bf16.xpose.msra.mxu0 0
        %6535 = vmatprep.subr.bf16.mxu0 0
        %6536 = vmatpush1.bf16.xpose.msra.mxu0 0
        %6537 = vmatprep.mubr.bf16.mxu0 0
        %6538 = vmatmul.mubr.bf16.gmra.mrb[0].mxu0 %v6500
        %v6539 = vpop.f32.mrb[0].mxu0
        %v6540 = vadd.f32 %v695, %v6539
        %v6541 = vpop.f32.mrb[0].mxu0
        %v6542 = vpop.f32.mrb[0].mxu0
        %v6543 = vpop.f32.mrb[0].mxu0
        %6544 = vdwg.mxu0
        %6545 = vrot.lane.b32.xlu0 %v584, 32
        %v6546 = vpop.permute.xlu0 %6545
        %6547 = vrot.lane.b32.xlu0 %v616, 32
        %v6548 = vpop.permute.xlu0 %6547
        %v6550 = vsel %vm709, %v6546, 0
        %v6553 = vsel %vm709, %v6548, 0
        %6555 = vmatprep.subr.bf16.mxu0 0
        %6556 = vmatpush1.bf16.xpose.msra.mxu0 %v6553
        %6557 = vmatprep.subr.bf16.mxu0 0
        %6558 = vmatpush1.bf16.xpose.msra.mxu0 0
        %6559 = vmatprep.subr.bf16.mxu0 0
        %6560 = vmatpush1.bf16.xpose.msra.mxu0 0
        %6561 = vmatprep.subr.bf16.mxu0 0
        %6562 = vmatpush1.bf16.xpose.msra.mxu0 0
        %6563 = vmatprep.subr.bf16.mxu0 0
        %6564 = vmatpush1.bf16.xpose.msra.mxu0 0
        %6565 = vmatprep.subr.bf16.mxu0 0
        %6566 = vmatpush1.bf16.xpose.msra.mxu0 0
        %6567 = vmatprep.subr.bf16.mxu0 0
        %6568 = vmatpush1.bf16.xpose.msra.mxu0 0
        %6569 = vmatprep.subr.bf16.mxu0 0
        %6570 = vmatpush1.bf16.xpose.msra.mxu0 0
        %6571 = vmatprep.subr.bf16.mxu0 0
        %6572 = vmatpush1.bf16.xpose.msra.mxu0 0
        %6573 = vmatprep.subr.bf16.mxu0 0
        %6574 = vmatpush1.bf16.xpose.msra.mxu0 0
        %6575 = vmatprep.subr.bf16.mxu0 0
        %6576 = vmatpush1.bf16.xpose.msra.mxu0 0
        %6577 = vmatprep.subr.bf16.mxu0 0
        %6578 = vmatpush1.bf16.xpose.msra.mxu0 0
        %6579 = vmatprep.subr.bf16.mxu0 0
        %6580 = vmatpush1.bf16.xpose.msra.mxu0 0
        %6581 = vmatprep.subr.bf16.mxu0 0
        %6582 = vmatpush1.bf16.xpose.msra.mxu0 0
        %6583 = vmatprep.subr.bf16.mxu0 0
        %6584 = vmatpush1.bf16.xpose.msra.mxu0 0
        %6585 = vmatprep.subr.bf16.mxu0 0
        %6586 = vmatpush1.bf16.xpose.msra.mxu0 0
        %6587 = vmatprep.mubr.bf16.mxu0 0
        %6588 = vmatmul.mubr.bf16.gmra.mrb[0].mxu0 %v6550
        %v6589 = vpop.f32.mrb[0].mxu0
        %v6590 = vadd.f32 %v696, %v6589
        %v6591 = vpop.f32.mrb[0].mxu0
        %v6592 = vpop.f32.mrb[0].mxu0
        %v6593 = vpop.f32.mrb[0].mxu0
        %6594 = vdwg.mxu0
        %6595 = vrot.lane.b32.xlu0 %v585, 32
        %v6596 = vpop.permute.xlu0 %6595
        %6597 = vrot.lane.b32.xlu0 %v617, 32
        %v6598 = vpop.permute.xlu0 %6597
        %v6600 = vsel %vm709, %v6596, 0
        %v6603 = vsel %vm709, %v6598, 0
        %6605 = vmatprep.subr.bf16.mxu0 0
        %6606 = vmatpush1.bf16.xpose.msra.mxu0 %v6603
        %6607 = vmatprep.subr.bf16.mxu0 0
        %6608 = vmatpush1.bf16.xpose.msra.mxu0 0
        %6609 = vmatprep.subr.bf16.mxu0 0
        %6610 = vmatpush1.bf16.xpose.msra.mxu0 0
        %6611 = vmatprep.subr.bf16.mxu0 0
        %6612 = vmatpush1.bf16.xpose.msra.mxu0 0
        %6613 = vmatprep.subr.bf16.mxu0 0
        %6614 = vmatpush1.bf16.xpose.msra.mxu0 0
        %6615 = vmatprep.subr.bf16.mxu0 0
        %6616 = vmatpush1.bf16.xpose.msra.mxu0 0
        %6617 = vmatprep.subr.bf16.mxu0 0
        %6618 = vmatpush1.bf16.xpose.msra.mxu0 0
        %6619 = vmatprep.subr.bf16.mxu0 0
        %6620 = vmatpush1.bf16.xpose.msra.mxu0 0
        %6621 = vmatprep.subr.bf16.mxu0 0
        %6622 = vmatpush1.bf16.xpose.msra.mxu0 0
        %6623 = vmatprep.subr.bf16.mxu0 0
        %6624 = vmatpush1.bf16.xpose.msra.mxu0 0
        %6625 = vmatprep.subr.bf16.mxu0 0
        %6626 = vmatpush1.bf16.xpose.msra.mxu0 0
        %6627 = vmatprep.subr.bf16.mxu0 0
        %6628 = vmatpush1.bf16.xpose.msra.mxu0 0
        %6629 = vmatprep.subr.bf16.mxu0 0
        %6630 = vmatpush1.bf16.xpose.msra.mxu0 0
        %6631 = vmatprep.subr.bf16.mxu0 0
        %6632 = vmatpush1.bf16.xpose.msra.mxu0 0
        %6633 = vmatprep.subr.bf16.mxu0 0
        %6634 = vmatpush1.bf16.xpose.msra.mxu0 0
        %6635 = vmatprep.subr.bf16.mxu0 0
        %6636 = vmatpush1.bf16.xpose.msra.mxu0 0
        %6637 = vmatprep.mubr.bf16.mxu0 0
        %6638 = vmatmul.mubr.bf16.gmra.mrb[0].mxu0 %v6600
        %v6639 = vpop.f32.mrb[0].mxu0
        %v6640 = vadd.f32 %v697, %v6639
        %v6641 = vpop.f32.mrb[0].mxu0
        %v6642 = vpop.f32.mrb[0].mxu0
        %v6643 = vpop.f32.mrb[0].mxu0
        %6644 = vdwg.mxu0
        %6645 = vrot.lane.b32.xlu0 %v586, 32
        %v6646 = vpop.permute.xlu0 %6645
        %6647 = vrot.lane.b32.xlu0 %v618, 32
        %v6648 = vpop.permute.xlu0 %6647
        %v6650 = vsel %vm709, %v6646, 0
        %v6653 = vsel %vm709, %v6648, 0
        %6655 = vmatprep.subr.bf16.mxu0 0
        %6656 = vmatpush1.bf16.xpose.msra.mxu0 %v6653
        %6657 = vmatprep.subr.bf16.mxu0 0
        %6658 = vmatpush1.bf16.xpose.msra.mxu0 0
        %6659 = vmatprep.subr.bf16.mxu0 0
        %6660 = vmatpush1.bf16.xpose.msra.mxu0 0
        %6661 = vmatprep.subr.bf16.mxu0 0
        %6662 = vmatpush1.bf16.xpose.msra.mxu0 0
        %6663 = vmatprep.subr.bf16.mxu0 0
        %6664 = vmatpush1.bf16.xpose.msra.mxu0 0
        %6665 = vmatprep.subr.bf16.mxu0 0
        %6666 = vmatpush1.bf16.xpose.msra.mxu0 0
        %6667 = vmatprep.subr.bf16.mxu0 0
        %6668 = vmatpush1.bf16.xpose.msra.mxu0 0
        %6669 = vmatprep.subr.bf16.mxu0 0
        %6670 = vmatpush1.bf16.xpose.msra.mxu0 0
        %6671 = vmatprep.subr.bf16.mxu0 0
        %6672 = vmatpush1.bf16.xpose.msra.mxu0 0
        %6673 = vmatprep.subr.bf16.mxu0 0
        %6674 = vmatpush1.bf16.xpose.msra.mxu0 0
        %6675 = vmatprep.subr.bf16.mxu0 0
        %6676 = vmatpush1.bf16.xpose.msra.mxu0 0
        %6677 = vmatprep.subr.bf16.mxu0 0
        %6678 = vmatpush1.bf16.xpose.msra.mxu0 0
        %6679 = vmatprep.subr.bf16.mxu0 0
        %6680 = vmatpush1.bf16.xpose.msra.mxu0 0
        %6681 = vmatprep.subr.bf16.mxu0 0
        %6682 = vmatpush1.bf16.xpose.msra.mxu0 0
        %6683 = vmatprep.subr.bf16.mxu0 0
        %6684 = vmatpush1.bf16.xpose.msra.mxu0 0
        %6685 = vmatprep.subr.bf16.mxu0 0
        %6686 = vmatpush1.bf16.xpose.msra.mxu0 0
        %6687 = vmatprep.mubr.bf16.mxu0 0
        %6688 = vmatmul.mubr.bf16.gmra.mrb[0].mxu0 %v6650
        %v6689 = vpop.f32.mrb[0].mxu0
        %v6690 = vadd.f32 %v698, %v6689
        %v6691 = vpop.f32.mrb[0].mxu0
        %v6692 = vpop.f32.mrb[0].mxu0
        %v6693 = vpop.f32.mrb[0].mxu0
        %6694 = vdwg.mxu0
        %6695 = vrot.lane.b32.xlu0 %v587, 32
        %v6696 = vpop.permute.xlu0 %6695
        %6697 = vrot.lane.b32.xlu0 %v619, 32
        %v6698 = vpop.permute.xlu0 %6697
        %v6700 = vsel %vm709, %v6696, 0
        %v6703 = vsel %vm709, %v6698, 0
        %6705 = vmatprep.subr.bf16.mxu0 0
        %6706 = vmatpush1.bf16.xpose.msra.mxu0 %v6703
        %6707 = vmatprep.subr.bf16.mxu0 0
        %6708 = vmatpush1.bf16.xpose.msra.mxu0 0
        %6709 = vmatprep.subr.bf16.mxu0 0
        %6710 = vmatpush1.bf16.xpose.msra.mxu0 0
        %6711 = vmatprep.subr.bf16.mxu0 0
        %6712 = vmatpush1.bf16.xpose.msra.mxu0 0
        %6713 = vmatprep.subr.bf16.mxu0 0
        %6714 = vmatpush1.bf16.xpose.msra.mxu0 0
        %6715 = vmatprep.subr.bf16.mxu0 0
        %6716 = vmatpush1.bf16.xpose.msra.mxu0 0
        %6717 = vmatprep.subr.bf16.mxu0 0
        %6718 = vmatpush1.bf16.xpose.msra.mxu0 0
        %6719 = vmatprep.subr.bf16.mxu0 0
        %6720 = vmatpush1.bf16.xpose.msra.mxu0 0
        %6721 = vmatprep.subr.bf16.mxu0 0
        %6722 = vmatpush1.bf16.xpose.msra.mxu0 0
        %6723 = vmatprep.subr.bf16.mxu0 0
        %6724 = vmatpush1.bf16.xpose.msra.mxu0 0
        %6725 = vmatprep.subr.bf16.mxu0 0
        %6726 = vmatpush1.bf16.xpose.msra.mxu0 0
        %6727 = vmatprep.subr.bf16.mxu0 0
        %6728 = vmatpush1.bf16.xpose.msra.mxu0 0
        %6729 = vmatprep.subr.bf16.mxu0 0
        %6730 = vmatpush1.bf16.xpose.msra.mxu0 0
        %6731 = vmatprep.subr.bf16.mxu0 0
        %6732 = vmatpush1.bf16.xpose.msra.mxu0 0
        %6733 = vmatprep.subr.bf16.mxu0 0
        %6734 = vmatpush1.bf16.xpose.msra.mxu0 0
        %6735 = vmatprep.subr.bf16.mxu0 0
        %6736 = vmatpush1.bf16.xpose.msra.mxu0 0
        %6737 = vmatprep.mubr.bf16.mxu0 0
        %6738 = vmatmul.mubr.bf16.gmra.mrb[0].mxu0 %v6700
        %v6739 = vpop.f32.mrb[0].mxu0
        %v6740 = vadd.f32 %v699, %v6739
        %v6741 = vpop.f32.mrb[0].mxu0
        %v6742 = vpop.f32.mrb[0].mxu0
        %v6743 = vpop.f32.mrb[0].mxu0
        %6744 = vdwg.mxu0
        %6745 = vrot.lane.b32.xlu0 %v588, 32
        %v6746 = vpop.permute.xlu0 %6745
        %6747 = vrot.lane.b32.xlu0 %v620, 32
        %v6748 = vpop.permute.xlu0 %6747
        %v6750 = vsel %vm709, %v6746, 0
        %v6753 = vsel %vm709, %v6748, 0
        %6755 = vmatprep.subr.bf16.mxu0 0
        %6756 = vmatpush1.bf16.xpose.msra.mxu0 %v6753
        %6757 = vmatprep.subr.bf16.mxu0 0
        %6758 = vmatpush1.bf16.xpose.msra.mxu0 0
        %6759 = vmatprep.subr.bf16.mxu0 0
        %6760 = vmatpush1.bf16.xpose.msra.mxu0 0
        %6761 = vmatprep.subr.bf16.mxu0 0
        %6762 = vmatpush1.bf16.xpose.msra.mxu0 0
        %6763 = vmatprep.subr.bf16.mxu0 0
        %6764 = vmatpush1.bf16.xpose.msra.mxu0 0
        %6765 = vmatprep.subr.bf16.mxu0 0
        %6766 = vmatpush1.bf16.xpose.msra.mxu0 0
        %6767 = vmatprep.subr.bf16.mxu0 0
        %6768 = vmatpush1.bf16.xpose.msra.mxu0 0
        %6769 = vmatprep.subr.bf16.mxu0 0
        %6770 = vmatpush1.bf16.xpose.msra.mxu0 0
        %6771 = vmatprep.subr.bf16.mxu0 0
        %6772 = vmatpush1.bf16.xpose.msra.mxu0 0
        %6773 = vmatprep.subr.bf16.mxu0 0
        %6774 = vmatpush1.bf16.xpose.msra.mxu0 0
        %6775 = vmatprep.subr.bf16.mxu0 0
        %6776 = vmatpush1.bf16.xpose.msra.mxu0 0
        %6777 = vmatprep.subr.bf16.mxu0 0
        %6778 = vmatpush1.bf16.xpose.msra.mxu0 0
        %6779 = vmatprep.subr.bf16.mxu0 0
        %6780 = vmatpush1.bf16.xpose.msra.mxu0 0
        %6781 = vmatprep.subr.bf16.mxu0 0
        %6782 = vmatpush1.bf16.xpose.msra.mxu0 0
        %6783 = vmatprep.subr.bf16.mxu0 0
        %6784 = vmatpush1.bf16.xpose.msra.mxu0 0
        %6785 = vmatprep.subr.bf16.mxu0 0
        %6786 = vmatpush1.bf16.xpose.msra.mxu0 0
        %6787 = vmatprep.mubr.bf16.mxu0 0
        %6788 = vmatmul.mubr.bf16.gmra.mrb[0].mxu0 %v6750
        %v6789 = vpop.f32.mrb[0].mxu0
        %v6790 = vadd.f32 %v700, %v6789
        %v6791 = vpop.f32.mrb[0].mxu0
        %v6792 = vpop.f32.mrb[0].mxu0
        %v6793 = vpop.f32.mrb[0].mxu0
        %6794 = vdwg.mxu0
        %6795 = vrot.lane.b32.xlu0 %v589, 32
        %v6796 = vpop.permute.xlu0 %6795
        %6797 = vrot.lane.b32.xlu0 %v621, 32
        %v6798 = vpop.permute.xlu0 %6797
        %v6800 = vsel %vm709, %v6796, 0
        %v6803 = vsel %vm709, %v6798, 0
        %6805 = vmatprep.subr.bf16.mxu0 0
        %6806 = vmatpush1.bf16.xpose.msra.mxu0 %v6803
        %6807 = vmatprep.subr.bf16.mxu0 0
        %6808 = vmatpush1.bf16.xpose.msra.mxu0 0
        %6809 = vmatprep.subr.bf16.mxu0 0
        %6810 = vmatpush1.bf16.xpose.msra.mxu0 0
        %6811 = vmatprep.subr.bf16.mxu0 0
        %6812 = vmatpush1.bf16.xpose.msra.mxu0 0
        %6813 = vmatprep.subr.bf16.mxu0 0
        %6814 = vmatpush1.bf16.xpose.msra.mxu0 0
        %6815 = vmatprep.subr.bf16.mxu0 0
        %6816 = vmatpush1.bf16.xpose.msra.mxu0 0
        %6817 = vmatprep.subr.bf16.mxu0 0
        %6818 = vmatpush1.bf16.xpose.msra.mxu0 0
        %6819 = vmatprep.subr.bf16.mxu0 0
        %6820 = vmatpush1.bf16.xpose.msra.mxu0 0
        %6821 = vmatprep.subr.bf16.mxu0 0
        %6822 = vmatpush1.bf16.xpose.msra.mxu0 0
        %6823 = vmatprep.subr.bf16.mxu0 0
        %6824 = vmatpush1.bf16.xpose.msra.mxu0 0
        %6825 = vmatprep.subr.bf16.mxu0 0
        %6826 = vmatpush1.bf16.xpose.msra.mxu0 0
        %6827 = vmatprep.subr.bf16.mxu0 0
        %6828 = vmatpush1.bf16.xpose.msra.mxu0 0
        %6829 = vmatprep.subr.bf16.mxu0 0
        %6830 = vmatpush1.bf16.xpose.msra.mxu0 0
        %6831 = vmatprep.subr.bf16.mxu0 0
        %6832 = vmatpush1.bf16.xpose.msra.mxu0 0
        %6833 = vmatprep.subr.bf16.mxu0 0
        %6834 = vmatpush1.bf16.xpose.msra.mxu0 0
        %6835 = vmatprep.subr.bf16.mxu0 0
        %6836 = vmatpush1.bf16.xpose.msra.mxu0 0
        %6837 = vmatprep.mubr.bf16.mxu0 0
        %6838 = vmatmul.mubr.bf16.gmra.mrb[0].mxu0 %v6800
        %v6839 = vpop.f32.mrb[0].mxu0
        %v6840 = vadd.f32 %v701, %v6839
        %v6841 = vpop.f32.mrb[0].mxu0
        %v6842 = vpop.f32.mrb[0].mxu0
        %v6843 = vpop.f32.mrb[0].mxu0
        %6844 = vdwg.mxu0
        %6845 = vrot.lane.b32.xlu0 %v590, 32
        %v6846 = vpop.permute.xlu0 %6845
        %6847 = vrot.lane.b32.xlu0 %v622, 32
        %v6848 = vpop.permute.xlu0 %6847
        %v6850 = vsel %vm709, %v6846, 0
        %v6853 = vsel %vm709, %v6848, 0
        %6855 = vmatprep.subr.bf16.mxu0 0
        %6856 = vmatpush1.bf16.xpose.msra.mxu0 %v6853
        %6857 = vmatprep.subr.bf16.mxu0 0
        %6858 = vmatpush1.bf16.xpose.msra.mxu0 0
        %6859 = vmatprep.subr.bf16.mxu0 0
        %6860 = vmatpush1.bf16.xpose.msra.mxu0 0
        %6861 = vmatprep.subr.bf16.mxu0 0
        %6862 = vmatpush1.bf16.xpose.msra.mxu0 0
        %6863 = vmatprep.subr.bf16.mxu0 0
        %6864 = vmatpush1.bf16.xpose.msra.mxu0 0
        %6865 = vmatprep.subr.bf16.mxu0 0
        %6866 = vmatpush1.bf16.xpose.msra.mxu0 0
        %6867 = vmatprep.subr.bf16.mxu0 0
        %6868 = vmatpush1.bf16.xpose.msra.mxu0 0
        %6869 = vmatprep.subr.bf16.mxu0 0
        %6870 = vmatpush1.bf16.xpose.msra.mxu0 0
        %6871 = vmatprep.subr.bf16.mxu0 0
        %6872 = vmatpush1.bf16.xpose.msra.mxu0 0
        %6873 = vmatprep.subr.bf16.mxu0 0
        %6874 = vmatpush1.bf16.xpose.msra.mxu0 0
        %6875 = vmatprep.subr.bf16.mxu0 0
        %6876 = vmatpush1.bf16.xpose.msra.mxu0 0
        %6877 = vmatprep.subr.bf16.mxu0 0
        %6878 = vmatpush1.bf16.xpose.msra.mxu0 0
        %6879 = vmatprep.subr.bf16.mxu0 0
        %6880 = vmatpush1.bf16.xpose.msra.mxu0 0
        %6881 = vmatprep.subr.bf16.mxu0 0
        %6882 = vmatpush1.bf16.xpose.msra.mxu0 0
        %6883 = vmatprep.subr.bf16.mxu0 0
        %6884 = vmatpush1.bf16.xpose.msra.mxu0 0
        %6885 = vmatprep.subr.bf16.mxu0 0
        %6886 = vmatpush1.bf16.xpose.msra.mxu0 0
        %6887 = vmatprep.mubr.bf16.mxu0 0
        %6888 = vmatmul.mubr.bf16.gmra.mrb[0].mxu0 %v6850
        %v6889 = vpop.f32.mrb[0].mxu0
        %v6890 = vadd.f32 %v702, %v6889
        %v6891 = vpop.f32.mrb[0].mxu0
        %v6892 = vpop.f32.mrb[0].mxu0
        %v6893 = vpop.f32.mrb[0].mxu0
        %6894 = vdwg.mxu0
        %6895 = vrot.lane.b32.xlu0 %v591, 32
        %v6896 = vpop.permute.xlu0 %6895
        %6897 = vrot.lane.b32.xlu0 %v623, 32
        %v6898 = vpop.permute.xlu0 %6897
        %v6900 = vsel %vm709, %v6896, 0
        %v6903 = vsel %vm709, %v6898, 0
        %6905 = vmatprep.subr.bf16.mxu0 0
        %6906 = vmatpush1.bf16.xpose.msra.mxu0 %v6903
        %6907 = vmatprep.subr.bf16.mxu0 0
        %6908 = vmatpush1.bf16.xpose.msra.mxu0 0
        %6909 = vmatprep.subr.bf16.mxu0 0
        %6910 = vmatpush1.bf16.xpose.msra.mxu0 0
        %6911 = vmatprep.subr.bf16.mxu0 0
        %6912 = vmatpush1.bf16.xpose.msra.mxu0 0
        %6913 = vmatprep.subr.bf16.mxu0 0
        %6914 = vmatpush1.bf16.xpose.msra.mxu0 0
        %6915 = vmatprep.subr.bf16.mxu0 0
        %6916 = vmatpush1.bf16.xpose.msra.mxu0 0
        %6917 = vmatprep.subr.bf16.mxu0 0
        %6918 = vmatpush1.bf16.xpose.msra.mxu0 0
        %6919 = vmatprep.subr.bf16.mxu0 0
        %6920 = vmatpush1.bf16.xpose.msra.mxu0 0
        %6921 = vmatprep.subr.bf16.mxu0 0
        %6922 = vmatpush1.bf16.xpose.msra.mxu0 0
        %6923 = vmatprep.subr.bf16.mxu0 0
        %6924 = vmatpush1.bf16.xpose.msra.mxu0 0
        %6925 = vmatprep.subr.bf16.mxu0 0
        %6926 = vmatpush1.bf16.xpose.msra.mxu0 0
        %6927 = vmatprep.subr.bf16.mxu0 0
        %6928 = vmatpush1.bf16.xpose.msra.mxu0 0
        %6929 = vmatprep.subr.bf16.mxu0 0
        %6930 = vmatpush1.bf16.xpose.msra.mxu0 0
        %6931 = vmatprep.subr.bf16.mxu0 0
        %6932 = vmatpush1.bf16.xpose.msra.mxu0 0
        %6933 = vmatprep.subr.bf16.mxu0 0
        %6934 = vmatpush1.bf16.xpose.msra.mxu0 0
        %6935 = vmatprep.subr.bf16.mxu0 0
        %6936 = vmatpush1.bf16.xpose.msra.mxu0 0
        %6937 = vmatprep.mubr.bf16.mxu0 0
        %6938 = vmatmul.mubr.bf16.gmra.mrb[0].mxu0 %v6900
        %v6939 = vpop.f32.mrb[0].mxu0
        %v6940 = vadd.f32 %v703, %v6939
        %v6941 = vpop.f32.mrb[0].mxu0
        %v6942 = vpop.f32.mrb[0].mxu0
        %v6943 = vpop.f32.mrb[0].mxu0
        %6944 = vdwg.mxu0
        %6945 = vrot.lane.b32.xlu0 %v592, 32
        %v6946 = vpop.permute.xlu0 %6945
        %6947 = vrot.lane.b32.xlu0 %v624, 32
        %v6948 = vpop.permute.xlu0 %6947
        %v6950 = vsel %vm709, %v6946, 0
        %v6953 = vsel %vm709, %v6948, 0
        %6955 = vmatprep.subr.bf16.mxu0 0
        %6956 = vmatpush1.bf16.xpose.msra.mxu0 %v6953
        %6957 = vmatprep.subr.bf16.mxu0 0
        %6958 = vmatpush1.bf16.xpose.msra.mxu0 0
        %6959 = vmatprep.subr.bf16.mxu0 0
        %6960 = vmatpush1.bf16.xpose.msra.mxu0 0
        %6961 = vmatprep.subr.bf16.mxu0 0
        %6962 = vmatpush1.bf16.xpose.msra.mxu0 0
        %6963 = vmatprep.subr.bf16.mxu0 0
        %6964 = vmatpush1.bf16.xpose.msra.mxu0 0
        %6965 = vmatprep.subr.bf16.mxu0 0
        %6966 = vmatpush1.bf16.xpose.msra.mxu0 0
        %6967 = vmatprep.subr.bf16.mxu0 0
        %6968 = vmatpush1.bf16.xpose.msra.mxu0 0
        %6969 = vmatprep.subr.bf16.mxu0 0
        %6970 = vmatpush1.bf16.xpose.msra.mxu0 0
        %6971 = vmatprep.subr.bf16.mxu0 0
        %6972 = vmatpush1.bf16.xpose.msra.mxu0 0
        %6973 = vmatprep.subr.bf16.mxu0 0
        %6974 = vmatpush1.bf16.xpose.msra.mxu0 0
        %6975 = vmatprep.subr.bf16.mxu0 0
        %6976 = vmatpush1.bf16.xpose.msra.mxu0 0
        %6977 = vmatprep.subr.bf16.mxu0 0
        %6978 = vmatpush1.bf16.xpose.msra.mxu0 0
        %6979 = vmatprep.subr.bf16.mxu0 0
        %6980 = vmatpush1.bf16.xpose.msra.mxu0 0
        %6981 = vmatprep.subr.bf16.mxu0 0
        %6982 = vmatpush1.bf16.xpose.msra.mxu0 0
        %6983 = vmatprep.subr.bf16.mxu0 0
        %6984 = vmatpush1.bf16.xpose.msra.mxu0 0
        %6985 = vmatprep.subr.bf16.mxu0 0
        %6986 = vmatpush1.bf16.xpose.msra.mxu0 0
        %6987 = vmatprep.mubr.bf16.mxu0 0
        %6988 = vmatmul.mubr.bf16.gmra.mrb[0].mxu0 %v6950
        %v6989 = vpop.f32.mrb[0].mxu0
        %v6990 = vadd.f32 %v704, %v6989
        %v6991 = vpop.f32.mrb[0].mxu0
        %v6992 = vpop.f32.mrb[0].mxu0
        %v6993 = vpop.f32.mrb[0].mxu0
        %6994 = vdwg.mxu0
        %6995 = vrot.lane.b32.xlu0 %v593, 32
        %v6996 = vpop.permute.xlu0 %6995
        %6997 = vrot.lane.b32.xlu0 %v625, 32
        %v6998 = vpop.permute.xlu0 %6997
        %v7000 = vsel %vm709, %v6996, 0
        %v7003 = vsel %vm709, %v6998, 0
        %7005 = vmatprep.subr.bf16.mxu0 0
        %7006 = vmatpush1.bf16.xpose.msra.mxu0 %v7003
        %7007 = vmatprep.subr.bf16.mxu0 0
        %7008 = vmatpush1.bf16.xpose.msra.mxu0 0
        %7009 = vmatprep.subr.bf16.mxu0 0
        %7010 = vmatpush1.bf16.xpose.msra.mxu0 0
        %7011 = vmatprep.subr.bf16.mxu0 0
        %7012 = vmatpush1.bf16.xpose.msra.mxu0 0
        %7013 = vmatprep.subr.bf16.mxu0 0
        %7014 = vmatpush1.bf16.xpose.msra.mxu0 0
        %7015 = vmatprep.subr.bf16.mxu0 0
        %7016 = vmatpush1.bf16.xpose.msra.mxu0 0
        %7017 = vmatprep.subr.bf16.mxu0 0
        %7018 = vmatpush1.bf16.xpose.msra.mxu0 0
        %7019 = vmatprep.subr.bf16.mxu0 0
        %7020 = vmatpush1.bf16.xpose.msra.mxu0 0
        %7021 = vmatprep.subr.bf16.mxu0 0
        %7022 = vmatpush1.bf16.xpose.msra.mxu0 0
        %7023 = vmatprep.subr.bf16.mxu0 0
        %7024 = vmatpush1.bf16.xpose.msra.mxu0 0
        %7025 = vmatprep.subr.bf16.mxu0 0
        %7026 = vmatpush1.bf16.xpose.msra.mxu0 0
        %7027 = vmatprep.subr.bf16.mxu0 0
        %7028 = vmatpush1.bf16.xpose.msra.mxu0 0
        %7029 = vmatprep.subr.bf16.mxu0 0
        %7030 = vmatpush1.bf16.xpose.msra.mxu0 0
        %7031 = vmatprep.subr.bf16.mxu0 0
        %7032 = vmatpush1.bf16.xpose.msra.mxu0 0
        %7033 = vmatprep.subr.bf16.mxu0 0
        %7034 = vmatpush1.bf16.xpose.msra.mxu0 0
        %7035 = vmatprep.subr.bf16.mxu0 0
        %7036 = vmatpush1.bf16.xpose.msra.mxu0 0
        %7037 = vmatprep.mubr.bf16.mxu0 0
        %7038 = vmatmul.mubr.bf16.gmra.mrb[0].mxu0 %v7000
        %v7039 = vpop.f32.mrb[0].mxu0
        %v7040 = vadd.f32 %v705, %v7039
        %v7041 = vpop.f32.mrb[0].mxu0
        %v7042 = vpop.f32.mrb[0].mxu0
        %v7043 = vpop.f32.mrb[0].mxu0
        %7044 = vdwg.mxu0
        %7045 = vrot.lane.b32.xlu0 %v594, 32
        %v7046 = vpop.permute.xlu0 %7045
        %7047 = vrot.lane.b32.xlu0 %v626, 32
        %v7048 = vpop.permute.xlu0 %7047
        %v7050 = vsel %vm709, %v7046, 0
        %v7053 = vsel %vm709, %v7048, 0
        %7055 = vmatprep.subr.bf16.mxu0 0
        %7056 = vmatpush1.bf16.xpose.msra.mxu0 %v7053
        %7057 = vmatprep.subr.bf16.mxu0 0
        %7058 = vmatpush1.bf16.xpose.msra.mxu0 0
        %7059 = vmatprep.subr.bf16.mxu0 0
        %7060 = vmatpush1.bf16.xpose.msra.mxu0 0
        %7061 = vmatprep.subr.bf16.mxu0 0
        %7062 = vmatpush1.bf16.xpose.msra.mxu0 0
        %7063 = vmatprep.subr.bf16.mxu0 0
        %7064 = vmatpush1.bf16.xpose.msra.mxu0 0
        %7065 = vmatprep.subr.bf16.mxu0 0
        %7066 = vmatpush1.bf16.xpose.msra.mxu0 0
        %7067 = vmatprep.subr.bf16.mxu0 0
        %7068 = vmatpush1.bf16.xpose.msra.mxu0 0
        %7069 = vmatprep.subr.bf16.mxu0 0
        %7070 = vmatpush1.bf16.xpose.msra.mxu0 0
        %7071 = vmatprep.subr.bf16.mxu0 0
        %7072 = vmatpush1.bf16.xpose.msra.mxu0 0
        %7073 = vmatprep.subr.bf16.mxu0 0
        %7074 = vmatpush1.bf16.xpose.msra.mxu0 0
        %7075 = vmatprep.subr.bf16.mxu0 0
        %7076 = vmatpush1.bf16.xpose.msra.mxu0 0
        %7077 = vmatprep.subr.bf16.mxu0 0
        %7078 = vmatpush1.bf16.xpose.msra.mxu0 0
        %7079 = vmatprep.subr.bf16.mxu0 0
        %7080 = vmatpush1.bf16.xpose.msra.mxu0 0
        %7081 = vmatprep.subr.bf16.mxu0 0
        %7082 = vmatpush1.bf16.xpose.msra.mxu0 0
        %7083 = vmatprep.subr.bf16.mxu0 0
        %7084 = vmatpush1.bf16.xpose.msra.mxu0 0
        %7085 = vmatprep.subr.bf16.mxu0 0
        %7086 = vmatpush1.bf16.xpose.msra.mxu0 0
        %7087 = vmatprep.mubr.bf16.mxu0 0
        %7088 = vmatmul.mubr.bf16.gmra.mrb[0].mxu0 %v7050
        %v7089 = vpop.f32.mrb[0].mxu0
        %v7090 = vadd.f32 %v706, %v7089
        %v7091 = vpop.f32.mrb[0].mxu0
        %v7092 = vpop.f32.mrb[0].mxu0
        %v7093 = vpop.f32.mrb[0].mxu0
        %7094 = vdwg.mxu0
        %7095 = vrot.lane.b32.xlu0 %v595, 32
        %v7096 = vpop.permute.xlu0 %7095
        %7097 = vrot.lane.b32.xlu0 %v627, 32
        %v7098 = vpop.permute.xlu0 %7097
        %v7100 = vsel %vm709, %v7096, 0
        %v7103 = vsel %vm709, %v7098, 0
        %7105 = vmatprep.subr.bf16.mxu0 0
        %7106 = vmatpush1.bf16.xpose.msra.mxu0 %v7103
        %7107 = vmatprep.subr.bf16.mxu0 0
        %7108 = vmatpush1.bf16.xpose.msra.mxu0 0
        %7109 = vmatprep.subr.bf16.mxu0 0
        %7110 = vmatpush1.bf16.xpose.msra.mxu0 0
        %7111 = vmatprep.subr.bf16.mxu0 0
        %7112 = vmatpush1.bf16.xpose.msra.mxu0 0
        %7113 = vmatprep.subr.bf16.mxu0 0
        %7114 = vmatpush1.bf16.xpose.msra.mxu0 0
        %7115 = vmatprep.subr.bf16.mxu0 0
        %7116 = vmatpush1.bf16.xpose.msra.mxu0 0
        %7117 = vmatprep.subr.bf16.mxu0 0
        %7118 = vmatpush1.bf16.xpose.msra.mxu0 0
        %7119 = vmatprep.subr.bf16.mxu0 0
        %7120 = vmatpush1.bf16.xpose.msra.mxu0 0
        %7121 = vmatprep.subr.bf16.mxu0 0
        %7122 = vmatpush1.bf16.xpose.msra.mxu0 0
        %7123 = vmatprep.subr.bf16.mxu0 0
        %7124 = vmatpush1.bf16.xpose.msra.mxu0 0
        %7125 = vmatprep.subr.bf16.mxu0 0
        %7126 = vmatpush1.bf16.xpose.msra.mxu0 0
        %7127 = vmatprep.subr.bf16.mxu0 0
        %7128 = vmatpush1.bf16.xpose.msra.mxu0 0
        %7129 = vmatprep.subr.bf16.mxu0 0
        %7130 = vmatpush1.bf16.xpose.msra.mxu0 0
        %7131 = vmatprep.subr.bf16.mxu0 0
        %7132 = vmatpush1.bf16.xpose.msra.mxu0 0
        %7133 = vmatprep.subr.bf16.mxu0 0
        %7134 = vmatpush1.bf16.xpose.msra.mxu0 0
        %7135 = vmatprep.subr.bf16.mxu0 0
        %7136 = vmatpush1.bf16.xpose.msra.mxu0 0
        %7137 = vmatprep.mubr.bf16.mxu0 0
        %7138 = vmatmul.mubr.bf16.gmra.mrb[0].mxu0 %v7100
        %v7139 = vpop.f32.mrb[0].mxu0
        %v7140 = vadd.f32 %v707, %v7139
        %v7141 = vpop.f32.mrb[0].mxu0
        %v7142 = vpop.f32.mrb[0].mxu0
        %v7143 = vpop.f32.mrb[0].mxu0
        %7144 = vdwg.mxu0
        %7145 = vrot.lane.b32.xlu0 %v596, 32
        %v7146 = vpop.permute.xlu0 %7145
        %7147 = vrot.lane.b32.xlu0 %v628, 32
        %v7148 = vpop.permute.xlu0 %7147
        %v7150 = vsel %vm709, %v7146, 0
        %v7153 = vsel %vm709, %v7148, 0
        %7155 = vmatprep.subr.bf16.mxu0 0
        %7156 = vmatpush1.bf16.xpose.msra.mxu0 %v7153
        %7157 = vmatprep.subr.bf16.mxu0 0
        %7158 = vmatpush1.bf16.xpose.msra.mxu0 0
        %7159 = vmatprep.subr.bf16.mxu0 0
        %7160 = vmatpush1.bf16.xpose.msra.mxu0 0
        %7161 = vmatprep.subr.bf16.mxu0 0
        %7162 = vmatpush1.bf16.xpose.msra.mxu0 0
        %7163 = vmatprep.subr.bf16.mxu0 0
        %7164 = vmatpush1.bf16.xpose.msra.mxu0 0
        %7165 = vmatprep.subr.bf16.mxu0 0
        %7166 = vmatpush1.bf16.xpose.msra.mxu0 0
        %7167 = vmatprep.subr.bf16.mxu0 0
        %7168 = vmatpush1.bf16.xpose.msra.mxu0 0
        %7169 = vmatprep.subr.bf16.mxu0 0
        %7170 = vmatpush1.bf16.xpose.msra.mxu0 0
        %7171 = vmatprep.subr.bf16.mxu0 0
        %7172 = vmatpush1.bf16.xpose.msra.mxu0 0
        %7173 = vmatprep.subr.bf16.mxu0 0
        %7174 = vmatpush1.bf16.xpose.msra.mxu0 0
        %7175 = vmatprep.subr.bf16.mxu0 0
        %7176 = vmatpush1.bf16.xpose.msra.mxu0 0
        %7177 = vmatprep.subr.bf16.mxu0 0
        %7178 = vmatpush1.bf16.xpose.msra.mxu0 0
        %7179 = vmatprep.subr.bf16.mxu0 0
        %7180 = vmatpush1.bf16.xpose.msra.mxu0 0
        %7181 = vmatprep.subr.bf16.mxu0 0
        %7182 = vmatpush1.bf16.xpose.msra.mxu0 0
        %7183 = vmatprep.subr.bf16.mxu0 0
        %7184 = vmatpush1.bf16.xpose.msra.mxu0 0
        %7185 = vmatprep.subr.bf16.mxu0 0
        %7186 = vmatpush1.bf16.xpose.msra.mxu0 0
        %7187 = vmatprep.mubr.bf16.mxu0 0
        %7188 = vmatmul.mubr.bf16.gmra.mrb[0].mxu0 %v7150
        %v7189 = vpop.f32.mrb[0].mxu0
        %v7190 = vadd.f32 %v708, %v7189
        %v7191 = vpop.f32.mrb[0].mxu0
        %v7192 = vpop.f32.mrb[0].mxu0
        %v7193 = vpop.f32.mrb[0].mxu0
        %7194 = vdwg.mxu0
        %v7195 = vsel %vm1446, %v6440, -inf
        %7196 = vmax.xlane.f32.xlu0 %v7195
        %v7197 = vpop.xlane.xlu0 %7196
        %v7198 = vsel %vm1446, %v6490, -inf
        %7199 = vmax.xlane.f32.xlu0 %v7198
        %v7200 = vpop.xlane.xlu0 %7199
        %v7201 = vsel %vm1446, %v6540, -inf
        %7202 = vmax.xlane.f32.xlu0 %v7201
        %v7203 = vpop.xlane.xlu0 %7202
        %v7204 = vsel %vm1446, %v6590, -inf
        %7205 = vmax.xlane.f32.xlu0 %v7204
        %v7206 = vpop.xlane.xlu0 %7205
        %v7207 = vsel %vm1446, %v6640, -inf
        %7208 = vmax.xlane.f32.xlu0 %v7207
        %v7209 = vpop.xlane.xlu0 %7208
        %v7210 = vsel %vm1446, %v6690, -inf
        %7211 = vmax.xlane.f32.xlu0 %v7210
        %v7212 = vpop.xlane.xlu0 %7211
        %v7213 = vsel %vm1446, %v6740, -inf
        %7214 = vmax.xlane.f32.xlu0 %v7213
        %v7215 = vpop.xlane.xlu0 %7214
        %v7216 = vsel %vm1446, %v6790, -inf
        %7217 = vmax.xlane.f32.xlu0 %v7216
        %v7218 = vpop.xlane.xlu0 %7217
        %v7219 = vsel %vm1446, %v6840, -inf
        %7220 = vmax.xlane.f32.xlu0 %v7219
        %v7221 = vpop.xlane.xlu0 %7220
        %v7222 = vsel %vm1446, %v6890, -inf
        %7223 = vmax.xlane.f32.xlu0 %v7222
        %v7224 = vpop.xlane.xlu0 %7223
        %v7225 = vsel %vm1446, %v6940, -inf
        %7226 = vmax.xlane.f32.xlu0 %v7225
        %v7227 = vpop.xlane.xlu0 %7226
        %v7228 = vsel %vm1446, %v6990, -inf
        %7229 = vmax.xlane.f32.xlu0 %v7228
        %v7230 = vpop.xlane.xlu0 %7229
        %v7231 = vsel %vm1446, %v7040, -inf
        %7232 = vmax.xlane.f32.xlu0 %v7231
        %v7233 = vpop.xlane.xlu0 %7232
        %v7234 = vsel %vm1446, %v7090, -inf
        %7235 = vmax.xlane.f32.xlu0 %v7234
        %v7236 = vpop.xlane.xlu0 %7235
        %v7237 = vsel %vm1446, %v7140, -inf
        %7238 = vmax.xlane.f32.xlu0 %v7237
        %v7239 = vpop.xlane.xlu0 %7238
        %v7240 = vsel %vm1446, %v7190, -inf
        %7241 = vmax.xlane.f32.xlu0 %v7240
        %v7242 = vpop.xlane.xlu0 %7241
        %v7243 = vsub.f32 %v6440, %v7197
        %v7244 = vsub.f32 %v6490, %v7200
        %v7245 = vsub.f32 %v6540, %v7203
        %v7246 = vsub.f32 %v6590, %v7206
        %v7247 = vsub.f32 %v6640, %v7209
        %v7248 = vsub.f32 %v6690, %v7212
        %v7249 = vsub.f32 %v6740, %v7215
        %v7250 = vsub.f32 %v6790, %v7218
        %v7251 = vsub.f32 %v6840, %v7221
        %v7252 = vsub.f32 %v6890, %v7224
        %v7253 = vsub.f32 %v6940, %v7227
        %v7254 = vsub.f32 %v6990, %v7230
        %v7255 = vsub.f32 %v7040, %v7233
        %v7256 = vsub.f32 %v7090, %v7236
        %v7257 = vsub.f32 %v7140, %v7239
        %v7258 = vsub.f32 %v7190, %v7242
        %v7259 = vmul.f32 %v7243, 1.442695
        %v7260 = vpow.pop %v7259
        %v7261 = vmul.f32 %v7244, 1.442695
        %v7262 = vpow.pop %v7261
        %v7263 = vmul.f32 %v7245, 1.442695
        %v7264 = vpow.pop %v7263
        %v7265 = vmul.f32 %v7246, 1.442695
        %v7266 = vpow.pop %v7265
        %v7267 = vmul.f32 %v7247, 1.442695
        %v7268 = vpow.pop %v7267
        %v7269 = vmul.f32 %v7248, 1.442695
        %v7270 = vpow.pop %v7269
        %v7271 = vmul.f32 %v7249, 1.442695
        %v7272 = vpow.pop %v7271
        %v7273 = vmul.f32 %v7250, 1.442695
        %v7274 = vpow.pop %v7273
        %v7275 = vmul.f32 %v7251, 1.442695
        %v7276 = vpow.pop %v7275
        %v7277 = vmul.f32 %v7252, 1.442695
        %v7278 = vpow.pop %v7277
        %v7279 = vmul.f32 %v7253, 1.442695
        %v7280 = vpow.pop %v7279
        %v7281 = vmul.f32 %v7254, 1.442695
        %v7282 = vpow.pop %v7281
        %v7283 = vmul.f32 %v7255, 1.442695
        %v7284 = vpow.pop %v7283
        %v7285 = vmul.f32 %v7256, 1.442695
        %v7286 = vpow.pop %v7285
        %v7287 = vmul.f32 %v7257, 1.442695
        %v7288 = vpow.pop %v7287
        %v7289 = vmul.f32 %v7258, 1.442695
        %v7290 = vpow.pop %v7289
        %v7291 = vsel %vm1446, %v7260, 0.0
        %7292 = vadd.xlane.f32.xlu0 %v7291
        %v7293 = vpop.xlane.xlu0 %7292
        %v7294 = vsel %vm1446, %v7262, 0.0
        %7295 = vadd.xlane.f32.xlu0 %v7294
        %v7296 = vpop.xlane.xlu0 %7295
        %v7297 = vsel %vm1446, %v7264, 0.0
        %7298 = vadd.xlane.f32.xlu0 %v7297
        %v7299 = vpop.xlane.xlu0 %7298
        %v7300 = vsel %vm1446, %v7266, 0.0
        %7301 = vadd.xlane.f32.xlu0 %v7300
        %v7302 = vpop.xlane.xlu0 %7301
        %v7303 = vsel %vm1446, %v7268, 0.0
        %7304 = vadd.xlane.f32.xlu0 %v7303
        %v7305 = vpop.xlane.xlu0 %7304
        %v7306 = vsel %vm1446, %v7270, 0.0
        %7307 = vadd.xlane.f32.xlu0 %v7306
        %v7308 = vpop.xlane.xlu0 %7307
        %v7309 = vsel %vm1446, %v7272, 0.0
        %7310 = vadd.xlane.f32.xlu0 %v7309
        %v7311 = vpop.xlane.xlu0 %7310
        %v7312 = vsel %vm1446, %v7274, 0.0
        %7313 = vadd.xlane.f32.xlu0 %v7312
        %v7314 = vpop.xlane.xlu0 %7313
        %v7315 = vsel %vm1446, %v7276, 0.0
        %7316 = vadd.xlane.f32.xlu0 %v7315
        %v7317 = vpop.xlane.xlu0 %7316
        %v7318 = vsel %vm1446, %v7278, 0.0
        %7319 = vadd.xlane.f32.xlu0 %v7318
        %v7320 = vpop.xlane.xlu0 %7319
        %v7321 = vsel %vm1446, %v7280, 0.0
        %7322 = vadd.xlane.f32.xlu0 %v7321
        %v7323 = vpop.xlane.xlu0 %7322
        %v7324 = vsel %vm1446, %v7282, 0.0
        %7325 = vadd.xlane.f32.xlu0 %v7324
        %v7326 = vpop.xlane.xlu0 %7325
        %v7327 = vsel %vm1446, %v7284, 0.0
        %7328 = vadd.xlane.f32.xlu0 %v7327
        %v7329 = vpop.xlane.xlu0 %7328
        %v7330 = vsel %vm1446, %v7286, 0.0
        %7331 = vadd.xlane.f32.xlu0 %v7330
        %v7332 = vpop.xlane.xlu0 %7331
        %v7333 = vsel %vm1446, %v7288, 0.0
        %7334 = vadd.xlane.f32.xlu0 %v7333
        %v7335 = vpop.xlane.xlu0 %7334
        %v7336 = vsel %vm1446, %v7290, 0.0
        %7337 = vadd.xlane.f32.xlu0 %v7336
        %v7338 = vpop.xlane.xlu0 %7337
        %v7339 = vrcp.pop %v7293
        %v7340 = vrcp.pop %v7296
        %v7341 = vrcp.pop %v7299
        %v7342 = vrcp.pop %v7302
        %v7343 = vrcp.pop %v7305
        %v7344 = vrcp.pop %v7308
        %v7345 = vrcp.pop %v7311
        %v7346 = vrcp.pop %v7314
        %v7347 = vrcp.pop %v7317
        %v7348 = vrcp.pop %v7320
        %v7349 = vrcp.pop %v7323
        %v7350 = vrcp.pop %v7326
        %v7351 = vrcp.pop %v7329
        %v7352 = vrcp.pop %v7332
        %v7353 = vrcp.pop %v7335
        %v7354 = vrcp.pop %v7338
        %v7355 = vmul.f32 %v7260, %v7339
        %v7356 = vmul.f32 %v7262, %v7340
        %v7357 = vmul.f32 %v7264, %v7341
        %v7358 = vmul.f32 %v7266, %v7342
        %v7359 = vmul.f32 %v7268, %v7343
        %v7360 = vmul.f32 %v7270, %v7344
        %v7361 = vmul.f32 %v7272, %v7345
        %v7362 = vmul.f32 %v7274, %v7346
        %v7363 = vmul.f32 %v7276, %v7347
        %v7364 = vmul.f32 %v7278, %v7348
        %v7365 = vmul.f32 %v7280, %v7349
        %v7366 = vmul.f32 %v7282, %v7350
        %v7367 = vmul.f32 %v7284, %v7351
        %v7368 = vmul.f32 %v7286, %v7352
        %v7369 = vmul.f32 %v7288, %v7353
        %v7370 = vmul.f32 %v7290, %v7354
        %v7371 = vpack.c.bf16 %v7355, %v7355
        %v7372 = vpack.c.bf16 %v7356, %v7356
        %v7373 = vpack.c.bf16 %v7357, %v7357
        %v7374 = vpack.c.bf16 %v7358, %v7358
        %v7375 = vpack.c.bf16 %v7359, %v7359
        %v7376 = vpack.c.bf16 %v7360, %v7360
        %v7377 = vpack.c.bf16 %v7361, %v7361
        %v7378 = vpack.c.bf16 %v7362, %v7362
        %v7379 = vpack.c.bf16 %v7363, %v7363
        %v7380 = vpack.c.bf16 %v7364, %v7364
        %v7381 = vpack.c.bf16 %v7365, %v7365
        %v7382 = vpack.c.bf16 %v7366, %v7366
        %v7383 = vpack.c.bf16 %v7367, %v7367
        %v7384 = vpack.c.bf16 %v7368, %v7368
        %v7385 = vpack.c.bf16 %v7369, %v7369
        %v7386 = vpack.c.bf16 %v7370, %v7370
        %7387 = vrot.lane.b32.xlu0 %v645, 32
        %v7388 = vpop.permute.xlu0 %7387
        %v7390 = vsel %vm1446, %v7371, 0
        %v7393 = vsel %vm1642, %v7388, 0
        %7395 = vmatprep.subr.bf16.mxu0 0
        %7396 = vmatpush1.bf16.msra.mxu0 %v7393
        %7397 = vmatprep.subr.bf16.mxu0 0
        %7398 = vmatpush1.bf16.msra.mxu0 0
        %7399 = vmatprep.subr.bf16.mxu0 0
        %7400 = vmatpush1.bf16.msra.mxu0 0
        %7401 = vmatprep.subr.bf16.mxu0 0
        %7402 = vmatpush1.bf16.msra.mxu0 0
        %7403 = vmatprep.subr.bf16.mxu0 0
        %7404 = vmatpush1.bf16.msra.mxu0 0
        %7405 = vmatprep.subr.bf16.mxu0 0
        %7406 = vmatpush1.bf16.msra.mxu0 0
        %7407 = vmatprep.subr.bf16.mxu0 0
        %7408 = vmatpush1.bf16.msra.mxu0 0
        %7409 = vmatprep.subr.bf16.mxu0 0
        %7410 = vmatpush1.bf16.msra.mxu0 0
        %7411 = vmatprep.subr.bf16.mxu0 0
        %7412 = vmatpush1.bf16.msra.mxu0 0
        %7413 = vmatprep.subr.bf16.mxu0 0
        %7414 = vmatpush1.bf16.msra.mxu0 0
        %7415 = vmatprep.subr.bf16.mxu0 0
        %7416 = vmatpush1.bf16.msra.mxu0 0
        %7417 = vmatprep.subr.bf16.mxu0 0
        %7418 = vmatpush1.bf16.msra.mxu0 0
        %7419 = vmatprep.subr.bf16.mxu0 0
        %7420 = vmatpush1.bf16.msra.mxu0 0
        %7421 = vmatprep.subr.bf16.mxu0 0
        %7422 = vmatpush1.bf16.msra.mxu0 0
        %7423 = vmatprep.subr.bf16.mxu0 0
        %7424 = vmatpush1.bf16.msra.mxu0 0
        %7425 = vmatprep.subr.bf16.mxu0 0
        %7426 = vmatpush1.bf16.msra.mxu0 0
        %7427 = vmatprep.mubr.bf16.mxu0 0
        %7428 = vmatmul.mubr.bf16.gmra.mrb[0].mxu0 %v7390
        %v7429 = vpop.f32.mrb[0].mxu0
        %v7430 = vadd.f32 0.0, %v7429
        %v7431 = vpop.f32.mrb[0].mxu0
        %v7432 = vpop.f32.mrb[0].mxu0
        %v7433 = vpop.f32.mrb[0].mxu0
        %7434 = vdwg.mxu0
        %7435 = vrot.lane.b32.xlu0 %v646, 32
        %v7436 = vpop.permute.xlu0 %7435
        %v7438 = vsel %vm1446, %v7372, 0
        %v7441 = vsel %vm1642, %v7436, 0
        %7443 = vmatprep.subr.bf16.mxu0 0
        %7444 = vmatpush1.bf16.msra.mxu0 %v7441
        %7445 = vmatprep.subr.bf16.mxu0 0
        %7446 = vmatpush1.bf16.msra.mxu0 0
        %7447 = vmatprep.subr.bf16.mxu0 0
        %7448 = vmatpush1.bf16.msra.mxu0 0
        %7449 = vmatprep.subr.bf16.mxu0 0
        %7450 = vmatpush1.bf16.msra.mxu0 0
        %7451 = vmatprep.subr.bf16.mxu0 0
        %7452 = vmatpush1.bf16.msra.mxu0 0
        %7453 = vmatprep.subr.bf16.mxu0 0
        %7454 = vmatpush1.bf16.msra.mxu0 0
        %7455 = vmatprep.subr.bf16.mxu0 0
        %7456 = vmatpush1.bf16.msra.mxu0 0
        %7457 = vmatprep.subr.bf16.mxu0 0
        %7458 = vmatpush1.bf16.msra.mxu0 0
        %7459 = vmatprep.subr.bf16.mxu0 0
        %7460 = vmatpush1.bf16.msra.mxu0 0
        %7461 = vmatprep.subr.bf16.mxu0 0
        %7462 = vmatpush1.bf16.msra.mxu0 0
        %7463 = vmatprep.subr.bf16.mxu0 0
        %7464 = vmatpush1.bf16.msra.mxu0 0
        %7465 = vmatprep.subr.bf16.mxu0 0
        %7466 = vmatpush1.bf16.msra.mxu0 0
        %7467 = vmatprep.subr.bf16.mxu0 0
        %7468 = vmatpush1.bf16.msra.mxu0 0
        %7469 = vmatprep.subr.bf16.mxu0 0
        %7470 = vmatpush1.bf16.msra.mxu0 0
        %7471 = vmatprep.subr.bf16.mxu0 0
        %7472 = vmatpush1.bf16.msra.mxu0 0
        %7473 = vmatprep.subr.bf16.mxu0 0
        %7474 = vmatpush1.bf16.msra.mxu0 0
        %7475 = vmatprep.mubr.bf16.mxu0 0
        %7476 = vmatmul.mubr.bf16.gmra.mrb[0].mxu0 %v7438
        %v7477 = vpop.f32.mrb[0].mxu0
        %v7478 = vadd.f32 0.0, %v7477
        %v7479 = vpop.f32.mrb[0].mxu0
        %v7480 = vpop.f32.mrb[0].mxu0
        %v7481 = vpop.f32.mrb[0].mxu0
        %7482 = vdwg.mxu0
        %7483 = vrot.lane.b32.xlu0 %v647, 32
        %v7484 = vpop.permute.xlu0 %7483
        %v7486 = vsel %vm1446, %v7373, 0
        %v7489 = vsel %vm1642, %v7484, 0
        %7491 = vmatprep.subr.bf16.mxu0 0
        %7492 = vmatpush1.bf16.msra.mxu0 %v7489
        %7493 = vmatprep.subr.bf16.mxu0 0
        %7494 = vmatpush1.bf16.msra.mxu0 0
        %7495 = vmatprep.subr.bf16.mxu0 0
        %7496 = vmatpush1.bf16.msra.mxu0 0
        %7497 = vmatprep.subr.bf16.mxu0 0
        %7498 = vmatpush1.bf16.msra.mxu0 0
        %7499 = vmatprep.subr.bf16.mxu0 0
        %7500 = vmatpush1.bf16.msra.mxu0 0
        %7501 = vmatprep.subr.bf16.mxu0 0
        %7502 = vmatpush1.bf16.msra.mxu0 0
        %7503 = vmatprep.subr.bf16.mxu0 0
        %7504 = vmatpush1.bf16.msra.mxu0 0
        %7505 = vmatprep.subr.bf16.mxu0 0
        %7506 = vmatpush1.bf16.msra.mxu0 0
        %7507 = vmatprep.subr.bf16.mxu0 0
        %7508 = vmatpush1.bf16.msra.mxu0 0
        %7509 = vmatprep.subr.bf16.mxu0 0
        %7510 = vmatpush1.bf16.msra.mxu0 0
        %7511 = vmatprep.subr.bf16.mxu0 0
        %7512 = vmatpush1.bf16.msra.mxu0 0
        %7513 = vmatprep.subr.bf16.mxu0 0
        %7514 = vmatpush1.bf16.msra.mxu0 0
        %7515 = vmatprep.subr.bf16.mxu0 0
        %7516 = vmatpush1.bf16.msra.mxu0 0
        %7517 = vmatprep.subr.bf16.mxu0 0
        %7518 = vmatpush1.bf16.msra.mxu0 0
        %7519 = vmatprep.subr.bf16.mxu0 0
        %7520 = vmatpush1.bf16.msra.mxu0 0
        %7521 = vmatprep.subr.bf16.mxu0 0
        %7522 = vmatpush1.bf16.msra.mxu0 0
        %7523 = vmatprep.mubr.bf16.mxu0 0
        %7524 = vmatmul.mubr.bf16.gmra.mrb[0].mxu0 %v7486
        %v7525 = vpop.f32.mrb[0].mxu0
        %v7526 = vadd.f32 0.0, %v7525
        %v7527 = vpop.f32.mrb[0].mxu0
        %v7528 = vpop.f32.mrb[0].mxu0
        %v7529 = vpop.f32.mrb[0].mxu0
        %7530 = vdwg.mxu0
        %7531 = vrot.lane.b32.xlu0 %v648, 32
        %v7532 = vpop.permute.xlu0 %7531
        %v7534 = vsel %vm1446, %v7374, 0
        %v7537 = vsel %vm1642, %v7532, 0
        %7539 = vmatprep.subr.bf16.mxu0 0
        %7540 = vmatpush1.bf16.msra.mxu0 %v7537
        %7541 = vmatprep.subr.bf16.mxu0 0
        %7542 = vmatpush1.bf16.msra.mxu0 0
        %7543 = vmatprep.subr.bf16.mxu0 0
        %7544 = vmatpush1.bf16.msra.mxu0 0
        %7545 = vmatprep.subr.bf16.mxu0 0
        %7546 = vmatpush1.bf16.msra.mxu0 0
        %7547 = vmatprep.subr.bf16.mxu0 0
        %7548 = vmatpush1.bf16.msra.mxu0 0
        %7549 = vmatprep.subr.bf16.mxu0 0
        %7550 = vmatpush1.bf16.msra.mxu0 0
        %7551 = vmatprep.subr.bf16.mxu0 0
        %7552 = vmatpush1.bf16.msra.mxu0 0
        %7553 = vmatprep.subr.bf16.mxu0 0
        %7554 = vmatpush1.bf16.msra.mxu0 0
        %7555 = vmatprep.subr.bf16.mxu0 0
        %7556 = vmatpush1.bf16.msra.mxu0 0
        %7557 = vmatprep.subr.bf16.mxu0 0
        %7558 = vmatpush1.bf16.msra.mxu0 0
        %7559 = vmatprep.subr.bf16.mxu0 0
        %7560 = vmatpush1.bf16.msra.mxu0 0
        %7561 = vmatprep.subr.bf16.mxu0 0
        %7562 = vmatpush1.bf16.msra.mxu0 0
        %7563 = vmatprep.subr.bf16.mxu0 0
        %7564 = vmatpush1.bf16.msra.mxu0 0
        %7565 = vmatprep.subr.bf16.mxu0 0
        %7566 = vmatpush1.bf16.msra.mxu0 0
        %7567 = vmatprep.subr.bf16.mxu0 0
        %7568 = vmatpush1.bf16.msra.mxu0 0
        %7569 = vmatprep.subr.bf16.mxu0 0
        %7570 = vmatpush1.bf16.msra.mxu0 0
        %7571 = vmatprep.mubr.bf16.mxu0 0
        %7572 = vmatmul.mubr.bf16.gmra.mrb[0].mxu0 %v7534
        %v7573 = vpop.f32.mrb[0].mxu0
        %v7574 = vadd.f32 0.0, %v7573
        %v7575 = vpop.f32.mrb[0].mxu0
        %v7576 = vpop.f32.mrb[0].mxu0
        %v7577 = vpop.f32.mrb[0].mxu0
        %7578 = vdwg.mxu0
        %7579 = vrot.lane.b32.xlu0 %v649, 32
        %v7580 = vpop.permute.xlu0 %7579
        %v7582 = vsel %vm1446, %v7375, 0
        %v7585 = vsel %vm1642, %v7580, 0
        %7587 = vmatprep.subr.bf16.mxu0 0
        %7588 = vmatpush1.bf16.msra.mxu0 %v7585
        %7589 = vmatprep.subr.bf16.mxu0 0
        %7590 = vmatpush1.bf16.msra.mxu0 0
        %7591 = vmatprep.subr.bf16.mxu0 0
        %7592 = vmatpush1.bf16.msra.mxu0 0
        %7593 = vmatprep.subr.bf16.mxu0 0
        %7594 = vmatpush1.bf16.msra.mxu0 0
        %7595 = vmatprep.subr.bf16.mxu0 0
        %7596 = vmatpush1.bf16.msra.mxu0 0
        %7597 = vmatprep.subr.bf16.mxu0 0
        %7598 = vmatpush1.bf16.msra.mxu0 0
        %7599 = vmatprep.subr.bf16.mxu0 0
        %7600 = vmatpush1.bf16.msra.mxu0 0
        %7601 = vmatprep.subr.bf16.mxu0 0
        %7602 = vmatpush1.bf16.msra.mxu0 0
        %7603 = vmatprep.subr.bf16.mxu0 0
        %7604 = vmatpush1.bf16.msra.mxu0 0
        %7605 = vmatprep.subr.bf16.mxu0 0
        %7606 = vmatpush1.bf16.msra.mxu0 0
        %7607 = vmatprep.subr.bf16.mxu0 0
        %7608 = vmatpush1.bf16.msra.mxu0 0
        %7609 = vmatprep.subr.bf16.mxu0 0
        %7610 = vmatpush1.bf16.msra.mxu0 0
        %7611 = vmatprep.subr.bf16.mxu0 0
        %7612 = vmatpush1.bf16.msra.mxu0 0
        %7613 = vmatprep.subr.bf16.mxu0 0
        %7614 = vmatpush1.bf16.msra.mxu0 0
        %7615 = vmatprep.subr.bf16.mxu0 0
        %7616 = vmatpush1.bf16.msra.mxu0 0
        %7617 = vmatprep.subr.bf16.mxu0 0
        %7618 = vmatpush1.bf16.msra.mxu0 0
        %7619 = vmatprep.mubr.bf16.mxu0 0
        %7620 = vmatmul.mubr.bf16.gmra.mrb[0].mxu0 %v7582
        %v7621 = vpop.f32.mrb[0].mxu0
        %v7622 = vadd.f32 0.0, %v7621
        %v7623 = vpop.f32.mrb[0].mxu0
        %v7624 = vpop.f32.mrb[0].mxu0
        %v7625 = vpop.f32.mrb[0].mxu0
        %7626 = vdwg.mxu0
        %7627 = vrot.lane.b32.xlu0 %v650, 32
        %v7628 = vpop.permute.xlu0 %7627
        %v7630 = vsel %vm1446, %v7376, 0
        %v7633 = vsel %vm1642, %v7628, 0
        %7635 = vmatprep.subr.bf16.mxu0 0
        %7636 = vmatpush1.bf16.msra.mxu0 %v7633
        %7637 = vmatprep.subr.bf16.mxu0 0
        %7638 = vmatpush1.bf16.msra.mxu0 0
        %7639 = vmatprep.subr.bf16.mxu0 0
        %7640 = vmatpush1.bf16.msra.mxu0 0
        %7641 = vmatprep.subr.bf16.mxu0 0
        %7642 = vmatpush1.bf16.msra.mxu0 0
        %7643 = vmatprep.subr.bf16.mxu0 0
        %7644 = vmatpush1.bf16.msra.mxu0 0
        %7645 = vmatprep.subr.bf16.mxu0 0
        %7646 = vmatpush1.bf16.msra.mxu0 0
        %7647 = vmatprep.subr.bf16.mxu0 0
        %7648 = vmatpush1.bf16.msra.mxu0 0
        %7649 = vmatprep.subr.bf16.mxu0 0
        %7650 = vmatpush1.bf16.msra.mxu0 0
        %7651 = vmatprep.subr.bf16.mxu0 0
        %7652 = vmatpush1.bf16.msra.mxu0 0
        %7653 = vmatprep.subr.bf16.mxu0 0
        %7654 = vmatpush1.bf16.msra.mxu0 0
        %7655 = vmatprep.subr.bf16.mxu0 0
        %7656 = vmatpush1.bf16.msra.mxu0 0
        %7657 = vmatprep.subr.bf16.mxu0 0
        %7658 = vmatpush1.bf16.msra.mxu0 0
        %7659 = vmatprep.subr.bf16.mxu0 0
        %7660 = vmatpush1.bf16.msra.mxu0 0
        %7661 = vmatprep.subr.bf16.mxu0 0
        %7662 = vmatpush1.bf16.msra.mxu0 0
        %7663 = vmatprep.subr.bf16.mxu0 0
        %7664 = vmatpush1.bf16.msra.mxu0 0
        %7665 = vmatprep.subr.bf16.mxu0 0
        %7666 = vmatpush1.bf16.msra.mxu0 0
        %7667 = vmatprep.mubr.bf16.mxu0 0
        %7668 = vmatmul.mubr.bf16.gmra.mrb[0].mxu0 %v7630
        %v7669 = vpop.f32.mrb[0].mxu0
        %v7670 = vadd.f32 0.0, %v7669
        %v7671 = vpop.f32.mrb[0].mxu0
        %v7672 = vpop.f32.mrb[0].mxu0
        %v7673 = vpop.f32.mrb[0].mxu0
        %7674 = vdwg.mxu0
        %7675 = vrot.lane.b32.xlu0 %v651, 32
        %v7676 = vpop.permute.xlu0 %7675
        %v7678 = vsel %vm1446, %v7377, 0
        %v7681 = vsel %vm1642, %v7676, 0
        %7683 = vmatprep.subr.bf16.mxu0 0
        %7684 = vmatpush1.bf16.msra.mxu0 %v7681
        %7685 = vmatprep.subr.bf16.mxu0 0
        %7686 = vmatpush1.bf16.msra.mxu0 0
        %7687 = vmatprep.subr.bf16.mxu0 0
        %7688 = vmatpush1.bf16.msra.mxu0 0
        %7689 = vmatprep.subr.bf16.mxu0 0
        %7690 = vmatpush1.bf16.msra.mxu0 0
        %7691 = vmatprep.subr.bf16.mxu0 0
        %7692 = vmatpush1.bf16.msra.mxu0 0
        %7693 = vmatprep.subr.bf16.mxu0 0
        %7694 = vmatpush1.bf16.msra.mxu0 0
        %7695 = vmatprep.subr.bf16.mxu0 0
        %7696 = vmatpush1.bf16.msra.mxu0 0
        %7697 = vmatprep.subr.bf16.mxu0 0
        %7698 = vmatpush1.bf16.msra.mxu0 0
        %7699 = vmatprep.subr.bf16.mxu0 0
        %7700 = vmatpush1.bf16.msra.mxu0 0
        %7701 = vmatprep.subr.bf16.mxu0 0
        %7702 = vmatpush1.bf16.msra.mxu0 0
        %7703 = vmatprep.subr.bf16.mxu0 0
        %7704 = vmatpush1.bf16.msra.mxu0 0
        %7705 = vmatprep.subr.bf16.mxu0 0
        %7706 = vmatpush1.bf16.msra.mxu0 0
        %7707 = vmatprep.subr.bf16.mxu0 0
        %7708 = vmatpush1.bf16.msra.mxu0 0
        %7709 = vmatprep.subr.bf16.mxu0 0
        %7710 = vmatpush1.bf16.msra.mxu0 0
        %7711 = vmatprep.subr.bf16.mxu0 0
        %7712 = vmatpush1.bf16.msra.mxu0 0
        %7713 = vmatprep.subr.bf16.mxu0 0
        %7714 = vmatpush1.bf16.msra.mxu0 0
        %7715 = vmatprep.mubr.bf16.mxu0 0
        %7716 = vmatmul.mubr.bf16.gmra.mrb[0].mxu0 %v7678
        %v7717 = vpop.f32.mrb[0].mxu0
        %v7718 = vadd.f32 0.0, %v7717
        %v7719 = vpop.f32.mrb[0].mxu0
        %v7720 = vpop.f32.mrb[0].mxu0
        %v7721 = vpop.f32.mrb[0].mxu0
        %7722 = vdwg.mxu0
        %7723 = vrot.lane.b32.xlu0 %v652, 32
        %v7724 = vpop.permute.xlu0 %7723
        %v7726 = vsel %vm1446, %v7378, 0
        %v7729 = vsel %vm1642, %v7724, 0
        %7731 = vmatprep.subr.bf16.mxu0 0
        %7732 = vmatpush1.bf16.msra.mxu0 %v7729
        %7733 = vmatprep.subr.bf16.mxu0 0
        %7734 = vmatpush1.bf16.msra.mxu0 0
        %7735 = vmatprep.subr.bf16.mxu0 0
        %7736 = vmatpush1.bf16.msra.mxu0 0
        %7737 = vmatprep.subr.bf16.mxu0 0
        %7738 = vmatpush1.bf16.msra.mxu0 0
        %7739 = vmatprep.subr.bf16.mxu0 0
        %7740 = vmatpush1.bf16.msra.mxu0 0
        %7741 = vmatprep.subr.bf16.mxu0 0
        %7742 = vmatpush1.bf16.msra.mxu0 0
        %7743 = vmatprep.subr.bf16.mxu0 0
        %7744 = vmatpush1.bf16.msra.mxu0 0
        %7745 = vmatprep.subr.bf16.mxu0 0
        %7746 = vmatpush1.bf16.msra.mxu0 0
        %7747 = vmatprep.subr.bf16.mxu0 0
        %7748 = vmatpush1.bf16.msra.mxu0 0
        %7749 = vmatprep.subr.bf16.mxu0 0
        %7750 = vmatpush1.bf16.msra.mxu0 0
        %7751 = vmatprep.subr.bf16.mxu0 0
        %7752 = vmatpush1.bf16.msra.mxu0 0
        %7753 = vmatprep.subr.bf16.mxu0 0
        %7754 = vmatpush1.bf16.msra.mxu0 0
        %7755 = vmatprep.subr.bf16.mxu0 0
        %7756 = vmatpush1.bf16.msra.mxu0 0
        %7757 = vmatprep.subr.bf16.mxu0 0
        %7758 = vmatpush1.bf16.msra.mxu0 0
        %7759 = vmatprep.subr.bf16.mxu0 0
        %7760 = vmatpush1.bf16.msra.mxu0 0
        %7761 = vmatprep.subr.bf16.mxu0 0
        %7762 = vmatpush1.bf16.msra.mxu0 0
        %7763 = vmatprep.mubr.bf16.mxu0 0
        %7764 = vmatmul.mubr.bf16.gmra.mrb[0].mxu0 %v7726
        %v7765 = vpop.f32.mrb[0].mxu0
        %v7766 = vadd.f32 0.0, %v7765
        %v7767 = vpop.f32.mrb[0].mxu0
        %v7768 = vpop.f32.mrb[0].mxu0
        %v7769 = vpop.f32.mrb[0].mxu0
        %7770 = vdwg.mxu0
        %7771 = vrot.lane.b32.xlu0 %v653, 32
        %v7772 = vpop.permute.xlu0 %7771
        %v7774 = vsel %vm1446, %v7379, 0
        %v7777 = vsel %vm1642, %v7772, 0
        %7779 = vmatprep.subr.bf16.mxu0 0
        %7780 = vmatpush1.bf16.msra.mxu0 %v7777
        %7781 = vmatprep.subr.bf16.mxu0 0
        %7782 = vmatpush1.bf16.msra.mxu0 0
        %7783 = vmatprep.subr.bf16.mxu0 0
        %7784 = vmatpush1.bf16.msra.mxu0 0
        %7785 = vmatprep.subr.bf16.mxu0 0
        %7786 = vmatpush1.bf16.msra.mxu0 0
        %7787 = vmatprep.subr.bf16.mxu0 0
        %7788 = vmatpush1.bf16.msra.mxu0 0
        %7789 = vmatprep.subr.bf16.mxu0 0
        %7790 = vmatpush1.bf16.msra.mxu0 0
        %7791 = vmatprep.subr.bf16.mxu0 0
        %7792 = vmatpush1.bf16.msra.mxu0 0
        %7793 = vmatprep.subr.bf16.mxu0 0
        %7794 = vmatpush1.bf16.msra.mxu0 0
        %7795 = vmatprep.subr.bf16.mxu0 0
        %7796 = vmatpush1.bf16.msra.mxu0 0
        %7797 = vmatprep.subr.bf16.mxu0 0
        %7798 = vmatpush1.bf16.msra.mxu0 0
        %7799 = vmatprep.subr.bf16.mxu0 0
        %7800 = vmatpush1.bf16.msra.mxu0 0
        %7801 = vmatprep.subr.bf16.mxu0 0
        %7802 = vmatpush1.bf16.msra.mxu0 0
        %7803 = vmatprep.subr.bf16.mxu0 0
        %7804 = vmatpush1.bf16.msra.mxu0 0
        %7805 = vmatprep.subr.bf16.mxu0 0
        %7806 = vmatpush1.bf16.msra.mxu0 0
        %7807 = vmatprep.subr.bf16.mxu0 0
        %7808 = vmatpush1.bf16.msra.mxu0 0
        %7809 = vmatprep.subr.bf16.mxu0 0
        %7810 = vmatpush1.bf16.msra.mxu0 0
        %7811 = vmatprep.mubr.bf16.mxu0 0
        %7812 = vmatmul.mubr.bf16.gmra.mrb[0].mxu0 %v7774
        %v7813 = vpop.f32.mrb[0].mxu0
        %v7814 = vadd.f32 0.0, %v7813
        %v7815 = vpop.f32.mrb[0].mxu0
        %v7816 = vpop.f32.mrb[0].mxu0
        %v7817 = vpop.f32.mrb[0].mxu0
        %7818 = vdwg.mxu0
        %7819 = vrot.lane.b32.xlu0 %v654, 32
        %v7820 = vpop.permute.xlu0 %7819
        %v7822 = vsel %vm1446, %v7380, 0
        %v7825 = vsel %vm1642, %v7820, 0
        %7827 = vmatprep.subr.bf16.mxu0 0
        %7828 = vmatpush1.bf16.msra.mxu0 %v7825
        %7829 = vmatprep.subr.bf16.mxu0 0
        %7830 = vmatpush1.bf16.msra.mxu0 0
        %7831 = vmatprep.subr.bf16.mxu0 0
        %7832 = vmatpush1.bf16.msra.mxu0 0
        %7833 = vmatprep.subr.bf16.mxu0 0
        %7834 = vmatpush1.bf16.msra.mxu0 0
        %7835 = vmatprep.subr.bf16.mxu0 0
        %7836 = vmatpush1.bf16.msra.mxu0 0
        %7837 = vmatprep.subr.bf16.mxu0 0
        %7838 = vmatpush1.bf16.msra.mxu0 0
        %7839 = vmatprep.subr.bf16.mxu0 0
        %7840 = vmatpush1.bf16.msra.mxu0 0
        %7841 = vmatprep.subr.bf16.mxu0 0
        %7842 = vmatpush1.bf16.msra.mxu0 0
        %7843 = vmatprep.subr.bf16.mxu0 0
        %7844 = vmatpush1.bf16.msra.mxu0 0
        %7845 = vmatprep.subr.bf16.mxu0 0
        %7846 = vmatpush1.bf16.msra.mxu0 0
        %7847 = vmatprep.subr.bf16.mxu0 0
        %7848 = vmatpush1.bf16.msra.mxu0 0
        %7849 = vmatprep.subr.bf16.mxu0 0
        %7850 = vmatpush1.bf16.msra.mxu0 0
        %7851 = vmatprep.subr.bf16.mxu0 0
        %7852 = vmatpush1.bf16.msra.mxu0 0
        %7853 = vmatprep.subr.bf16.mxu0 0
        %7854 = vmatpush1.bf16.msra.mxu0 0
        %7855 = vmatprep.subr.bf16.mxu0 0
        %7856 = vmatpush1.bf16.msra.mxu0 0
        %7857 = vmatprep.subr.bf16.mxu0 0
        %7858 = vmatpush1.bf16.msra.mxu0 0
        %7859 = vmatprep.mubr.bf16.mxu0 0
        %7860 = vmatmul.mubr.bf16.gmra.mrb[0].mxu0 %v7822
        %v7861 = vpop.f32.mrb[0].mxu0
        %v7862 = vadd.f32 0.0, %v7861
        %v7863 = vpop.f32.mrb[0].mxu0
        %v7864 = vpop.f32.mrb[0].mxu0
        %v7865 = vpop.f32.mrb[0].mxu0
        %7866 = vdwg.mxu0
        %7867 = vrot.lane.b32.xlu0 %v655, 32
        %v7868 = vpop.permute.xlu0 %7867
        %v7870 = vsel %vm1446, %v7381, 0
        %v7873 = vsel %vm1642, %v7868, 0
        %7875 = vmatprep.subr.bf16.mxu0 0
        %7876 = vmatpush1.bf16.msra.mxu0 %v7873
        %7877 = vmatprep.subr.bf16.mxu0 0
        %7878 = vmatpush1.bf16.msra.mxu0 0
        %7879 = vmatprep.subr.bf16.mxu0 0
        %7880 = vmatpush1.bf16.msra.mxu0 0
        %7881 = vmatprep.subr.bf16.mxu0 0
        %7882 = vmatpush1.bf16.msra.mxu0 0
        %7883 = vmatprep.subr.bf16.mxu0 0
        %7884 = vmatpush1.bf16.msra.mxu0 0
        %7885 = vmatprep.subr.bf16.mxu0 0
        %7886 = vmatpush1.bf16.msra.mxu0 0
        %7887 = vmatprep.subr.bf16.mxu0 0
        %7888 = vmatpush1.bf16.msra.mxu0 0
        %7889 = vmatprep.subr.bf16.mxu0 0
        %7890 = vmatpush1.bf16.msra.mxu0 0
        %7891 = vmatprep.subr.bf16.mxu0 0
        %7892 = vmatpush1.bf16.msra.mxu0 0
        %7893 = vmatprep.subr.bf16.mxu0 0
        %7894 = vmatpush1.bf16.msra.mxu0 0
        %7895 = vmatprep.subr.bf16.mxu0 0
        %7896 = vmatpush1.bf16.msra.mxu0 0
        %7897 = vmatprep.subr.bf16.mxu0 0
        %7898 = vmatpush1.bf16.msra.mxu0 0
        %7899 = vmatprep.subr.bf16.mxu0 0
        %7900 = vmatpush1.bf16.msra.mxu0 0
        %7901 = vmatprep.subr.bf16.mxu0 0
        %7902 = vmatpush1.bf16.msra.mxu0 0
        %7903 = vmatprep.subr.bf16.mxu0 0
        %7904 = vmatpush1.bf16.msra.mxu0 0
        %7905 = vmatprep.subr.bf16.mxu0 0
        %7906 = vmatpush1.bf16.msra.mxu0 0
        %7907 = vmatprep.mubr.bf16.mxu0 0
        %7908 = vmatmul.mubr.bf16.gmra.mrb[0].mxu0 %v7870
        %v7909 = vpop.f32.mrb[0].mxu0
        %v7910 = vadd.f32 0.0, %v7909
        %v7911 = vpop.f32.mrb[0].mxu0
        %v7912 = vpop.f32.mrb[0].mxu0
        %v7913 = vpop.f32.mrb[0].mxu0
        %7914 = vdwg.mxu0
        %7915 = vrot.lane.b32.xlu0 %v656, 32
        %v7916 = vpop.permute.xlu0 %7915
        %v7918 = vsel %vm1446, %v7382, 0
        %v7921 = vsel %vm1642, %v7916, 0
        %7923 = vmatprep.subr.bf16.mxu0 0
        %7924 = vmatpush1.bf16.msra.mxu0 %v7921
        %7925 = vmatprep.subr.bf16.mxu0 0
        %7926 = vmatpush1.bf16.msra.mxu0 0
        %7927 = vmatprep.subr.bf16.mxu0 0
        %7928 = vmatpush1.bf16.msra.mxu0 0
        %7929 = vmatprep.subr.bf16.mxu0 0
        %7930 = vmatpush1.bf16.msra.mxu0 0
        %7931 = vmatprep.subr.bf16.mxu0 0
        %7932 = vmatpush1.bf16.msra.mxu0 0
        %7933 = vmatprep.subr.bf16.mxu0 0
        %7934 = vmatpush1.bf16.msra.mxu0 0
        %7935 = vmatprep.subr.bf16.mxu0 0
        %7936 = vmatpush1.bf16.msra.mxu0 0
        %7937 = vmatprep.subr.bf16.mxu0 0
        %7938 = vmatpush1.bf16.msra.mxu0 0
        %7939 = vmatprep.subr.bf16.mxu0 0
        %7940 = vmatpush1.bf16.msra.mxu0 0
        %7941 = vmatprep.subr.bf16.mxu0 0
        %7942 = vmatpush1.bf16.msra.mxu0 0
        %7943 = vmatprep.subr.bf16.mxu0 0
        %7944 = vmatpush1.bf16.msra.mxu0 0
        %7945 = vmatprep.subr.bf16.mxu0 0
        %7946 = vmatpush1.bf16.msra.mxu0 0
        %7947 = vmatprep.subr.bf16.mxu0 0
        %7948 = vmatpush1.bf16.msra.mxu0 0
        %7949 = vmatprep.subr.bf16.mxu0 0
        %7950 = vmatpush1.bf16.msra.mxu0 0
        %7951 = vmatprep.subr.bf16.mxu0 0
        %7952 = vmatpush1.bf16.msra.mxu0 0
        %7953 = vmatprep.subr.bf16.mxu0 0
        %7954 = vmatpush1.bf16.msra.mxu0 0
        %7955 = vmatprep.mubr.bf16.mxu0 0
        %7956 = vmatmul.mubr.bf16.gmra.mrb[0].mxu0 %v7918
        %v7957 = vpop.f32.mrb[0].mxu0
        %v7958 = vadd.f32 0.0, %v7957
        %v7959 = vpop.f32.mrb[0].mxu0
        %v7960 = vpop.f32.mrb[0].mxu0
        %v7961 = vpop.f32.mrb[0].mxu0
        %7962 = vdwg.mxu0
        %7963 = vrot.lane.b32.xlu0 %v657, 32
        %v7964 = vpop.permute.xlu0 %7963
        %v7966 = vsel %vm1446, %v7383, 0
        %v7969 = vsel %vm1642, %v7964, 0
        %7971 = vmatprep.subr.bf16.mxu0 0
        %7972 = vmatpush1.bf16.msra.mxu0 %v7969
        %7973 = vmatprep.subr.bf16.mxu0 0
        %7974 = vmatpush1.bf16.msra.mxu0 0
        %7975 = vmatprep.subr.bf16.mxu0 0
        %7976 = vmatpush1.bf16.msra.mxu0 0
        %7977 = vmatprep.subr.bf16.mxu0 0
        %7978 = vmatpush1.bf16.msra.mxu0 0
        %7979 = vmatprep.subr.bf16.mxu0 0
        %7980 = vmatpush1.bf16.msra.mxu0 0
        %7981 = vmatprep.subr.bf16.mxu0 0
        %7982 = vmatpush1.bf16.msra.mxu0 0
        %7983 = vmatprep.subr.bf16.mxu0 0
        %7984 = vmatpush1.bf16.msra.mxu0 0
        %7985 = vmatprep.subr.bf16.mxu0 0
        %7986 = vmatpush1.bf16.msra.mxu0 0
        %7987 = vmatprep.subr.bf16.mxu0 0
        %7988 = vmatpush1.bf16.msra.mxu0 0
        %7989 = vmatprep.subr.bf16.mxu0 0
        %7990 = vmatpush1.bf16.msra.mxu0 0
        %7991 = vmatprep.subr.bf16.mxu0 0
        %7992 = vmatpush1.bf16.msra.mxu0 0
        %7993 = vmatprep.subr.bf16.mxu0 0
        %7994 = vmatpush1.bf16.msra.mxu0 0
        %7995 = vmatprep.subr.bf16.mxu0 0
        %7996 = vmatpush1.bf16.msra.mxu0 0
        %7997 = vmatprep.subr.bf16.mxu0 0
        %7998 = vmatpush1.bf16.msra.mxu0 0
        %7999 = vmatprep.subr.bf16.mxu0 0
        %8000 = vmatpush1.bf16.msra.mxu0 0
        %8001 = vmatprep.subr.bf16.mxu0 0
        %8002 = vmatpush1.bf16.msra.mxu0 0
        %8003 = vmatprep.mubr.bf16.mxu0 0
        %8004 = vmatmul.mubr.bf16.gmra.mrb[0].mxu0 %v7966
        %v8005 = vpop.f32.mrb[0].mxu0
        %v8006 = vadd.f32 0.0, %v8005
        %v8007 = vpop.f32.mrb[0].mxu0
        %v8008 = vpop.f32.mrb[0].mxu0
        %v8009 = vpop.f32.mrb[0].mxu0
        %8010 = vdwg.mxu0
        %8011 = vrot.lane.b32.xlu0 %v658, 32
        %v8012 = vpop.permute.xlu0 %8011
        %v8014 = vsel %vm1446, %v7384, 0
        %v8017 = vsel %vm1642, %v8012, 0
        %8019 = vmatprep.subr.bf16.mxu0 0
        %8020 = vmatpush1.bf16.msra.mxu0 %v8017
        %8021 = vmatprep.subr.bf16.mxu0 0
        %8022 = vmatpush1.bf16.msra.mxu0 0
        %8023 = vmatprep.subr.bf16.mxu0 0
        %8024 = vmatpush1.bf16.msra.mxu0 0
        %8025 = vmatprep.subr.bf16.mxu0 0
        %8026 = vmatpush1.bf16.msra.mxu0 0
        %8027 = vmatprep.subr.bf16.mxu0 0
        %8028 = vmatpush1.bf16.msra.mxu0 0
        %8029 = vmatprep.subr.bf16.mxu0 0
        %8030 = vmatpush1.bf16.msra.mxu0 0
        %8031 = vmatprep.subr.bf16.mxu0 0
        %8032 = vmatpush1.bf16.msra.mxu0 0
        %8033 = vmatprep.subr.bf16.mxu0 0
        %8034 = vmatpush1.bf16.msra.mxu0 0
        %8035 = vmatprep.subr.bf16.mxu0 0
        %8036 = vmatpush1.bf16.msra.mxu0 0
        %8037 = vmatprep.subr.bf16.mxu0 0
        %8038 = vmatpush1.bf16.msra.mxu0 0
        %8039 = vmatprep.subr.bf16.mxu0 0
        %8040 = vmatpush1.bf16.msra.mxu0 0
        %8041 = vmatprep.subr.bf16.mxu0 0
        %8042 = vmatpush1.bf16.msra.mxu0 0
        %8043 = vmatprep.subr.bf16.mxu0 0
        %8044 = vmatpush1.bf16.msra.mxu0 0
        %8045 = vmatprep.subr.bf16.mxu0 0
        %8046 = vmatpush1.bf16.msra.mxu0 0
        %8047 = vmatprep.subr.bf16.mxu0 0
        %8048 = vmatpush1.bf16.msra.mxu0 0
        %8049 = vmatprep.subr.bf16.mxu0 0
        %8050 = vmatpush1.bf16.msra.mxu0 0
        %8051 = vmatprep.mubr.bf16.mxu0 0
        %8052 = vmatmul.mubr.bf16.gmra.mrb[0].mxu0 %v8014
        %v8053 = vpop.f32.mrb[0].mxu0
        %v8054 = vadd.f32 0.0, %v8053
        %v8055 = vpop.f32.mrb[0].mxu0
        %v8056 = vpop.f32.mrb[0].mxu0
        %v8057 = vpop.f32.mrb[0].mxu0
        %8058 = vdwg.mxu0
        %8059 = vrot.lane.b32.xlu0 %v659, 32
        %v8060 = vpop.permute.xlu0 %8059
        %v8062 = vsel %vm1446, %v7385, 0
        %v8065 = vsel %vm1642, %v8060, 0
        %8067 = vmatprep.subr.bf16.mxu0 0
        %8068 = vmatpush1.bf16.msra.mxu0 %v8065
        %8069 = vmatprep.subr.bf16.mxu0 0
        %8070 = vmatpush1.bf16.msra.mxu0 0
        %8071 = vmatprep.subr.bf16.mxu0 0
        %8072 = vmatpush1.bf16.msra.mxu0 0
        %8073 = vmatprep.subr.bf16.mxu0 0
        %8074 = vmatpush1.bf16.msra.mxu0 0
        %8075 = vmatprep.subr.bf16.mxu0 0
        %8076 = vmatpush1.bf16.msra.mxu0 0
        %8077 = vmatprep.subr.bf16.mxu0 0
        %8078 = vmatpush1.bf16.msra.mxu0 0
        %8079 = vmatprep.subr.bf16.mxu0 0
        %8080 = vmatpush1.bf16.msra.mxu0 0
        %8081 = vmatprep.subr.bf16.mxu0 0
        %8082 = vmatpush1.bf16.msra.mxu0 0
        %8083 = vmatprep.subr.bf16.mxu0 0
        %8084 = vmatpush1.bf16.msra.mxu0 0
        %8085 = vmatprep.subr.bf16.mxu0 0
        %8086 = vmatpush1.bf16.msra.mxu0 0
        %8087 = vmatprep.subr.bf16.mxu0 0
        %8088 = vmatpush1.bf16.msra.mxu0 0
        %8089 = vmatprep.subr.bf16.mxu0 0
        %8090 = vmatpush1.bf16.msra.mxu0 0
        %8091 = vmatprep.subr.bf16.mxu0 0
        %8092 = vmatpush1.bf16.msra.mxu0 0
        %8093 = vmatprep.subr.bf16.mxu0 0
        %8094 = vmatpush1.bf16.msra.mxu0 0
        %8095 = vmatprep.subr.bf16.mxu0 0
        %8096 = vmatpush1.bf16.msra.mxu0 0
        %8097 = vmatprep.subr.bf16.mxu0 0
        %8098 = vmatpush1.bf16.msra.mxu0 0
        %8099 = vmatprep.mubr.bf16.mxu0 0
        %8100 = vmatmul.mubr.bf16.gmra.mrb[0].mxu0 %v8062
        %v8101 = vpop.f32.mrb[0].mxu0
        %v8102 = vadd.f32 0.0, %v8101
        %v8103 = vpop.f32.mrb[0].mxu0
        %v8104 = vpop.f32.mrb[0].mxu0
        %v8105 = vpop.f32.mrb[0].mxu0
        %8106 = vdwg.mxu0
        %8107 = vrot.lane.b32.xlu0 %v660, 32
        %v8108 = vpop.permute.xlu0 %8107
        %v8110 = vsel %vm1446, %v7386, 0
        %v8113 = vsel %vm1642, %v8108, 0
        %8115 = vmatprep.subr.bf16.mxu0 0
        %8116 = vmatpush1.bf16.msra.mxu0 %v8113
        %8117 = vmatprep.subr.bf16.mxu0 0
        %8118 = vmatpush1.bf16.msra.mxu0 0
        %8119 = vmatprep.subr.bf16.mxu0 0
        %8120 = vmatpush1.bf16.msra.mxu0 0
        %8121 = vmatprep.subr.bf16.mxu0 0
        %8122 = vmatpush1.bf16.msra.mxu0 0
        %8123 = vmatprep.subr.bf16.mxu0 0
        %8124 = vmatpush1.bf16.msra.mxu0 0
        %8125 = vmatprep.subr.bf16.mxu0 0
        %8126 = vmatpush1.bf16.msra.mxu0 0
        %8127 = vmatprep.subr.bf16.mxu0 0
        %8128 = vmatpush1.bf16.msra.mxu0 0
        %8129 = vmatprep.subr.bf16.mxu0 0
        %8130 = vmatpush1.bf16.msra.mxu0 0
        %8131 = vmatprep.subr.bf16.mxu0 0
        %8132 = vmatpush1.bf16.msra.mxu0 0
        %8133 = vmatprep.subr.bf16.mxu0 0
        %8134 = vmatpush1.bf16.msra.mxu0 0
        %8135 = vmatprep.subr.bf16.mxu0 0
        %8136 = vmatpush1.bf16.msra.mxu0 0
        %8137 = vmatprep.subr.bf16.mxu0 0
        %8138 = vmatpush1.bf16.msra.mxu0 0
        %8139 = vmatprep.subr.bf16.mxu0 0
        %8140 = vmatpush1.bf16.msra.mxu0 0
        %8141 = vmatprep.subr.bf16.mxu0 0
        %8142 = vmatpush1.bf16.msra.mxu0 0
        %8143 = vmatprep.subr.bf16.mxu0 0
        %8144 = vmatpush1.bf16.msra.mxu0 0
        %8145 = vmatprep.subr.bf16.mxu0 0
        %8146 = vmatpush1.bf16.msra.mxu0 0
        %8147 = vmatprep.mubr.bf16.mxu0 0
        %8148 = vmatmul.mubr.bf16.gmra.mrb[0].mxu0 %v8110
        %v8149 = vpop.f32.mrb[0].mxu0
        %v8150 = vadd.f32 0.0, %v8149
        %v8151 = vpop.f32.mrb[0].mxu0
        %v8152 = vpop.f32.mrb[0].mxu0
        %v8153 = vpop.f32.mrb[0].mxu0
        %8154 = vdwg.mxu0
        %v8155 = vpack.c.bf16 %v7478, %v7430
        %v8156 = vpack.c.bf16 %v7574, %v7526
        %v8157 = vpack.c.bf16 %v7670, %v7622
        %v8158 = vpack.c.bf16 %v7766, %v7718
        %v8159 = vpack.c.bf16 %v7862, %v7814
        %v8160 = vpack.c.bf16 %v7958, %v7910
        %v8161 = vpack.c.bf16 %v8054, %v8006
        %v8162 = vpack.c.bf16 %v8150, %v8102
        %v8163 = vld [vmem:[%s4 + $0x30] sm:$0xf]
        %v8164 = vld [vmem:[%s4 + $0x34] sm:$0xf]
        %v8165 = vld [vmem:[%s4 + $0x38] sm:$0xf]
        %v8166 = vld [vmem:[%s4 + $0x3c] sm:$0xf]
        %v8171 = vunpack.c.l.b16 %v8163
        %v8172 = vunpack.c.l.b16 %v8164
        %v8173 = vunpack.c.l.b16 %v8165
        %v8174 = vunpack.c.l.b16 %v8166
        %v8175 = vpack.c.b16 %v8172, %v8171
        %v8176 = vpack.c.b16 %v8174, %v8173
        %v8180 = vsel %vm709, %v8155, 0
        %v8183 = vsel %vm709, %v8156, 0
        %v8186 = vsel %vm709, %v8157, 0
        %v8189 = vsel %vm709, %v8158, 0
        %v8192 = vsel %vm709, %v8159, 0
        %v8195 = vsel %vm709, %v8160, 0
        %v8198 = vsel %vm709, %v8161, 0
        %v8201 = vsel %vm709, %v8162, 0
        %8203 = vmatprep.subr.bf16.mxu0 0
        %8204 = vmatpush1.bf16.msra.mxu0 %v8175
        %8205 = vmatprep.subr.bf16.mxu0 0
        %8206 = vmatpush1.bf16.msra.mxu0 %v8176
        %8207 = vmatprep.subr.bf16.mxu0 0
        %8208 = vmatpush1.bf16.msra.mxu0 0
        %8209 = vmatprep.subr.bf16.mxu0 0
        %8210 = vmatpush1.bf16.msra.mxu0 0
        %8211 = vmatprep.subr.bf16.mxu0 0
        %8212 = vmatpush1.bf16.msra.mxu0 0
        %8213 = vmatprep.subr.bf16.mxu0 0
        %8214 = vmatpush1.bf16.msra.mxu0 0
        %8215 = vmatprep.subr.bf16.mxu0 0
        %8216 = vmatpush1.bf16.msra.mxu0 0
        %8217 = vmatprep.subr.bf16.mxu0 0
        %8218 = vmatpush1.bf16.msra.mxu0 0
        %8219 = vmatprep.subr.bf16.mxu0 0
        %8220 = vmatpush1.bf16.msra.mxu0 0
        %8221 = vmatprep.subr.bf16.mxu0 0
        %8222 = vmatpush1.bf16.msra.mxu0 0
        %8223 = vmatprep.subr.bf16.mxu0 0
        %8224 = vmatpush1.bf16.msra.mxu0 0
        %8225 = vmatprep.subr.bf16.mxu0 0
        %8226 = vmatpush1.bf16.msra.mxu0 0
        %8227 = vmatprep.subr.bf16.mxu0 0
        %8228 = vmatpush1.bf16.msra.mxu0 0
        %8229 = vmatprep.subr.bf16.mxu0 0
        %8230 = vmatpush1.bf16.msra.mxu0 0
        %8231 = vmatprep.subr.bf16.mxu0 0
        %8232 = vmatpush1.bf16.msra.mxu0 0
        %8233 = vmatprep.subr.bf16.mxu0 0
        %8234 = vmatpush1.bf16.msra.mxu0 0
        %8235 = vmatprep.mubr.bf16.mxu0 0
        %8236 = vmatmul.mubr.bf16.gmra.mrb[0].mxu0 %v8180
        %v8237 = vpop.f32.mrb[0].mxu0
        %v8238 = vadd.f32 0.0, %v8237
        %v8239 = vpop.f32.mrb[0].mxu0
        %v8240 = vpop.f32.mrb[0].mxu0
        %v8241 = vadd.f32 0.0, %v8240
        %v8242 = vpop.f32.mrb[0].mxu0
        %8243 = vmatprep.mubr.bf16.mxu0 0
        %8244 = vmatmul.mubr.bf16.gmra.mrb[0].mxu0 %v8183
        %v8245 = vpop.f32.mrb[0].mxu0
        %v8246 = vadd.f32 0.0, %v8245
        %v8247 = vpop.f32.mrb[0].mxu0
        %v8248 = vpop.f32.mrb[0].mxu0
        %v8249 = vadd.f32 0.0, %v8248
        %v8250 = vpop.f32.mrb[0].mxu0
        %8251 = vmatprep.mubr.bf16.mxu0 0
        %8252 = vmatmul.mubr.bf16.gmra.mrb[0].mxu0 %v8186
        %v8253 = vpop.f32.mrb[0].mxu0
        %v8254 = vadd.f32 0.0, %v8253
        %v8255 = vpop.f32.mrb[0].mxu0
        %v8256 = vpop.f32.mrb[0].mxu0
        %v8257 = vadd.f32 0.0, %v8256
        %v8258 = vpop.f32.mrb[0].mxu0
        %8259 = vmatprep.mubr.bf16.mxu0 0
        %8260 = vmatmul.mubr.bf16.gmra.mrb[0].mxu0 %v8189
        %v8261 = vpop.f32.mrb[0].mxu0
        %v8262 = vadd.f32 0.0, %v8261
        %v8263 = vpop.f32.mrb[0].mxu0
        %v8264 = vpop.f32.mrb[0].mxu0
        %v8265 = vadd.f32 0.0, %v8264
        %v8266 = vpop.f32.mrb[0].mxu0
        %8267 = vmatprep.mubr.bf16.mxu0 0
        %8268 = vmatmul.mubr.bf16.gmra.mrb[0].mxu0 %v8192
        %v8269 = vpop.f32.mrb[0].mxu0
        %v8270 = vadd.f32 0.0, %v8269
        %v8271 = vpop.f32.mrb[0].mxu0
        %v8272 = vpop.f32.mrb[0].mxu0
        %v8273 = vadd.f32 0.0, %v8272
        %v8274 = vpop.f32.mrb[0].mxu0
        %8275 = vmatprep.mubr.bf16.mxu0 0
        %8276 = vmatmul.mubr.bf16.gmra.mrb[0].mxu0 %v8195
        %v8277 = vpop.f32.mrb[0].mxu0
        %v8278 = vadd.f32 0.0, %v8277
        %v8279 = vpop.f32.mrb[0].mxu0
        %v8280 = vpop.f32.mrb[0].mxu0
        %v8281 = vadd.f32 0.0, %v8280
        %v8282 = vpop.f32.mrb[0].mxu0
        %8283 = vmatprep.mubr.bf16.mxu0 0
        %8284 = vmatmul.mubr.bf16.gmra.mrb[0].mxu0 %v8198
        %v8285 = vpop.f32.mrb[0].mxu0
        %v8286 = vadd.f32 0.0, %v8285
        %v8287 = vpop.f32.mrb[0].mxu0
        %v8288 = vpop.f32.mrb[0].mxu0
        %v8289 = vadd.f32 0.0, %v8288
        %v8290 = vpop.f32.mrb[0].mxu0
        %8291 = vmatprep.mubr.bf16.mxu0 0
        %8292 = vmatmul.mubr.bf16.gmra.mrb[0].mxu0 %v8201
        %v8293 = vpop.f32.mrb[0].mxu0
        %v8294 = vadd.f32 0.0, %v8293
        %v8295 = vpop.f32.mrb[0].mxu0
        %v8296 = vpop.f32.mrb[0].mxu0
        %v8297 = vadd.f32 0.0, %v8296
        %v8298 = vpop.f32.mrb[0].mxu0
        %8299 = vdwg.mxu0
        %v8300 = vadd.f32 %v6379, %v8238
        %v8301 = vadd.f32 %v6380, %v8241
        %v8302 = vadd.f32 %v6381, %v8246
        %v8303 = vadd.f32 %v6382, %v8249
        %v8304 = vadd.f32 %v6383, %v8254
        %v8305 = vadd.f32 %v6384, %v8257
        %v8306 = vadd.f32 %v6385, %v8262
        %v8307 = vadd.f32 %v6386, %v8265
        %v8308 = vadd.f32 %v6387, %v8270
        %v8309 = vadd.f32 %v6388, %v8273
        %v8310 = vadd.f32 %v6389, %v8278
        %v8311 = vadd.f32 %v6390, %v8281
        %v8312 = vadd.f32 %v6391, %v8286
        %v8313 = vadd.f32 %v6392, %v8289
        %v8314 = vadd.f32 %v6393, %v8294
        %v8315 = vadd.f32 %v6394, %v8297
        %v8316 = vld [vmem:[%s5] sm:$0x1]
        %v8318 = vlaneseq
        %v8319 = vshrl.u32 %v8318, 7
        %v8320 = vsub.s32 0, %v8319
        %v8321 = vrot.slane %v8316, %v8320
        %v8323 = vadd.f32 %v8300, %v8321
        %v8324 = vadd.f32 %v8301, %v8321
        %v8325 = vadd.f32 %v8302, %v8321
        %v8326 = vadd.f32 %v8303, %v8321
        %v8327 = vadd.f32 %v8304, %v8321
        %v8328 = vadd.f32 %v8305, %v8321
        %v8329 = vadd.f32 %v8306, %v8321
        %v8330 = vadd.f32 %v8307, %v8321
        %v8331 = vadd.f32 %v8308, %v8321
        %v8332 = vadd.f32 %v8309, %v8321
        %v8333 = vadd.f32 %v8310, %v8321
        %v8334 = vadd.f32 %v8311, %v8321
        %v8335 = vadd.f32 %v8312, %v8321
        %v8336 = vadd.f32 %v8313, %v8321
        %v8337 = vadd.f32 %v8314, %v8321
        %v8338 = vadd.f32 %v8315, %v8321
        %v8339 = vld [vmem:[%s6] sm:$0x1]
        %v8340 = vld [vmem:[%s7] sm:$0x1]
        %v8341 = vld [vmem:[%s537] sm:$0xff]
        %v8342 = vld [vmem:[%s537 + $0x8] sm:$0xff]
        %v8343 = vld [vmem:[%s537 + $0x10] sm:$0xff]
        %v8344 = vld [vmem:[%s537 + $0x18] sm:$0xff]
        %v8345 = vld [vmem:[%s537 + $0x20] sm:$0xff]
        %v8346 = vld [vmem:[%s537 + $0x28] sm:$0xff]
        %v8347 = vld [vmem:[%s537 + $0x30] sm:$0xff]
        %v8348 = vld [vmem:[%s537 + $0x38] sm:$0xff]
        %v8349 = vld [vmem:[%s537 + $0x40] sm:$0xff]
        %v8350 = vld [vmem:[%s537 + $0x48] sm:$0xff]
        %v8351 = vld [vmem:[%s537 + $0x50] sm:$0xff]
        %v8352 = vld [vmem:[%s537 + $0x58] sm:$0xff]
        %v8353 = vld [vmem:[%s537 + $0x60] sm:$0xff]
        %v8354 = vld [vmem:[%s537 + $0x68] sm:$0xff]
        %v8355 = vld [vmem:[%s537 + $0x70] sm:$0xff]
        %v8356 = vld [vmem:[%s537 + $0x78] sm:$0xff]
        %v8357 = vadd.f32 %v8323, %v8341
        %v8358 = vadd.f32 %v8324, %v8342
        %v8359 = vadd.f32 %v8325, %v8343
        %v8360 = vadd.f32 %v8326, %v8344
        %v8361 = vadd.f32 %v8327, %v8345
        %v8362 = vadd.f32 %v8328, %v8346
        %v8363 = vadd.f32 %v8329, %v8347
        %v8364 = vadd.f32 %v8330, %v8348
        %v8365 = vadd.f32 %v8331, %v8349
        %v8366 = vadd.f32 %v8332, %v8350
        %v8367 = vadd.f32 %v8333, %v8351
        %v8368 = vadd.f32 %v8334, %v8352
        %v8369 = vadd.f32 %v8335, %v8353
        %v8370 = vadd.f32 %v8336, %v8354
        %v8371 = vadd.f32 %v8337, %v8355
        %v8372 = vadd.f32 %v8338, %v8356
        %8373 = vadd.xlane.f32.xlu0 %v8357
        %v8374 = vpop.xlane.xlu0 %8373
        %8375 = vadd.xlane.f32.xlu0 %v8358
        %v8376 = vpop.xlane.xlu0 %8375
        %8377 = vadd.xlane.f32.xlu0 %v8359
        %v8378 = vpop.xlane.xlu0 %8377
        %8379 = vadd.xlane.f32.xlu0 %v8360
        %v8380 = vpop.xlane.xlu0 %8379
        %8381 = vadd.xlane.f32.xlu0 %v8361
        %v8382 = vpop.xlane.xlu0 %8381
        %8383 = vadd.xlane.f32.xlu0 %v8362
        %v8384 = vpop.xlane.xlu0 %8383
        %8385 = vadd.xlane.f32.xlu0 %v8363
        %v8386 = vpop.xlane.xlu0 %8385
        %8387 = vadd.xlane.f32.xlu0 %v8364
        %v8388 = vpop.xlane.xlu0 %8387
        %8389 = vadd.xlane.f32.xlu0 %v8365
        %v8390 = vpop.xlane.xlu0 %8389
        %8391 = vadd.xlane.f32.xlu0 %v8366
        %v8392 = vpop.xlane.xlu0 %8391
        %8393 = vadd.xlane.f32.xlu0 %v8367
        %v8394 = vpop.xlane.xlu0 %8393
        %8395 = vadd.xlane.f32.xlu0 %v8368
        %v8396 = vpop.xlane.xlu0 %8395
        %8397 = vadd.xlane.f32.xlu0 %v8369
        %v8398 = vpop.xlane.xlu0 %8397
        %8399 = vadd.xlane.f32.xlu0 %v8370
        %v8400 = vpop.xlane.xlu0 %8399
        %8401 = vadd.xlane.f32.xlu0 %v8371
        %v8402 = vpop.xlane.xlu0 %8401
        %8403 = vadd.xlane.f32.xlu0 %v8372
        %v8404 = vpop.xlane.xlu0 %8403
        %v8405 = vrcp.pop 128.0
        %v8406 = vmul.f32 %v8374, %v8405
        %v8407 = vmul.f32 %v8376, %v8405
        %v8408 = vmul.f32 %v8378, %v8405
        %v8409 = vmul.f32 %v8380, %v8405
        %v8410 = vmul.f32 %v8382, %v8405
        %v8411 = vmul.f32 %v8384, %v8405
        %v8412 = vmul.f32 %v8386, %v8405
        %v8413 = vmul.f32 %v8388, %v8405
        %v8414 = vmul.f32 %v8390, %v8405
        %v8415 = vmul.f32 %v8392, %v8405
        %v8416 = vmul.f32 %v8394, %v8405
        %v8417 = vmul.f32 %v8396, %v8405
        %v8418 = vmul.f32 %v8398, %v8405
        %v8419 = vmul.f32 %v8400, %v8405
        %v8420 = vmul.f32 %v8402, %v8405
        %v8421 = vmul.f32 %v8404, %v8405
        %v8422 = vsub.f32 %v8357, %v8406
        %v8423 = vsub.f32 %v8358, %v8407
        %v8424 = vsub.f32 %v8359, %v8408
        %v8425 = vsub.f32 %v8360, %v8409
        %v8426 = vsub.f32 %v8361, %v8410
        %v8427 = vsub.f32 %v8362, %v8411
        %v8428 = vsub.f32 %v8363, %v8412
        %v8429 = vsub.f32 %v8364, %v8413
        %v8430 = vsub.f32 %v8365, %v8414
        %v8431 = vsub.f32 %v8366, %v8415
        %v8432 = vsub.f32 %v8367, %v8416
        %v8433 = vsub.f32 %v8368, %v8417
        %v8434 = vsub.f32 %v8369, %v8418
        %v8435 = vsub.f32 %v8370, %v8419
        %v8436 = vsub.f32 %v8371, %v8420
        %v8437 = vsub.f32 %v8372, %v8421
        %v8438 = vmul.f32 %v8422, %v8422
        %v8439 = vmul.f32 %v8423, %v8423
        %v8440 = vmul.f32 %v8424, %v8424
        %v8441 = vmul.f32 %v8425, %v8425
        %v8442 = vmul.f32 %v8426, %v8426
        %v8443 = vmul.f32 %v8427, %v8427
        %v8444 = vmul.f32 %v8428, %v8428
        %v8445 = vmul.f32 %v8429, %v8429
        %v8446 = vmul.f32 %v8430, %v8430
        %v8447 = vmul.f32 %v8431, %v8431
        %v8448 = vmul.f32 %v8432, %v8432
        %v8449 = vmul.f32 %v8433, %v8433
        %v8450 = vmul.f32 %v8434, %v8434
        %v8451 = vmul.f32 %v8435, %v8435
        %v8452 = vmul.f32 %v8436, %v8436
        %v8453 = vmul.f32 %v8437, %v8437
        %8454 = vadd.xlane.f32.xlu0 %v8438
        %v8455 = vpop.xlane.xlu0 %8454
        %8456 = vadd.xlane.f32.xlu0 %v8439
        %v8457 = vpop.xlane.xlu0 %8456
        %8458 = vadd.xlane.f32.xlu0 %v8440
        %v8459 = vpop.xlane.xlu0 %8458
        %8460 = vadd.xlane.f32.xlu0 %v8441
        %v8461 = vpop.xlane.xlu0 %8460
        %8462 = vadd.xlane.f32.xlu0 %v8442
        %v8463 = vpop.xlane.xlu0 %8462
        %8464 = vadd.xlane.f32.xlu0 %v8443
        %v8465 = vpop.xlane.xlu0 %8464
        %8466 = vadd.xlane.f32.xlu0 %v8444
        %v8467 = vpop.xlane.xlu0 %8466
        %8468 = vadd.xlane.f32.xlu0 %v8445
        %v8469 = vpop.xlane.xlu0 %8468
        %8470 = vadd.xlane.f32.xlu0 %v8446
        %v8471 = vpop.xlane.xlu0 %8470
        %8472 = vadd.xlane.f32.xlu0 %v8447
        %v8473 = vpop.xlane.xlu0 %8472
        %8474 = vadd.xlane.f32.xlu0 %v8448
        %v8475 = vpop.xlane.xlu0 %8474
        %8476 = vadd.xlane.f32.xlu0 %v8449
        %v8477 = vpop.xlane.xlu0 %8476
        %8478 = vadd.xlane.f32.xlu0 %v8450
        %v8479 = vpop.xlane.xlu0 %8478
        %8480 = vadd.xlane.f32.xlu0 %v8451
        %v8481 = vpop.xlane.xlu0 %8480
        %8482 = vadd.xlane.f32.xlu0 %v8452
        %v8483 = vpop.xlane.xlu0 %8482
        %8484 = vadd.xlane.f32.xlu0 %v8453
        %v8485 = vpop.xlane.xlu0 %8484
        %v8486 = vmul.f32 %v8455, %v8405
        %v8487 = vmul.f32 %v8457, %v8405
        %v8488 = vmul.f32 %v8459, %v8405
        %v8489 = vmul.f32 %v8461, %v8405
        %v8490 = vmul.f32 %v8463, %v8405
        %v8491 = vmul.f32 %v8465, %v8405
        %v8492 = vmul.f32 %v8467, %v8405
        %v8493 = vmul.f32 %v8469, %v8405
        %v8494 = vmul.f32 %v8471, %v8405
        %v8495 = vmul.f32 %v8473, %v8405
        %v8496 = vmul.f32 %v8475, %v8405
        %v8497 = vmul.f32 %v8477, %v8405
        %v8498 = vmul.f32 %v8479, %v8405
        %v8499 = vmul.f32 %v8481, %v8405
        %v8500 = vmul.f32 %v8483, %v8405
        %v8501 = vmul.f32 %v8485, %v8405
        %v8502 = vadd.f32 %v8486, 1e-05
        %v8503 = vadd.f32 %v8487, 1e-05
        %v8504 = vadd.f32 %v8488, 1e-05
        %v8505 = vadd.f32 %v8489, 1e-05
        %v8506 = vadd.f32 %v8490, 1e-05
        %v8507 = vadd.f32 %v8491, 1e-05
        %v8508 = vadd.f32 %v8492, 1e-05
        %v8509 = vadd.f32 %v8493, 1e-05
        %v8510 = vadd.f32 %v8494, 1e-05
        %v8511 = vadd.f32 %v8495, 1e-05
        %v8512 = vadd.f32 %v8496, 1e-05
        %v8513 = vadd.f32 %v8497, 1e-05
        %v8514 = vadd.f32 %v8498, 1e-05
        %v8515 = vadd.f32 %v8499, 1e-05
        %v8516 = vadd.f32 %v8500, 1e-05
        %v8517 = vadd.f32 %v8501, 1e-05
        %v8518 = vrsqrt.pop %v8502
        %v8519 = vrsqrt.pop %v8503
        %v8520 = vrsqrt.pop %v8504
        %v8521 = vrsqrt.pop %v8505
        %v8522 = vrsqrt.pop %v8506
        %v8523 = vrsqrt.pop %v8507
        %v8524 = vrsqrt.pop %v8508
        %v8525 = vrsqrt.pop %v8509
        %v8526 = vrsqrt.pop %v8510
        %v8527 = vrsqrt.pop %v8511
        %v8528 = vrsqrt.pop %v8512
        %v8529 = vrsqrt.pop %v8513
        %v8530 = vrsqrt.pop %v8514
        %v8531 = vrsqrt.pop %v8515
        %v8532 = vrsqrt.pop %v8516
        %v8533 = vrsqrt.pop %v8517
        %v8534 = vmul.f32 %v8422, %v8518
        %v8535 = vmul.f32 %v8423, %v8519
        %v8536 = vmul.f32 %v8424, %v8520
        %v8537 = vmul.f32 %v8425, %v8521
        %v8538 = vmul.f32 %v8426, %v8522
        %v8539 = vmul.f32 %v8427, %v8523
        %v8540 = vmul.f32 %v8428, %v8524
        %v8541 = vmul.f32 %v8429, %v8525
        %v8542 = vmul.f32 %v8430, %v8526
        %v8543 = vmul.f32 %v8431, %v8527
        %v8544 = vmul.f32 %v8432, %v8528
        %v8545 = vmul.f32 %v8433, %v8529
        %v8546 = vmul.f32 %v8434, %v8530
        %v8547 = vmul.f32 %v8435, %v8531
        %v8548 = vmul.f32 %v8436, %v8532
        %v8549 = vmul.f32 %v8437, %v8533
        %v8551 = vlaneseq
        %v8552 = vshrl.u32 %v8551, 7
        %v8553 = vsub.s32 0, %v8552
        %v8554 = vrot.slane %v8339, %v8553
        %v8556 = vmul.f32 %v8534, %v8554
        %v8557 = vmul.f32 %v8535, %v8554
        %v8558 = vmul.f32 %v8536, %v8554
        %v8559 = vmul.f32 %v8537, %v8554
        %v8560 = vmul.f32 %v8538, %v8554
        %v8561 = vmul.f32 %v8539, %v8554
        %v8562 = vmul.f32 %v8540, %v8554
        %v8563 = vmul.f32 %v8541, %v8554
        %v8564 = vmul.f32 %v8542, %v8554
        %v8565 = vmul.f32 %v8543, %v8554
        %v8566 = vmul.f32 %v8544, %v8554
        %v8567 = vmul.f32 %v8545, %v8554
        %v8568 = vmul.f32 %v8546, %v8554
        %v8569 = vmul.f32 %v8547, %v8554
        %v8570 = vmul.f32 %v8548, %v8554
        %v8571 = vmul.f32 %v8549, %v8554
        %v8573 = vlaneseq
        %v8574 = vshrl.u32 %v8573, 7
        %v8575 = vsub.s32 0, %v8574
        %v8576 = vrot.slane %v8340, %v8575
        %v8578 = vadd.f32 %v8556, %v8576
        %v8579 = vadd.f32 %v8557, %v8576
        %v8580 = vadd.f32 %v8558, %v8576
        %v8581 = vadd.f32 %v8559, %v8576
        %v8582 = vadd.f32 %v8560, %v8576
        %v8583 = vadd.f32 %v8561, %v8576
        %v8584 = vadd.f32 %v8562, %v8576
        %v8585 = vadd.f32 %v8563, %v8576
        %v8586 = vadd.f32 %v8564, %v8576
        %v8587 = vadd.f32 %v8565, %v8576
        %v8588 = vadd.f32 %v8566, %v8576
        %v8589 = vadd.f32 %v8567, %v8576
        %v8590 = vadd.f32 %v8568, %v8576
        %v8591 = vadd.f32 %v8569, %v8576
        %v8592 = vadd.f32 %v8570, %v8576
        %v8593 = vadd.f32 %v8571, %v8576
        %v8594 = vpack.c.bf16 %v8579, %v8578
        %v8595 = vpack.c.bf16 %v8581, %v8580
        %v8596 = vpack.c.bf16 %v8583, %v8582
        %v8597 = vpack.c.bf16 %v8585, %v8584
        %v8598 = vpack.c.bf16 %v8587, %v8586
        %v8599 = vpack.c.bf16 %v8589, %v8588
        %v8600 = vpack.c.bf16 %v8591, %v8590
        %v8601 = vpack.c.bf16 %v8593, %v8592
        %v8602 = vld [vmem:[#allocation7] sm:$0xff]
        %v8603 = vld [vmem:[#allocation7 + $0x8] sm:$0xff]
        %v8604 = vld [vmem:[#allocation7 + $0x10] sm:$0xff]
        %v8605 = vld [vmem:[#allocation7 + $0x18] sm:$0xff]
        %v8606 = vld [vmem:[#allocation7 + $0x20] sm:$0xff]
        %v8607 = vld [vmem:[#allocation7 + $0x28] sm:$0xff]
        %v8608 = vld [vmem:[#allocation7 + $0x30] sm:$0xff]
        %v8609 = vld [vmem:[#allocation7 + $0x38] sm:$0xff]
        %v8610 = vld [vmem:[#allocation7 + $0x40] sm:$0xff]
        %v8611 = vld [vmem:[#allocation7 + $0x48] sm:$0xff]
        %v8612 = vld [vmem:[#allocation7 + $0x50] sm:$0xff]
        %v8613 = vld [vmem:[#allocation7 + $0x58] sm:$0xff]
        %v8614 = vld [vmem:[#allocation7 + $0x60] sm:$0xff]
        %v8615 = vld [vmem:[#allocation7 + $0x68] sm:$0xff]
        %v8616 = vld [vmem:[#allocation7 + $0x70] sm:$0xff]
        %v8617 = vld [vmem:[#allocation7 + $0x78] sm:$0xff]
        %v8618 = vld [vmem:[#allocation7 + $0x80] sm:$0xff]
        %v8619 = vld [vmem:[#allocation7 + $0x88] sm:$0xff]
        %v8620 = vld [vmem:[#allocation7 + $0x90] sm:$0xff]
        %v8621 = vld [vmem:[#allocation7 + $0x98] sm:$0xff]
        %v8622 = vld [vmem:[#allocation7 + $0xa0] sm:$0xff]
        %v8623 = vld [vmem:[#allocation7 + $0xa8] sm:$0xff]
        %v8624 = vld [vmem:[#allocation7 + $0xb0] sm:$0xff]
        %v8625 = vld [vmem:[#allocation7 + $0xb8] sm:$0xff]
        %v8626 = vld [vmem:[#allocation7 + $0xc0] sm:$0xff]
        %v8627 = vld [vmem:[#allocation7 + $0xc8] sm:$0xff]
        %v8628 = vld [vmem:[#allocation7 + $0xd0] sm:$0xff]
        %v8629 = vld [vmem:[#allocation7 + $0xd8] sm:$0xff]
        %v8630 = vld [vmem:[#allocation7 + $0xe0] sm:$0xff]
        %v8631 = vld [vmem:[#allocation7 + $0xe8] sm:$0xff]
        %v8632 = vld [vmem:[#allocation7 + $0xf0] sm:$0xff]
        %v8633 = vld [vmem:[#allocation7 + $0xf8] sm:$0xff]
        %v8634 = vld [vmem:[%s9] sm:$0xf]
        %v8636 = vlaneseq
        %v8637 = vshrl.u32 %v8636, 7
        %v8638 = vsub.s32 0, %v8637
        %v8639 = vrot.slane %v8634, %v8638
        %v8640 = vlaneseq
        %v8641 = vshrl.u32 %v8640, 7
        %v8642 = vsub.s32 1, %v8641
        %v8643 = vrot.slane %v8634, %v8642
        %v8644 = vlaneseq
        %v8645 = vshrl.u32 %v8644, 7
        %v8646 = vsub.s32 2, %v8645
        %v8647 = vrot.slane %v8634, %v8646
        %v8648 = vlaneseq
        %v8649 = vshrl.u32 %v8648, 7
        %v8650 = vsub.s32 3, %v8649
        %v8651 = vrot.slane %v8634, %v8650
        %v8688 = vunpack.c.l.b16 %v8602
        %v8689 = vunpack.c.h.b16 %v8602
        %v8690 = vunpack.c.l.b16 %v8603
        %v8691 = vunpack.c.h.b16 %v8603
        %v8692 = vunpack.c.l.b16 %v8604
        %v8693 = vunpack.c.h.b16 %v8604
        %v8694 = vunpack.c.l.b16 %v8605
        %v8695 = vunpack.c.h.b16 %v8605
        %v8696 = vunpack.c.l.b16 %v8606
        %v8697 = vunpack.c.h.b16 %v8606
        %v8698 = vunpack.c.l.b16 %v8607
        %v8699 = vunpack.c.h.b16 %v8607
        %v8700 = vunpack.c.l.b16 %v8608
        %v8701 = vunpack.c.h.b16 %v8608
        %v8702 = vunpack.c.l.b16 %v8609
        %v8703 = vunpack.c.h.b16 %v8609
        %v8704 = vunpack.c.l.b16 %v8610
        %v8705 = vunpack.c.h.b16 %v8610
        %v8706 = vunpack.c.l.b16 %v8611
        %v8707 = vunpack.c.h.b16 %v8611
        %v8708 = vunpack.c.l.b16 %v8612
        %v8709 = vunpack.c.h.b16 %v8612
        %v8710 = vunpack.c.l.b16 %v8613
        %v8711 = vunpack.c.h.b16 %v8613
        %v8712 = vunpack.c.l.b16 %v8614
        %v8713 = vunpack.c.h.b16 %v8614
        %v8714 = vunpack.c.l.b16 %v8615
        %v8715 = vunpack.c.h.b16 %v8615
        %v8716 = vunpack.c.l.b16 %v8616
        %v8717 = vunpack.c.h.b16 %v8616
        %v8718 = vunpack.c.l.b16 %v8617
        %v8719 = vunpack.c.h.b16 %v8617
        %v8720 = vunpack.c.l.b16 %v8618
        %v8721 = vunpack.c.h.b16 %v8618
        %v8722 = vunpack.c.l.b16 %v8619
        %v8723 = vunpack.c.h.b16 %v8619
        %v8724 = vunpack.c.l.b16 %v8620
        %v8725 = vunpack.c.h.b16 %v8620
        %v8726 = vunpack.c.l.b16 %v8621
        %v8727 = vunpack.c.h.b16 %v8621
        %v8728 = vunpack.c.l.b16 %v8622
        %v8729 = vunpack.c.h.b16 %v8622
        %v8730 = vunpack.c.l.b16 %v8623
        %v8731 = vunpack.c.h.b16 %v8623
        %v8732 = vunpack.c.l.b16 %v8624
        %v8733 = vunpack.c.h.b16 %v8624
        %v8734 = vunpack.c.l.b16 %v8625
        %v8735 = vunpack.c.h.b16 %v8625
        %v8736 = vunpack.c.l.b16 %v8626
        %v8737 = vunpack.c.h.b16 %v8626
        %v8738 = vunpack.c.l.b16 %v8627
        %v8739 = vunpack.c.h.b16 %v8627
        %v8740 = vunpack.c.l.b16 %v8628
        %v8741 = vunpack.c.h.b16 %v8628
        %v8742 = vunpack.c.l.b16 %v8629
        %v8743 = vunpack.c.h.b16 %v8629
        %v8744 = vunpack.c.l.b16 %v8630
        %v8745 = vunpack.c.h.b16 %v8630
        %v8746 = vunpack.c.l.b16 %v8631
        %v8747 = vunpack.c.h.b16 %v8631
        %v8748 = vunpack.c.l.b16 %v8632
        %v8749 = vunpack.c.h.b16 %v8632
        %v8750 = vunpack.c.l.b16 %v8633
        %v8751 = vunpack.c.h.b16 %v8633
        %v8752 = vpack.c.b16 %v8692, %v8688
        %v8753 = vpack.c.b16 %v8693, %v8689
        %v8754 = vpack.c.b16 %v8694, %v8690
        %v8755 = vpack.c.b16 %v8695, %v8691
        %v8756 = vpack.c.b16 %v8700, %v8696
        %v8757 = vpack.c.b16 %v8701, %v8697
        %v8758 = vpack.c.b16 %v8702, %v8698
        %v8759 = vpack.c.b16 %v8703, %v8699
        %v8760 = vpack.c.b16 %v8708, %v8704
        %v8761 = vpack.c.b16 %v8709, %v8705
        %v8762 = vpack.c.b16 %v8710, %v8706
        %v8763 = vpack.c.b16 %v8711, %v8707
        %v8764 = vpack.c.b16 %v8716, %v8712
        %v8765 = vpack.c.b16 %v8717, %v8713
        %v8766 = vpack.c.b16 %v8718, %v8714
        %v8767 = vpack.c.b16 %v8719, %v8715
        %v8768 = vpack.c.b16 %v8724, %v8720
        %v8769 = vpack.c.b16 %v8725, %v8721
        %v8770 = vpack.c.b16 %v8726, %v8722
        %v8771 = vpack.c.b16 %v8727, %v8723
        %v8772 = vpack.c.b16 %v8732, %v8728
        %v8773 = vpack.c.b16 %v8733, %v8729
        %v8774 = vpack.c.b16 %v8734, %v8730
        %v8775 = vpack.c.b16 %v8735, %v8731
        %v8776 = vpack.c.b16 %v8740, %v8736
        %v8777 = vpack.c.b16 %v8741, %v8737
        %v8778 = vpack.c.b16 %v8742, %v8738
        %v8779 = vpack.c.b16 %v8743, %v8739
        %v8780 = vpack.c.b16 %v8748, %v8744
        %v8781 = vpack.c.b16 %v8749, %v8745
        %v8782 = vpack.c.b16 %v8750, %v8746
        %v8783 = vpack.c.b16 %v8751, %v8747
        %8816 = vmatprep.subr.bf16.mxu0 %v8753
        %8817 = vmatpush1.bf16.msra.mxu0 %v8752
        %8818 = vmatprep.subr.bf16.mxu0 %v8757
        %8819 = vmatpush1.bf16.msra.mxu0 %v8756
        %8820 = vmatprep.subr.bf16.mxu0 %v8761
        %8821 = vmatpush1.bf16.msra.mxu0 %v8760
        %8822 = vmatprep.subr.bf16.mxu0 %v8765
        %8823 = vmatpush1.bf16.msra.mxu0 %v8764
        %8824 = vmatprep.subr.bf16.mxu0 %v8769
        %8825 = vmatpush1.bf16.msra.mxu0 %v8768
        %8826 = vmatprep.subr.bf16.mxu0 %v8773
        %8827 = vmatpush1.bf16.msra.mxu0 %v8772
        %8828 = vmatprep.subr.bf16.mxu0 %v8777
        %8829 = vmatpush1.bf16.msra.mxu0 %v8776
        %8830 = vmatprep.subr.bf16.mxu0 %v8781
        %8831 = vmatpush1.bf16.msra.mxu0 %v8780
        %8832 = vmatprep.subr.bf16.mxu0 0
        %8833 = vmatpush1.bf16.msra.mxu0 0
        %8834 = vmatprep.subr.bf16.mxu0 0
        %8835 = vmatpush1.bf16.msra.mxu0 0
        %8836 = vmatprep.subr.bf16.mxu0 0
        %8837 = vmatpush1.bf16.msra.mxu0 0
        %8838 = vmatprep.subr.bf16.mxu0 0
        %8839 = vmatpush1.bf16.msra.mxu0 0
        %8840 = vmatprep.subr.bf16.mxu0 0
        %8841 = vmatpush1.bf16.msra.mxu0 0
        %8842 = vmatprep.subr.bf16.mxu0 0
        %8843 = vmatpush1.bf16.msra.mxu0 0
        %8844 = vmatprep.subr.bf16.mxu0 0
        %8845 = vmatpush1.bf16.msra.mxu0 0
        %8846 = vmatprep.subr.bf16.mxu0 0
        %8847 = vmatpush1.bf16.msra.mxu0 0
        %8848 = vmatprep.mubr.bf16.mxu0 0
        %8849 = vmatmul.mubr.bf16.gmra.mrb[0].mxu0 %v8594
        %v8850 = vpop.f32.mrb[0].mxu0
        %v8851 = vadd.f32 %v8639, %v8850
        %v8852 = vpop.f32.mrb[0].mxu0
        %v8853 = vadd.f32 %v8643, %v8852
        %v8854 = vpop.f32.mrb[0].mxu0
        %v8855 = vadd.f32 %v8639, %v8854
        %v8856 = vpop.f32.mrb[0].mxu0
        %v8857 = vadd.f32 %v8643, %v8856
        %8858 = vmatprep.mubr.bf16.mxu0 0
        %8859 = vmatmul.mubr.bf16.gmra.mrb[0].mxu0 %v8595
        %v8860 = vpop.f32.mrb[0].mxu0
        %v8861 = vadd.f32 %v8639, %v8860
        %v8862 = vpop.f32.mrb[0].mxu0
        %v8863 = vadd.f32 %v8643, %v8862
        %v8864 = vpop.f32.mrb[0].mxu0
        %v8865 = vadd.f32 %v8639, %v8864
        %v8866 = vpop.f32.mrb[0].mxu0
        %v8867 = vadd.f32 %v8643, %v8866
        %8868 = vmatprep.mubr.bf16.mxu0 0
        %8869 = vmatmul.mubr.bf16.gmra.mrb[0].mxu0 %v8596
        %v8870 = vpop.f32.mrb[0].mxu0
        %v8871 = vadd.f32 %v8639, %v8870
        %v8872 = vpop.f32.mrb[0].mxu0
        %v8873 = vadd.f32 %v8643, %v8872
        %v8874 = vpop.f32.mrb[0].mxu0
        %v8875 = vadd.f32 %v8639, %v8874
        %v8876 = vpop.f32.mrb[0].mxu0
        %v8877 = vadd.f32 %v8643, %v8876
        %8878 = vmatprep.mubr.bf16.mxu0 0
        %8879 = vmatmul.mubr.bf16.gmra.mrb[0].mxu0 %v8597
        %v8880 = vpop.f32.mrb[0].mxu0
        %v8881 = vadd.f32 %v8639, %v8880
        %v8882 = vpop.f32.mrb[0].mxu0
        %v8883 = vadd.f32 %v8643, %v8882
        %v8884 = vpop.f32.mrb[0].mxu0
        %v8885 = vadd.f32 %v8639, %v8884
        %v8886 = vpop.f32.mrb[0].mxu0
        %v8887 = vadd.f32 %v8643, %v8886
        %8888 = vmatprep.mubr.bf16.mxu0 0
        %8889 = vmatmul.mubr.bf16.gmra.mrb[0].mxu0 %v8598
        %v8890 = vpop.f32.mrb[0].mxu0
        %v8891 = vadd.f32 %v8639, %v8890
        %v8892 = vpop.f32.mrb[0].mxu0
        %v8893 = vadd.f32 %v8643, %v8892
        %v8894 = vpop.f32.mrb[0].mxu0
        %v8895 = vadd.f32 %v8639, %v8894
        %v8896 = vpop.f32.mrb[0].mxu0
        %v8897 = vadd.f32 %v8643, %v8896
        %8898 = vmatprep.mubr.bf16.mxu0 0
        %8899 = vmatmul.mubr.bf16.gmra.mrb[0].mxu0 %v8599
        %v8900 = vpop.f32.mrb[0].mxu0
        %v8901 = vadd.f32 %v8639, %v8900
        %v8902 = vpop.f32.mrb[0].mxu0
        %v8903 = vadd.f32 %v8643, %v8902
        %v8904 = vpop.f32.mrb[0].mxu0
        %v8905 = vadd.f32 %v8639, %v8904
        %v8906 = vpop.f32.mrb[0].mxu0
        %v8907 = vadd.f32 %v8643, %v8906
        %8908 = vmatprep.mubr.bf16.mxu0 0
        %8909 = vmatmul.mubr.bf16.gmra.mrb[0].mxu0 %v8600
        %v8910 = vpop.f32.mrb[0].mxu0
        %v8911 = vadd.f32 %v8639, %v8910
        %v8912 = vpop.f32.mrb[0].mxu0
        %v8913 = vadd.f32 %v8643, %v8912
        %v8914 = vpop.f32.mrb[0].mxu0
        %v8915 = vadd.f32 %v8639, %v8914
        %v8916 = vpop.f32.mrb[0].mxu0
        %v8917 = vadd.f32 %v8643, %v8916
        %8918 = vmatprep.mubr.bf16.mxu0 0
        %8919 = vmatmul.mubr.bf16.gmra.mrb[0].mxu0 %v8601
        %v8920 = vpop.f32.mrb[0].mxu0
        %v8921 = vadd.f32 %v8639, %v8920
        %v8922 = vpop.f32.mrb[0].mxu0
        %v8923 = vadd.f32 %v8643, %v8922
        %v8924 = vpop.f32.mrb[0].mxu0
        %v8925 = vadd.f32 %v8639, %v8924
        %v8926 = vpop.f32.mrb[0].mxu0
        %v8927 = vadd.f32 %v8643, %v8926
        %8928 = vdwg.mxu0
        %8929 = vmatprep.subr.bf16.mxu0 %v8755
        %8930 = vmatpush1.bf16.msra.mxu0 %v8754
        %8931 = vmatprep.subr.bf16.mxu0 %v8759
        %8932 = vmatpush1.bf16.msra.mxu0 %v8758
        %8933 = vmatprep.subr.bf16.mxu0 %v8763
        %8934 = vmatpush1.bf16.msra.mxu0 %v8762
        %8935 = vmatprep.subr.bf16.mxu0 %v8767
        %8936 = vmatpush1.bf16.msra.mxu0 %v8766
        %8937 = vmatprep.subr.bf16.mxu0 %v8771
        %8938 = vmatpush1.bf16.msra.mxu0 %v8770
        %8939 = vmatprep.subr.bf16.mxu0 %v8775
        %8940 = vmatpush1.bf16.msra.mxu0 %v8774
        %8941 = vmatprep.subr.bf16.mxu0 %v8779
        %8942 = vmatpush1.bf16.msra.mxu0 %v8778
        %8943 = vmatprep.subr.bf16.mxu0 %v8783
        %8944 = vmatpush1.bf16.msra.mxu0 %v8782
        %8945 = vmatprep.subr.bf16.mxu0 0
        %8946 = vmatpush1.bf16.msra.mxu0 0
        %8947 = vmatprep.subr.bf16.mxu0 0
        %8948 = vmatpush1.bf16.msra.mxu0 0
        %8949 = vmatprep.subr.bf16.mxu0 0
        %8950 = vmatpush1.bf16.msra.mxu0 0
        %8951 = vmatprep.subr.bf16.mxu0 0
        %8952 = vmatpush1.bf16.msra.mxu0 0
        %8953 = vmatprep.subr.bf16.mxu0 0
        %8954 = vmatpush1.bf16.msra.mxu0 0
        %8955 = vmatprep.subr.bf16.mxu0 0
        %8956 = vmatpush1.bf16.msra.mxu0 0
        %8957 = vmatprep.subr.bf16.mxu0 0
        %8958 = vmatpush1.bf16.msra.mxu0 0
        %8959 = vmatprep.subr.bf16.mxu0 0
        %8960 = vmatpush1.bf16.msra.mxu0 0
        %8961 = vmatprep.mubr.bf16.mxu0 0
        %8962 = vmatmul.mubr.bf16.gmra.mrb[0].mxu0 %v8594
        %v8963 = vpop.f32.mrb[0].mxu0
        %v8964 = vadd.f32 %v8647, %v8963
        %v8965 = vpop.f32.mrb[0].mxu0
        %v8966 = vadd.f32 %v8651, %v8965
        %v8967 = vpop.f32.mrb[0].mxu0
        %v8968 = vadd.f32 %v8647, %v8967
        %v8969 = vpop.f32.mrb[0].mxu0
        %v8970 = vadd.f32 %v8651, %v8969
        %8971 = vmatprep.mubr.bf16.mxu0 0
        %8972 = vmatmul.mubr.bf16.gmra.mrb[0].mxu0 %v8595
        %v8973 = vpop.f32.mrb[0].mxu0
        %v8974 = vadd.f32 %v8647, %v8973
        %v8975 = vpop.f32.mrb[0].mxu0
        %v8976 = vadd.f32 %v8651, %v8975
        %v8977 = vpop.f32.mrb[0].mxu0
        %v8978 = vadd.f32 %v8647, %v8977
        %v8979 = vpop.f32.mrb[0].mxu0
        %v8980 = vadd.f32 %v8651, %v8979
        %8981 = vmatprep.mubr.bf16.mxu0 0
        %8982 = vmatmul.mubr.bf16.gmra.mrb[0].mxu0 %v8596
        %v8983 = vpop.f32.mrb[0].mxu0
        %v8984 = vadd.f32 %v8647, %v8983
        %v8985 = vpop.f32.mrb[0].mxu0
        %v8986 = vadd.f32 %v8651, %v8985
        %v8987 = vpop.f32.mrb[0].mxu0
        %v8988 = vadd.f32 %v8647, %v8987
        %v8989 = vpop.f32.mrb[0].mxu0
        %v8990 = vadd.f32 %v8651, %v8989
        %8991 = vmatprep.mubr.bf16.mxu0 0
        %8992 = vmatmul.mubr.bf16.gmra.mrb[0].mxu0 %v8597
        %v8993 = vpop.f32.mrb[0].mxu0
        %v8994 = vadd.f32 %v8647, %v8993
        %v8995 = vpop.f32.mrb[0].mxu0
        %v8996 = vadd.f32 %v8651, %v8995
        %v8997 = vpop.f32.mrb[0].mxu0
        %v8998 = vadd.f32 %v8647, %v8997
        %v8999 = vpop.f32.mrb[0].mxu0
        %v9000 = vadd.f32 %v8651, %v8999
        %9001 = vmatprep.mubr.bf16.mxu0 0
        %9002 = vmatmul.mubr.bf16.gmra.mrb[0].mxu0 %v8598
        %v9003 = vpop.f32.mrb[0].mxu0
        %v9004 = vadd.f32 %v8647, %v9003
        %v9005 = vpop.f32.mrb[0].mxu0
        %v9006 = vadd.f32 %v8651, %v9005
        %v9007 = vpop.f32.mrb[0].mxu0
        %v9008 = vadd.f32 %v8647, %v9007
        %v9009 = vpop.f32.mrb[0].mxu0
        %v9010 = vadd.f32 %v8651, %v9009
        %9011 = vmatprep.mubr.bf16.mxu0 0
        %9012 = vmatmul.mubr.bf16.gmra.mrb[0].mxu0 %v8599
        %v9013 = vpop.f32.mrb[0].mxu0
        %v9014 = vadd.f32 %v8647, %v9013
        %v9015 = vpop.f32.mrb[0].mxu0
        %v9016 = vadd.f32 %v8651, %v9015
        %v9017 = vpop.f32.mrb[0].mxu0
        %v9018 = vadd.f32 %v8647, %v9017
        %v9019 = vpop.f32.mrb[0].mxu0
        %v9020 = vadd.f32 %v8651, %v9019
        %9021 = vmatprep.mubr.bf16.mxu0 0
        %9022 = vmatmul.mubr.bf16.gmra.mrb[0].mxu0 %v8600
        %v9023 = vpop.f32.mrb[0].mxu0
        %v9024 = vadd.f32 %v8647, %v9023
        %v9025 = vpop.f32.mrb[0].mxu0
        %v9026 = vadd.f32 %v8651, %v9025
        %v9027 = vpop.f32.mrb[0].mxu0
        %v9028 = vadd.f32 %v8647, %v9027
        %v9029 = vpop.f32.mrb[0].mxu0
        %v9030 = vadd.f32 %v8651, %v9029
        %9031 = vmatprep.mubr.bf16.mxu0 0
        %9032 = vmatmul.mubr.bf16.gmra.mrb[0].mxu0 %v8601
        %v9033 = vpop.f32.mrb[0].mxu0
        %v9034 = vadd.f32 %v8647, %v9033
        %v9035 = vpop.f32.mrb[0].mxu0
        %v9036 = vadd.f32 %v8651, %v9035
        %v9037 = vpop.f32.mrb[0].mxu0
        %v9038 = vadd.f32 %v8647, %v9037
        %v9039 = vpop.f32.mrb[0].mxu0
        %v9040 = vadd.f32 %v8651, %v9039
        %9041 = vdwg.mxu0
        %v9042 = vmax.f32 %v8851, 0.0
        %v9043 = vmax.f32 %v8853, 0.0
        %v9044 = vmax.f32 %v8964, 0.0
        %v9045 = vmax.f32 %v8966, 0.0
        %v9046 = vmax.f32 %v8855, 0.0
        %v9047 = vmax.f32 %v8857, 0.0
        %v9048 = vmax.f32 %v8968, 0.0
        %v9049 = vmax.f32 %v8970, 0.0
        %v9050 = vmax.f32 %v8861, 0.0
        %v9051 = vmax.f32 %v8863, 0.0
        %v9052 = vmax.f32 %v8974, 0.0
        %v9053 = vmax.f32 %v8976, 0.0
        %v9054 = vmax.f32 %v8865, 0.0
        %v9055 = vmax.f32 %v8867, 0.0
        %v9056 = vmax.f32 %v8978, 0.0
        %v9057 = vmax.f32 %v8980, 0.0
        %v9058 = vmax.f32 %v8871, 0.0
        %v9059 = vmax.f32 %v8873, 0.0
        %v9060 = vmax.f32 %v8984, 0.0
        %v9061 = vmax.f32 %v8986, 0.0
        %v9062 = vmax.f32 %v8875, 0.0
        %v9063 = vmax.f32 %v8877, 0.0
        %v9064 = vmax.f32 %v8988, 0.0
        %v9065 = vmax.f32 %v8990, 0.0
        %v9066 = vmax.f32 %v8881, 0.0
        %v9067 = vmax.f32 %v8883, 0.0
        %v9068 = vmax.f32 %v8994, 0.0
        %v9069 = vmax.f32 %v8996, 0.0
        %v9070 = vmax.f32 %v8885, 0.0
        %v9071 = vmax.f32 %v8887, 0.0
        %v9072 = vmax.f32 %v8998, 0.0
        %v9073 = vmax.f32 %v9000, 0.0
        %v9074 = vmax.f32 %v8891, 0.0
        %v9075 = vmax.f32 %v8893, 0.0
        %v9076 = vmax.f32 %v9004, 0.0
        %v9077 = vmax.f32 %v9006, 0.0
        %v9078 = vmax.f32 %v8895, 0.0
        %v9079 = vmax.f32 %v8897, 0.0
        %v9080 = vmax.f32 %v9008, 0.0
        %v9081 = vmax.f32 %v9010, 0.0
        %v9082 = vmax.f32 %v8901, 0.0
        %v9083 = vmax.f32 %v8903, 0.0
        %v9084 = vmax.f32 %v9014, 0.0
        %v9085 = vmax.f32 %v9016, 0.0
        %v9086 = vmax.f32 %v8905, 0.0
        %v9087 = vmax.f32 %v8907, 0.0
        %v9088 = vmax.f32 %v9018, 0.0
        %v9089 = vmax.f32 %v9020, 0.0
        %v9090 = vmax.f32 %v8911, 0.0
        %v9091 = vmax.f32 %v8913, 0.0
        %v9092 = vmax.f32 %v9024, 0.0
        %v9093 = vmax.f32 %v9026, 0.0
        %v9094 = vmax.f32 %v8915, 0.0
        %v9095 = vmax.f32 %v8917, 0.0
        %v9096 = vmax.f32 %v9028, 0.0
        %v9097 = vmax.f32 %v9030, 0.0
        %v9098 = vmax.f32 %v8921, 0.0
        %v9099 = vmax.f32 %v8923, 0.0
        %v9100 = vmax.f32 %v9034, 0.0
        %v9101 = vmax.f32 %v9036, 0.0
        %v9102 = vmax.f32 %v8925, 0.0
        %v9103 = vmax.f32 %v8927, 0.0
        %v9104 = vmax.f32 %v9038, 0.0
        %v9105 = vmax.f32 %v9040, 0.0
        %v9106 = vpack.c.bf16 %v9046, %v9042
        %v9107 = vpack.c.bf16 %v9047, %v9043
        %v9108 = vpack.c.bf16 %v9048, %v9044
        %v9109 = vpack.c.bf16 %v9049, %v9045
        %v9110 = vpack.c.bf16 %v9054, %v9050
        %v9111 = vpack.c.bf16 %v9055, %v9051
        %v9112 = vpack.c.bf16 %v9056, %v9052
        %v9113 = vpack.c.bf16 %v9057, %v9053
        %v9114 = vpack.c.bf16 %v9062, %v9058
        %v9115 = vpack.c.bf16 %v9063, %v9059
        %v9116 = vpack.c.bf16 %v9064, %v9060
        %v9117 = vpack.c.bf16 %v9065, %v9061
        %v9118 = vpack.c.bf16 %v9070, %v9066
        %v9119 = vpack.c.bf16 %v9071, %v9067
        %v9120 = vpack.c.bf16 %v9072, %v9068
        %v9121 = vpack.c.bf16 %v9073, %v9069
        %v9122 = vpack.c.bf16 %v9078, %v9074
        %v9123 = vpack.c.bf16 %v9079, %v9075
        %v9124 = vpack.c.bf16 %v9080, %v9076
        %v9125 = vpack.c.bf16 %v9081, %v9077
        %v9126 = vpack.c.bf16 %v9086, %v9082
        %v9127 = vpack.c.bf16 %v9087, %v9083
        %v9128 = vpack.c.bf16 %v9088, %v9084
        %v9129 = vpack.c.bf16 %v9089, %v9085
        %v9130 = vpack.c.bf16 %v9094, %v9090
        %v9131 = vpack.c.bf16 %v9095, %v9091
        %v9132 = vpack.c.bf16 %v9096, %v9092
        %v9133 = vpack.c.bf16 %v9097, %v9093
        %v9134 = vpack.c.bf16 %v9102, %v9098
        %v9135 = vpack.c.bf16 %v9103, %v9099
        %v9136 = vpack.c.bf16 %v9104, %v9100
        %v9137 = vpack.c.bf16 %v9105, %v9101
        %v9138 = vld [vmem:[#allocation8] sm:$0xf]
        %v9139 = vld [vmem:[#allocation8 + $0x4] sm:$0xf]
        %v9140 = vld [vmem:[#allocation8 + $0x8] sm:$0xf]
        %v9141 = vld [vmem:[#allocation8 + $0xc] sm:$0xf]
        %v9142 = vld [vmem:[#allocation8 + $0x10] sm:$0xf]
        %v9143 = vld [vmem:[#allocation8 + $0x14] sm:$0xf]
        %v9144 = vld [vmem:[#allocation8 + $0x18] sm:$0xf]
        %v9145 = vld [vmem:[#allocation8 + $0x1c] sm:$0xf]
        %v9146 = vld [vmem:[#allocation8 + $0x20] sm:$0xf]
        %v9147 = vld [vmem:[#allocation8 + $0x24] sm:$0xf]
        %v9148 = vld [vmem:[#allocation8 + $0x28] sm:$0xf]
        %v9149 = vld [vmem:[#allocation8 + $0x2c] sm:$0xf]
        %v9150 = vld [vmem:[#allocation8 + $0x30] sm:$0xf]
        %v9151 = vld [vmem:[#allocation8 + $0x34] sm:$0xf]
        %v9152 = vld [vmem:[#allocation8 + $0x38] sm:$0xf]
        %v9153 = vld [vmem:[#allocation8 + $0x3c] sm:$0xf]
        %v9154 = vld [vmem:[#allocation8 + $0x40] sm:$0xf]
        %v9155 = vld [vmem:[#allocation8 + $0x44] sm:$0xf]
        %v9156 = vld [vmem:[#allocation8 + $0x48] sm:$0xf]
        %v9157 = vld [vmem:[#allocation8 + $0x4c] sm:$0xf]
        %v9158 = vld [vmem:[#allocation8 + $0x50] sm:$0xf]
        %v9159 = vld [vmem:[#allocation8 + $0x54] sm:$0xf]
        %v9160 = vld [vmem:[#allocation8 + $0x58] sm:$0xf]
        %v9161 = vld [vmem:[#allocation8 + $0x5c] sm:$0xf]
        %v9162 = vld [vmem:[#allocation8 + $0x60] sm:$0xf]
        %v9163 = vld [vmem:[#allocation8 + $0x64] sm:$0xf]
        %v9164 = vld [vmem:[#allocation8 + $0x68] sm:$0xf]
        %v9165 = vld [vmem:[#allocation8 + $0x6c] sm:$0xf]
        %v9166 = vld [vmem:[#allocation8 + $0x70] sm:$0xf]
        %v9167 = vld [vmem:[#allocation8 + $0x74] sm:$0xf]
        %v9168 = vld [vmem:[#allocation8 + $0x78] sm:$0xf]
        %v9169 = vld [vmem:[#allocation8 + $0x7c] sm:$0xf]
        %v9170 = vld [vmem:[#allocation8 + $0x80] sm:$0xf]
        %v9171 = vld [vmem:[#allocation8 + $0x84] sm:$0xf]
        %v9172 = vld [vmem:[#allocation8 + $0x88] sm:$0xf]
        %v9173 = vld [vmem:[#allocation8 + $0x8c] sm:$0xf]
        %v9174 = vld [vmem:[#allocation8 + $0x90] sm:$0xf]
        %v9175 = vld [vmem:[#allocation8 + $0x94] sm:$0xf]
        %v9176 = vld [vmem:[#allocation8 + $0x98] sm:$0xf]
        %v9177 = vld [vmem:[#allocation8 + $0x9c] sm:$0xf]
        %v9178 = vld [vmem:[#allocation8 + $0xa0] sm:$0xf]
        %v9179 = vld [vmem:[#allocation8 + $0xa4] sm:$0xf]
        %v9180 = vld [vmem:[#allocation8 + $0xa8] sm:$0xf]
        %v9181 = vld [vmem:[#allocation8 + $0xac] sm:$0xf]
        %v9182 = vld [vmem:[#allocation8 + $0xb0] sm:$0xf]
        %v9183 = vld [vmem:[#allocation8 + $0xb4] sm:$0xf]
        %v9184 = vld [vmem:[#allocation8 + $0xb8] sm:$0xf]
        %v9185 = vld [vmem:[#allocation8 + $0xbc] sm:$0xf]
        %v9186 = vld [vmem:[#allocation8 + $0xc0] sm:$0xf]
        %v9187 = vld [vmem:[#allocation8 + $0xc4] sm:$0xf]
        %v9188 = vld [vmem:[#allocation8 + $0xc8] sm:$0xf]
        %v9189 = vld [vmem:[#allocation8 + $0xcc] sm:$0xf]
        %v9190 = vld [vmem:[#allocation8 + $0xd0] sm:$0xf]
        %v9191 = vld [vmem:[#allocation8 + $0xd4] sm:$0xf]
        %v9192 = vld [vmem:[#allocation8 + $0xd8] sm:$0xf]
        %v9193 = vld [vmem:[#allocation8 + $0xdc] sm:$0xf]
        %v9194 = vld [vmem:[#allocation8 + $0xe0] sm:$0xf]
        %v9195 = vld [vmem:[#allocation8 + $0xe4] sm:$0xf]
        %v9196 = vld [vmem:[#allocation8 + $0xe8] sm:$0xf]
        %v9197 = vld [vmem:[#allocation8 + $0xec] sm:$0xf]
        %v9198 = vld [vmem:[#allocation8 + $0xf0] sm:$0xf]
        %v9199 = vld [vmem:[#allocation8 + $0xf4] sm:$0xf]
        %v9200 = vld [vmem:[#allocation8 + $0xf8] sm:$0xf]
        %v9201 = vld [vmem:[#allocation8 + $0xfc] sm:$0xf]
        %v9202 = vld [vmem:[%s11] sm:$0x1]
        %v9204 = vlaneseq
        %v9205 = vshrl.u32 %v9204, 7
        %v9206 = vsub.s32 0, %v9205
        %v9207 = vrot.slane %v9202, %v9206
        %v9273 = vunpack.c.l.b16 %v9138
        %v9274 = vunpack.c.l.b16 %v9139
        %v9275 = vunpack.c.l.b16 %v9140
        %v9276 = vunpack.c.l.b16 %v9141
        %v9277 = vunpack.c.l.b16 %v9142
        %v9278 = vunpack.c.l.b16 %v9143
        %v9279 = vunpack.c.l.b16 %v9144
        %v9280 = vunpack.c.l.b16 %v9145
        %v9281 = vunpack.c.l.b16 %v9146
        %v9282 = vunpack.c.l.b16 %v9147
        %v9283 = vunpack.c.l.b16 %v9148
        %v9284 = vunpack.c.l.b16 %v9149
        %v9285 = vunpack.c.l.b16 %v9150
        %v9286 = vunpack.c.l.b16 %v9151
        %v9287 = vunpack.c.l.b16 %v9152
        %v9288 = vunpack.c.l.b16 %v9153
        %v9289 = vunpack.c.l.b16 %v9154
        %v9290 = vunpack.c.l.b16 %v9155
        %v9291 = vunpack.c.l.b16 %v9156
        %v9292 = vunpack.c.l.b16 %v9157
        %v9293 = vunpack.c.l.b16 %v9158
        %v9294 = vunpack.c.l.b16 %v9159
        %v9295 = vunpack.c.l.b16 %v9160
        %v9296 = vunpack.c.l.b16 %v9161
        %v9297 = vunpack.c.l.b16 %v9162
        %v9298 = vunpack.c.l.b16 %v9163
        %v9299 = vunpack.c.l.b16 %v9164
        %v9300 = vunpack.c.l.b16 %v9165
        %v9301 = vunpack.c.l.b16 %v9166
        %v9302 = vunpack.c.l.b16 %v9167
        %v9303 = vunpack.c.l.b16 %v9168
        %v9304 = vunpack.c.l.b16 %v9169
        %v9305 = vunpack.c.l.b16 %v9170
        %v9306 = vunpack.c.l.b16 %v9171
        %v9307 = vunpack.c.l.b16 %v9172
        %v9308 = vunpack.c.l.b16 %v9173
        %v9309 = vunpack.c.l.b16 %v9174
        %v9310 = vunpack.c.l.b16 %v9175
        %v9311 = vunpack.c.l.b16 %v9176
        %v9312 = vunpack.c.l.b16 %v9177
        %v9313 = vunpack.c.l.b16 %v9178
        %v9314 = vunpack.c.l.b16 %v9179
        %v9315 = vunpack.c.l.b16 %v9180
        %v9316 = vunpack.c.l.b16 %v9181
        %v9317 = vunpack.c.l.b16 %v9182
        %v9318 = vunpack.c.l.b16 %v9183
        %v9319 = vunpack.c.l.b16 %v9184
        %v9320 = vunpack.c.l.b16 %v9185
        %v9321 = vunpack.c.l.b16 %v9186
        %v9322 = vunpack.c.l.b16 %v9187
        %v9323 = vunpack.c.l.b16 %v9188
        %v9324 = vunpack.c.l.b16 %v9189
        %v9325 = vunpack.c.l.b16 %v9190
        %v9326 = vunpack.c.l.b16 %v9191
        %v9327 = vunpack.c.l.b16 %v9192
        %v9328 = vunpack.c.l.b16 %v9193
        %v9329 = vunpack.c.l.b16 %v9194
        %v9330 = vunpack.c.l.b16 %v9195
        %v9331 = vunpack.c.l.b16 %v9196
        %v9332 = vunpack.c.l.b16 %v9197
        %v9333 = vunpack.c.l.b16 %v9198
        %v9334 = vunpack.c.l.b16 %v9199
        %v9335 = vunpack.c.l.b16 %v9200
        %v9336 = vunpack.c.l.b16 %v9201
        %v9337 = vpack.c.b16 %v9274, %v9273
        %v9338 = vpack.c.b16 %v9276, %v9275
        %v9339 = vpack.c.b16 %v9278, %v9277
        %v9340 = vpack.c.b16 %v9280, %v9279
        %v9341 = vpack.c.b16 %v9282, %v9281
        %v9342 = vpack.c.b16 %v9284, %v9283
        %v9343 = vpack.c.b16 %v9286, %v9285
        %v9344 = vpack.c.b16 %v9288, %v9287
        %v9345 = vpack.c.b16 %v9290, %v9289
        %v9346 = vpack.c.b16 %v9292, %v9291
        %v9347 = vpack.c.b16 %v9294, %v9293
        %v9348 = vpack.c.b16 %v9296, %v9295
        %v9349 = vpack.c.b16 %v9298, %v9297
        %v9350 = vpack.c.b16 %v9300, %v9299
        %v9351 = vpack.c.b16 %v9302, %v9301
        %v9352 = vpack.c.b16 %v9304, %v9303
        %v9353 = vpack.c.b16 %v9306, %v9305
        %v9354 = vpack.c.b16 %v9308, %v9307
        %v9355 = vpack.c.b16 %v9310, %v9309
        %v9356 = vpack.c.b16 %v9312, %v9311
        %v9357 = vpack.c.b16 %v9314, %v9313
        %v9358 = vpack.c.b16 %v9316, %v9315
        %v9359 = vpack.c.b16 %v9318, %v9317
        %v9360 = vpack.c.b16 %v9320, %v9319
        %v9361 = vpack.c.b16 %v9322, %v9321
        %v9362 = vpack.c.b16 %v9324, %v9323
        %v9363 = vpack.c.b16 %v9326, %v9325
        %v9364 = vpack.c.b16 %v9328, %v9327
        %v9365 = vpack.c.b16 %v9330, %v9329
        %v9366 = vpack.c.b16 %v9332, %v9331
        %v9367 = vpack.c.b16 %v9334, %v9333
        %v9368 = vpack.c.b16 %v9336, %v9335
        %9401 = vmatprep.subr.bf16.mxu0 0
        %9402 = vmatpush1.bf16.msra.mxu0 %v9337
        %9403 = vmatprep.subr.bf16.mxu0 0
        %9404 = vmatpush1.bf16.msra.mxu0 %v9338
        %9405 = vmatprep.subr.bf16.mxu0 0
        %9406 = vmatpush1.bf16.msra.mxu0 %v9339
        %9407 = vmatprep.subr.bf16.mxu0 0
        %9408 = vmatpush1.bf16.msra.mxu0 %v9340
        %9409 = vmatprep.subr.bf16.mxu0 0
        %9410 = vmatpush1.bf16.msra.mxu0 %v9341
        %9411 = vmatprep.subr.bf16.mxu0 0
        %9412 = vmatpush1.bf16.msra.mxu0 %v9342
        %9413 = vmatprep.subr.bf16.mxu0 0
        %9414 = vmatpush1.bf16.msra.mxu0 %v9343
        %9415 = vmatprep.subr.bf16.mxu0 0
        %9416 = vmatpush1.bf16.msra.mxu0 %v9344
        %9417 = vmatprep.subr.bf16.mxu0 0
        %9418 = vmatpush1.bf16.msra.mxu0 %v9345
        %9419 = vmatprep.subr.bf16.mxu0 0
        %9420 = vmatpush1.bf16.msra.mxu0 %v9346
        %9421 = vmatprep.subr.bf16.mxu0 0
        %9422 = vmatpush1.bf16.msra.mxu0 %v9347
        %9423 = vmatprep.subr.bf16.mxu0 0
        %9424 = vmatpush1.bf16.msra.mxu0 %v9348
        %9425 = vmatprep.subr.bf16.mxu0 0
        %9426 = vmatpush1.bf16.msra.mxu0 %v9349
        %9427 = vmatprep.subr.bf16.mxu0 0
        %9428 = vmatpush1.bf16.msra.mxu0 %v9350
        %9429 = vmatprep.subr.bf16.mxu0 0
        %9430 = vmatpush1.bf16.msra.mxu0 %v9351
        %9431 = vmatprep.subr.bf16.mxu0 0
        %9432 = vmatpush1.bf16.msra.mxu0 %v9352
        %9433 = vmatprep.mubr.bf16.mxu0 %v9107
        %9434 = vmatmul.mubr.bf16.gmra.mrb[0].mxu0 %v9106
        %v9435 = vpop.f32.mrb[0].mxu0
        %v9436 = vadd.f32 %v9207, %v9435
        %v9437 = vpop.f32.mrb[0].mxu0
        %v9438 = vpop.f32.mrb[0].mxu0
        %v9439 = vadd.f32 %v9207, %v9438
        %v9440 = vpop.f32.mrb[0].mxu0
        %9441 = vmatprep.mubr.bf16.mxu0 %v9111
        %9442 = vmatmul.mubr.bf16.gmra.mrb[0].mxu0 %v9110
        %v9443 = vpop.f32.mrb[0].mxu0
        %v9444 = vadd.f32 %v9207, %v9443
        %v9445 = vpop.f32.mrb[0].mxu0
        %v9446 = vpop.f32.mrb[0].mxu0
        %v9447 = vadd.f32 %v9207, %v9446
        %v9448 = vpop.f32.mrb[0].mxu0
        %9449 = vmatprep.mubr.bf16.mxu0 %v9115
        %9450 = vmatmul.mubr.bf16.gmra.mrb[0].mxu0 %v9114
        %v9451 = vpop.f32.mrb[0].mxu0
        %v9452 = vadd.f32 %v9207, %v9451
        %v9453 = vpop.f32.mrb[0].mxu0
        %v9454 = vpop.f32.mrb[0].mxu0
        %v9455 = vadd.f32 %v9207, %v9454
        %v9456 = vpop.f32.mrb[0].mxu0
        %9457 = vmatprep.mubr.bf16.mxu0 %v9119
        %9458 = vmatmul.mubr.bf16.gmra.mrb[0].mxu0 %v9118
        %v9459 = vpop.f32.mrb[0].mxu0
        %v9460 = vadd.f32 %v9207, %v9459
        %v9461 = vpop.f32.mrb[0].mxu0
        %v9462 = vpop.f32.mrb[0].mxu0
        %v9463 = vadd.f32 %v9207, %v9462
        %v9464 = vpop.f32.mrb[0].mxu0
        %9465 = vmatprep.mubr.bf16.mxu0 %v9123
        %9466 = vmatmul.mubr.bf16.gmra.mrb[0].mxu0 %v9122
        %v9467 = vpop.f32.mrb[0].mxu0
        %v9468 = vadd.f32 %v9207, %v9467
        %v9469 = vpop.f32.mrb[0].mxu0
        %v9470 = vpop.f32.mrb[0].mxu0
        %v9471 = vadd.f32 %v9207, %v9470
        %v9472 = vpop.f32.mrb[0].mxu0
        %9473 = vmatprep.mubr.bf16.mxu0 %v9127
        %9474 = vmatmul.mubr.bf16.gmra.mrb[0].mxu0 %v9126
        %v9475 = vpop.f32.mrb[0].mxu0
        %v9476 = vadd.f32 %v9207, %v9475
        %v9477 = vpop.f32.mrb[0].mxu0
        %v9478 = vpop.f32.mrb[0].mxu0
        %v9479 = vadd.f32 %v9207, %v9478
        %v9480 = vpop.f32.mrb[0].mxu0
        %9481 = vmatprep.mubr.bf16.mxu0 %v9131
        %9482 = vmatmul.mubr.bf16.gmra.mrb[0].mxu0 %v9130
        %v9483 = vpop.f32.mrb[0].mxu0
        %v9484 = vadd.f32 %v9207, %v9483
        %v9485 = vpop.f32.mrb[0].mxu0
        %v9486 = vpop.f32.mrb[0].mxu0
        %v9487 = vadd.f32 %v9207, %v9486
        %v9488 = vpop.f32.mrb[0].mxu0
        %9489 = vmatprep.mubr.bf16.mxu0 %v9135
        %9490 = vmatmul.mubr.bf16.gmra.mrb[0].mxu0 %v9134
        %v9491 = vpop.f32.mrb[0].mxu0
        %v9492 = vadd.f32 %v9207, %v9491
        %v9493 = vpop.f32.mrb[0].mxu0
        %v9494 = vpop.f32.mrb[0].mxu0
        %v9495 = vadd.f32 %v9207, %v9494
        %v9496 = vpop.f32.mrb[0].mxu0
        %9497 = vdwg.mxu0
        %9498 = vmatprep.subr.bf16.mxu0 0
        %9499 = vmatpush1.bf16.msra.mxu0 %v9353
        %9500 = vmatprep.subr.bf16.mxu0 0
        %9501 = vmatpush1.bf16.msra.mxu0 %v9354
        %9502 = vmatprep.subr.bf16.mxu0 0
        %9503 = vmatpush1.bf16.msra.mxu0 %v9355
        %9504 = vmatprep.subr.bf16.mxu0 0
        %9505 = vmatpush1.bf16.msra.mxu0 %v9356
        %9506 = vmatprep.subr.bf16.mxu0 0
        %9507 = vmatpush1.bf16.msra.mxu0 %v9357
        %9508 = vmatprep.subr.bf16.mxu0 0
        %9509 = vmatpush1.bf16.msra.mxu0 %v9358
        %9510 = vmatprep.subr.bf16.mxu0 0
        %9511 = vmatpush1.bf16.msra.mxu0 %v9359
        %9512 = vmatprep.subr.bf16.mxu0 0
        %9513 = vmatpush1.bf16.msra.mxu0 %v9360
        %9514 = vmatprep.subr.bf16.mxu0 0
        %9515 = vmatpush1.bf16.msra.mxu0 %v9361
        %9516 = vmatprep.subr.bf16.mxu0 0
        %9517 = vmatpush1.bf16.msra.mxu0 %v9362
        %9518 = vmatprep.subr.bf16.mxu0 0
        %9519 = vmatpush1.bf16.msra.mxu0 %v9363
        %9520 = vmatprep.subr.bf16.mxu0 0
        %9521 = vmatpush1.bf16.msra.mxu0 %v9364
        %9522 = vmatprep.subr.bf16.mxu0 0
        %9523 = vmatpush1.bf16.msra.mxu0 %v9365
        %9524 = vmatprep.subr.bf16.mxu0 0
        %9525 = vmatpush1.bf16.msra.mxu0 %v9366
        %9526 = vmatprep.subr.bf16.mxu0 0
        %9527 = vmatpush1.bf16.msra.mxu0 %v9367
        %9528 = vmatprep.subr.bf16.mxu0 0
        %9529 = vmatpush1.bf16.msra.mxu0 %v9368
        %9530 = vmatprep.mubr.bf16.mxu0 %v9109
        %9531 = vmatmul.mubr.bf16.gmra.mrb[0].mxu0 %v9108
        %v9532 = vpop.f32.mrb[0].mxu0
        %v9533 = vadd.f32 %v9436, %v9532
        %v9534 = vpop.f32.mrb[0].mxu0
        %v9535 = vpop.f32.mrb[0].mxu0
        %v9536 = vadd.f32 %v9439, %v9535
        %v9537 = vpop.f32.mrb[0].mxu0
        %9538 = vmatprep.mubr.bf16.mxu0 %v9113
        %9539 = vmatmul.mubr.bf16.gmra.mrb[0].mxu0 %v9112
        %v9540 = vpop.f32.mrb[0].mxu0
        %v9541 = vadd.f32 %v9444, %v9540
        %v9542 = vpop.f32.mrb[0].mxu0
        %v9543 = vpop.f32.mrb[0].mxu0
        %v9544 = vadd.f32 %v9447, %v9543
        %v9545 = vpop.f32.mrb[0].mxu0
        %9546 = vmatprep.mubr.bf16.mxu0 %v9117
        %9547 = vmatmul.mubr.bf16.gmra.mrb[0].mxu0 %v9116
        %v9548 = vpop.f32.mrb[0].mxu0
        %v9549 = vadd.f32 %v9452, %v9548
        %v9550 = vpop.f32.mrb[0].mxu0
        %v9551 = vpop.f32.mrb[0].mxu0
        %v9552 = vadd.f32 %v9455, %v9551
        %v9553 = vpop.f32.mrb[0].mxu0
        %9554 = vmatprep.mubr.bf16.mxu0 %v9121
        %9555 = vmatmul.mubr.bf16.gmra.mrb[0].mxu0 %v9120
        %v9556 = vpop.f32.mrb[0].mxu0
        %v9557 = vadd.f32 %v9460, %v9556
        %v9558 = vpop.f32.mrb[0].mxu0
        %v9559 = vpop.f32.mrb[0].mxu0
        %v9560 = vadd.f32 %v9463, %v9559
        %v9561 = vpop.f32.mrb[0].mxu0
        %9562 = vmatprep.mubr.bf16.mxu0 %v9125
        %9563 = vmatmul.mubr.bf16.gmra.mrb[0].mxu0 %v9124
        %v9564 = vpop.f32.mrb[0].mxu0
        %v9565 = vadd.f32 %v9468, %v9564
        %v9566 = vpop.f32.mrb[0].mxu0
        %v9567 = vpop.f32.mrb[0].mxu0
        %v9568 = vadd.f32 %v9471, %v9567
        %v9569 = vpop.f32.mrb[0].mxu0
        %9570 = vmatprep.mubr.bf16.mxu0 %v9129
        %9571 = vmatmul.mubr.bf16.gmra.mrb[0].mxu0 %v9128
        %v9572 = vpop.f32.mrb[0].mxu0
        %v9573 = vadd.f32 %v9476, %v9572
        %v9574 = vpop.f32.mrb[0].mxu0
        %v9575 = vpop.f32.mrb[0].mxu0
        %v9576 = vadd.f32 %v9479, %v9575
        %v9577 = vpop.f32.mrb[0].mxu0
        %9578 = vmatprep.mubr.bf16.mxu0 %v9133
        %9579 = vmatmul.mubr.bf16.gmra.mrb[0].mxu0 %v9132
        %v9580 = vpop.f32.mrb[0].mxu0
        %v9581 = vadd.f32 %v9484, %v9580
        %v9582 = vpop.f32.mrb[0].mxu0
        %v9583 = vpop.f32.mrb[0].mxu0
        %v9584 = vadd.f32 %v9487, %v9583
        %v9585 = vpop.f32.mrb[0].mxu0
        %9586 = vmatprep.mubr.bf16.mxu0 %v9137
        %9587 = vmatmul.mubr.bf16.gmra.mrb[0].mxu0 %v9136
        %v9588 = vpop.f32.mrb[0].mxu0
        %v9589 = vadd.f32 %v9492, %v9588
        %v9590 = vpop.f32.mrb[0].mxu0
        %v9591 = vpop.f32.mrb[0].mxu0
        %v9592 = vadd.f32 %v9495, %v9591
        %v9593 = vpop.f32.mrb[0].mxu0
        %9594 = vdwg.mxu0
        %v9595 = vadd.f32 %v9533, %v8578
        %v9596 = vadd.f32 %v9536, %v8579
        %v9597 = vadd.f32 %v9541, %v8580
        %v9598 = vadd.f32 %v9544, %v8581
        %v9599 = vadd.f32 %v9549, %v8582
        %v9600 = vadd.f32 %v9552, %v8583
        %v9601 = vadd.f32 %v9557, %v8584
        %v9602 = vadd.f32 %v9560, %v8585
        %v9603 = vadd.f32 %v9565, %v8586
        %v9604 = vadd.f32 %v9568, %v8587
        %v9605 = vadd.f32 %v9573, %v8588
        %v9606 = vadd.f32 %v9576, %v8589
        %v9607 = vadd.f32 %v9581, %v8590
        %v9608 = vadd.f32 %v9584, %v8591
        %v9609 = vadd.f32 %v9589, %v8592
        %v9610 = vadd.f32 %v9592, %v8593
        %9611 = vadd.xlane.f32.xlu0 %v9595
        %v9612 = vpop.xlane.xlu0 %9611
        %9613 = vadd.xlane.f32.xlu0 %v9596
        %v9614 = vpop.xlane.xlu0 %9613
        %9615 = vadd.xlane.f32.xlu0 %v9597
        %v9616 = vpop.xlane.xlu0 %9615
        %9617 = vadd.xlane.f32.xlu0 %v9598
        %v9618 = vpop.xlane.xlu0 %9617
        %9619 = vadd.xlane.f32.xlu0 %v9599
        %v9620 = vpop.xlane.xlu0 %9619
        %9621 = vadd.xlane.f32.xlu0 %v9600
        %v9622 = vpop.xlane.xlu0 %9621
        %9623 = vadd.xlane.f32.xlu0 %v9601
        %v9624 = vpop.xlane.xlu0 %9623
        %9625 = vadd.xlane.f32.xlu0 %v9602
        %v9626 = vpop.xlane.xlu0 %9625
        %9627 = vadd.xlane.f32.xlu0 %v9603
        %v9628 = vpop.xlane.xlu0 %9627
        %9629 = vadd.xlane.f32.xlu0 %v9604
        %v9630 = vpop.xlane.xlu0 %9629
        %9631 = vadd.xlane.f32.xlu0 %v9605
        %v9632 = vpop.xlane.xlu0 %9631
        %9633 = vadd.xlane.f32.xlu0 %v9606
        %v9634 = vpop.xlane.xlu0 %9633
        %9635 = vadd.xlane.f32.xlu0 %v9607
        %v9636 = vpop.xlane.xlu0 %9635
        %9637 = vadd.xlane.f32.xlu0 %v9608
        %v9638 = vpop.xlane.xlu0 %9637
        %9639 = vadd.xlane.f32.xlu0 %v9609
        %v9640 = vpop.xlane.xlu0 %9639
        %9641 = vadd.xlane.f32.xlu0 %v9610
        %v9642 = vpop.xlane.xlu0 %9641
        %v9643 = vmul.f32 %v9612, %v8405
        %v9644 = vmul.f32 %v9614, %v8405
        %v9645 = vmul.f32 %v9616, %v8405
        %v9646 = vmul.f32 %v9618, %v8405
        %v9647 = vmul.f32 %v9620, %v8405
        %v9648 = vmul.f32 %v9622, %v8405
        %v9649 = vmul.f32 %v9624, %v8405
        %v9650 = vmul.f32 %v9626, %v8405
        %v9651 = vmul.f32 %v9628, %v8405
        %v9652 = vmul.f32 %v9630, %v8405
        %v9653 = vmul.f32 %v9632, %v8405
        %v9654 = vmul.f32 %v9634, %v8405
        %v9655 = vmul.f32 %v9636, %v8405
        %v9656 = vmul.f32 %v9638, %v8405
        %v9657 = vmul.f32 %v9640, %v8405
        %v9658 = vmul.f32 %v9642, %v8405
        %v9659 = vsub.f32 %v9595, %v9643
        %v9660 = vsub.f32 %v9596, %v9644
        %v9661 = vsub.f32 %v9597, %v9645
        %v9662 = vsub.f32 %v9598, %v9646
        %v9663 = vsub.f32 %v9599, %v9647
        %v9664 = vsub.f32 %v9600, %v9648
        %v9665 = vsub.f32 %v9601, %v9649
        %v9666 = vsub.f32 %v9602, %v9650
        %v9667 = vsub.f32 %v9603, %v9651
        %v9668 = vsub.f32 %v9604, %v9652
        %v9669 = vsub.f32 %v9605, %v9653
        %v9670 = vsub.f32 %v9606, %v9654
        %v9671 = vsub.f32 %v9607, %v9655
        %v9672 = vsub.f32 %v9608, %v9656
        %v9673 = vsub.f32 %v9609, %v9657
        %v9674 = vsub.f32 %v9610, %v9658
        %v9675 = vmul.f32 %v9659, %v9659
        %v9676 = vmul.f32 %v9660, %v9660
        %v9677 = vmul.f32 %v9661, %v9661
        %v9678 = vmul.f32 %v9662, %v9662
        %v9679 = vmul.f32 %v9663, %v9663
        %v9680 = vmul.f32 %v9664, %v9664
        %v9681 = vmul.f32 %v9665, %v9665
        %v9682 = vmul.f32 %v9666, %v9666
        %v9683 = vmul.f32 %v9667, %v9667
        %v9684 = vmul.f32 %v9668, %v9668
        %v9685 = vmul.f32 %v9669, %v9669
        %v9686 = vmul.f32 %v9670, %v9670
        %v9687 = vmul.f32 %v9671, %v9671
        %v9688 = vmul.f32 %v9672, %v9672
        %v9689 = vmul.f32 %v9673, %v9673
        %v9690 = vmul.f32 %v9674, %v9674
        %9691 = vadd.xlane.f32.xlu0 %v9675
        %v9692 = vpop.xlane.xlu0 %9691
        %9693 = vadd.xlane.f32.xlu0 %v9676
        %v9694 = vpop.xlane.xlu0 %9693
        %9695 = vadd.xlane.f32.xlu0 %v9677
        %v9696 = vpop.xlane.xlu0 %9695
        %9697 = vadd.xlane.f32.xlu0 %v9678
        %v9698 = vpop.xlane.xlu0 %9697
        %9699 = vadd.xlane.f32.xlu0 %v9679
        %v9700 = vpop.xlane.xlu0 %9699
        %9701 = vadd.xlane.f32.xlu0 %v9680
        %v9702 = vpop.xlane.xlu0 %9701
        %9703 = vadd.xlane.f32.xlu0 %v9681
        %v9704 = vpop.xlane.xlu0 %9703
        %9705 = vadd.xlane.f32.xlu0 %v9682
        %v9706 = vpop.xlane.xlu0 %9705
        %9707 = vadd.xlane.f32.xlu0 %v9683
        %v9708 = vpop.xlane.xlu0 %9707
        %9709 = vadd.xlane.f32.xlu0 %v9684
        %v9710 = vpop.xlane.xlu0 %9709
        %9711 = vadd.xlane.f32.xlu0 %v9685
        %v9712 = vpop.xlane.xlu0 %9711
        %9713 = vadd.xlane.f32.xlu0 %v9686
        %v9714 = vpop.xlane.xlu0 %9713
        %9715 = vadd.xlane.f32.xlu0 %v9687
        %v9716 = vpop.xlane.xlu0 %9715
        %9717 = vadd.xlane.f32.xlu0 %v9688
        %v9718 = vpop.xlane.xlu0 %9717
        %9719 = vadd.xlane.f32.xlu0 %v9689
        %v9720 = vpop.xlane.xlu0 %9719
        %9721 = vadd.xlane.f32.xlu0 %v9690
        %v9722 = vpop.xlane.xlu0 %9721
        %v9723 = vmul.f32 %v9692, %v8405
        %v9724 = vmul.f32 %v9694, %v8405
        %v9725 = vmul.f32 %v9696, %v8405
        %v9726 = vmul.f32 %v9698, %v8405
        %v9727 = vmul.f32 %v9700, %v8405
        %v9728 = vmul.f32 %v9702, %v8405
        %v9729 = vmul.f32 %v9704, %v8405
        %v9730 = vmul.f32 %v9706, %v8405
        %v9731 = vmul.f32 %v9708, %v8405
        %v9732 = vmul.f32 %v9710, %v8405
        %v9733 = vmul.f32 %v9712, %v8405
        %v9734 = vmul.f32 %v9714, %v8405
        %v9735 = vmul.f32 %v9716, %v8405
        %v9736 = vmul.f32 %v9718, %v8405
        %v9737 = vmul.f32 %v9720, %v8405
        %v9738 = vmul.f32 %v9722, %v8405
        %v9739 = vadd.f32 %v9723, 1e-05
        %v9740 = vadd.f32 %v9724, 1e-05
        %v9741 = vadd.f32 %v9725, 1e-05
        %v9742 = vadd.f32 %v9726, 1e-05
        %v9743 = vadd.f32 %v9727, 1e-05
        %v9744 = vadd.f32 %v9728, 1e-05
        %v9745 = vadd.f32 %v9729, 1e-05
        %v9746 = vadd.f32 %v9730, 1e-05
        %v9747 = vadd.f32 %v9731, 1e-05
        %v9748 = vadd.f32 %v9732, 1e-05
        %v9749 = vadd.f32 %v9733, 1e-05
        %v9750 = vadd.f32 %v9734, 1e-05
        %v9751 = vadd.f32 %v9735, 1e-05
        %v9752 = vadd.f32 %v9736, 1e-05
        %v9753 = vadd.f32 %v9737, 1e-05
        %v9754 = vadd.f32 %v9738, 1e-05
        %v9755 = vrsqrt.pop %v9739
        %v9756 = vrsqrt.pop %v9740
        %v9757 = vrsqrt.pop %v9741
        %v9758 = vrsqrt.pop %v9742
        %v9759 = vrsqrt.pop %v9743
        %v9760 = vrsqrt.pop %v9744
        %v9761 = vrsqrt.pop %v9745
        %v9762 = vrsqrt.pop %v9746
        %v9763 = vrsqrt.pop %v9747
        %v9764 = vrsqrt.pop %v9748
        %v9765 = vrsqrt.pop %v9749
        %v9766 = vrsqrt.pop %v9750
        %v9767 = vrsqrt.pop %v9751
        %v9768 = vrsqrt.pop %v9752
        %v9769 = vrsqrt.pop %v9753
        %v9770 = vrsqrt.pop %v9754
        %v9771 = vmul.f32 %v9659, %v9755
        %v9772 = vmul.f32 %v9660, %v9756
        %v9773 = vmul.f32 %v9661, %v9757
        %v9774 = vmul.f32 %v9662, %v9758
        %v9775 = vmul.f32 %v9663, %v9759
        %v9776 = vmul.f32 %v9664, %v9760
        %v9777 = vmul.f32 %v9665, %v9761
        %v9778 = vmul.f32 %v9666, %v9762
        %v9779 = vmul.f32 %v9667, %v9763
        %v9780 = vmul.f32 %v9668, %v9764
        %v9781 = vmul.f32 %v9669, %v9765
        %v9782 = vmul.f32 %v9670, %v9766
        %v9783 = vmul.f32 %v9671, %v9767
        %v9784 = vmul.f32 %v9672, %v9768
        %v9785 = vmul.f32 %v9673, %v9769
        %v9786 = vmul.f32 %v9674, %v9770
        %v9787 = vmul.f32 %v9771, %v8554
        %v9788 = vmul.f32 %v9772, %v8554
        %v9789 = vmul.f32 %v9773, %v8554
        %v9790 = vmul.f32 %v9774, %v8554
        %v9791 = vmul.f32 %v9775, %v8554
        %v9792 = vmul.f32 %v9776, %v8554
        %v9793 = vmul.f32 %v9777, %v8554
        %v9794 = vmul.f32 %v9778, %v8554
        %v9795 = vmul.f32 %v9779, %v8554
        %v9796 = vmul.f32 %v9780, %v8554
        %v9797 = vmul.f32 %v9781, %v8554
        %v9798 = vmul.f32 %v9782, %v8554
        %v9799 = vmul.f32 %v9783, %v8554
        %v9800 = vmul.f32 %v9784, %v8554
        %v9801 = vmul.f32 %v9785, %v8554
        %v9802 = vmul.f32 %v9786, %v8554
        %v9803 = vadd.f32 %v9787, %v8576
        %v9804 = vadd.f32 %v9788, %v8576
        %v9805 = vadd.f32 %v9789, %v8576
        %v9806 = vadd.f32 %v9790, %v8576
        %v9807 = vadd.f32 %v9791, %v8576
        %v9808 = vadd.f32 %v9792, %v8576
        %v9809 = vadd.f32 %v9793, %v8576
        %v9810 = vadd.f32 %v9794, %v8576
        %v9811 = vadd.f32 %v9795, %v8576
        %v9812 = vadd.f32 %v9796, %v8576
        %v9813 = vadd.f32 %v9797, %v8576
        %v9814 = vadd.f32 %v9798, %v8576
        %v9815 = vadd.f32 %v9799, %v8576
        %v9816 = vadd.f32 %v9800, %v8576
        %v9817 = vadd.f32 %v9801, %v8576
        %v9818 = vadd.f32 %v9802, %v8576
        %9819 = vst [vmem:[%s532] sm:$0xff] %v9803
        %9820 = vst [vmem:[%s532 + $0x8] sm:$0xff] %v9804
        %9821 = vst [vmem:[%s532 + $0x10] sm:$0xff] %v9805
        %9822 = vst [vmem:[%s532 + $0x18] sm:$0xff] %v9806
        %9823 = vst [vmem:[%s532 + $0x20] sm:$0xff] %v9807
        %9824 = vst [vmem:[%s532 + $0x28] sm:$0xff] %v9808
        %9825 = vst [vmem:[%s532 + $0x30] sm:$0xff] %v9809
        %9826 = vst [vmem:[%s532 + $0x38] sm:$0xff] %v9810
        %9827 = vst [vmem:[%s532 + $0x40] sm:$0xff] %v9811
        %9828 = vst [vmem:[%s532 + $0x48] sm:$0xff] %v9812
        %9829 = vst [vmem:[%s532 + $0x50] sm:$0xff] %v9813
        %9830 = vst [vmem:[%s532 + $0x58] sm:$0xff] %v9814
        %9831 = vst [vmem:[%s532 + $0x60] sm:$0xff] %v9815
        %9832 = vst [vmem:[%s532 + $0x68] sm:$0xff] %v9816
        %9833 = vst [vmem:[%s532 + $0x70] sm:$0xff] %v9817
        %9834 = vst [vmem:[%s532 + $0x78] sm:$0xff] %v9818
        %s9835 = sand.u32 %s313, 1
        %s9836 = scalar_lea.sflag [#allocation4], %s9835
        %s9837 = sand.u32 %s313, 1
        %s9838 = smul.addr %s9837, 128
        %s9839 = scalar_lea.vmem [#allocation10], %s9838
        // Predicated region
        $region85: #{tpu_custom_call.1} parent=67 // pred_check
          %p9840 = pneg %p323
        $region86: #{tpu_custom_call.1} parent=67 // pred_check_branch
          %9842 = sbr.rel (%p9840) target = $region88
        $region87: #{tpu_custom_call.1} parent=67 // pred_region
          %s9843 = smul.u32 16, %s33
          %s9845 = ssub.s32 2048, 2048
          %9846 = vsyncadd %s9836, %s9845
          %s9847 = smul.addr %s9843, 128
          %s9848 = scalar_lea.hbm %s12, %s9847
          %s9849 = sshll.u32 %s9839, 4
          %s9850 = int_to_ptr.vmem [resolvable:$true] %s9849
          %9855 = dma.vmem_to_hbm [thread:$0]  %s9850, 2048, %s9848, %s9836, 128, 128, 8
        $region88: #{tpu_custom_call.1} parent=67 // pred_fallthru
          _
      $region68: #{tpu_custom_call.1} parent=5 // pred_fallthru
        _
      %p9856 = scmp.le.s32.totalorder 2, %s28
      // Predicated region
      $region89: #{tpu_custom_call.1} parent=5 // pred_check
        %p9857 = pneg %p9856
      $region90: #{tpu_custom_call.1} parent=5 // pred_check_branch
        %9859 = sbr.rel (%p9857) target = $region92
      $region91: #{tpu_custom_call.1} parent=5 // pred_region
        %s9860 = ssub.s32 %s28, 2
        // Predicated region
        $region93: #{tpu_custom_call.1} parent=91 // pred_check
          %p9861 = pneg %p329
        $region94: #{tpu_custom_call.1} parent=91 // pred_check_branch
          %9863 = sbr.rel (%p9861) target = $region96
        $region95: #{tpu_custom_call.1} parent=91 // pred_region
          %s9864 = sand.u32 %s314, 1
          %s9865 = scalar_lea.sflag [#allocation4], %s9864
          %s9866 = sand.u32 %s314, 1
          %s9867 = smul.addr %s9866, 128
          %s9868 = scalar_lea.vmem [#allocation10], %s9867
          %9869 = dma.done %s9865, 2048
        $region96: #{tpu_custom_call.1} parent=91 // pred_fallthru
          _
      $region92: #{tpu_custom_call.1} parent=5 // pred_fallthru
        _
    $region6: #{tpu_custom_call.1} parent=1 // loop_footer
      %s32 = sadd.s32 1, %s28
    $region7: #{tpu_custom_call.1} parent=1 // loop_footer_branch
      %27 = sbr.rel target = $region3
    $region8: #{tpu_custom_call.1} parent=1 // loop_exit
      _
    %9870 = vsyncpa [#allocation3], 1
    %s9871 = scalar_lea.sflag [#allocation3], 1
    %9872 = vsyncpa %s9871, 1
    %9873 = vsyncpa [#allocation6], 1
    %s9874 = scalar_lea.sflag [#allocation6], 1
    %9875 = vsyncpa %s9874, 1
    %9876 = vsyncpa [#allocation9], 1
    %9877 = vsyncpa [#allocation4], 1
    %s9878 = scalar_lea.sflag [#allocation4], 1
    %9879 = vsyncpa %s9878, 1

</llo_original>
